<compile_context>
chip_gen: v7x
topology: tpu7x:2x2x1
jax: 0.10.0
libtpu: 0.0.40
codegen_flags: <defaults>
</compile_context>

<pallas_src>
import math
import functools

import jax
import jax.numpy as jnp
from jax.experimental import pallas as pl
from jax.experimental.pallas import tpu as pltpu


# Flip to True for bf16 MXU inputs (f32 accumulate) on the conv matmuls:
# ~2-4x throughput on v5e/v6e/v7x at the cost of exact f32 parity.
MATMUL_BF16 = False


# ----------------------------------------------------------------------------
# small helpers
# ----------------------------------------------------------------------------

def _round_up(x, m):
    return -(-x // m) * m


_ACTS = {
    'none': lambda v: v,
    'relu': lambda v: jnp.maximum(v, 0.0),
    'lrelu': lambda v: jnp.where(v >= 0.0, v, 0.2 * v),
}


def _mosaic_params(semantics, vmem_bytes=None):
    """dimension_semantics plus an explicit scoped-VMEM limit whenever the
    kernel's block working set exceeds the conservative 16 MiB default."""
    if vmem_bytes is not None and vmem_bytes > 16 * 2 ** 20:
        return pltpu.CompilerParams(
            dimension_semantics=semantics,
            vmem_limit_bytes=int(min(vmem_bytes, 64 * 2 ** 20)))
    return pltpu.CompilerParams(dimension_semantics=semantics)


# ----------------------------------------------------------------------------
# Pallas kernels: tiled matmul with fused activation prologue / bias epilogue
# ----------------------------------------------------------------------------

def _matmul_kernel(act_fn, a_ref, b_ref, bias_ref, o_ref, acc_ref):
    @pl.when(pl.program_id(2) == 0)
    def _init():
        acc_ref[...] = jnp.zeros_like(acc_ref)

    acc_ref[...] += jnp.dot(act_fn(a_ref[...]), b_ref[...],
                            preferred_element_type=jnp.float32)

    @pl.when(pl.program_id(2) == pl.num_programs(2) - 1)
    def _fin():
        o_ref[...] = acc_ref[...] + bias_ref[...]


def matmul_act_bias(a, b, bias, act='none'):
    """act(a) @ b + bias as a tiled, pipelined MXU matmul.  The activation
    (none / relu / leaky-relu) runs as a prologue on the A tiles, so no
    standalone elementwise pass over HBM is needed (exact since act(0)=0 on
    the zero K-padding)."""
    M, K = a.shape
    _, N = b.shape
    if M <= 512:
        tm = _round_up(M, 8); Mp = tm
    else:
        tm = 512; Mp = _round_up(M, tm)
    if N <= 512:
        tn = _round_up(N, 128); Np = tn
    else:
        tn = 512; Np = _round_up(N, tn)
    if K <= 1024:
        tk = _round_up(K, 128); Kp = tk
    else:
        tk = 1024; Kp = _round_up(K, tk)

    a_p = jnp.pad(a, ((0, Mp - M), (0, Kp - K)))
    b_p = jnp.pad(b, ((0, Kp - K), (0, Np - N)))
    if MATMUL_BF16:
        a_p = a_p.astype(jnp.bfloat16)
        b_p = b_p.astype(jnp.bfloat16)
    bias_p = jnp.pad(bias.reshape(1, N), ((0, 0), (0, Np - N)))

    esz = 2 if MATMUL_BF16 else 4
    blk = 2 * esz * (tm * tk + tk * tn) + 4 * (3 * tm * tn + 2 * tn)
    out = pl.pallas_call(
        functools.partial(_matmul_kernel, _ACTS[act]),
        grid=(Mp // tm, Np // tn, Kp // tk),
        in_specs=[
            pl.BlockSpec((tm, tk), lambda i, j, k: (i, k)),
            pl.BlockSpec((tk, tn), lambda i, j, k: (k, j)),
            pl.BlockSpec((1, tn), lambda i, j, k: (0, j)),
        ],
        out_specs=pl.BlockSpec((tm, tn), lambda i, j, k: (i, j)),
        out_shape=jax.ShapeDtypeStruct((Mp, Np), jnp.float32),
        scratch_shapes=[pltpu.VMEM((tm, tn), jnp.float32)],
        compiler_params=_mosaic_params(("parallel", "parallel", "arbitrary"),
                                       blk),
    )(a_p, b_p, bias_p)
    return out[:M, :N]


# ----------------------------------------------------------------------------
# Pallas kernels: tiled two-pass BatchNorm / per-batch InstanceNorm (chan-last)
# ----------------------------------------------------------------------------

def _bn_stats_kernel(x_ref, o_ref):
    # accumulate per-channel sum (row 0) and sum-of-squares (row 1); the output
    # block is resident across the "arbitrary" row-tile axis.
    @pl.when(pl.program_id(0) == 0)
    def _init():
        o_ref[...] = jnp.zeros_like(o_ref)
    x = x_ref[...]
    o_ref[0:1, :] += jnp.sum(x, axis=0, keepdims=True)
    o_ref[1:2, :] += jnp.sum(x * x, axis=0, keepdims=True)


def _scale_shift_kernel(act_fn, x_ref, sc_ref, sh_ref, o_ref):
    o_ref[...] = act_fn(x_ref[...] * sc_ref[...] + sh_ref[...])


def batchnorm_cl(x_slab, gamma, beta, act='none', eps=1e-5):
    """Training-mode BatchNorm on a channels-last (rows, C) slab, tiled over
    rows.  Pass 1 accumulates sum / sumsq per channel (zero row padding is
    exact); the tiny per-channel mean/var/affine math runs in XLA; pass 2
    normalizes row tiles with a fused activation epilogue."""
    M, C = x_slab.shape
    tr = 512 if M > 512 else _round_up(M, 8)
    Mp = _round_up(M, tr)
    x_p = jnp.pad(x_slab, ((0, Mp - M), (0, 0)))
    grid = (Mp // tr,)

    stats = pl.pallas_call(
        _bn_stats_kernel,
        grid=grid,
        in_specs=[pl.BlockSpec((tr, C), lambda r: (r, 0))],
        out_specs=pl.BlockSpec((2, C), lambda r: (0, 0)),
        out_shape=jax.ShapeDtypeStruct((2, C), jnp.float32),
        compiler_params=_mosaic_params(("arbitrary",)),
    )(x_p)

    mean = stats[0] / M
    var = jnp.maximum(stats[1] / M - mean * mean, 0.0)
    scale = gamma * jax.lax.rsqrt(var + eps)
    shift = beta - mean * scale

    # NOTE: with C < 128 the output stores are masked (not lane-dense); at real
    # Shift-Net widths (C >= 128) they become unmasked full-lane stores.
    y = pl.pallas_call(
        functools.partial(_scale_shift_kernel, _ACTS[act]),
        grid=grid,
        in_specs=[pl.BlockSpec((tr, C), lambda r: (r, 0)),
                  pl.BlockSpec((1, C), lambda r: (0, 0)),
                  pl.BlockSpec((1, C), lambda r: (0, 0))],
        out_specs=pl.BlockSpec((tr, C), lambda r: (r, 0)),
        out_shape=jax.ShapeDtypeStruct((Mp, C), jnp.float32),
        compiler_params=_mosaic_params(("parallel",)),
    )(x_p, scale.reshape(1, C), shift.reshape(1, C))
    return y[:M]


def _instnorm_kernel(eps, act_fn, x_ref, o_ref):
    x = x_ref[...]
    mean = jnp.mean(x, axis=0, keepdims=True)
    var = jnp.mean(jnp.square(x - mean), axis=0, keepdims=True)
    o_ref[...] = act_fn((x - mean) * jax.lax.rsqrt(var + eps))


def _instnorm_add_kernel(eps, x_ref, r_ref, o_ref):
    x = x_ref[...]
    mean = jnp.mean(x, axis=0, keepdims=True)
    var = jnp.mean(jnp.square(x - mean), axis=0, keepdims=True)
    o_ref[...] = r_ref[...] + (x - mean) * jax.lax.rsqrt(var + eps)


def instancenorm_cl(x_slab, B, act='none', residual=None, eps=1e-5):
    """nn.InstanceNorm2d (affine=False) on a channels-last (B*HW, C) slab:
    per-(batch, channel) stats; grid over the batch axis ("parallel").
    Optionally fuses a ReLU epilogue or a residual add."""
    BHW, C = x_slab.shape
    HW = BHW // B
    if residual is None:
        return pl.pallas_call(
            functools.partial(_instnorm_kernel, eps, _ACTS[act]),
            grid=(B,),
            in_specs=[pl.BlockSpec((HW, C), lambda b: (b, 0))],
            out_specs=pl.BlockSpec((HW, C), lambda b: (b, 0)),
            out_shape=jax.ShapeDtypeStruct((BHW, C), jnp.float32),
            compiler_params=_mosaic_params(("parallel",)),
        )(x_slab)
    return pl.pallas_call(
        functools.partial(_instnorm_add_kernel, eps),
        grid=(B,),
        in_specs=[pl.BlockSpec((HW, C), lambda b: (b, 0)),
                  pl.BlockSpec((HW, C), lambda b: (b, 0))],
        out_specs=pl.BlockSpec((HW, C), lambda b: (b, 0)),
        out_shape=jax.ShapeDtypeStruct((BHW, C), jnp.float32),
        compiler_params=_mosaic_params(("parallel",)),
    )(x_slab, residual)


# ----------------------------------------------------------------------------
# Pallas kernel: patch-soft-shift attention + fused paste (one kernel per batch)
# ----------------------------------------------------------------------------

def _shift_attn_paste_kernel(h, w, a_ref, lwt_ref, invden_ref, mm_ref,
                             wtap_ref, xmask_ref, former_ref, o_ref):
    """Per-batch patch-soft-shift, fully resident in VMEM, in (location,window)
    layout (transpose-equivariant to PyTorch's (window,location) form):
      scores matmul -> 1/||w|| column scaling -> eye(3) "fuse" conv ->
      folded permute-fuse-permute -> masked x10 softmax ->
      paste (conv_transpose with raw windows) fused with F_c * F_shift / 9.
    The (HW,HW) cosine map never leaves VMEM."""
    HW = h * w
    C2 = former_ref.shape[2]

    # ---- scores: former windows . latter windows, per-window normalization
    s = jnp.dot(a_ref[0], lwt_ref[0], preferred_element_type=jnp.float32)
    s = s * invden_ref[0]                      # (1,HW) bcast: scale window cols

    # ---- hoisted rank-1 boundary / band masks (no (HW,HW) iota temporaries)
    ri = jax.lax.broadcasted_iota(jnp.int32, (HW, 1), 0)
    ci = jax.lax.broadcasted_iota(jnp.int32, (1, HW), 1)
    r_nf = (ri > 0).astype(jnp.float32)
    r_nl = (ri < HW - 1).astype(jnp.float32)
    c_nf = (ci > 0).astype(jnp.float32)
    c_nl = (ci < HW - 1).astype(jnp.float32)
    r_low, r_high = ri < w, ri >= HW - w       # y == 0 / y == h-1 row bands
    c_low, c_high = ci < w, ci >= HW - w       # jy == 0 / jy == h-1 col bands
    y_not_first = (ri >= w).astype(jnp.float32)      # paste mask: y > 0
    y_not_last = (ri < HW - w).astype(jnp.float32)   # paste mask: y < h-1
    x_not_first = xmask_ref[0]                       # paste mask: x > 0
    x_not_last = xmask_ref[1]                        # paste mask: x < w-1

    def diag3(m):
        # F.conv2d(m, eye(3), padding=1) on the flat (HW, HW) image.
        ul = pltpu.roll(pltpu.roll(m, 1, 0), 1, 1) * r_nf * c_nf
        dr = pltpu.roll(pltpu.roll(m, HW - 1, 0), HW - 1, 1) * r_nl * c_nl
        return ul + m + dr

    def diag3_perm(m):
        # The same eye(3) conv applied after the (y,x)->(x,y) / (jy,jx)->(jx,jy)
        # permute of both axes, folded back into the original layout
        # (permute^-1 o diag3 o permute).  A +-1 step in permuted flat
        # coordinates is a roll by w (interior rows/cols) or w+1 (wrap band),
        # so no O(HW^3) permutation-matrix matmuls are needed.
        u = jnp.where(r_low, pltpu.roll(m, w + 1, 0),
                      pltpu.roll(m, w, 0)) * r_nf
        u = jnp.where(c_low, pltpu.roll(u, w + 1, 1),
                      pltpu.roll(u, w, 1)) * c_nf
        d = jnp.where(r_high, pltpu.roll(m, HW - w - 1, 0),
                      pltpu.roll(m, HW - w, 0)) * r_nl
        d = jnp.where(c_high, pltpu.roll(d, HW - w - 1, 1),
                      pltpu.roll(d, HW - w, 1)) * c_nl
        return u + m + d

    s = diag3(s)
    s = diag3_perm(s)

    # ---- cosine = softmax((y*mm)*10, over windows) * mm  (windows = lane axis)
    mm = mm_ref[0]
    z = (s * mm) * 10.0
    z = z - jnp.max(z, axis=1, keepdims=True)
    e = jnp.exp(z)
    cos = e * (1.0 / jnp.sum(e, axis=1, keepdims=True)) * mm

    # ---- paste: F.conv_transpose2d(cosine, raw latter windows, padding=1)/9
    # fused with F_c * F_shift.  Nine per-tap matmuls on the resident cosine
    # tile; each (HW, C2) result is rolled + boundary-masked and accumulated.
    acc = jnp.zeros((HW, C2), jnp.float32)
    for ky in range(3):
        for kx in range(3):
            tap = ky * 3 + kx
            wt = wtap_ref[0, tap * HW:(tap + 1) * HW, :]       # (HW, C2)
            t = jnp.dot(cos, wt, preferred_element_type=jnp.float32)
            dy, dx = 1 - ky, 1 - kx
            off = dy * w + dx
            if off:
                t = pltpu.roll(t, (-off) % HW, 0)
            if dy == 1:
                t = t * y_not_last
            elif dy == -1:
                t = t * y_not_first
            if dx == 1:
                t = t * x_not_last
            elif dx == -1:
                t = t * x_not_first
            acc = acc + t

    o_ref[0] = former_ref[0] * (acc * (1.0 / 9.0))


# ----------------------------------------------------------------------------
# conv glue (im2col / sub-pixel conv-transpose), channels-last
# ----------------------------------------------------------------------------

def _im2col_nhwc(x, kh, kw, stride, pad):
    B, H, W, C = x.shape
    xp = jnp.pad(x, ((0, 0), (pad, pad), (pad, pad), (0, 0)))
    OH = (H + 2 * pad - kh) // stride + 1
    OW = (W + 2 * pad - kw) // stride + 1
    taps = []
    for ky in range(kh):
        for kx in range(kw):
            taps.append(xp[:, ky:ky + stride * OH:stride,
                           kx:kx + stride * OW:stride, :])
    p = jnp.stack(taps, axis=3)                    # (B, OH, OW, kh*kw, C)
    return p.reshape(B * OH * OW, kh * kw * C), OH, OW


def conv2d_cl(x_nhwc, w, b, stride=1, pad=0, act='none'):
    """PyTorch Conv2d on an NHWC tensor.  w: (Cout, Cin, kh, kw)."""
    Cout, Cin, kh, kw = w.shape
    cols, OH, OW = _im2col_nhwc(x_nhwc, kh, kw, stride, pad)
    wf = w.transpose(2, 3, 1, 0).reshape(kh * kw * Cin, Cout)
    y = matmul_act_bias(cols, wf, b, act=act)
    return y.reshape(x_nhwc.shape[0], OH, OW, Cout)


def conv_transpose2d_s2k4p1_cl(x_nhwc, w, b, act='none'):
    """PyTorch ConvTranspose2d(kernel=4, stride=2, padding=1) on NHWC via a
    sub-pixel decomposition: one dense 2x2-tap matmul (all four output
    residues as extra output columns) + pixel shuffle.  w: (Cin, Cout, 4, 4)."""
    B, H, W, Cin = x_nhwc.shape
    Cout = w.shape[1]
    # output residue r uses kernel taps ky = 3 - 2*dy - r  (dy = input offset)
    sel = jnp.array([[3, 2], [1, 0]], dtype=jnp.int32)         # [dy, r] -> k
    wsub = w[:, :, sel[:, :, None, None], sel[None, None, :, :]]
    # wsub: (Cin, Cout, dy, ry, dx, rx) -> rows (dy,dx,Cin), cols (ry,rx,Cout)
    wcomb = wsub.transpose(2, 4, 0, 3, 5, 1).reshape(4 * Cin, 4 * Cout)
    bcomb = jnp.tile(b, 4)

    xp = jnp.pad(x_nhwc, ((0, 0), (1, 1), (1, 1), (0, 0)))
    taps = []
    for dy in range(2):
        for dx in range(2):
            taps.append(xp[:, dy:dy + H + 1, dx:dx + W + 1, :])
    a = jnp.stack(taps, axis=3).reshape(B * (H + 1) * (W + 1), 4 * Cin)
    y = matmul_act_bias(a, wcomb, bcomb, act=act)
    y = y.reshape(B, H + 1, W + 1, 2, 2, Cout)                 # (.., ry, rx, c)

    rows = []
    for ry in range(2):
        cols = [y[:, ry:ry + H, rx:rx + W, ry, rx, :] for rx in range(2)]
        rows.append(jnp.stack(cols, axis=3))                   # (B, H, W, 2, C)
    z = jnp.stack(rows, axis=2)                                # (B, H, 2, W, 2, C)
    return z.reshape(B, 2 * H, 2 * W, Cout)


def _unfold_windows_nchw(x, k, pad):
    # torch: pad(x).unfold(2, k, 1).unfold(3, k, 1) -> (B, C, H, W, k, k)
    B, C, H, W = x.shape
    xp = jnp.pad(x, ((0, 0), (0, 0), (pad, pad), (pad, pad)))
    rows = []
    for ky in range(k):
        cols = [xp[:, :, ky:ky + H, kx:kx + W] for kx in range(k)]
        rows.append(jnp.stack(cols, axis=-1))
    return jnp.stack(rows, axis=-2)


# ----------------------------------------------------------------------------
# InnerResPatchSoftShiftTriple (fuse=True, stride=1, shift_sz=3, mask_thred=1)
# ----------------------------------------------------------------------------

def inner_res_patch_soft_shift(former, latter, mask_feat, p, shift_sz=3,
                               mask_thred=1):
    """former/latter: (B, h, w, C2) NHWC (already ReLU'd). mask_feat: (B,1,h,w)."""
    assert shift_sz == 3
    B, h, w, C2 = former.shape
    HW = h * w
    k = shift_sz
    pad = k // 2
    K9 = C2 * k * k

    # latter windows, reproducing PyTorch's raw `.contiguous().view()` memory
    # reinterpretation exactly (NOT a transpose when C2 > 1 -- parity quirk).
    latter_nchw = latter.transpose(0, 3, 1, 2)
    lat_unf = _unfold_windows_nchw(latter_nchw, k, pad)        # (B, C2, h, w, k, k)
    lat_win = lat_unf.reshape(B, HW, C2, k, k)

    # window-validity mask (integer window-count compare; equivalent to the
    # reference's mean-vs-thred/9 float compare, but immune to rounding).
    m = mask_feat[:, 0]
    mp = jnp.pad(m, ((0, 0), (pad, pad), (pad, pad)))
    msum = sum(mp[:, ky:ky + h, kx:kx + w] for ky in range(k) for kx in range(k))
    mm = (msum <= (mask_thred + 0.5)).astype(jnp.float32).reshape(B, 1, HW)
    # TODO(synk): upstream, util.cal_feat_mask derives mask_feat from the global
    # mask; here the feature-level mask is taken as a direct input.

    # per-window 1/||window||, applied to the score columns (equivalent to
    # normalizing the conv weights, but cheaper).
    den = jnp.sqrt(jnp.sum(lat_win * lat_win, axis=(2, 3, 4)))
    inv_den = (1.0 / jnp.maximum(den, 1e-4)).reshape(B, 1, HW)

    # attention operands (contraction dim lane-padded once)
    lw_flat = lat_win.transpose(0, 1, 3, 4, 2).reshape(B, HW, K9)   # (ky,kx,c)
    K9p = _round_up(K9, 128)
    lwt = jnp.pad(lw_flat.transpose(0, 2, 1), ((0, 0), (0, K9p - K9), (0, 0)))
    a_cols, _, _ = _im2col_nhwc(former, k, k, 1, pad)
    a_cols = jnp.pad(a_cols.reshape(B, HW, K9), ((0, 0), (0, 0), (0, K9p - K9)))

    # per-tap (HW, C2) paste weights: wtap[b, tap*HW + n, c] = lat_win[b,n,c,ky,kx]
    wtap = lat_win.transpose(0, 3, 4, 1, 2).reshape(B, k * k * HW, C2)

    # rank-1 x-coordinate masks for the paste taps (shared across batch)
    xi = jnp.arange(HW, dtype=jnp.int32) % w
    xmask = jnp.stack([(xi > 0), (xi < w - 1)]).astype(jnp.float32)
    xmask = xmask.reshape(2, HW, 1)

    former_slab = former.reshape(B, HW, C2)

    # TODO(synk): at real Shift-Net resolutions (HW ~ 1024) on v7x (64 MiB VMEM)
    # this kernel should additionally be tiled over the query-location axis with
    # a w+1 row halo for the fuse stages; at these shapes one resident block per
    # batch is optimal.
    blk_bytes = 4 * (2 * HW * K9p + 4 * HW + 9 * HW * C2 + 2 * HW + 2 * HW * C2)
    vmem_est = 2 * blk_bytes + 4 * 8 * HW * HW
    f_fuse = pl.pallas_call(
        functools.partial(_shift_attn_paste_kernel, h, w),
        grid=(B,),
        in_specs=[
            pl.BlockSpec((1, HW, K9p), lambda b: (b, 0, 0)),      # former im2col
            pl.BlockSpec((1, K9p, HW), lambda b: (b, 0, 0)),      # latter windows^T
            pl.BlockSpec((1, 1, HW), lambda b: (b, 0, 0)),        # 1/||window||
            pl.BlockSpec((1, 1, HW), lambda b: (b, 0, 0)),        # validity mask
            pl.BlockSpec((1, k * k * HW, C2), lambda b: (b, 0, 0)),  # paste taps
            pl.BlockSpec((2, HW, 1), lambda b: (0, 0, 0)),        # x-coord masks
            pl.BlockSpec((1, HW, C2), lambda b: (b, 0, 0)),       # F_c
        ],
        out_specs=pl.BlockSpec((1, HW, C2), lambda b: (b, 0, 0)),
        out_shape=jax.ShapeDtypeStruct((B, HW, C2), jnp.float32),
        compiler_params=_mosaic_params(("parallel",), vmem_est),
    )(a_cols, lwt, inv_den, mm, wtap, xmask, former_slab)

    # residual branch: conv3x3 -> IN+ReLU -> conv3x3 -> IN (+ F_c)  then cat F_s
    f_com = jnp.concatenate([former, f_fuse.reshape(B, h, w, C2)], axis=-1)
    r = conv2d_cl(f_com, p['res_conv1_w'], p['res_conv1_b'], stride=1, pad=1)
    r = instancenorm_cl(r.reshape(B * HW, C2), B, act='relu')
    r = conv2d_cl(r.reshape(B, h, w, C2), p['res_conv2_w'], p['res_conv2_b'],
                  stride=1, pad=1)
    f_c_new = instancenorm_cl(r.reshape(B * HW, C2), B,
                              residual=former_slab.reshape(B * HW, C2))
    f_c_new = f_c_new.reshape(B, h, w, C2)
    return jnp.concatenate([f_c_new, latter], axis=-1)


# ----------------------------------------------------------------------------
# Full ResPatchSoftUnetSkipConnectionShiftTriple forward
# ----------------------------------------------------------------------------

def forward(x, p, mask_feat):
    B, _, H, W = x.shape
    inner = p['downconv_w'].shape[0]
    outer = p['upconv_w'].shape[1]
    x_nhwc = x.transpose(0, 2, 3, 1)

    # down: LeakyReLU -> Conv4x4s2 -> BatchNorm
    d = conv2d_cl(x_nhwc, p['downconv_w'], p['downconv_b'], stride=2, pad=1,
                  act='lrelu')
    _, oh, ow, _ = d.shape
    d = batchnorm_cl(d.reshape(B * oh * ow, inner), p['downnorm_g'],
                     p['downnorm_b']).reshape(B, oh, ow, inner)

    # innermost submodule: upnorm(upconvT(relu(downconv(lrelu(d)))))
    s = conv2d_cl(d, p['sub_downconv_w'], p['sub_downconv_b'], stride=2, pad=1,
                  act='lrelu')
    s = conv_transpose2d_s2k4p1_cl(s, p['sub_upconv_w'], p['sub_upconv_b'],
                                   act='relu')
    # The ReLU applied to cat([s, d]) before the shift layer is fused into the
    # BN epilogue for the s-half ...
    s = batchnorm_cl(s.reshape(B * oh * ow, inner), p['sub_upnorm_g'],
                     p['sub_upnorm_b'], act='relu').reshape(B, oh, ow, inner)
    # ... and applied lazily for the d-half (XLA fuses it into the window gather).
    latter = jnp.maximum(d, 0.0)

    # InnerCos.forward is identity; then the patch-soft-shift block.
    u = inner_res_patch_soft_shift(s, latter, mask_feat, p, shift_sz=3,
                                   mask_thred=1)

    # up: ConvTranspose4x4s2 -> BatchNorm
    up = conv_transpose2d_s2k4p1_cl(u, p['upconv_w'], p['upconv_b'])
    x_latter = batchnorm_cl(up.reshape(B * H * W, outer), p['upnorm_g'],
                            p['upnorm_b']).reshape(B, H, W, outer)
    x_latter = x_latter.transpose(0, 3, 1, 2)
    # spatial dims already match x (even sizes): the F.interpolate branch is a no-op
    return jnp.concatenate([x_latter, x], axis=1)


# ----------------------------------------------------------------------------
# Deterministic parameter initialization (PyTorch layouts)
# ----------------------------------------------------------------------------

def _uniform(key, shape, bound):
    return jax.random.uniform(key, shape, jnp.float32, -bound, bound)


def make_params(key, input_nc, inner_nc, outer_nc, sub_inner_nc):
    ks = jax.random.split(key, 6)

    def cw(k, cout, cin, ksz):
        b = 1.0 / math.sqrt(cin * ksz * ksz)
        k1, k2 = jax.random.split(k)
        return _uniform(k1, (cout, cin, ksz, ksz), b), _uniform(k2, (cout,), b)

    def ctw(k, cin, cout, ksz):
        b = 1.0 / math.sqrt(cin * ksz * ksz)
        k1, k2 = jax.random.split(k)
        return _uniform(k1, (cin, cout, ksz, ksz), b), _uniform(k2, (cout,), b)

    p = {}
    p['downconv_w'], p['downconv_b'] = cw(ks[0], inner_nc, input_nc, 4)
    p['downnorm_g'] = jnp.ones((inner_nc,), jnp.float32)
    p['downnorm_b'] = jnp.zeros((inner_nc,), jnp.float32)
    p['sub_downconv_w'], p['sub_downconv_b'] = cw(ks[1], sub_inner_nc, inner_nc, 4)
    p['sub_upconv_w'], p['sub_upconv_b'] = ctw(ks[2], sub_inner_nc, inner_nc, 4)
    p['sub_upnorm_g'] = jnp.ones((inner_nc,), jnp.float32)
    p['sub_upnorm_b'] = jnp.zeros((inner_nc,), jnp.float32)
    p['res_conv1_w'], p['res_conv1_b'] = cw(ks[3], inner_nc, inner_nc * 2, 3)
    p['res_conv2_w'], p['res_conv2_b'] = cw(ks[4], inner_nc, inner_nc, 3)
    p['upconv_w'], p['upconv_b'] = ctw(ks[5], inner_nc * 2, outer_nc, 4)
    p['upnorm_g'] = jnp.ones((outer_nc,), jnp.float32)
    p['upnorm_b'] = jnp.zeros((outer_nc,), jnp.float32)
    return p


if __name__ == "__main__":
    B, input_nc, H, W = 2, 4, 16, 16
    inner_nc, outer_nc, sub_inner_nc = 4, 4, 8

    root = jax.random.PRNGKey(0)
    k_x, k_p = jax.random.split(root)
    x = jax.random.normal(k_x, (B, input_nc, H, W), dtype=jnp.float32)

    # Feature-level hole mask at the shift-layer resolution (H/2, W/2);
    # 1 = missing region, 0 = known region.
    mask_feat = jnp.zeros((B, 1, H // 2, W // 2), jnp.float32)
    mask_feat = mask_feat.at[:, :, 2:6, 2:6].set(1.0)

    params = make_params(k_p, input_nc, inner_nc, outer_nc, sub_inner_nc)

    fwd = jax.jit(forward)
    out = fwd(x, params, mask_feat)
    out = jax.block_until_ready(out)

    assert out.shape == (B, outer_nc + input_nc, H, W), out.shape
    assert bool(jnp.all(jnp.isfinite(out)))
    print("KERNEL_OK")
</pallas_src>

<mosaic_0001>
module attributes {stable_mosaic.version = 11 : i64} {
  func.func @_matmul_kernel(%arg0: i32, %arg1: i32, %arg2: i32, %arg3: memref<128x128xf32, #tpu.memory_space<vmem>>, %arg4: memref<128x128xf32, #tpu.memory_space<vmem>>, %arg5: memref<1x128xf32, #tpu.memory_space<vmem>>, %arg6: memref<128x128xf32, #tpu.memory_space<vmem>>, %arg7: memref<128x128xf32, #tpu.memory_space<vmem>>) attributes {dimension_semantics = [#tpu.dimension_semantics<parallel>, #tpu.dimension_semantics<parallel>, #tpu.dimension_semantics<arbitrary>], iteration_bounds = array<i64: 1, 1, 1>, scalar_prefetch = 0 : i64, scratch_operands = 1 : i64, tpu.core_type = #tpu.core_type<tc>, window_params = [{transform_indices = @transform_0, window_bounds = array<i64: 128, 128>}, {transform_indices = @transform_1, window_bounds = array<i64: 128, 128>}, {transform_indices = @transform_2, window_bounds = array<i64: 1, 128>}, {transform_indices = @transform_3, window_bounds = array<i64: 128, 128>}]} {
    %c0_i32 = arith.constant 0 : i32
    %0 = arith.cmpi eq, %arg2, %c0_i32 : i32
    %1 = arith.extui %0 : i1 to i32
    %c0_i32_0 = arith.constant 0 : i32
    %2 = arith.cmpi ne, %1, %c0_i32_0 : i32
    scf.if %2 {
      %cst_12 = arith.constant 0.000000e+00 : f32
      %17 = vector.broadcast %cst_12 : f32 to vector<128x128xf32>
      %c0_13 = arith.constant 0 : index
      %c0_14 = arith.constant 0 : index
      %18 = vector.load %arg7[%c0_13, %c0_14] : memref<128x128xf32, #tpu.memory_space<vmem>>, vector<128x128xf32>
      tpu.vector_store %arg7[%c0_13, %c0_14], %17 {strides = array<i32>} : memref<128x128xf32, #tpu.memory_space<vmem>>, vector<128x128xf32>,
    } else {
    }
    %c0 = arith.constant 0 : index
    %c0_1 = arith.constant 0 : index
    %3 = vector.load %arg7[%c0, %c0_1] : memref<128x128xf32, #tpu.memory_space<vmem>>, vector<128x128xf32>
    %c0_2 = arith.constant 0 : index
    %c0_3 = arith.constant 0 : index
    %4 = vector.load %arg3[%c0_2, %c0_3] : memref<128x128xf32, #tpu.memory_space<vmem>>, vector<128x128xf32>
    %cst = arith.constant 0.000000e+00 : f32
    %5 = vector.broadcast %cst : f32 to vector<128x128xf32>
    %6 = arith.cmpf oge, %4, %5 : vector<128x128xf32>
    %cst_4 = arith.constant 2.000000e-01 : f32
    %7 = vector.broadcast %cst_4 : f32 to vector<128x128xf32>
    %8 = arith.mulf %7, %4 : vector<128x128xf32>
    %9 = arith.select %6, %4, %8 : vector<128x128xi1>, vector<128x128xf32>
    %c0_5 = arith.constant 0 : index
    %c0_6 = arith.constant 0 : index
    %10 = vector.load %arg4[%c0_5, %c0_6] : memref<128x128xf32, #tpu.memory_space<vmem>>, vector<128x128xf32>
    %cst_7 = arith.constant dense<0.000000e+00> : vector<128x128xf32>
    %11 = tpu.matmul %9, %10, %cst_7 {dimension_numbers = #tpu.dot_dimension_numbers<[1], [0], [0], [1], [0, 0, 1, 1], [], []>} : vector<128x128xf32>, vector<128x128xf32>, vector<128x128xf32> -> vector<128x128xf32>
    %12 = arith.addf %3, %11 : vector<128x128xf32>
    %c0_8 = arith.constant 0 : index
    %c0_9 = arith.constant 0 : index
    %13 = vector.load %arg7[%c0_8, %c0_9] : memref<128x128xf32, #tpu.memory_space<vmem>>, vector<128x128xf32>
    tpu.vector_store %arg7[%c0_8, %c0_9], %12 {strides = array<i32>} : memref<128x128xf32, #tpu.memory_space<vmem>>, vector<128x128xf32>,
    %c0_i32_10 = arith.constant 0 : i32
    %14 = arith.cmpi eq, %arg2, %c0_i32_10 : i32
    %15 = arith.extui %14 : i1 to i32
    %c0_i32_11 = arith.constant 0 : i32
    %16 = arith.cmpi ne, %15, %c0_i32_11 : i32
    scf.if %16 {
      %c0_12 = arith.constant 0 : index
      %c0_13 = arith.constant 0 : index
      %17 = vector.load %arg7[%c0_12, %c0_13] : memref<128x128xf32, #tpu.memory_space<vmem>>, vector<128x128xf32>
      %c0_14 = arith.constant 0 : index
      %c0_15 = arith.constant 0 : index
      %18 = vector.load %arg5[%c0_14, %c0_15] : memref<1x128xf32, #tpu.memory_space<vmem>>, vector<1x128xf32>
      %19 = vector.broadcast %18 : vector<1x128xf32> to vector<128x128xf32>
      %20 = arith.addf %17, %19 : vector<128x128xf32>
      %c0_16 = arith.constant 0 : index
      %c0_17 = arith.constant 0 : index
      %21 = vector.load %arg6[%c0_16, %c0_17] : memref<128x128xf32, #tpu.memory_space<vmem>>, vector<128x128xf32>
      tpu.vector_store %arg6[%c0_16, %c0_17], %20 {strides = array<i32>} : memref<128x128xf32, #tpu.memory_space<vmem>>, vector<128x128xf32>,
    } else {
    }
    return
  }
  func.func @transform_0(%arg0: i32, %arg1: i32, %arg2: i32) -> (i32, i32) {
    %c0_i32 = arith.constant 0 : i32
    return %arg0, %arg2 : i32, i32
  }
  func.func @transform_1(%arg0: i32, %arg1: i32, %arg2: i32) -> (i32, i32) {
    %c0_i32 = arith.constant 0 : i32
    return %arg2, %arg1 : i32, i32
  }
  func.func @transform_2(%arg0: i32, %arg1: i32, %arg2: i32) -> (i32, i32) {
    %c0_i32 = arith.constant 0 : i32
    %c0_i32_0 = arith.constant 0 : i32
    return %c0_i32, %arg1 : i32, i32
  }
  func.func @transform_3(%arg0: i32, %arg1: i32, %arg2: i32) -> (i32, i32) {
    %c0_i32 = arith.constant 0 : i32
    return %arg0, %arg1 : i32, i32
  }
}

module attributes {stable_mosaic.version = 11 : i64} {
  func.func @_bn_stats_kernel(%arg0: i32, %arg1: memref<128x4xf32, #tpu.memory_space<vmem>>, %arg2: memref<2x4xf32, #tpu.memory_space<vmem>>) attributes {dimension_semantics = [#tpu.dimension_semantics<arbitrary>], iteration_bounds = array<i64: 1>, scalar_prefetch = 0 : i64, scratch_operands = 0 : i64, tpu.core_type = #tpu.core_type<tc>, window_params = [{transform_indices = @transform_0, window_bounds = array<i64: 128, 4>}, {pipeline_mode = #tpu.pipeline_mode<synchronous>, transform_indices = @transform_1, window_bounds = array<i64: 2, 4>}]} {
    %c0_i32 = arith.constant 0 : i32
    %0 = arith.cmpi eq, %arg0, %c0_i32 : i32
    %1 = arith.extui %0 : i1 to i32
    %c0_i32_0 = arith.constant 0 : i32
    %2 = arith.cmpi ne, %1, %c0_i32_0 : i32
    scf.if %2 {
      %cst_10 = arith.constant 0.000000e+00 : f32
      %15 = vector.broadcast %cst_10 : f32 to vector<2x4xf32>
      %c0_11 = arith.constant 0 : index
      %c0_12 = arith.constant 0 : index
      %16 = vector.load %arg2[%c0_11, %c0_12] : memref<2x4xf32, #tpu.memory_space<vmem>>, vector<2x4xf32>
      tpu.vector_store %arg2[%c0_11, %c0_12], %15 {strides = array<i32>} : memref<2x4xf32, #tpu.memory_space<vmem>>, vector<2x4xf32>,
    } else {
    }
    %c0 = arith.constant 0 : index
    %c0_1 = arith.constant 0 : index
    %3 = vector.load %arg1[%c0, %c0_1] : memref<128x4xf32, #tpu.memory_space<vmem>>, vector<128x4xf32>
    %c0_2 = arith.constant 0 : index
    %c0_3 = arith.constant 0 : index
    %4 = vector.load %arg2[%c0_2, %c0_3] : memref<2x4xf32, #tpu.memory_space<vmem>>, vector<1x4xf32>
    %cst = arith.constant dense<0.000000e+00> : vector<4xf32>
    %5 = vector.multi_reduction <add>, %3, %cst [0] : vector<128x4xf32> to vector<4xf32>
    %6 = vector.shape_cast %5 : vector<4xf32> to vector<1x4xf32>
    %7 = arith.addf %4, %6 : vector<1x4xf32>
    %c0_4 = arith.constant 0 : index
    %c0_5 = arith.constant 0 : index
    %8 = vector.load %arg2[%c0_4, %c0_5] : memref<2x4xf32, #tpu.memory_space<vmem>>, vector<1x4xf32>
    tpu.vector_store %arg2[%c0_4, %c0_5], %7 {strides = array<i32>} : memref<2x4xf32, #tpu.memory_space<vmem>>, vector<1x4xf32>,
    %c1 = arith.constant 1 : index
    %c0_6 = arith.constant 0 : index
    %9 = vector.load %arg2[%c1, %c0_6] : memref<2x4xf32, #tpu.memory_space<vmem>>, vector<1x4xf32>
    %10 = arith.mulf %3, %3 : vector<128x4xf32>
    %cst_7 = arith.constant dense<0.000000e+00> : vector<4xf32>
    %11 = vector.multi_reduction <add>, %10, %cst_7 [0] : vector<128x4xf32> to vector<4xf32>
    %12 = vector.shape_cast %11 : vector<4xf32> to vector<1x4xf32>
    %13 = arith.addf %9, %12 : vector<1x4xf32>
    %c1_8 = arith.constant 1 : index
    %c0_9 = arith.constant 0 : index
    %14 = vector.load %arg2[%c1_8, %c0_9] : memref<2x4xf32, #tpu.memory_space<vmem>>, vector<1x4xf32>
    tpu.vector_store %arg2[%c1_8, %c0_9], %13 {strides = array<i32>} : memref<2x4xf32, #tpu.memory_space<vmem>>, vector<1x4xf32>,
    return
  }
  func.func @transform_0(%arg0: i32) -> (i32, i32) {
    %c0_i32 = arith.constant 0 : i32
    %c0_i32_0 = arith.constant 0 : i32
    return %arg0, %c0_i32 : i32, i32
  }
  func.func @transform_1(%arg0: i32) -> (i32, i32) {
    %c0_i32 = arith.constant 0 : i32
    %c0_i32_0 = arith.constant 0 : i32
    %c0_i32_1 = arith.constant 0 : i32
    return %c0_i32, %c0_i32_0 : i32, i32
  }
}

module attributes {stable_mosaic.version = 11 : i64} {
  func.func @_scale_shift_kernel(%arg0: i32, %arg1: memref<128x4xf32, #tpu.memory_space<vmem>>, %arg2: memref<1x4xf32, #tpu.memory_space<vmem>>, %arg3: memref<1x4xf32, #tpu.memory_space<vmem>>, %arg4: memref<128x4xf32, #tpu.memory_space<vmem>>) attributes {dimension_semantics = [#tpu.dimension_semantics<parallel>], iteration_bounds = array<i64: 1>, scalar_prefetch = 0 : i64, scratch_operands = 0 : i64, tpu.core_type = #tpu.core_type<tc>, window_params = [{transform_indices = @transform_0, window_bounds = array<i64: 128, 4>}, {pipeline_mode = #tpu.pipeline_mode<synchronous>, transform_indices = @transform_1, window_bounds = array<i64: 1, 4>}, {pipeline_mode = #tpu.pipeline_mode<synchronous>, transform_indices = @transform_2, window_bounds = array<i64: 1, 4>}, {transform_indices = @transform_3, window_bounds = array<i64: 128, 4>}]} {
    %c0 = arith.constant 0 : index
    %c0_0 = arith.constant 0 : index
    %0 = vector.load %arg1[%c0, %c0_0] : memref<128x4xf32, #tpu.memory_space<vmem>>, vector<128x4xf32>
    %c0_1 = arith.constant 0 : index
    %c0_2 = arith.constant 0 : index
    %1 = vector.load %arg2[%c0_1, %c0_2] : memref<1x4xf32, #tpu.memory_space<vmem>>, vector<1x4xf32>
    %2 = vector.broadcast %1 : vector<1x4xf32> to vector<128x4xf32>
    %3 = arith.mulf %0, %2 : vector<128x4xf32>
    %c0_3 = arith.constant 0 : index
    %c0_4 = arith.constant 0 : index
    %4 = vector.load %arg3[%c0_3, %c0_4] : memref<1x4xf32, #tpu.memory_space<vmem>>, vector<1x4xf32>
    %5 = vector.broadcast %4 : vector<1x4xf32> to vector<128x4xf32>
    %6 = arith.addf %3, %5 : vector<128x4xf32>
    %c0_5 = arith.constant 0 : index
    %c0_6 = arith.constant 0 : index
    %7 = vector.load %arg4[%c0_5, %c0_6] : memref<128x4xf32, #tpu.memory_space<vmem>>, vector<128x4xf32>
    tpu.vector_store %arg4[%c0_5, %c0_6], %6 {strides = array<i32>} : memref<128x4xf32, #tpu.memory_space<vmem>>, vector<128x4xf32>,
    return
  }
  func.func @transform_0(%arg0: i32) -> (i32, i32) {
    %c0_i32 = arith.constant 0 : i32
    %c0_i32_0 = arith.constant 0 : i32
    return %arg0, %c0_i32 : i32, i32
  }
  func.func @transform_1(%arg0: i32) -> (i32, i32) {
    %c0_i32 = arith.constant 0 : i32
    %c0_i32_0 = arith.constant 0 : i32
    %c0_i32_1 = arith.constant 0 : i32
    return %c0_i32, %c0_i32_0 : i32, i32
  }
  func.func @transform_2(%arg0: i32) -> (i32, i32) {
    %c0_i32 = arith.constant 0 : i32
    %c0_i32_0 = arith.constant 0 : i32
    %c0_i32_1 = arith.constant 0 : i32
    return %c0_i32, %c0_i32_0 : i32, i32
  }
  func.func @transform_3(%arg0: i32) -> (i32, i32) {
    %c0_i32 = arith.constant 0 : i32
    %c0_i32_0 = arith.constant 0 : i32
    return %arg0, %c0_i32 : i32, i32
  }
}

module attributes {stable_mosaic.version = 11 : i64} {
  func.func @_matmul_kernel(%arg0: i32, %arg1: i32, %arg2: i32, %arg3: memref<32x128xf32, #tpu.memory_space<vmem>>, %arg4: memref<128x128xf32, #tpu.memory_space<vmem>>, %arg5: memref<1x128xf32, #tpu.memory_space<vmem>>, %arg6: memref<32x128xf32, #tpu.memory_space<vmem>>, %arg7: memref<32x128xf32, #tpu.memory_space<vmem>>) attributes {dimension_semantics = [#tpu.dimension_semantics<parallel>, #tpu.dimension_semantics<parallel>, #tpu.dimension_semantics<arbitrary>], iteration_bounds = array<i64: 1, 1, 1>, scalar_prefetch = 0 : i64, scratch_operands = 1 : i64, tpu.core_type = #tpu.core_type<tc>, window_params = [{transform_indices = @transform_0, window_bounds = array<i64: 32, 128>}, {transform_indices = @transform_1, window_bounds = array<i64: 128, 128>}, {transform_indices = @transform_2, window_bounds = array<i64: 1, 128>}, {transform_indices = @transform_3, window_bounds = array<i64: 32, 128>}]} {
    %c0_i32 = arith.constant 0 : i32
    %0 = arith.cmpi eq, %arg2, %c0_i32 : i32
    %1 = arith.extui %0 : i1 to i32
    %c0_i32_0 = arith.constant 0 : i32
    %2 = arith.cmpi ne, %1, %c0_i32_0 : i32
    scf.if %2 {
      %cst_12 = arith.constant 0.000000e+00 : f32
      %17 = vector.broadcast %cst_12 : f32 to vector<32x128xf32>
      %c0_13 = arith.constant 0 : index
      %c0_14 = arith.constant 0 : index
      %18 = vector.load %arg7[%c0_13, %c0_14] : memref<32x128xf32, #tpu.memory_space<vmem>>, vector<32x128xf32>
      tpu.vector_store %arg7[%c0_13, %c0_14], %17 {strides = array<i32>} : memref<32x128xf32, #tpu.memory_space<vmem>>, vector<32x128xf32>,
    } else {
    }
    %c0 = arith.constant 0 : index
    %c0_1 = arith.constant 0 : index
    %3 = vector.load %arg7[%c0, %c0_1] : memref<32x128xf32, #tpu.memory_space<vmem>>, vector<32x128xf32>
    %c0_2 = arith.constant 0 : index
    %c0_3 = arith.constant 0 : index
    %4 = vector.load %arg3[%c0_2, %c0_3] : memref<32x128xf32, #tpu.memory_space<vmem>>, vector<32x128xf32>
    %cst = arith.constant 0.000000e+00 : f32
    %5 = vector.broadcast %cst : f32 to vector<32x128xf32>
    %6 = arith.cmpf oge, %4, %5 : vector<32x128xf32>
    %cst_4 = arith.constant 2.000000e-01 : f32
    %7 = vector.broadcast %cst_4 : f32 to vector<32x128xf32>
    %8 = arith.mulf %7, %4 : vector<32x128xf32>
    %9 = arith.select %6, %4, %8 : vector<32x128xi1>, vector<32x128xf32>
    %c0_5 = arith.constant 0 : index
    %c0_6 = arith.constant 0 : index
    %10 = vector.load %arg4[%c0_5, %c0_6] : memref<128x128xf32, #tpu.memory_space<vmem>>, vector<128x128xf32>
    %cst_7 = arith.constant dense<0.000000e+00> : vector<32x128xf32>
    %11 = tpu.matmul %9, %10, %cst_7 {dimension_numbers = #tpu.dot_dimension_numbers<[1], [0], [0], [1], [0, 0, 1, 1], [], []>} : vector<32x128xf32>, vector<128x128xf32>, vector<32x128xf32> -> vector<32x128xf32>
    %12 = arith.addf %3, %11 : vector<32x128xf32>
    %c0_8 = arith.constant 0 : index
    %c0_9 = arith.constant 0 : index
    %13 = vector.load %arg7[%c0_8, %c0_9] : memref<32x128xf32, #tpu.memory_space<vmem>>, vector<32x128xf32>
    tpu.vector_store %arg7[%c0_8, %c0_9], %12 {strides = array<i32>} : memref<32x128xf32, #tpu.memory_space<vmem>>, vector<32x128xf32>,
    %c0_i32_10 = arith.constant 0 : i32
    %14 = arith.cmpi eq, %arg2, %c0_i32_10 : i32
    %15 = arith.extui %14 : i1 to i32
    %c0_i32_11 = arith.constant 0 : i32
    %16 = arith.cmpi ne, %15, %c0_i32_11 : i32
    scf.if %16 {
      %c0_12 = arith.constant 0 : index
      %c0_13 = arith.constant 0 : index
      %17 = vector.load %arg7[%c0_12, %c0_13] : memref<32x128xf32, #tpu.memory_space<vmem>>, vector<32x128xf32>
      %c0_14 = arith.constant 0 : index
      %c0_15 = arith.constant 0 : index
      %18 = vector.load %arg5[%c0_14, %c0_15] : memref<1x128xf32, #tpu.memory_space<vmem>>, vector<1x128xf32>
      %19 = vector.broadcast %18 : vector<1x128xf32> to vector<32x128xf32>
      %20 = arith.addf %17, %19 : vector<32x128xf32>
      %c0_16 = arith.constant 0 : index
      %c0_17 = arith.constant 0 : index
      %21 = vector.load %arg6[%c0_16, %c0_17] : memref<32x128xf32, #tpu.memory_space<vmem>>, vector<32x128xf32>
      tpu.vector_store %arg6[%c0_16, %c0_17], %20 {strides = array<i32>} : memref<32x128xf32, #tpu.memory_space<vmem>>, vector<32x128xf32>,
    } else {
    }
    return
  }
  func.func @transform_0(%arg0: i32, %arg1: i32, %arg2: i32) -> (i32, i32) {
    %c0_i32 = arith.constant 0 : i32
    return %arg0, %arg2 : i32, i32
  }
  func.func @transform_1(%arg0: i32, %arg1: i32, %arg2: i32) -> (i32, i32) {
    %c0_i32 = arith.constant 0 : i32
    return %arg2, %arg1 : i32, i32
  }
  func.func @transform_2(%arg0: i32, %arg1: i32, %arg2: i32) -> (i32, i32) {
    %c0_i32 = arith.constant 0 : i32
    %c0_i32_0 = arith.constant 0 : i32
    return %c0_i32, %arg1 : i32, i32
  }
  func.func @transform_3(%arg0: i32, %arg1: i32, %arg2: i32) -> (i32, i32) {
    %c0_i32 = arith.constant 0 : i32
    return %arg0, %arg1 : i32, i32
  }
}

module attributes {stable_mosaic.version = 11 : i64} {
  func.func @_matmul_kernel(%arg0: i32, %arg1: i32, %arg2: i32, %arg3: memref<56x128xf32, #tpu.memory_space<vmem>>, %arg4: memref<128x128xf32, #tpu.memory_space<vmem>>, %arg5: memref<1x128xf32, #tpu.memory_space<vmem>>, %arg6: memref<56x128xf32, #tpu.memory_space<vmem>>, %arg7: memref<56x128xf32, #tpu.memory_space<vmem>>) attributes {dimension_semantics = [#tpu.dimension_semantics<parallel>, #tpu.dimension_semantics<parallel>, #tpu.dimension_semantics<arbitrary>], iteration_bounds = array<i64: 1, 1, 1>, scalar_prefetch = 0 : i64, scratch_operands = 1 : i64, tpu.core_type = #tpu.core_type<tc>, window_params = [{transform_indices = @transform_0, window_bounds = array<i64: 56, 128>}, {transform_indices = @transform_1, window_bounds = array<i64: 128, 128>}, {transform_indices = @transform_2, window_bounds = array<i64: 1, 128>}, {transform_indices = @transform_3, window_bounds = array<i64: 56, 128>}]} {
    %c0_i32 = arith.constant 0 : i32
    %0 = arith.cmpi eq, %arg2, %c0_i32 : i32
    %1 = arith.extui %0 : i1 to i32
    %c0_i32_0 = arith.constant 0 : i32
    %2 = arith.cmpi ne, %1, %c0_i32_0 : i32
    scf.if %2 {
      %cst_11 = arith.constant 0.000000e+00 : f32
      %14 = vector.broadcast %cst_11 : f32 to vector<56x128xf32>
      %c0_12 = arith.constant 0 : index
      %c0_13 = arith.constant 0 : index
      %15 = vector.load %arg7[%c0_12, %c0_13] : memref<56x128xf32, #tpu.memory_space<vmem>>, vector<56x128xf32>
      tpu.vector_store %arg7[%c0_12, %c0_13], %14 {strides = array<i32>} : memref<56x128xf32, #tpu.memory_space<vmem>>, vector<56x128xf32>,
    } else {
    }
    %c0 = arith.constant 0 : index
    %c0_1 = arith.constant 0 : index
    %3 = vector.load %arg7[%c0, %c0_1] : memref<56x128xf32, #tpu.memory_space<vmem>>, vector<56x128xf32>
    %c0_2 = arith.constant 0 : index
    %c0_3 = arith.constant 0 : index
    %4 = vector.load %arg3[%c0_2, %c0_3] : memref<56x128xf32, #tpu.memory_space<vmem>>, vector<56x128xf32>
    %cst = arith.constant 0.000000e+00 : f32
    %5 = vector.broadcast %cst : f32 to vector<56x128xf32>
    %6 = arith.maximumf %4, %5 : vector<56x128xf32>
    %c0_4 = arith.constant 0 : index
    %c0_5 = arith.constant 0 : index
    %7 = vector.load %arg4[%c0_4, %c0_5] : memref<128x128xf32, #tpu.memory_space<vmem>>, vector<128x128xf32>
    %cst_6 = arith.constant dense<0.000000e+00> : vector<56x128xf32>
    %8 = tpu.matmul %6, %7, %cst_6 {dimension_numbers = #tpu.dot_dimension_numbers<[1], [0], [0], [1], [0, 0, 1, 1], [], []>} : vector<56x128xf32>, vector<128x128xf32>, vector<56x128xf32> -> vector<56x128xf32>
    %9 = arith.addf %3, %8 : vector<56x128xf32>
    %c0_7 = arith.constant 0 : index
    %c0_8 = arith.constant 0 : index
    %10 = vector.load %arg7[%c0_7, %c0_8] : memref<56x128xf32, #tpu.memory_space<vmem>>, vector<56x128xf32>
    tpu.vector_store %arg7[%c0_7, %c0_8], %9 {strides = array<i32>} : memref<56x128xf32, #tpu.memory_space<vmem>>, vector<56x128xf32>,
    %c0_i32_9 = arith.constant 0 : i32
    %11 = arith.cmpi eq, %arg2, %c0_i32_9 : i32
    %12 = arith.extui %11 : i1 to i32
    %c0_i32_10 = arith.constant 0 : i32
    %13 = arith.cmpi ne, %12, %c0_i32_10 : i32
    scf.if %13 {
      %c0_11 = arith.constant 0 : index
      %c0_12 = arith.constant 0 : index
      %14 = vector.load %arg7[%c0_11, %c0_12] : memref<56x128xf32, #tpu.memory_space<vmem>>, vector<56x128xf32>
      %c0_13 = arith.constant 0 : index
      %c0_14 = arith.constant 0 : index
      %15 = vector.load %arg5[%c0_13, %c0_14] : memref<1x128xf32, #tpu.memory_space<vmem>>, vector<1x128xf32>
      %16 = vector.broadcast %15 : vector<1x128xf32> to vector<56x128xf32>
      %17 = arith.addf %14, %16 : vector<56x128xf32>
      %c0_15 = arith.constant 0 : index
      %c0_16 = arith.constant 0 : index
      %18 = vector.load %arg6[%c0_15, %c0_16] : memref<56x128xf32, #tpu.memory_space<vmem>>, vector<56x128xf32>
      tpu.vector_store %arg6[%c0_15, %c0_16], %17 {strides = array<i32>} : memref<56x128xf32, #tpu.memory_space<vmem>>, vector<56x128xf32>,
    } else {
    }
    return
  }
  func.func @transform_0(%arg0: i32, %arg1: i32, %arg2: i32) -> (i32, i32) {
    %c0_i32 = arith.constant 0 : i32
    return %arg0, %arg2 : i32, i32
  }
  func.func @transform_1(%arg0: i32, %arg1: i32, %arg2: i32) -> (i32, i32) {
    %c0_i32 = arith.constant 0 : i32
    return %arg2, %arg1 : i32, i32
  }
  func.func @transform_2(%arg0: i32, %arg1: i32, %arg2: i32) -> (i32, i32) {
    %c0_i32 = arith.constant 0 : i32
    %c0_i32_0 = arith.constant 0 : i32
    return %c0_i32, %arg1 : i32, i32
  }
  func.func @transform_3(%arg0: i32, %arg1: i32, %arg2: i32) -> (i32, i32) {
    %c0_i32 = arith.constant 0 : i32
    return %arg0, %arg1 : i32, i32
  }
}

module attributes {stable_mosaic.version = 11 : i64} {
  func.func @_scale_shift_kernel(%arg0: i32, %arg1: memref<128x4xf32, #tpu.memory_space<vmem>>, %arg2: memref<1x4xf32, #tpu.memory_space<vmem>>, %arg3: memref<1x4xf32, #tpu.memory_space<vmem>>, %arg4: memref<128x4xf32, #tpu.memory_space<vmem>>) attributes {dimension_semantics = [#tpu.dimension_semantics<parallel>], iteration_bounds = array<i64: 1>, scalar_prefetch = 0 : i64, scratch_operands = 0 : i64, tpu.core_type = #tpu.core_type<tc>, window_params = [{transform_indices = @transform_0, window_bounds = array<i64: 128, 4>}, {pipeline_mode = #tpu.pipeline_mode<synchronous>, transform_indices = @transform_1, window_bounds = array<i64: 1, 4>}, {pipeline_mode = #tpu.pipeline_mode<synchronous>, transform_indices = @transform_2, window_bounds = array<i64: 1, 4>}, {transform_indices = @transform_3, window_bounds = array<i64: 128, 4>}]} {
    %c0 = arith.constant 0 : index
    %c0_0 = arith.constant 0 : index
    %0 = vector.load %arg1[%c0, %c0_0] : memref<128x4xf32, #tpu.memory_space<vmem>>, vector<128x4xf32>
    %c0_1 = arith.constant 0 : index
    %c0_2 = arith.constant 0 : index
    %1 = vector.load %arg2[%c0_1, %c0_2] : memref<1x4xf32, #tpu.memory_space<vmem>>, vector<1x4xf32>
    %2 = vector.broadcast %1 : vector<1x4xf32> to vector<128x4xf32>
    %3 = arith.mulf %0, %2 : vector<128x4xf32>
    %c0_3 = arith.constant 0 : index
    %c0_4 = arith.constant 0 : index
    %4 = vector.load %arg3[%c0_3, %c0_4] : memref<1x4xf32, #tpu.memory_space<vmem>>, vector<1x4xf32>
    %5 = vector.broadcast %4 : vector<1x4xf32> to vector<128x4xf32>
    %6 = arith.addf %3, %5 : vector<128x4xf32>
    %cst = arith.constant 0.000000e+00 : f32
    %7 = vector.broadcast %cst : f32 to vector<128x4xf32>
    %8 = arith.maximumf %6, %7 : vector<128x4xf32>
    %c0_5 = arith.constant 0 : index
    %c0_6 = arith.constant 0 : index
    %9 = vector.load %arg4[%c0_5, %c0_6] : memref<128x4xf32, #tpu.memory_space<vmem>>, vector<128x4xf32>
    tpu.vector_store %arg4[%c0_5, %c0_6], %8 {strides = array<i32>} : memref<128x4xf32, #tpu.memory_space<vmem>>, vector<128x4xf32>,
    return
  }
  func.func @transform_0(%arg0: i32) -> (i32, i32) {
    %c0_i32 = arith.constant 0 : i32
    %c0_i32_0 = arith.constant 0 : i32
    return %arg0, %c0_i32 : i32, i32
  }
  func.func @transform_1(%arg0: i32) -> (i32, i32) {
    %c0_i32 = arith.constant 0 : i32
    %c0_i32_0 = arith.constant 0 : i32
    %c0_i32_1 = arith.constant 0 : i32
    return %c0_i32, %c0_i32_0 : i32, i32
  }
  func.func @transform_2(%arg0: i32) -> (i32, i32) {
    %c0_i32 = arith.constant 0 : i32
    %c0_i32_0 = arith.constant 0 : i32
    %c0_i32_1 = arith.constant 0 : i32
    return %c0_i32, %c0_i32_0 : i32, i32
  }
  func.func @transform_3(%arg0: i32) -> (i32, i32) {
    %c0_i32 = arith.constant 0 : i32
    %c0_i32_0 = arith.constant 0 : i32
    return %arg0, %c0_i32 : i32, i32
  }
}

module attributes {stable_mosaic.version = 11 : i64} {
  func.func @_shift_attn_paste_kernel(%arg0: i32, %arg1: memref<1x64x128xf32, #tpu.memory_space<vmem>>, %arg2: memref<1x128x64xf32, #tpu.memory_space<vmem>>, %arg3: memref<1x1x64xf32, #tpu.memory_space<vmem>>, %arg4: memref<1x1x64xf32, #tpu.memory_space<vmem>>, %arg5: memref<1x576x4xf32, #tpu.memory_space<vmem>>, %arg6: memref<2x64x1xf32, #tpu.memory_space<vmem>>, %arg7: memref<1x64x4xf32, #tpu.memory_space<vmem>>, %arg8: memref<1x64x4xf32, #tpu.memory_space<vmem>>) attributes {dimension_semantics = [#tpu.dimension_semantics<parallel>], iteration_bounds = array<i64: 2>, scalar_prefetch = 0 : i64, scratch_operands = 0 : i64, tpu.core_type = #tpu.core_type<tc>, window_params = [{transform_indices = @transform_0, window_bounds = array<i64: 1, 64, 128>}, {transform_indices = @transform_1, window_bounds = array<i64: 1, 128, 64>}, {transform_indices = @transform_2, window_bounds = array<i64: 1, 1, 64>}, {transform_indices = @transform_3, window_bounds = array<i64: 1, 1, 64>}, {transform_indices = @transform_4, window_bounds = array<i64: 1, 576, 4>}, {pipeline_mode = #tpu.pipeline_mode<synchronous>, transform_indices = @transform_5, window_bounds = array<i64: 2, 64, 1>}, {transform_indices = @transform_6, window_bounds = array<i64: 1, 64, 4>}, {transform_indices = @transform_7, window_bounds = array<i64: 1, 64, 4>}]} {
    %c0 = arith.constant 0 : index
    %c0_0 = arith.constant 0 : index
    %c0_1 = arith.constant 0 : index
    %0 = vector.load %arg1[%c0, %c0_0, %c0_1] : memref<1x64x128xf32, #tpu.memory_space<vmem>>, vector<1x64x128xf32>
    %1 = vector.shape_cast %0 : vector<1x64x128xf32> to vector<64x128xf32>
    %c0_2 = arith.constant 0 : index
    %c0_3 = arith.constant 0 : index
    %c0_4 = arith.constant 0 : index
    %2 = vector.load %arg2[%c0_2, %c0_3, %c0_4] : memref<1x128x64xf32, #tpu.memory_space<vmem>>, vector<1x128x64xf32>
    %3 = vector.shape_cast %2 : vector<1x128x64xf32> to vector<128x64xf32>
    %cst = arith.constant dense<0.000000e+00> : vector<64x64xf32>
    %4 = tpu.matmul %1, %3, %cst {dimension_numbers = #tpu.dot_dimension_numbers<[1], [0], [0], [1], [0, 0, 1, 1], [], []>} : vector<64x128xf32>, vector<128x64xf32>, vector<64x64xf32> -> vector<64x64xf32>
    %c0_5 = arith.constant 0 : index
    %c0_6 = arith.constant 0 : index
    %c0_7 = arith.constant 0 : index
    %5 = vector.load %arg3[%c0_5, %c0_6, %c0_7] : memref<1x1x64xf32, #tpu.memory_space<vmem>>, vector<1x1x64xf32>
    %6 = vector.shape_cast %5 : vector<1x1x64xf32> to vector<1x64xf32>
    %7 = vector.broadcast %6 : vector<1x64xf32> to vector<64x64xf32>
    %8 = arith.mulf %4, %7 : vector<64x64xf32>
    %9 = tpu.iota {dimensions = array<i32: 0>} : vector<64x1xi32>
    %10 = tpu.iota {dimensions = array<i32: 1>} : vector<1x64xi32>
    %c0_i32 = arith.constant 0 : i32
    %11 = vector.broadcast %c0_i32 : i32 to vector<64x1xi32>
    %12 = arith.cmpi sgt, %9, %11 : vector<64x1xi32>
    %13 = arith.extui %12 : vector<64x1xi1> to vector<64x1xi32>
    %14 = arith.sitofp %13 : vector<64x1xi32> to vector<64x1xf32>
    %c63_i32 = arith.constant 63 : i32
    %15 = vector.broadcast %c63_i32 : i32 to vector<64x1xi32>
    %16 = arith.cmpi slt, %9, %15 : vector<64x1xi32>
    %17 = arith.extui %16 : vector<64x1xi1> to vector<64x1xi32>
    %18 = arith.sitofp %17 : vector<64x1xi32> to vector<64x1xf32>
    %c0_i32_8 = arith.constant 0 : i32
    %19 = vector.broadcast %c0_i32_8 : i32 to vector<1x64xi32>
    %20 = arith.cmpi sgt, %10, %19 : vector<1x64xi32>
    %21 = arith.extui %20 : vector<1x64xi1> to vector<1x64xi32>
    %22 = arith.sitofp %21 : vector<1x64xi32> to vector<1x64xf32>
    %c63_i32_9 = arith.constant 63 : i32
    %23 = vector.broadcast %c63_i32_9 : i32 to vector<1x64xi32>
    %24 = arith.cmpi slt, %10, %23 : vector<1x64xi32>
    %25 = arith.extui %24 : vector<1x64xi1> to vector<1x64xi32>
    %26 = arith.sitofp %25 : vector<1x64xi32> to vector<1x64xf32>
    %c8_i32 = arith.constant 8 : i32
    %27 = vector.broadcast %c8_i32 : i32 to vector<64x1xi32>
    %28 = arith.cmpi slt, %9, %27 : vector<64x1xi32>
    %c56_i32 = arith.constant 56 : i32
    %29 = vector.broadcast %c56_i32 : i32 to vector<64x1xi32>
    %30 = arith.cmpi sge, %9, %29 : vector<64x1xi32>
    %c8_i32_10 = arith.constant 8 : i32
    %31 = vector.broadcast %c8_i32_10 : i32 to vector<1x64xi32>
    %32 = arith.cmpi slt, %10, %31 : vector<1x64xi32>
    %c56_i32_11 = arith.constant 56 : i32
    %33 = vector.broadcast %c56_i32_11 : i32 to vector<1x64xi32>
    %34 = arith.cmpi sge, %10, %33 : vector<1x64xi32>
    %c8_i32_12 = arith.constant 8 : i32
    %35 = vector.broadcast %c8_i32_12 : i32 to vector<64x1xi32>
    %36 = arith.cmpi sge, %9, %35 : vector<64x1xi32>
    %37 = arith.extui %36 : vector<64x1xi1> to vector<64x1xi32>
    %38 = arith.sitofp %37 : vector<64x1xi32> to vector<64x1xf32>
    %c56_i32_13 = arith.constant 56 : i32
    %39 = vector.broadcast %c56_i32_13 : i32 to vector<64x1xi32>
    %40 = arith.cmpi slt, %9, %39 : vector<64x1xi32>
    %41 = arith.extui %40 : vector<64x1xi1> to vector<64x1xi32>
    %42 = arith.sitofp %41 : vector<64x1xi32> to vector<64x1xf32>
    %c0_14 = arith.constant 0 : index
    %c0_15 = arith.constant 0 : index
    %c0_16 = arith.constant 0 : index
    %43 = vector.load %arg6[%c0_14, %c0_15, %c0_16] : memref<2x64x1xf32, #tpu.memory_space<vmem>>, vector<1x64x1xf32>
    %44 = vector.shape_cast %43 : vector<1x64x1xf32> to vector<64x1xf32>
    %c1 = arith.constant 1 : index
    %c0_17 = arith.constant 0 : index
    %c0_18 = arith.constant 0 : index
    %45 = vector.load %arg6[%c1, %c0_17, %c0_18] : memref<2x64x1xf32, #tpu.memory_space<vmem>>, vector<1x64x1xf32>
    %46 = vector.shape_cast %45 : vector<1x64x1xf32> to vector<64x1xf32>
    %c1_i32 = arith.constant 1 : i32
    %47 = tpu.dynamic_rotate %8 by %c1_i32 dim 0 : vector<64x64xf32>, i32 -> vector<64x64xf32>
    %c1_i32_19 = arith.constant 1 : i32
    %48 = tpu.dynamic_rotate %47 by %c1_i32_19 dim 1 : vector<64x64xf32>, i32 -> vector<64x64xf32>
    %49 = vector.broadcast %14 : vector<64x1xf32> to vector<64x64xf32>
    %50 = arith.mulf %48, %49 : vector<64x64xf32>
    %51 = vector.broadcast %22 : vector<1x64xf32> to vector<64x64xf32>
    %52 = arith.mulf %50, %51 : vector<64x64xf32>
    %c63_i32_20 = arith.constant 63 : i32
    %53 = tpu.dynamic_rotate %8 by %c63_i32_20 dim 0 : vector<64x64xf32>, i32 -> vector<64x64xf32>
    %c63_i32_21 = arith.constant 63 : i32
    %54 = tpu.dynamic_rotate %53 by %c63_i32_21 dim 1 : vector<64x64xf32>, i32 -> vector<64x64xf32>
    %55 = vector.broadcast %18 : vector<64x1xf32> to vector<64x64xf32>
    %56 = arith.mulf %54, %55 : vector<64x64xf32>
    %57 = vector.broadcast %26 : vector<1x64xf32> to vector<64x64xf32>
    %58 = arith.mulf %56, %57 : vector<64x64xf32>
    %59 = arith.addf %52, %8 : vector<64x64xf32>
    %60 = arith.addf %59, %58 : vector<64x64xf32>
    %c9_i32 = arith.constant 9 : i32
    %61 = tpu.dynamic_rotate %60 by %c9_i32 dim 0 : vector<64x64xf32>, i32 -> vector<64x64xf32>
    %c8_i32_22 = arith.constant 8 : i32
    %62 = tpu.dynamic_rotate %60 by %c8_i32_22 dim 0 : vector<64x64xf32>, i32 -> vector<64x64xf32>
    %63 = vector.shape_cast %28 : vector<64x1xi1> to vector<64x1xi1>
    %64 = vector.broadcast %63 : vector<64x1xi1> to vector<64x64xi1>
    %65 = arith.select %64, %61, %62 : vector<64x64xi1>, vector<64x64xf32>
    %66 = vector.broadcast %14 : vector<64x1xf32> to vector<64x64xf32>
    %67 = arith.mulf %65, %66 : vector<64x64xf32>
    %c9_i32_23 = arith.constant 9 : i32
    %68 = tpu.dynamic_rotate %67 by %c9_i32_23 dim 1 : vector<64x64xf32>, i32 -> vector<64x64xf32>
    %c8_i32_24 = arith.constant 8 : i32
    %69 = tpu.dynamic_rotate %67 by %c8_i32_24 dim 1 : vector<64x64xf32>, i32 -> vector<64x64xf32>
    %70 = vector.shape_cast %32 : vector<1x64xi1> to vector<1x64xi1>
    %71 = vector.broadcast %70 : vector<1x64xi1> to vector<64x64xi1>
    %72 = arith.select %71, %68, %69 : vector<64x64xi1>, vector<64x64xf32>
    %73 = vector.broadcast %22 : vector<1x64xf32> to vector<64x64xf32>
    %74 = arith.mulf %72, %73 : vector<64x64xf32>
    %c55_i32 = arith.constant 55 : i32
    %75 = tpu.dynamic_rotate %60 by %c55_i32 dim 0 : vector<64x64xf32>, i32 -> vector<64x64xf32>
    %c56_i32_25 = arith.constant 56 : i32
    %76 = tpu.dynamic_rotate %60 by %c56_i32_25 dim 0 : vector<64x64xf32>, i32 -> vector<64x64xf32>
    %77 = vector.shape_cast %30 : vector<64x1xi1> to vector<64x1xi1>
    %78 = vector.broadcast %77 : vector<64x1xi1> to vector<64x64xi1>
    %79 = arith.select %78, %75, %76 : vector<64x64xi1>, vector<64x64xf32>
    %80 = vector.broadcast %18 : vector<64x1xf32> to vector<64x64xf32>
    %81 = arith.mulf %79, %80 : vector<64x64xf32>
    %c55_i32_26 = arith.constant 55 : i32
    %82 = tpu.dynamic_rotate %81 by %c55_i32_26 dim 1 : vector<64x64xf32>, i32 -> vector<64x64xf32>
    %c56_i32_27 = arith.constant 56 : i32
    %83 = tpu.dynamic_rotate %81 by %c56_i32_27 dim 1 : vector<64x64xf32>, i32 -> vector<64x64xf32>
    %84 = vector.shape_cast %34 : vector<1x64xi1> to vector<1x64xi1>
    %85 = vector.broadcast %84 : vector<1x64xi1> to vector<64x64xi1>
    %86 = arith.select %85, %82, %83 : vector<64x64xi1>, vector<64x64xf32>
    %87 = vector.broadcast %26 : vector<1x64xf32> to vector<64x64xf32>
    %88 = arith.mulf %86, %87 : vector<64x64xf32>
    %89 = arith.addf %74, %60 : vector<64x64xf32>
    %90 = arith.addf %89, %88 : vector<64x64xf32>
    %c0_28 = arith.constant 0 : index
    %c0_29 = arith.constant 0 : index
    %c0_30 = arith.constant 0 : index
    %91 = vector.load %arg4[%c0_28, %c0_29, %c0_30] : memref<1x1x64xf32, #tpu.memory_space<vmem>>, vector<1x1x64xf32>
    %92 = vector.shape_cast %91 : vector<1x1x64xf32> to vector<1x64xf32>
    %93 = vector.broadcast %92 : vector<1x64xf32> to vector<64x64xf32>
    %94 = arith.mulf %90, %93 : vector<64x64xf32>
    %cst_31 = arith.constant 1.000000e+01 : f32
    %95 = vector.broadcast %cst_31 : f32 to vector<64x64xf32>
    %96 = arith.mulf %94, %95 : vector<64x64xf32>
    %cst_32 = arith.constant dense<0xFF800000> : vector<64xf32>
    %97 = vector.multi_reduction <maximumf>, %96, %cst_32 [1] : vector<64x64xf32> to vector<64xf32>
    %98 = vector.shape_cast %97 : vector<64xf32> to vector<64x1xf32>
    %99 = vector.broadcast %98 : vector<64x1xf32> to vector<64x64xf32>
    %100 = arith.subf %96, %99 : vector<64x64xf32>
    %101 = math.exp %100 : vector<64x64xf32>
    %cst_33 = arith.constant dense<0.000000e+00> : vector<64xf32>
    %102 = vector.multi_reduction <add>, %101, %cst_33 [1] : vector<64x64xf32> to vector<64xf32>
    %103 = vector.shape_cast %102 : vector<64xf32> to vector<64x1xf32>
    %cst_34 = arith.constant 1.000000e+00 : f32
    %104 = vector.broadcast %cst_34 : f32 to vector<64x1xf32>
    %105 = arith.divf %104, %103 : vector<64x1xf32>
    %106 = vector.broadcast %105 : vector<64x1xf32> to vector<64x64xf32>
    %107 = arith.mulf %101, %106 : vector<64x64xf32>
    %108 = vector.broadcast %92 : vector<1x64xf32> to vector<64x64xf32>
    %109 = arith.mulf %107, %108 : vector<64x64xf32>
    %cst_35 = arith.constant 0.000000e+00 : f32
    %110 = vector.broadcast %cst_35 : f32 to vector<64x4xf32>
    %c0_36 = arith.constant 0 : index
    %c0_37 = arith.constant 0 : index
    %c0_38 = arith.constant 0 : index
    %111 = vector.load %arg5[%c0_36, %c0_37, %c0_38] : memref<1x576x4xf32, #tpu.memory_space<vmem>>, vector<1x64x4xf32>
    %112 = vector.shape_cast %111 : vector<1x64x4xf32> to vector<64x4xf32>
    %cst_39 = arith.constant dense<0.000000e+00> : vector<64x4xf32>
    %113 = tpu.matmul %109, %112, %cst_39 {dimension_numbers = #tpu.dot_dimension_numbers<[1], [0], [0], [1], [0, 0, 1, 1], [], []>} : vector<64x64xf32>, vector<64x4xf32>, vector<64x4xf32> -> vector<64x4xf32>
    %c55_i32_40 = arith.constant 55 : i32
    %114 = tpu.dynamic_rotate %113 by %c55_i32_40 dim 0 : vector<64x4xf32>, i32 -> vector<64x4xf32>
    %115 = vector.broadcast %42 : vector<64x1xf32> to vector<64x4xf32>
    %116 = arith.mulf %114, %115 : vector<64x4xf32>
    %117 = vector.broadcast %46 : vector<64x1xf32> to vector<64x4xf32>
    %118 = arith.mulf %116, %117 : vector<64x4xf32>
    %119 = arith.addf %110, %118 : vector<64x4xf32>
    %c0_41 = arith.constant 0 : index
    %c64 = arith.constant 64 : index
    %c0_42 = arith.constant 0 : index
    %120 = vector.load %arg5[%c0_41, %c64, %c0_42] : memref<1x576x4xf32, #tpu.memory_space<vmem>>, vector<1x64x4xf32>
    %121 = vector.shape_cast %120 : vector<1x64x4xf32> to vector<64x4xf32>
    %cst_43 = arith.constant dense<0.000000e+00> : vector<64x4xf32>
    %122 = tpu.matmul %109, %121, %cst_43 {dimension_numbers = #tpu.dot_dimension_numbers<[1], [0], [0], [1], [0, 0, 1, 1], [], []>} : vector<64x64xf32>, vector<64x4xf32>, vector<64x4xf32> -> vector<64x4xf32>
    %c56_i32_44 = arith.constant 56 : i32
    %123 = tpu.dynamic_rotate %122 by %c56_i32_44 dim 0 : vector<64x4xf32>, i32 -> vector<64x4xf32>
    %124 = vector.broadcast %42 : vector<64x1xf32> to vector<64x4xf32>
    %125 = arith.mulf %123, %124 : vector<64x4xf32>
    %126 = arith.addf %119, %125 : vector<64x4xf32>
    %c0_45 = arith.constant 0 : index
    %c128 = arith.constant 128 : index
    %c0_46 = arith.constant 0 : index
    %127 = vector.load %arg5[%c0_45, %c128, %c0_46] : memref<1x576x4xf32, #tpu.memory_space<vmem>>, vector<1x64x4xf32>
    %128 = vector.shape_cast %127 : vector<1x64x4xf32> to vector<64x4xf32>
    %cst_47 = arith.constant dense<0.000000e+00> : vector<64x4xf32>
    %129 = tpu.matmul %109, %128, %cst_47 {dimension_numbers = #tpu.dot_dimension_numbers<[1], [0], [0], [1], [0, 0, 1, 1], [], []>} : vector<64x64xf32>, vector<64x4xf32>, vector<64x4xf32> -> vector<64x4xf32>
    %c57_i32 = arith.constant 57 : i32
    %130 = tpu.dynamic_rotate %129 by %c57_i32 dim 0 : vector<64x4xf32>, i32 -> vector<64x4xf32>
    %131 = vector.broadcast %42 : vector<64x1xf32> to vector<64x4xf32>
    %132 = arith.mulf %130, %131 : vector<64x4xf32>
    %133 = vector.broadcast %44 : vector<64x1xf32> to vector<64x4xf32>
    %134 = arith.mulf %132, %133 : vector<64x4xf32>
    %135 = arith.addf %126, %134 : vector<64x4xf32>
    %c0_48 = arith.constant 0 : index
    %c192 = arith.constant 192 : index
    %c0_49 = arith.constant 0 : index
    %136 = vector.load %arg5[%c0_48, %c192, %c0_49] : memref<1x576x4xf32, #tpu.memory_space<vmem>>, vector<1x64x4xf32>
    %137 = vector.shape_cast %136 : vector<1x64x4xf32> to vector<64x4xf32>
    %cst_50 = arith.constant dense<0.000000e+00> : vector<64x4xf32>
    %138 = tpu.matmul %109, %137, %cst_50 {dimension_numbers = #tpu.dot_dimension_numbers<[1], [0], [0], [1], [0, 0, 1, 1], [], []>} : vector<64x64xf32>, vector<64x4xf32>, vector<64x4xf32> -> vector<64x4xf32>
    %c63_i32_51 = arith.constant 63 : i32
    %139 = tpu.dynamic_rotate %138 by %c63_i32_51 dim 0 : vector<64x4xf32>, i32 -> vector<64x4xf32>
    %140 = vector.broadcast %46 : vector<64x1xf32> to vector<64x4xf32>
    %141 = arith.mulf %139, %140 : vector<64x4xf32>
    %142 = arith.addf %135, %141 : vector<64x4xf32>
    %c0_52 = arith.constant 0 : index
    %c256 = arith.constant 256 : index
    %c0_53 = arith.constant 0 : index
    %143 = vector.load %arg5[%c0_52, %c256, %c0_53] : memref<1x576x4xf32, #tpu.memory_space<vmem>>, vector<1x64x4xf32>
    %144 = vector.shape_cast %143 : vector<1x64x4xf32> to vector<64x4xf32>
    %cst_54 = arith.constant dense<0.000000e+00> : vector<64x4xf32>
    %145 = tpu.matmul %109, %144, %cst_54 {dimension_numbers = #tpu.dot_dimension_numbers<[1], [0], [0], [1], [0, 0, 1, 1], [], []>} : vector<64x64xf32>, vector<64x4xf32>, vector<64x4xf32> -> vector<64x4xf32>
    %146 = arith.addf %142, %145 : vector<64x4xf32>
    %c0_55 = arith.constant 0 : index
    %c320 = arith.constant 320 : index
    %c0_56 = arith.constant 0 : index
    %147 = vector.load %arg5[%c0_55, %c320, %c0_56] : memref<1x576x4xf32, #tpu.memory_space<vmem>>, vector<1x64x4xf32>
    %148 = vector.shape_cast %147 : vector<1x64x4xf32> to vector<64x4xf32>
    %cst_57 = arith.constant dense<0.000000e+00> : vector<64x4xf32>
    %149 = tpu.matmul %109, %148, %cst_57 {dimension_numbers = #tpu.dot_dimension_numbers<[1], [0], [0], [1], [0, 0, 1, 1], [], []>} : vector<64x64xf32>, vector<64x4xf32>, vector<64x4xf32> -> vector<64x4xf32>
    %c1_i32_58 = arith.constant 1 : i32
    %150 = tpu.dynamic_rotate %149 by %c1_i32_58 dim 0 : vector<64x4xf32>, i32 -> vector<64x4xf32>
    %151 = vector.broadcast %44 : vector<64x1xf32> to vector<64x4xf32>
    %152 = arith.mulf %150, %151 : vector<64x4xf32>
    %153 = arith.addf %146, %152 : vector<64x4xf32>
    %c0_59 = arith.constant 0 : index
    %c384 = arith.constant 384 : index
    %c0_60 = arith.constant 0 : index
    %154 = vector.load %arg5[%c0_59, %c384, %c0_60] : memref<1x576x4xf32, #tpu.memory_space<vmem>>, vector<1x64x4xf32>
    %155 = vector.shape_cast %154 : vector<1x64x4xf32> to vector<64x4xf32>
    %cst_61 = arith.constant dense<0.000000e+00> : vector<64x4xf32>
    %156 = tpu.matmul %109, %155, %cst_61 {dimension_numbers = #tpu.dot_dimension_numbers<[1], [0], [0], [1], [0, 0, 1, 1], [], []>} : vector<64x64xf32>, vector<64x4xf32>, vector<64x4xf32> -> vector<64x4xf32>
    %c7_i32 = arith.constant 7 : i32
    %157 = tpu.dynamic_rotate %156 by %c7_i32 dim 0 : vector<64x4xf32>, i32 -> vector<64x4xf32>
    %158 = vector.broadcast %38 : vector<64x1xf32> to vector<64x4xf32>
    %159 = arith.mulf %157, %158 : vector<64x4xf32>
    %160 = vector.broadcast %46 : vector<64x1xf32> to vector<64x4xf32>
    %161 = arith.mulf %159, %160 : vector<64x4xf32>
    %162 = arith.addf %153, %161 : vector<64x4xf32>
    %c0_62 = arith.constant 0 : index
    %c448 = arith.constant 448 : index
    %c0_63 = arith.constant 0 : index
    %163 = vector.load %arg5[%c0_62, %c448, %c0_63] : memref<1x576x4xf32, #tpu.memory_space<vmem>>, vector<1x64x4xf32>
    %164 = vector.shape_cast %163 : vector<1x64x4xf32> to vector<64x4xf32>
    %cst_64 = arith.constant dense<0.000000e+00> : vector<64x4xf32>
    %165 = tpu.matmul %109, %164, %cst_64 {dimension_numbers = #tpu.dot_dimension_numbers<[1], [0], [0], [1], [0, 0, 1, 1], [], []>} : vector<64x64xf32>, vector<64x4xf32>, vector<64x4xf32> -> vector<64x4xf32>
    %c8_i32_65 = arith.constant 8 : i32
    %166 = tpu.dynamic_rotate %165 by %c8_i32_65 dim 0 : vector<64x4xf32>, i32 -> vector<64x4xf32>
    %167 = vector.broadcast %38 : vector<64x1xf32> to vector<64x4xf32>
    %168 = arith.mulf %166, %167 : vector<64x4xf32>
    %169 = arith.addf %162, %168 : vector<64x4xf32>
    %c0_66 = arith.constant 0 : index
    %c512 = arith.constant 512 : index
    %c0_67 = arith.constant 0 : index
    %170 = vector.load %arg5[%c0_66, %c512, %c0_67] : memref<1x576x4xf32, #tpu.memory_space<vmem>>, vector<1x64x4xf32>
    %171 = vector.shape_cast %170 : vector<1x64x4xf32> to vector<64x4xf32>
    %cst_68 = arith.constant dense<0.000000e+00> : vector<64x4xf32>
    %172 = tpu.matmul %109, %171, %cst_68 {dimension_numbers = #tpu.dot_dimension_numbers<[1], [0], [0], [1], [0, 0, 1, 1], [], []>} : vector<64x64xf32>, vector<64x4xf32>, vector<64x4xf32> -> vector<64x4xf32>
    %c9_i32_69 = arith.constant 9 : i32
    %173 = tpu.dynamic_rotate %172 by %c9_i32_69 dim 0 : vector<64x4xf32>, i32 -> vector<64x4xf32>
    %174 = vector.broadcast %38 : vector<64x1xf32> to vector<64x4xf32>
    %175 = arith.mulf %173, %174 : vector<64x4xf32>
    %176 = vector.broadcast %44 : vector<64x1xf32> to vector<64x4xf32>
    %177 = arith.mulf %175, %176 : vector<64x4xf32>
    %178 = arith.addf %169, %177 : vector<64x4xf32>
    %c0_70 = arith.constant 0 : index
    %c0_71 = arith.constant 0 : index
    %c0_72 = arith.constant 0 : index
    %179 = vector.load %arg7[%c0_70, %c0_71, %c0_72] : memref<1x64x4xf32, #tpu.memory_space<vmem>>, vector<1x64x4xf32>
    %180 = vector.shape_cast %179 : vector<1x64x4xf32> to vector<64x4xf32>
    %cst_73 = arith.constant 0.111111112 : f32
    %181 = vector.broadcast %cst_73 : f32 to vector<64x4xf32>
    %182 = arith.mulf %178, %181 : vector<64x4xf32>
    %183 = arith.mulf %180, %182 : vector<64x4xf32>
    %c0_74 = arith.constant 0 : index
    %c0_75 = arith.constant 0 : index
    %c0_76 = arith.constant 0 : index
    %184 = vector.load %arg8[%c0_74, %c0_75, %c0_76] : memref<1x64x4xf32, #tpu.memory_space<vmem>>, vector<1x64x4xf32>
    %185 = vector.shape_cast %184 : vector<1x64x4xf32> to vector<64x4xf32>
    %186 = vector.shape_cast %183 : vector<64x4xf32> to vector<1x64x4xf32>
    tpu.vector_store %arg8[%c0_74, %c0_75, %c0_76], %186 {strides = array<i32>} : memref<1x64x4xf32, #tpu.memory_space<vmem>>, vector<1x64x4xf32>,
    return
  }
  func.func @transform_0(%arg0: i32) -> (i32, i32, i32) {
    %c0_i32 = arith.constant 0 : i32
    %c0_i32_0 = arith.constant 0 : i32
    %c0_i32_1 = arith.constant 0 : i32
    return %arg0, %c0_i32, %c0_i32_0 : i32, i32, i32
  }
  func.func @transform_1(%arg0: i32) -> (i32, i32, i32) {
    %c0_i32 = arith.constant 0 : i32
    %c0_i32_0 = arith.constant 0 : i32
    %c0_i32_1 = arith.constant 0 : i32
    return %arg0, %c0_i32, %c0_i32_0 : i32, i32, i32
  }
  func.func @transform_2(%arg0: i32) -> (i32, i32, i32) {
    %c0_i32 = arith.constant 0 : i32
    %c0_i32_0 = arith.constant 0 : i32
    %c0_i32_1 = arith.constant 0 : i32
    return %arg0, %c0_i32, %c0_i32_0 : i32, i32, i32
  }
  func.func @transform_3(%arg0: i32) -> (i32, i32, i32) {
    %c0_i32 = arith.constant 0 : i32
    %c0_i32_0 = arith.constant 0 : i32
    %c0_i32_1 = arith.constant 0 : i32
    return %arg0, %c0_i32, %c0_i32_0 : i32, i32, i32
  }
  func.func @transform_4(%arg0: i32) -> (i32, i32, i32) {
    %c0_i32 = arith.constant 0 : i32
    %c0_i32_0 = arith.constant 0 : i32
    %c0_i32_1 = arith.constant 0 : i32
    return %arg0, %c0_i32, %c0_i32_0 : i32, i32, i32
  }
  func.func @transform_5(%arg0: i32) -> (i32, i32, i32) {
    %c0_i32 = arith.constant 0 : i32
    %c0_i32_0 = arith.constant 0 : i32
    %c0_i32_1 = arith.constant 0 : i32
    %c0_i32_2 = arith.constant 0 : i32
    return %c0_i32, %c0_i32_0, %c0_i32_1 : i32, i32, i32
  }
  func.func @transform_6(%arg0: i32) -> (i32, i32, i32) {
    %c0_i32 = arith.constant 0 : i32
    %c0_i32_0 = arith.constant 0 : i32
    %c0_i32_1 = arith.constant 0 : i32
    return %arg0, %c0_i32, %c0_i32_0 : i32, i32, i32
  }
  func.func @transform_7(%arg0: i32) -> (i32, i32, i32) {
    %c0_i32 = arith.constant 0 : i32
    %c0_i32_0 = arith.constant 0 : i32
    %c0_i32_1 = arith.constant 0 : i32
    return %arg0, %c0_i32, %c0_i32_0 : i32, i32, i32
  }
}

module attributes {stable_mosaic.version = 11 : i64} {
  func.func @_instnorm_kernel(%arg0: i32, %arg1: memref<64x4xf32, #tpu.memory_space<vmem>>, %arg2: memref<64x4xf32, #tpu.memory_space<vmem>>) attributes {dimension_semantics = [#tpu.dimension_semantics<parallel>], iteration_bounds = array<i64: 2>, scalar_prefetch = 0 : i64, scratch_operands = 0 : i64, tpu.core_type = #tpu.core_type<tc>, window_params = [{transform_indices = @transform_0, window_bounds = array<i64: 64, 4>}, {transform_indices = @transform_1, window_bounds = array<i64: 64, 4>}]} {
    %c0 = arith.constant 0 : index
    %c0_0 = arith.constant 0 : index
    %0 = vector.load %arg1[%c0, %c0_0] : memref<64x4xf32, #tpu.memory_space<vmem>>, vector<64x4xf32>
    %cst = arith.constant dense<0.000000e+00> : vector<4xf32>
    %1 = vector.multi_reduction <add>, %0, %cst [0] : vector<64x4xf32> to vector<4xf32>
    %2 = vector.shape_cast %1 : vector<4xf32> to vector<1x4xf32>
    %cst_1 = arith.constant 6.400000e+01 : f32
    %3 = vector.broadcast %cst_1 : f32 to vector<1x4xf32>
    %4 = arith.divf %2, %3 : vector<1x4xf32>
    %5 = vector.broadcast %4 : vector<1x4xf32> to vector<64x4xf32>
    %6 = arith.subf %0, %5 : vector<64x4xf32>
    %7 = arith.mulf %6, %6 : vector<64x4xf32>
    %cst_2 = arith.constant dense<0.000000e+00> : vector<4xf32>
    %8 = vector.multi_reduction <add>, %7, %cst_2 [0] : vector<64x4xf32> to vector<4xf32>
    %9 = vector.shape_cast %8 : vector<4xf32> to vector<1x4xf32>
    %cst_3 = arith.constant 6.400000e+01 : f32
    %10 = vector.broadcast %cst_3 : f32 to vector<1x4xf32>
    %11 = arith.divf %9, %10 : vector<1x4xf32>
    %12 = vector.broadcast %4 : vector<1x4xf32> to vector<64x4xf32>
    %13 = arith.subf %0, %12 : vector<64x4xf32>
    %cst_4 = arith.constant 9.99999974E-6 : f32
    %14 = vector.broadcast %cst_4 : f32 to vector<1x4xf32>
    %15 = arith.addf %11, %14 : vector<1x4xf32>
    %16 = math.rsqrt %15 : vector<1x4xf32>
    %17 = vector.broadcast %16 : vector<1x4xf32> to vector<64x4xf32>
    %18 = arith.mulf %13, %17 : vector<64x4xf32>
    %cst_5 = arith.constant 0.000000e+00 : f32
    %19 = vector.broadcast %cst_5 : f32 to vector<64x4xf32>
    %20 = arith.maximumf %18, %19 : vector<64x4xf32>
    %c0_6 = arith.constant 0 : index
    %c0_7 = arith.constant 0 : index
    %21 = vector.load %arg2[%c0_6, %c0_7] : memref<64x4xf32, #tpu.memory_space<vmem>>, vector<64x4xf32>
    tpu.vector_store %arg2[%c0_6, %c0_7], %20 {strides = array<i32>} : memref<64x4xf32, #tpu.memory_space<vmem>>, vector<64x4xf32>,
    return
  }
  func.func @transform_0(%arg0: i32) -> (i32, i32) {
    %c0_i32 = arith.constant 0 : i32
    %c0_i32_0 = arith.constant 0 : i32
    return %arg0, %c0_i32 : i32, i32
  }
  func.func @transform_1(%arg0: i32) -> (i32, i32) {
    %c0_i32 = arith.constant 0 : i32
    %c0_i32_0 = arith.constant 0 : i32
    return %arg0, %c0_i32 : i32, i32
  }
}

module attributes {stable_mosaic.version = 11 : i64} {
  func.func @_matmul_kernel(%arg0: i32, %arg1: i32, %arg2: i32, %arg3: memref<128x128xf32, #tpu.memory_space<vmem>>, %arg4: memref<128x128xf32, #tpu.memory_space<vmem>>, %arg5: memref<1x128xf32, #tpu.memory_space<vmem>>, %arg6: memref<128x128xf32, #tpu.memory_space<vmem>>, %arg7: memref<128x128xf32, #tpu.memory_space<vmem>>) attributes {dimension_semantics = [#tpu.dimension_semantics<parallel>, #tpu.dimension_semantics<parallel>, #tpu.dimension_semantics<arbitrary>], iteration_bounds = array<i64: 1, 1, 1>, scalar_prefetch = 0 : i64, scratch_operands = 1 : i64, tpu.core_type = #tpu.core_type<tc>, window_params = [{transform_indices = @transform_0, window_bounds = array<i64: 128, 128>}, {transform_indices = @transform_1, window_bounds = array<i64: 128, 128>}, {transform_indices = @transform_2, window_bounds = array<i64: 1, 128>}, {transform_indices = @transform_3, window_bounds = array<i64: 128, 128>}]} {
    %c0_i32 = arith.constant 0 : i32
    %0 = arith.cmpi eq, %arg2, %c0_i32 : i32
    %1 = arith.extui %0 : i1 to i32
    %c0_i32_0 = arith.constant 0 : i32
    %2 = arith.cmpi ne, %1, %c0_i32_0 : i32
    scf.if %2 {
      %cst_10 = arith.constant 0.000000e+00 : f32
      %12 = vector.broadcast %cst_10 : f32 to vector<128x128xf32>
      %c0_11 = arith.constant 0 : index
      %c0_12 = arith.constant 0 : index
      %13 = vector.load %arg7[%c0_11, %c0_12] : memref<128x128xf32, #tpu.memory_space<vmem>>, vector<128x128xf32>
      tpu.vector_store %arg7[%c0_11, %c0_12], %12 {strides = array<i32>} : memref<128x128xf32, #tpu.memory_space<vmem>>, vector<128x128xf32>,
    } else {
    }
    %c0 = arith.constant 0 : index
    %c0_1 = arith.constant 0 : index
    %3 = vector.load %arg7[%c0, %c0_1] : memref<128x128xf32, #tpu.memory_space<vmem>>, vector<128x128xf32>
    %c0_2 = arith.constant 0 : index
    %c0_3 = arith.constant 0 : index
    %4 = vector.load %arg3[%c0_2, %c0_3] : memref<128x128xf32, #tpu.memory_space<vmem>>, vector<128x128xf32>
    %c0_4 = arith.constant 0 : index
    %c0_5 = arith.constant 0 : index
    %5 = vector.load %arg4[%c0_4, %c0_5] : memref<128x128xf32, #tpu.memory_space<vmem>>, vector<128x128xf32>
    %cst = arith.constant dense<0.000000e+00> : vector<128x128xf32>
    %6 = tpu.matmul %4, %5, %cst {dimension_numbers = #tpu.dot_dimension_numbers<[1], [0], [0], [1], [0, 0, 1, 1], [], []>} : vector<128x128xf32>, vector<128x128xf32>, vector<128x128xf32> -> vector<128x128xf32>
    %7 = arith.addf %3, %6 : vector<128x128xf32>
    %c0_6 = arith.constant 0 : index
    %c0_7 = arith.constant 0 : index
    %8 = vector.load %arg7[%c0_6, %c0_7] : memref<128x128xf32, #tpu.memory_space<vmem>>, vector<128x128xf32>
    tpu.vector_store %arg7[%c0_6, %c0_7], %7 {strides = array<i32>} : memref<128x128xf32, #tpu.memory_space<vmem>>, vector<128x128xf32>,
    %c0_i32_8 = arith.constant 0 : i32
    %9 = arith.cmpi eq, %arg2, %c0_i32_8 : i32
    %10 = arith.extui %9 : i1 to i32
    %c0_i32_9 = arith.constant 0 : i32
    %11 = arith.cmpi ne, %10, %c0_i32_9 : i32
    scf.if %11 {
      %c0_10 = arith.constant 0 : index
      %c0_11 = arith.constant 0 : index
      %12 = vector.load %arg7[%c0_10, %c0_11] : memref<128x128xf32, #tpu.memory_space<vmem>>, vector<128x128xf32>
      %c0_12 = arith.constant 0 : index
      %c0_13 = arith.constant 0 : index
      %13 = vector.load %arg5[%c0_12, %c0_13] : memref<1x128xf32, #tpu.memory_space<vmem>>, vector<1x128xf32>
      %14 = vector.broadcast %13 : vector<1x128xf32> to vector<128x128xf32>
      %15 = arith.addf %12, %14 : vector<128x128xf32>
      %c0_14 = arith.constant 0 : index
      %c0_15 = arith.constant 0 : index
      %16 = vector.load %arg6[%c0_14, %c0_15] : memref<128x128xf32, #tpu.memory_space<vmem>>, vector<128x128xf32>
      tpu.vector_store %arg6[%c0_14, %c0_15], %15 {strides = array<i32>} : memref<128x128xf32, #tpu.memory_space<vmem>>, vector<128x128xf32>,
    } else {
    }
    return
  }
  func.func @transform_0(%arg0: i32, %arg1: i32, %arg2: i32) -> (i32, i32) {
    %c0_i32 = arith.constant 0 : i32
    return %arg0, %arg2 : i32, i32
  }
  func.func @transform_1(%arg0: i32, %arg1: i32, %arg2: i32) -> (i32, i32) {
    %c0_i32 = arith.constant 0 : i32
    return %arg2, %arg1 : i32, i32
  }
  func.func @transform_2(%arg0: i32, %arg1: i32, %arg2: i32) -> (i32, i32) {
    %c0_i32 = arith.constant 0 : i32
    %c0_i32_0 = arith.constant 0 : i32
    return %c0_i32, %arg1 : i32, i32
  }
  func.func @transform_3(%arg0: i32, %arg1: i32, %arg2: i32) -> (i32, i32) {
    %c0_i32 = arith.constant 0 : i32
    return %arg0, %arg1 : i32, i32
  }
}

module attributes {stable_mosaic.version = 11 : i64} {
  func.func @_instnorm_add_kernel(%arg0: i32, %arg1: memref<64x4xf32, #tpu.memory_space<vmem>>, %arg2: memref<64x4xf32, #tpu.memory_space<vmem>>, %arg3: memref<64x4xf32, #tpu.memory_space<vmem>>) attributes {dimension_semantics = [#tpu.dimension_semantics<parallel>], iteration_bounds = array<i64: 2>, scalar_prefetch = 0 : i64, scratch_operands = 0 : i64, tpu.core_type = #tpu.core_type<tc>, window_params = [{transform_indices = @transform_0, window_bounds = array<i64: 64, 4>}, {transform_indices = @transform_1, window_bounds = array<i64: 64, 4>}, {transform_indices = @transform_2, window_bounds = array<i64: 64, 4>}]} {
    %c0 = arith.constant 0 : index
    %c0_0 = arith.constant 0 : index
    %0 = vector.load %arg1[%c0, %c0_0] : memref<64x4xf32, #tpu.memory_space<vmem>>, vector<64x4xf32>
    %cst = arith.constant dense<0.000000e+00> : vector<4xf32>
    %1 = vector.multi_reduction <add>, %0, %cst [0] : vector<64x4xf32> to vector<4xf32>
    %2 = vector.shape_cast %1 : vector<4xf32> to vector<1x4xf32>
    %cst_1 = arith.constant 6.400000e+01 : f32
    %3 = vector.broadcast %cst_1 : f32 to vector<1x4xf32>
    %4 = arith.divf %2, %3 : vector<1x4xf32>
    %5 = vector.broadcast %4 : vector<1x4xf32> to vector<64x4xf32>
    %6 = arith.subf %0, %5 : vector<64x4xf32>
    %7 = arith.mulf %6, %6 : vector<64x4xf32>
    %cst_2 = arith.constant dense<0.000000e+00> : vector<4xf32>
    %8 = vector.multi_reduction <add>, %7, %cst_2 [0] : vector<64x4xf32> to vector<4xf32>
    %9 = vector.shape_cast %8 : vector<4xf32> to vector<1x4xf32>
    %cst_3 = arith.constant 6.400000e+01 : f32
    %10 = vector.broadcast %cst_3 : f32 to vector<1x4xf32>
    %11 = arith.divf %9, %10 : vector<1x4xf32>
    %c0_4 = arith.constant 0 : index
    %c0_5 = arith.constant 0 : index
    %12 = vector.load %arg2[%c0_4, %c0_5] : memref<64x4xf32, #tpu.memory_space<vmem>>, vector<64x4xf32>
    %13 = vector.broadcast %4 : vector<1x4xf32> to vector<64x4xf32>
    %14 = arith.subf %0, %13 : vector<64x4xf32>
    %cst_6 = arith.constant 9.99999974E-6 : f32
    %15 = vector.broadcast %cst_6 : f32 to vector<1x4xf32>
    %16 = arith.addf %11, %15 : vector<1x4xf32>
    %17 = math.rsqrt %16 : vector<1x4xf32>
    %18 = vector.broadcast %17 : vector<1x4xf32> to vector<64x4xf32>
    %19 = arith.mulf %14, %18 : vector<64x4xf32>
    %20 = arith.addf %12, %19 : vector<64x4xf32>
    %c0_7 = arith.constant 0 : index
    %c0_8 = arith.constant 0 : index
    %21 = vector.load %arg3[%c0_7, %c0_8] : memref<64x4xf32, #tpu.memory_space<vmem>>, vector<64x4xf32>
    tpu.vector_store %arg3[%c0_7, %c0_8], %20 {strides = array<i32>} : memref<64x4xf32, #tpu.memory_space<vmem>>, vector<64x4xf32>,
    return
  }
  func.func @transform_0(%arg0: i32) -> (i32, i32) {
    %c0_i32 = arith.constant 0 : i32
    %c0_i32_0 = arith.constant 0 : i32
    return %arg0, %c0_i32 : i32, i32
  }
  func.func @transform_1(%arg0: i32) -> (i32, i32) {
    %c0_i32 = arith.constant 0 : i32
    %c0_i32_0 = arith.constant 0 : i32
    return %arg0, %c0_i32 : i32, i32
  }
  func.func @transform_2(%arg0: i32) -> (i32, i32) {
    %c0_i32 = arith.constant 0 : i32
    %c0_i32_0 = arith.constant 0 : i32
    return %arg0, %c0_i32 : i32, i32
  }
}

module attributes {stable_mosaic.version = 11 : i64} {
  func.func @_matmul_kernel(%arg0: i32, %arg1: i32, %arg2: i32, %arg3: memref<168x128xf32, #tpu.memory_space<vmem>>, %arg4: memref<128x128xf32, #tpu.memory_space<vmem>>, %arg5: memref<1x128xf32, #tpu.memory_space<vmem>>, %arg6: memref<168x128xf32, #tpu.memory_space<vmem>>, %arg7: memref<168x128xf32, #tpu.memory_space<vmem>>) attributes {dimension_semantics = [#tpu.dimension_semantics<parallel>, #tpu.dimension_semantics<parallel>, #tpu.dimension_semantics<arbitrary>], iteration_bounds = array<i64: 1, 1, 1>, scalar_prefetch = 0 : i64, scratch_operands = 1 : i64, tpu.core_type = #tpu.core_type<tc>, window_params = [{transform_indices = @transform_0, window_bounds = array<i64: 168, 128>}, {transform_indices = @transform_1, window_bounds = array<i64: 128, 128>}, {transform_indices = @transform_2, window_bounds = array<i64: 1, 128>}, {transform_indices = @transform_3, window_bounds = array<i64: 168, 128>}]} {
    %c0_i32 = arith.constant 0 : i32
    %0 = arith.cmpi eq, %arg2, %c0_i32 : i32
    %1 = arith.extui %0 : i1 to i32
    %c0_i32_0 = arith.constant 0 : i32
    %2 = arith.cmpi ne, %1, %c0_i32_0 : i32
    scf.if %2 {
      %cst_10 = arith.constant 0.000000e+00 : f32
      %12 = vector.broadcast %cst_10 : f32 to vector<168x128xf32>
      %c0_11 = arith.constant 0 : index
      %c0_12 = arith.constant 0 : index
      %13 = vector.load %arg7[%c0_11, %c0_12] : memref<168x128xf32, #tpu.memory_space<vmem>>, vector<168x128xf32>
      tpu.vector_store %arg7[%c0_11, %c0_12], %12 {strides = array<i32>} : memref<168x128xf32, #tpu.memory_space<vmem>>, vector<168x128xf32>,
    } else {
    }
    %c0 = arith.constant 0 : index
    %c0_1 = arith.constant 0 : index
    %3 = vector.load %arg7[%c0, %c0_1] : memref<168x128xf32, #tpu.memory_space<vmem>>, vector<168x128xf32>
    %c0_2 = arith.constant 0 : index
    %c0_3 = arith.constant 0 : index
    %4 = vector.load %arg3[%c0_2, %c0_3] : memref<168x128xf32, #tpu.memory_space<vmem>>, vector<168x128xf32>
    %c0_4 = arith.constant 0 : index
    %c0_5 = arith.constant 0 : index
    %5 = vector.load %arg4[%c0_4, %c0_5] : memref<128x128xf32, #tpu.memory_space<vmem>>, vector<128x128xf32>
    %cst = arith.constant dense<0.000000e+00> : vector<168x128xf32>
    %6 = tpu.matmul %4, %5, %cst {dimension_numbers = #tpu.dot_dimension_numbers<[1], [0], [0], [1], [0, 0, 1, 1], [], []>} : vector<168x128xf32>, vector<128x128xf32>, vector<168x128xf32> -> vector<168x128xf32>
    %7 = arith.addf %3, %6 : vector<168x128xf32>
    %c0_6 = arith.constant 0 : index
    %c0_7 = arith.constant 0 : index
    %8 = vector.load %arg7[%c0_6, %c0_7] : memref<168x128xf32, #tpu.memory_space<vmem>>, vector<168x128xf32>
    tpu.vector_store %arg7[%c0_6, %c0_7], %7 {strides = array<i32>} : memref<168x128xf32, #tpu.memory_space<vmem>>, vector<168x128xf32>,
    %c0_i32_8 = arith.constant 0 : i32
    %9 = arith.cmpi eq, %arg2, %c0_i32_8 : i32
    %10 = arith.extui %9 : i1 to i32
    %c0_i32_9 = arith.constant 0 : i32
    %11 = arith.cmpi ne, %10, %c0_i32_9 : i32
    scf.if %11 {
      %c0_10 = arith.constant 0 : index
      %c0_11 = arith.constant 0 : index
      %12 = vector.load %arg7[%c0_10, %c0_11] : memref<168x128xf32, #tpu.memory_space<vmem>>, vector<168x128xf32>
      %c0_12 = arith.constant 0 : index
      %c0_13 = arith.constant 0 : index
      %13 = vector.load %arg5[%c0_12, %c0_13] : memref<1x128xf32, #tpu.memory_space<vmem>>, vector<1x128xf32>
      %14 = vector.broadcast %13 : vector<1x128xf32> to vector<168x128xf32>
      %15 = arith.addf %12, %14 : vector<168x128xf32>
      %c0_14 = arith.constant 0 : index
      %c0_15 = arith.constant 0 : index
      %16 = vector.load %arg6[%c0_14, %c0_15] : memref<168x128xf32, #tpu.memory_space<vmem>>, vector<168x128xf32>
      tpu.vector_store %arg6[%c0_14, %c0_15], %15 {strides = array<i32>} : memref<168x128xf32, #tpu.memory_space<vmem>>, vector<168x128xf32>,
    } else {
    }
    return
  }
  func.func @transform_0(%arg0: i32, %arg1: i32, %arg2: i32) -> (i32, i32) {
    %c0_i32 = arith.constant 0 : i32
    return %arg0, %arg2 : i32, i32
  }
  func.func @transform_1(%arg0: i32, %arg1: i32, %arg2: i32) -> (i32, i32) {
    %c0_i32 = arith.constant 0 : i32
    return %arg2, %arg1 : i32, i32
  }
  func.func @transform_2(%arg0: i32, %arg1: i32, %arg2: i32) -> (i32, i32) {
    %c0_i32 = arith.constant 0 : i32
    %c0_i32_0 = arith.constant 0 : i32
    return %c0_i32, %arg1 : i32, i32
  }
  func.func @transform_3(%arg0: i32, %arg1: i32, %arg2: i32) -> (i32, i32) {
    %c0_i32 = arith.constant 0 : i32
    return %arg0, %arg1 : i32, i32
  }
}

module attributes {stable_mosaic.version = 11 : i64} {
  func.func @_scale_shift_kernel(%arg0: i32, %arg1: memref<512x4xf32, #tpu.memory_space<vmem>>, %arg2: memref<1x4xf32, #tpu.memory_space<vmem>>, %arg3: memref<1x4xf32, #tpu.memory_space<vmem>>, %arg4: memref<512x4xf32, #tpu.memory_space<vmem>>) attributes {dimension_semantics = [#tpu.dimension_semantics<parallel>], iteration_bounds = array<i64: 1>, scalar_prefetch = 0 : i64, scratch_operands = 0 : i64, tpu.core_type = #tpu.core_type<tc>, window_params = [{transform_indices = @transform_0, window_bounds = array<i64: 512, 4>}, {pipeline_mode = #tpu.pipeline_mode<synchronous>, transform_indices = @transform_1, window_bounds = array<i64: 1, 4>}, {pipeline_mode = #tpu.pipeline_mode<synchronous>, transform_indices = @transform_2, window_bounds = array<i64: 1, 4>}, {transform_indices = @transform_3, window_bounds = array<i64: 512, 4>}]} {
    %c0 = arith.constant 0 : index
    %c0_0 = arith.constant 0 : index
    %0 = vector.load %arg1[%c0, %c0_0] : memref<512x4xf32, #tpu.memory_space<vmem>>, vector<512x4xf32>
    %c0_1 = arith.constant 0 : index
    %c0_2 = arith.constant 0 : index
    %1 = vector.load %arg2[%c0_1, %c0_2] : memref<1x4xf32, #tpu.memory_space<vmem>>, vector<1x4xf32>
    %2 = vector.broadcast %1 : vector<1x4xf32> to vector<512x4xf32>
    %3 = arith.mulf %0, %2 : vector<512x4xf32>
    %c0_3 = arith.constant 0 : index
    %c0_4 = arith.constant 0 : index
    %4 = vector.load %arg3[%c0_3, %c0_4] : memref<1x4xf32, #tpu.memory_space<vmem>>, vector<1x4xf32>
    %5 = vector.broadcast %4 : vector<1x4xf32> to vector<512x4xf32>
    %6 = arith.addf %3, %5 : vector<512x4xf32>
    %c0_5 = arith.constant 0 : index
    %c0_6 = arith.constant 0 : index
    %7 = vector.load %arg4[%c0_5, %c0_6] : memref<512x4xf32, #tpu.memory_space<vmem>>, vector<512x4xf32>
    tpu.vector_store %arg4[%c0_5, %c0_6], %6 {strides = array<i32>} : memref<512x4xf32, #tpu.memory_space<vmem>>, vector<512x4xf32>,
    return
  }
  func.func @transform_0(%arg0: i32) -> (i32, i32) {
    %c0_i32 = arith.constant 0 : i32
    %c0_i32_0 = arith.constant 0 : i32
    return %arg0, %c0_i32 : i32, i32
  }
  func.func @transform_1(%arg0: i32) -> (i32, i32) {
    %c0_i32 = arith.constant 0 : i32
    %c0_i32_0 = arith.constant 0 : i32
    %c0_i32_1 = arith.constant 0 : i32
    return %c0_i32, %c0_i32_0 : i32, i32
  }
  func.func @transform_2(%arg0: i32) -> (i32, i32) {
    %c0_i32 = arith.constant 0 : i32
    %c0_i32_0 = arith.constant 0 : i32
    %c0_i32_1 = arith.constant 0 : i32
    return %c0_i32, %c0_i32_0 : i32, i32
  }
  func.func @transform_3(%arg0: i32) -> (i32, i32) {
    %c0_i32 = arith.constant 0 : i32
    %c0_i32_0 = arith.constant 0 : i32
    return %arg0, %c0_i32 : i32, i32
  }
}

module attributes {stable_mosaic.version = 11 : i64} {
  func.func @_bn_stats_kernel(%arg0: i32, %arg1: memref<512x4xf32, #tpu.memory_space<vmem>>, %arg2: memref<2x4xf32, #tpu.memory_space<vmem>>) attributes {dimension_semantics = [#tpu.dimension_semantics<arbitrary>], iteration_bounds = array<i64: 1>, scalar_prefetch = 0 : i64, scratch_operands = 0 : i64, tpu.core_type = #tpu.core_type<tc>, window_params = [{transform_indices = @transform_0, window_bounds = array<i64: 512, 4>}, {pipeline_mode = #tpu.pipeline_mode<synchronous>, transform_indices = @transform_1, window_bounds = array<i64: 2, 4>}]} {
    %c0_i32 = arith.constant 0 : i32
    %0 = arith.cmpi eq, %arg0, %c0_i32 : i32
    %1 = arith.extui %0 : i1 to i32
    %c0_i32_0 = arith.constant 0 : i32
    %2 = arith.cmpi ne, %1, %c0_i32_0 : i32
    scf.if %2 {
      %cst_10 = arith.constant 0.000000e+00 : f32
      %15 = vector.broadcast %cst_10 : f32 to vector<2x4xf32>
      %c0_11 = arith.constant 0 : index
      %c0_12 = arith.constant 0 : index
      %16 = vector.load %arg2[%c0_11, %c0_12] : memref<2x4xf32, #tpu.memory_space<vmem>>, vector<2x4xf32>
      tpu.vector_store %arg2[%c0_11, %c0_12], %15 {strides = array<i32>} : memref<2x4xf32, #tpu.memory_space<vmem>>, vector<2x4xf32>,
    } else {
    }
    %c0 = arith.constant 0 : index
    %c0_1 = arith.constant 0 : index
    %3 = vector.load %arg1[%c0, %c0_1] : memref<512x4xf32, #tpu.memory_space<vmem>>, vector<512x4xf32>
    %c0_2 = arith.constant 0 : index
    %c0_3 = arith.constant 0 : index
    %4 = vector.load %arg2[%c0_2, %c0_3] : memref<2x4xf32, #tpu.memory_space<vmem>>, vector<1x4xf32>
    %cst = arith.constant dense<0.000000e+00> : vector<4xf32>
    %5 = vector.multi_reduction <add>, %3, %cst [0] : vector<512x4xf32> to vector<4xf32>
    %6 = vector.shape_cast %5 : vector<4xf32> to vector<1x4xf32>
    %7 = arith.addf %4, %6 : vector<1x4xf32>
    %c0_4 = arith.constant 0 : index
    %c0_5 = arith.constant 0 : index
    %8 = vector.load %arg2[%c0_4, %c0_5] : memref<2x4xf32, #tpu.memory_space<vmem>>, vector<1x4xf32>
    tpu.vector_store %arg2[%c0_4, %c0_5], %7 {strides = array<i32>} : memref<2x4xf32, #tpu.memory_space<vmem>>, vector<1x4xf32>,
    %c1 = arith.constant 1 : index
    %c0_6 = arith.constant 0 : index
    %9 = vector.load %arg2[%c1, %c0_6] : memref<2x4xf32, #tpu.memory_space<vmem>>, vector<1x4xf32>
    %10 = arith.mulf %3, %3 : vector<512x4xf32>
    %cst_7 = arith.constant dense<0.000000e+00> : vector<4xf32>
    %11 = vector.multi_reduction <add>, %10, %cst_7 [0] : vector<512x4xf32> to vector<4xf32>
    %12 = vector.shape_cast %11 : vector<4xf32> to vector<1x4xf32>
    %13 = arith.addf %9, %12 : vector<1x4xf32>
    %c1_8 = arith.constant 1 : index
    %c0_9 = arith.constant 0 : index
    %14 = vector.load %arg2[%c1_8, %c0_9] : memref<2x4xf32, #tpu.memory_space<vmem>>, vector<1x4xf32>
    tpu.vector_store %arg2[%c1_8, %c0_9], %13 {strides = array<i32>} : memref<2x4xf32, #tpu.memory_space<vmem>>, vector<1x4xf32>,
    return
  }
  func.func @transform_0(%arg0: i32) -> (i32, i32) {
    %c0_i32 = arith.constant 0 : i32
    %c0_i32_0 = arith.constant 0 : i32
    return %arg0, %c0_i32 : i32, i32
  }
  func.func @transform_1(%arg0: i32) -> (i32, i32) {
    %c0_i32 = arith.constant 0 : i32
    %c0_i32_0 = arith.constant 0 : i32
    %c0_i32_1 = arith.constant 0 : i32
    return %c0_i32, %c0_i32_0 : i32, i32
  }
}

</mosaic_0001>

<llo_original>
// kernel: forward.16
$region0: #{forward.16}
  #allocation0 [shape = 'u32[]', space=smem, size = 0x4, offset = 0x4, fixed_abs, tag = 'smem constant byte address 0x4 - core index']
  #allocation1 [shape = 'u32[144,128]{1,0:T(1,128)}', space=vmem, size = 0x12000, scoped, tag = 'internal scratch']
  %s0 = inlined_call_operand.vmem [shape: f32[128,4], index: 0, kind: input, shape index: {}]
  %s1 = inlined_call_operand.vmem [shape: f32[2,4], index: 1, kind: output, shape index: {}]
  %s2 = sld [smem:[#allocation0]]
  $region18: #{forward.16} parent=0
    _
  %s4 = ssub.s32 1, %s2
  %s5 = scalar_select 0, %s4, %s2
  // Predicated region
  $region2: #{forward.16} parent=0 // pred_check
    _
  $region3: #{forward.16} parent=0 // pred_check_branch
    %7 = sbr.rel (0) target = $region5
  $region4: #{forward.16} parent=0 // pred_region
    _
  $region5: #{forward.16} parent=0 // pred_fallthru
    _
  %p8 = scmp.eq.s32.totalorder 0, 0
  // Predicated region
  $region6: #{forward.16} parent=0 // pred_check
    %p9 = pneg %p8
  $region7: #{forward.16} parent=0 // pred_check_branch
    %11 = sbr.rel (%p9) target = $region9
  $region8: #{forward.16} parent=0 // pred_region
    %vm12 = vcmask 25600
    %13 = vst.msk [vmem:[%s1] sm:$0x3] %vm12, 0.0
  $region9: #{forward.16} parent=0 // pred_fallthru
    _
  %v14 = vld [vmem:[%s0] sm:$0xff]
  %v15 = vld [vmem:[%s0 + $0x8] sm:$0xff]
  %v16 = vld [vmem:[%s0 + $0x10] sm:$0xff]
  %v17 = vld [vmem:[%s0 + $0x18] sm:$0xff]
  %v18 = vld [vmem:[%s0 + $0x20] sm:$0xff]
  %v19 = vld [vmem:[%s0 + $0x28] sm:$0xff]
  %v20 = vld [vmem:[%s0 + $0x30] sm:$0xff]
  %v21 = vld [vmem:[%s0 + $0x38] sm:$0xff]
  %v22 = vld [vmem:[%s0 + $0x40] sm:$0xff]
  %v23 = vld [vmem:[%s0 + $0x48] sm:$0xff]
  %v24 = vld [vmem:[%s0 + $0x50] sm:$0xff]
  %v25 = vld [vmem:[%s0 + $0x58] sm:$0xff]
  %v26 = vld [vmem:[%s0 + $0x60] sm:$0xff]
  %v27 = vld [vmem:[%s0 + $0x68] sm:$0xff]
  %v28 = vld [vmem:[%s0 + $0x70] sm:$0xff]
  %v29 = vld [vmem:[%s0 + $0x78] sm:$0xff]
  %v30 = vld [vmem:[%s1] sm:$0x1]
  %vm31 = vcmask 31744
  %v32 = vsel %vm31, %v14, 0.0
  %v33 = vsel %vm31, %v15, 0.0
  %v34 = vadd.f32 %v32, %v33
  %v35 = vsel %vm31, %v16, 0.0
  %v36 = vadd.f32 %v34, %v35
  %v37 = vsel %vm31, %v17, 0.0
  %v38 = vadd.f32 %v36, %v37
  %v39 = vsel %vm31, %v18, 0.0
  %v40 = vadd.f32 %v38, %v39
  %v41 = vsel %vm31, %v19, 0.0
  %v42 = vadd.f32 %v40, %v41
  %v43 = vsel %vm31, %v20, 0.0
  %v44 = vadd.f32 %v42, %v43
  %v45 = vsel %vm31, %v21, 0.0
  %v46 = vadd.f32 %v44, %v45
  %v47 = vsel %vm31, %v22, 0.0
  %v48 = vadd.f32 %v46, %v47
  %v49 = vsel %vm31, %v23, 0.0
  %v50 = vadd.f32 %v48, %v49
  %v51 = vsel %vm31, %v24, 0.0
  %v52 = vadd.f32 %v50, %v51
  %v53 = vsel %vm31, %v25, 0.0
  %v54 = vadd.f32 %v52, %v53
  %v55 = vsel %vm31, %v26, 0.0
  %v56 = vadd.f32 %v54, %v55
  %v57 = vsel %vm31, %v27, 0.0
  %v58 = vadd.f32 %v56, %v57
  %v59 = vsel %vm31, %v28, 0.0
  %v60 = vadd.f32 %v58, %v59
  %v61 = vsel %vm31, %v29, 0.0
  %v62 = vadd.f32 %v60, %v61
  %v63 = vrot.slane %v62, 4
  %v64 = vadd.f32 %v62, %v63
  %v65 = vrot.slane %v64, 2
  %v66 = vadd.f32 %v64, %v65
  %v67 = vrot.slane %v66, 1
  %v68 = vadd.f32 %v66, %v67
  %v69 = vadd.f32 %v30, %v68
  %vm70 = vcmask 24576
  %71 = vst.msk [vmem:[%s1] sm:$0x1] %vm70, %v69
  %v72 = vld [vmem:[%s1 + $0x1] sm:$0x1]
  %v73 = vmul.f32 %v14, %v14
  %v74 = vmul.f32 %v15, %v15
  %v75 = vmul.f32 %v16, %v16
  %v76 = vmul.f32 %v17, %v17
  %v77 = vmul.f32 %v18, %v18
  %v78 = vmul.f32 %v19, %v19
  %v79 = vmul.f32 %v20, %v20
  %v80 = vmul.f32 %v21, %v21
  %v81 = vmul.f32 %v22, %v22
  %v82 = vmul.f32 %v23, %v23
  %v83 = vmul.f32 %v24, %v24
  %v84 = vmul.f32 %v25, %v25
  %v85 = vmul.f32 %v26, %v26
  %v86 = vmul.f32 %v27, %v27
  %v87 = vmul.f32 %v28, %v28
  %v88 = vmul.f32 %v29, %v29
  %v89 = vsel %vm31, %v73, 0.0
  %v90 = vsel %vm31, %v74, 0.0
  %v91 = vadd.f32 %v89, %v90
  %v92 = vsel %vm31, %v75, 0.0
  %v93 = vadd.f32 %v91, %v92
  %v94 = vsel %vm31, %v76, 0.0
  %v95 = vadd.f32 %v93, %v94
  %v96 = vsel %vm31, %v77, 0.0
  %v97 = vadd.f32 %v95, %v96
  %v98 = vsel %vm31, %v78, 0.0
  %v99 = vadd.f32 %v97, %v98
  %v100 = vsel %vm31, %v79, 0.0
  %v101 = vadd.f32 %v99, %v100
  %v102 = vsel %vm31, %v80, 0.0
  %v103 = vadd.f32 %v101, %v102
  %v104 = vsel %vm31, %v81, 0.0
  %v105 = vadd.f32 %v103, %v104
  %v106 = vsel %vm31, %v82, 0.0
  %v107 = vadd.f32 %v105, %v106
  %v108 = vsel %vm31, %v83, 0.0
  %v109 = vadd.f32 %v107, %v108
  %v110 = vsel %vm31, %v84, 0.0
  %v111 = vadd.f32 %v109, %v110
  %v112 = vsel %vm31, %v85, 0.0
  %v113 = vadd.f32 %v111, %v112
  %v114 = vsel %vm31, %v86, 0.0
  %v115 = vadd.f32 %v113, %v114
  %v116 = vsel %vm31, %v87, 0.0
  %v117 = vadd.f32 %v115, %v116
  %v118 = vsel %vm31, %v88, 0.0
  %v119 = vadd.f32 %v117, %v118
  %v120 = vrot.slane %v119, 4
  %v121 = vadd.f32 %v119, %v120
  %v122 = vrot.slane %v121, 2
  %v123 = vadd.f32 %v121, %v122
  %v124 = vrot.slane %v123, 1
  %v125 = vadd.f32 %v123, %v124
  %v126 = vadd.f32 %v72, %v125
  %127 = vst.msk [vmem:[%s1 + $0x1] sm:$0x1] %vm70, %v126
  // Predicated region
  $region10: #{forward.16} parent=0 // pred_check
    _
  $region11: #{forward.16} parent=0 // pred_check_branch
    %129 = sbr.rel (0) target = $region13
  $region12: #{forward.16} parent=0 // pred_region
    _
  $region13: #{forward.16} parent=0 // pred_fallthru
    _
  // Predicated region
  $region14: #{forward.16} parent=0 // pred_check
    _
  $region15: #{forward.16} parent=0 // pred_check_branch
    %131 = sbr.rel (0) target = $region17
  $region16: #{forward.16} parent=0 // pred_region
    _
  $region17: #{forward.16} parent=0 // pred_fallthru
    _

// kernel: forward.15
$region0: #{forward.15}
  #allocation0 [shape = 'u32[]', space=smem, size = 0x4, offset = 0x4, fixed_abs, tag = 'smem constant byte address 0x4 - core index']
  #allocation1 [shape = 'u32[144,128]{1,0:T(1,128)}', space=vmem, size = 0x12000, scoped, tag = 'internal scratch']
  #allocation2 [shape = 'f32[128,128]{1,0:T(8,128)}', space=vmem, size = 0x10000, scoped, tag = 'scratch operand']
  %s0 = inlined_call_operand.vmem [shape: f32[128,128], index: 0, kind: input, shape index: {}]
  %s1 = inlined_call_operand.vmem [shape: f32[128,128], index: 1, kind: input, shape index: {}]
  %s2 = inlined_call_operand.vmem [shape: f32[1,128], index: 2, kind: input, shape index: {}]
  %s3 = inlined_call_operand.vmem [shape: f32[128,128], index: 3, kind: output, shape index: {}]
  %s4 = sld [smem:[#allocation0]]
  $region30: #{forward.15} parent=0
    _
  %s6 = ssub.s32 1, %s4
  %s7 = scalar_select 0, %s6, %s4
  // Predicated region
  $region2: #{forward.15} parent=0 // pred_check
    _
  $region3: #{forward.15} parent=0 // pred_check_branch
    %9 = sbr.rel (0) target = $region5
  $region4: #{forward.15} parent=0 // pred_region
    _
  $region5: #{forward.15} parent=0 // pred_fallthru
    _
  // Predicated region
  $region6: #{forward.15} parent=0 // pred_check
    _
  $region7: #{forward.15} parent=0 // pred_check_branch
    %11 = sbr.rel (0) target = $region9
  $region8: #{forward.15} parent=0 // pred_region
    _
  $region9: #{forward.15} parent=0 // pred_fallthru
    _
  // Predicated region
  $region10: #{forward.15} parent=0 // pred_check
    _
  $region11: #{forward.15} parent=0 // pred_check_branch
    %13 = sbr.rel (0) target = $region13
  $region12: #{forward.15} parent=0 // pred_region
    _
  $region13: #{forward.15} parent=0 // pred_fallthru
    _
  %p14 = scmp.eq.s32.totalorder 0, 0
  // Predicated region
  $region14: #{forward.15} parent=0 // pred_check
    %p15 = pneg %p14
  $region15: #{forward.15} parent=0 // pred_check_branch
    %17 = sbr.rel (%p15) target = $region17
  $region16: #{forward.15} parent=0 // pred_region
    %18 = vst [vmem:[#allocation2] sm:$0xff] 0.0
    %19 = vst [vmem:[#allocation2 + $0x8] sm:$0xff] 0.0
    %20 = vst [vmem:[#allocation2 + $0x10] sm:$0xff] 0.0
    %21 = vst [vmem:[#allocation2 + $0x18] sm:$0xff] 0.0
    %22 = vst [vmem:[#allocation2 + $0x20] sm:$0xff] 0.0
    %23 = vst [vmem:[#allocation2 + $0x28] sm:$0xff] 0.0
    %24 = vst [vmem:[#allocation2 + $0x30] sm:$0xff] 0.0
    %25 = vst [vmem:[#allocation2 + $0x38] sm:$0xff] 0.0
    %26 = vst [vmem:[#allocation2 + $0x40] sm:$0xff] 0.0
    %27 = vst [vmem:[#allocation2 + $0x48] sm:$0xff] 0.0
    %28 = vst [vmem:[#allocation2 + $0x50] sm:$0xff] 0.0
    %29 = vst [vmem:[#allocation2 + $0x58] sm:$0xff] 0.0
    %30 = vst [vmem:[#allocation2 + $0x60] sm:$0xff] 0.0
    %31 = vst [vmem:[#allocation2 + $0x68] sm:$0xff] 0.0
    %32 = vst [vmem:[#allocation2 + $0x70] sm:$0xff] 0.0
    %33 = vst [vmem:[#allocation2 + $0x78] sm:$0xff] 0.0
  $region17: #{forward.15} parent=0 // pred_fallthru
    _
  %v34 = vld [vmem:[#allocation2] sm:$0xff]
  %v35 = vld [vmem:[#allocation2 + $0x8] sm:$0xff]
  %v36 = vld [vmem:[#allocation2 + $0x10] sm:$0xff]
  %v37 = vld [vmem:[#allocation2 + $0x18] sm:$0xff]
  %v38 = vld [vmem:[#allocation2 + $0x20] sm:$0xff]
  %v39 = vld [vmem:[#allocation2 + $0x28] sm:$0xff]
  %v40 = vld [vmem:[#allocation2 + $0x30] sm:$0xff]
  %v41 = vld [vmem:[#allocation2 + $0x38] sm:$0xff]
  %v42 = vld [vmem:[#allocation2 + $0x40] sm:$0xff]
  %v43 = vld [vmem:[#allocation2 + $0x48] sm:$0xff]
  %v44 = vld [vmem:[#allocation2 + $0x50] sm:$0xff]
  %v45 = vld [vmem:[#allocation2 + $0x58] sm:$0xff]
  %v46 = vld [vmem:[#allocation2 + $0x60] sm:$0xff]
  %v47 = vld [vmem:[#allocation2 + $0x68] sm:$0xff]
  %v48 = vld [vmem:[#allocation2 + $0x70] sm:$0xff]
  %v49 = vld [vmem:[#allocation2 + $0x78] sm:$0xff]
  %v50 = vld [vmem:[%s0] sm:$0xff]
  %v51 = vld [vmem:[%s0 + $0x8] sm:$0xff]
  %v52 = vld [vmem:[%s0 + $0x10] sm:$0xff]
  %v53 = vld [vmem:[%s0 + $0x18] sm:$0xff]
  %v54 = vld [vmem:[%s0 + $0x20] sm:$0xff]
  %v55 = vld [vmem:[%s0 + $0x28] sm:$0xff]
  %v56 = vld [vmem:[%s0 + $0x30] sm:$0xff]
  %v57 = vld [vmem:[%s0 + $0x38] sm:$0xff]
  %v58 = vld [vmem:[%s0 + $0x40] sm:$0xff]
  %v59 = vld [vmem:[%s0 + $0x48] sm:$0xff]
  %v60 = vld [vmem:[%s0 + $0x50] sm:$0xff]
  %v61 = vld [vmem:[%s0 + $0x58] sm:$0xff]
  %v62 = vld [vmem:[%s0 + $0x60] sm:$0xff]
  %v63 = vld [vmem:[%s0 + $0x68] sm:$0xff]
  %v64 = vld [vmem:[%s0 + $0x70] sm:$0xff]
  %v65 = vld [vmem:[%s0 + $0x78] sm:$0xff]
  %vm66 = vcmp.ge.f32.partialorder %v50, 0.0
  %vm67 = vcmp.ge.f32.partialorder %v51, 0.0
  %vm68 = vcmp.ge.f32.partialorder %v52, 0.0
  %vm69 = vcmp.ge.f32.partialorder %v53, 0.0
  %vm70 = vcmp.ge.f32.partialorder %v54, 0.0
  %vm71 = vcmp.ge.f32.partialorder %v55, 0.0
  %vm72 = vcmp.ge.f32.partialorder %v56, 0.0
  %vm73 = vcmp.ge.f32.partialorder %v57, 0.0
  %vm74 = vcmp.ge.f32.partialorder %v58, 0.0
  %vm75 = vcmp.ge.f32.partialorder %v59, 0.0
  %vm76 = vcmp.ge.f32.partialorder %v60, 0.0
  %vm77 = vcmp.ge.f32.partialorder %v61, 0.0
  %vm78 = vcmp.ge.f32.partialorder %v62, 0.0
  %vm79 = vcmp.ge.f32.partialorder %v63, 0.0
  %vm80 = vcmp.ge.f32.partialorder %v64, 0.0
  %vm81 = vcmp.ge.f32.partialorder %v65, 0.0
  %v82 = vmul.f32 %v50, 0.2
  %v83 = vmul.f32 %v51, 0.2
  %v84 = vmul.f32 %v52, 0.2
  %v85 = vmul.f32 %v53, 0.2
  %v86 = vmul.f32 %v54, 0.2
  %v87 = vmul.f32 %v55, 0.2
  %v88 = vmul.f32 %v56, 0.2
  %v89 = vmul.f32 %v57, 0.2
  %v90 = vmul.f32 %v58, 0.2
  %v91 = vmul.f32 %v59, 0.2
  %v92 = vmul.f32 %v60, 0.2
  %v93 = vmul.f32 %v61, 0.2
  %v94 = vmul.f32 %v62, 0.2
  %v95 = vmul.f32 %v63, 0.2
  %v96 = vmul.f32 %v64, 0.2
  %v97 = vmul.f32 %v65, 0.2
  %v98 = vsel %vm66, %v50, %v82
  %v99 = vsel %vm67, %v51, %v83
  %v100 = vsel %vm68, %v52, %v84
  %v101 = vsel %vm69, %v53, %v85
  %v102 = vsel %vm70, %v54, %v86
  %v103 = vsel %vm71, %v55, %v87
  %v104 = vsel %vm72, %v56, %v88
  %v105 = vsel %vm73, %v57, %v89
  %v106 = vsel %vm74, %v58, %v90
  %v107 = vsel %vm75, %v59, %v91
  %v108 = vsel %vm76, %v60, %v92
  %v109 = vsel %vm77, %v61, %v93
  %v110 = vsel %vm78, %v62, %v94
  %v111 = vsel %vm79, %v63, %v95
  %v112 = vsel %vm80, %v64, %v96
  %v113 = vsel %vm81, %v65, %v97
  %v114 = vld [vmem:[%s1] sm:$0xff]
  %v115 = vld [vmem:[%s1 + $0x8] sm:$0xff]
  %v116 = vld [vmem:[%s1 + $0x10] sm:$0xff]
  %v117 = vld [vmem:[%s1 + $0x18] sm:$0xff]
  %v118 = vld [vmem:[%s1 + $0x20] sm:$0xff]
  %v119 = vld [vmem:[%s1 + $0x28] sm:$0xff]
  %v120 = vld [vmem:[%s1 + $0x30] sm:$0xff]
  %v121 = vld [vmem:[%s1 + $0x38] sm:$0xff]
  %v122 = vld [vmem:[%s1 + $0x40] sm:$0xff]
  %v123 = vld [vmem:[%s1 + $0x48] sm:$0xff]
  %v124 = vld [vmem:[%s1 + $0x50] sm:$0xff]
  %v125 = vld [vmem:[%s1 + $0x58] sm:$0xff]
  %v126 = vld [vmem:[%s1 + $0x60] sm:$0xff]
  %v127 = vld [vmem:[%s1 + $0x68] sm:$0xff]
  %v128 = vld [vmem:[%s1 + $0x70] sm:$0xff]
  %v129 = vld [vmem:[%s1 + $0x78] sm:$0xff]
  %130 = vmatprep.subr.mxu0 0.0
  %131 = vmatpush1.msra.mxu0 %v114
  %132 = vmatprep.subr.mxu0 0.0
  %133 = vmatpush1.msra.mxu0 %v115
  %134 = vmatprep.subr.mxu0 0.0
  %135 = vmatpush1.msra.mxu0 %v116
  %136 = vmatprep.subr.mxu0 0.0
  %137 = vmatpush1.msra.mxu0 %v117
  %138 = vmatprep.subr.mxu0 0.0
  %139 = vmatpush1.msra.mxu0 %v118
  %140 = vmatprep.subr.mxu0 0.0
  %141 = vmatpush1.msra.mxu0 %v119
  %142 = vmatprep.subr.mxu0 0.0
  %143 = vmatpush1.msra.mxu0 %v120
  %144 = vmatprep.subr.mxu0 0.0
  %145 = vmatpush1.msra.mxu0 %v121
  %146 = vmatprep.subr.mxu0 0.0
  %147 = vmatpush1.msra.mxu0 %v122
  %148 = vmatprep.subr.mxu0 0.0
  %149 = vmatpush1.msra.mxu0 %v123
  %150 = vmatprep.subr.mxu0 0.0
  %151 = vmatpush1.msra.mxu0 %v124
  %152 = vmatprep.subr.mxu0 0.0
  %153 = vmatpush1.msra.mxu0 %v125
  %154 = vmatprep.subr.mxu0 0.0
  %155 = vmatpush1.msra.mxu0 %v126
  %156 = vmatprep.subr.mxu0 0.0
  %157 = vmatpush1.msra.mxu0 %v127
  %158 = vmatprep.subr.mxu0 0.0
  %159 = vmatpush1.msra.mxu0 %v128
  %160 = vmatprep.subr.mxu0 0.0
  %161 = vmatpush1.msra.mxu0 %v129
  %162 = vmatprep.subr.mxu0 0.0
  %163 = vmatpush1.msra.mxu0 0.0
  %164 = vmatprep.subr.mxu0 0.0
  %165 = vmatpush1.msra.mxu0 0.0
  %166 = vmatprep.subr.mxu0 0.0
  %167 = vmatpush1.msra.mxu0 0.0
  %168 = vmatprep.subr.mxu0 0.0
  %169 = vmatpush1.msra.mxu0 0.0
  %170 = vmatprep.subr.mxu0 0.0
  %171 = vmatpush1.msra.mxu0 0.0
  %172 = vmatprep.subr.mxu0 0.0
  %173 = vmatpush1.msra.mxu0 0.0
  %174 = vmatprep.subr.mxu0 0.0
  %175 = vmatpush1.msra.mxu0 0.0
  %176 = vmatprep.subr.mxu0 0.0
  %177 = vmatpush1.msra.mxu0 0.0
  %178 = vmatprep.subr.mxu0 0.0
  %179 = vmatpush1.msra.mxu0 0.0
  %180 = vmatprep.subr.mxu0 0.0
  %181 = vmatpush1.msra.mxu0 0.0
  %182 = vmatprep.subr.mxu0 0.0
  %183 = vmatpush1.msra.mxu0 0.0
  %184 = vmatprep.subr.mxu0 0.0
  %185 = vmatpush1.msra.mxu0 0.0
  %186 = vmatprep.subr.mxu0 0.0
  %187 = vmatpush1.msra.mxu0 0.0
  %188 = vmatprep.subr.mxu0 0.0
  %189 = vmatpush1.msra.mxu0 0.0
  %190 = vmatprep.subr.mxu0 0.0
  %191 = vmatpush1.msra.mxu0 0.0
  %192 = vmatprep.subr.mxu0 0.0
  %193 = vmatpush1.msra.mxu0 0.0
  %194 = vmatprep.mubr.f32.mxu0 0.0
  %195 = vmatmul.mubr.f32.gmra.mrb[0].mxu0 %v98
  %v196 = vpop.f32.mrb[0].mxu0
  %v197 = vadd.f32 0.0, %v196
  %v198 = vpop.f32.mrb[0].mxu0
  %199 = vmatprep.mubr.f32.mxu0 0.0
  %200 = vmatmul.mubr.f32.gmra.mrb[0].mxu0 %v99
  %v201 = vpop.f32.mrb[0].mxu0
  %v202 = vadd.f32 0.0, %v201
  %v203 = vpop.f32.mrb[0].mxu0
  %204 = vmatprep.mubr.f32.mxu0 0.0
  %205 = vmatmul.mubr.f32.gmra.mrb[0].mxu0 %v100
  %v206 = vpop.f32.mrb[0].mxu0
  %v207 = vadd.f32 0.0, %v206
  %v208 = vpop.f32.mrb[0].mxu0
  %209 = vmatprep.mubr.f32.mxu0 0.0
  %210 = vmatmul.mubr.f32.gmra.mrb[0].mxu0 %v101
  %v211 = vpop.f32.mrb[0].mxu0
  %v212 = vadd.f32 0.0, %v211
  %v213 = vpop.f32.mrb[0].mxu0
  %214 = vmatprep.mubr.f32.mxu0 0.0
  %215 = vmatmul.mubr.f32.gmra.mrb[0].mxu0 %v102
  %v216 = vpop.f32.mrb[0].mxu0
  %v217 = vadd.f32 0.0, %v216
  %v218 = vpop.f32.mrb[0].mxu0
  %219 = vmatprep.mubr.f32.mxu0 0.0
  %220 = vmatmul.mubr.f32.gmra.mrb[0].mxu0 %v103
  %v221 = vpop.f32.mrb[0].mxu0
  %v222 = vadd.f32 0.0, %v221
  %v223 = vpop.f32.mrb[0].mxu0
  %224 = vmatprep.mubr.f32.mxu0 0.0
  %225 = vmatmul.mubr.f32.gmra.mrb[0].mxu0 %v104
  %v226 = vpop.f32.mrb[0].mxu0
  %v227 = vadd.f32 0.0, %v226
  %v228 = vpop.f32.mrb[0].mxu0
  %229 = vmatprep.mubr.f32.mxu0 0.0
  %230 = vmatmul.mubr.f32.gmra.mrb[0].mxu0 %v105
  %v231 = vpop.f32.mrb[0].mxu0
  %v232 = vadd.f32 0.0, %v231
  %v233 = vpop.f32.mrb[0].mxu0
  %234 = vmatprep.mubr.f32.mxu0 0.0
  %235 = vmatmul.mubr.f32.gmra.mrb[0].mxu0 %v106
  %v236 = vpop.f32.mrb[0].mxu0
  %v237 = vadd.f32 0.0, %v236
  %v238 = vpop.f32.mrb[0].mxu0
  %239 = vmatprep.mubr.f32.mxu0 0.0
  %240 = vmatmul.mubr.f32.gmra.mrb[0].mxu0 %v107
  %v241 = vpop.f32.mrb[0].mxu0
  %v242 = vadd.f32 0.0, %v241
  %v243 = vpop.f32.mrb[0].mxu0
  %244 = vmatprep.mubr.f32.mxu0 0.0
  %245 = vmatmul.mubr.f32.gmra.mrb[0].mxu0 %v108
  %v246 = vpop.f32.mrb[0].mxu0
  %v247 = vadd.f32 0.0, %v246
  %v248 = vpop.f32.mrb[0].mxu0
  %249 = vmatprep.mubr.f32.mxu0 0.0
  %250 = vmatmul.mubr.f32.gmra.mrb[0].mxu0 %v109
  %v251 = vpop.f32.mrb[0].mxu0
  %v252 = vadd.f32 0.0, %v251
  %v253 = vpop.f32.mrb[0].mxu0
  %254 = vmatprep.mubr.f32.mxu0 0.0
  %255 = vmatmul.mubr.f32.gmra.mrb[0].mxu0 %v110
  %v256 = vpop.f32.mrb[0].mxu0
  %v257 = vadd.f32 0.0, %v256
  %v258 = vpop.f32.mrb[0].mxu0
  %259 = vmatprep.mubr.f32.mxu0 0.0
  %260 = vmatmul.mubr.f32.gmra.mrb[0].mxu0 %v111
  %v261 = vpop.f32.mrb[0].mxu0
  %v262 = vadd.f32 0.0, %v261
  %v263 = vpop.f32.mrb[0].mxu0
  %264 = vmatprep.mubr.f32.mxu0 0.0
  %265 = vmatmul.mubr.f32.gmra.mrb[0].mxu0 %v112
  %v266 = vpop.f32.mrb[0].mxu0
  %v267 = vadd.f32 0.0, %v266
  %v268 = vpop.f32.mrb[0].mxu0
  %269 = vmatprep.mubr.f32.mxu0 0.0
  %270 = vmatmul.mubr.f32.gmra.mrb[0].mxu0 %v113
  %v271 = vpop.f32.mrb[0].mxu0
  %v272 = vadd.f32 0.0, %v271
  %v273 = vpop.f32.mrb[0].mxu0
  %274 = vdwg.mxu0
  %v275 = vadd.f32 %v34, %v197
  %v276 = vadd.f32 %v35, %v202
  %v277 = vadd.f32 %v36, %v207
  %v278 = vadd.f32 %v37, %v212
  %v279 = vadd.f32 %v38, %v217
  %v280 = vadd.f32 %v39, %v222
  %v281 = vadd.f32 %v40, %v227
  %v282 = vadd.f32 %v41, %v232
  %v283 = vadd.f32 %v42, %v237
  %v284 = vadd.f32 %v43, %v242
  %v285 = vadd.f32 %v44, %v247
  %v286 = vadd.f32 %v45, %v252
  %v287 = vadd.f32 %v46, %v257
  %v288 = vadd.f32 %v47, %v262
  %v289 = vadd.f32 %v48, %v267
  %v290 = vadd.f32 %v49, %v272
  %291 = vst [vmem:[#allocation2] sm:$0xff] %v275
  %292 = vst [vmem:[#allocation2 + $0x8] sm:$0xff] %v276
  %293 = vst [vmem:[#allocation2 + $0x10] sm:$0xff] %v277
  %294 = vst [vmem:[#allocation2 + $0x18] sm:$0xff] %v278
  %295 = vst [vmem:[#allocation2 + $0x20] sm:$0xff] %v279
  %296 = vst [vmem:[#allocation2 + $0x28] sm:$0xff] %v280
  %297 = vst [vmem:[#allocation2 + $0x30] sm:$0xff] %v281
  %298 = vst [vmem:[#allocation2 + $0x38] sm:$0xff] %v282
  %299 = vst [vmem:[#allocation2 + $0x40] sm:$0xff] %v283
  %300 = vst [vmem:[#allocation2 + $0x48] sm:$0xff] %v284
  %301 = vst [vmem:[#allocation2 + $0x50] sm:$0xff] %v285
  %302 = vst [vmem:[#allocation2 + $0x58] sm:$0xff] %v286
  %303 = vst [vmem:[#allocation2 + $0x60] sm:$0xff] %v287
  %304 = vst [vmem:[#allocation2 + $0x68] sm:$0xff] %v288
  %305 = vst [vmem:[#allocation2 + $0x70] sm:$0xff] %v289
  %306 = vst [vmem:[#allocation2 + $0x78] sm:$0xff] %v290
  // Predicated region
  $region18: #{forward.15} parent=0 // pred_check
    %p307 = pneg %p14
  $region19: #{forward.15} parent=0 // pred_check_branch
    %309 = sbr.rel (%p307) target = $region21
  $region20: #{forward.15} parent=0 // pred_region
    %v310 = vld [vmem:[#allocation2] sm:$0xff]
    %v311 = vld [vmem:[#allocation2 + $0x8] sm:$0xff]
    %v312 = vld [vmem:[#allocation2 + $0x10] sm:$0xff]
    %v313 = vld [vmem:[#allocation2 + $0x18] sm:$0xff]
    %v314 = vld [vmem:[#allocation2 + $0x20] sm:$0xff]
    %v315 = vld [vmem:[#allocation2 + $0x28] sm:$0xff]
    %v316 = vld [vmem:[#allocation2 + $0x30] sm:$0xff]
    %v317 = vld [vmem:[#allocation2 + $0x38] sm:$0xff]
    %v318 = vld [vmem:[#allocation2 + $0x40] sm:$0xff]
    %v319 = vld [vmem:[#allocation2 + $0x48] sm:$0xff]
    %v320 = vld [vmem:[#allocation2 + $0x50] sm:$0xff]
    %v321 = vld [vmem:[#allocation2 + $0x58] sm:$0xff]
    %v322 = vld [vmem:[#allocation2 + $0x60] sm:$0xff]
    %v323 = vld [vmem:[#allocation2 + $0x68] sm:$0xff]
    %v324 = vld [vmem:[#allocation2 + $0x70] sm:$0xff]
    %v325 = vld [vmem:[#allocation2 + $0x78] sm:$0xff]
    %v326 = vld [vmem:[%s2] sm:$0x1]
    %v328 = vlaneseq
    %v329 = vshrl.u32 %v328, 7
    %v330 = vsub.s32 0, %v329
    %v331 = vrot.slane %v326, %v330
    %v333 = vadd.f32 %v310, %v331
    %v334 = vadd.f32 %v311, %v331
    %v335 = vadd.f32 %v312, %v331
    %v336 = vadd.f32 %v313, %v331
    %v337 = vadd.f32 %v314, %v331
    %v338 = vadd.f32 %v315, %v331
    %v339 = vadd.f32 %v316, %v331
    %v340 = vadd.f32 %v317, %v331
    %v341 = vadd.f32 %v318, %v331
    %v342 = vadd.f32 %v319, %v331
    %v343 = vadd.f32 %v320, %v331
    %v344 = vadd.f32 %v321, %v331
    %v345 = vadd.f32 %v322, %v331
    %v346 = vadd.f32 %v323, %v331
    %v347 = vadd.f32 %v324, %v331
    %v348 = vadd.f32 %v325, %v331
    %349 = vst [vmem:[%s3] sm:$0xff] %v333
    %350 = vst [vmem:[%s3 + $0x8] sm:$0xff] %v334
    %351 = vst [vmem:[%s3 + $0x10] sm:$0xff] %v335
    %352 = vst [vmem:[%s3 + $0x18] sm:$0xff] %v336
    %353 = vst [vmem:[%s3 + $0x20] sm:$0xff] %v337
    %354 = vst [vmem:[%s3 + $0x28] sm:$0xff] %v338
    %355 = vst [vmem:[%s3 + $0x30] sm:$0xff] %v339
    %356 = vst [vmem:[%s3 + $0x38] sm:$0xff] %v340
    %357 = vst [vmem:[%s3 + $0x40] sm:$0xff] %v341
    %358 = vst [vmem:[%s3 + $0x48] sm:$0xff] %v342
    %359 = vst [vmem:[%s3 + $0x50] sm:$0xff] %v343
    %360 = vst [vmem:[%s3 + $0x58] sm:$0xff] %v344
    %361 = vst [vmem:[%s3 + $0x60] sm:$0xff] %v345
    %362 = vst [vmem:[%s3 + $0x68] sm:$0xff] %v346
    %363 = vst [vmem:[%s3 + $0x70] sm:$0xff] %v347
    %364 = vst [vmem:[%s3 + $0x78] sm:$0xff] %v348
  $region21: #{forward.15} parent=0 // pred_fallthru
    _
  // Predicated region
  $region22: #{forward.15} parent=0 // pred_check
    _
  $region23: #{forward.15} parent=0 // pred_check_branch
    %366 = sbr.rel (0) target = $region25
  $region24: #{forward.15} parent=0 // pred_region
    _
  $region25: #{forward.15} parent=0 // pred_fallthru
    _
  // Predicated region
  $region26: #{forward.15} parent=0 // pred_check
    _
  $region27: #{forward.15} parent=0 // pred_check_branch
    %368 = sbr.rel (0) target = $region29
  $region28: #{forward.15} parent=0 // pred_region
    _
  $region29: #{forward.15} parent=0 // pred_fallthru
    _

// kernel: forward.17
$region0: #{forward.17}
  #allocation0 [shape = 'u32[]', space=smem, size = 0x4, offset = 0x4, fixed_abs, tag = 'smem constant byte address 0x4 - core index']
  #allocation1 [shape = 'u32[144,128]{1,0:T(1,128)}', space=vmem, size = 0x12000, scoped, tag = 'internal scratch']
  %s0 = inlined_call_operand.vmem [shape: f32[128,4], index: 0, kind: input, shape index: {}]
  %s1 = inlined_call_operand.vmem [shape: f32[1,4], index: 1, kind: input, shape index: {}]
  %s2 = inlined_call_operand.vmem [shape: f32[1,4], index: 2, kind: input, shape index: {}]
  %s3 = inlined_call_operand.vmem [shape: f32[128,4], index: 3, kind: output, shape index: {}]
  %s4 = sld [smem:[#allocation0]]
  $region22: #{forward.17} parent=0
    _
  %s6 = ssub.s32 1, %s4
  %s7 = scalar_select 0, %s6, %s4
  // Predicated region
  $region2: #{forward.17} parent=0 // pred_check
    _
  $region3: #{forward.17} parent=0 // pred_check_branch
    %9 = sbr.rel (0) target = $region5
  $region4: #{forward.17} parent=0 // pred_region
    _
  $region5: #{forward.17} parent=0 // pred_fallthru
    _
  // Predicated region
  $region6: #{forward.17} parent=0 // pred_check
    _
  $region7: #{forward.17} parent=0 // pred_check_branch
    %11 = sbr.rel (0) target = $region9
  $region8: #{forward.17} parent=0 // pred_region
    _
  $region9: #{forward.17} parent=0 // pred_fallthru
    _
  // Predicated region
  $region10: #{forward.17} parent=0 // pred_check
    _
  $region11: #{forward.17} parent=0 // pred_check_branch
    %13 = sbr.rel (0) target = $region13
  $region12: #{forward.17} parent=0 // pred_region
    _
  $region13: #{forward.17} parent=0 // pred_fallthru
    _
  %v14 = vld [vmem:[%s0] sm:$0xff]
  %v15 = vld [vmem:[%s0 + $0x8] sm:$0xff]
  %v16 = vld [vmem:[%s0 + $0x10] sm:$0xff]
  %v17 = vld [vmem:[%s0 + $0x18] sm:$0xff]
  %v18 = vld [vmem:[%s0 + $0x20] sm:$0xff]
  %v19 = vld [vmem:[%s0 + $0x28] sm:$0xff]
  %v20 = vld [vmem:[%s0 + $0x30] sm:$0xff]
  %v21 = vld [vmem:[%s0 + $0x38] sm:$0xff]
  %v22 = vld [vmem:[%s0 + $0x40] sm:$0xff]
  %v23 = vld [vmem:[%s0 + $0x48] sm:$0xff]
  %v24 = vld [vmem:[%s0 + $0x50] sm:$0xff]
  %v25 = vld [vmem:[%s0 + $0x58] sm:$0xff]
  %v26 = vld [vmem:[%s0 + $0x60] sm:$0xff]
  %v27 = vld [vmem:[%s0 + $0x68] sm:$0xff]
  %v28 = vld [vmem:[%s0 + $0x70] sm:$0xff]
  %v29 = vld [vmem:[%s0 + $0x78] sm:$0xff]
  %v30 = vld [vmem:[%s1] sm:$0x1]
  %v32 = vlaneseq
  %v33 = vshrl.u32 %v32, 7
  %v34 = vsub.s32 0, %v33
  %v35 = vrot.slane %v30, %v34
  %v37 = vmul.f32 %v14, %v35
  %v38 = vmul.f32 %v15, %v35
  %v39 = vmul.f32 %v16, %v35
  %v40 = vmul.f32 %v17, %v35
  %v41 = vmul.f32 %v18, %v35
  %v42 = vmul.f32 %v19, %v35
  %v43 = vmul.f32 %v20, %v35
  %v44 = vmul.f32 %v21, %v35
  %v45 = vmul.f32 %v22, %v35
  %v46 = vmul.f32 %v23, %v35
  %v47 = vmul.f32 %v24, %v35
  %v48 = vmul.f32 %v25, %v35
  %v49 = vmul.f32 %v26, %v35
  %v50 = vmul.f32 %v27, %v35
  %v51 = vmul.f32 %v28, %v35
  %v52 = vmul.f32 %v29, %v35
  %v53 = vld [vmem:[%s2] sm:$0x1]
  %v55 = vlaneseq
  %v56 = vshrl.u32 %v55, 7
  %v57 = vsub.s32 0, %v56
  %v58 = vrot.slane %v53, %v57
  %v60 = vadd.f32 %v37, %v58
  %v61 = vadd.f32 %v38, %v58
  %v62 = vadd.f32 %v39, %v58
  %v63 = vadd.f32 %v40, %v58
  %v64 = vadd.f32 %v41, %v58
  %v65 = vadd.f32 %v42, %v58
  %v66 = vadd.f32 %v43, %v58
  %v67 = vadd.f32 %v44, %v58
  %v68 = vadd.f32 %v45, %v58
  %v69 = vadd.f32 %v46, %v58
  %v70 = vadd.f32 %v47, %v58
  %v71 = vadd.f32 %v48, %v58
  %v72 = vadd.f32 %v49, %v58
  %v73 = vadd.f32 %v50, %v58
  %v74 = vadd.f32 %v51, %v58
  %v75 = vadd.f32 %v52, %v58
  %vm76 = vcmask 31744
  %77 = vst.msk [vmem:[%s3] sm:$0xff] %vm76, %v60
  %78 = vst.msk [vmem:[%s3 + $0x8] sm:$0xff] %vm76, %v61
  %79 = vst.msk [vmem:[%s3 + $0x10] sm:$0xff] %vm76, %v62
  %80 = vst.msk [vmem:[%s3 + $0x18] sm:$0xff] %vm76, %v63
  %81 = vst.msk [vmem:[%s3 + $0x20] sm:$0xff] %vm76, %v64
  %82 = vst.msk [vmem:[%s3 + $0x28] sm:$0xff] %vm76, %v65
  %83 = vst.msk [vmem:[%s3 + $0x30] sm:$0xff] %vm76, %v66
  %84 = vst.msk [vmem:[%s3 + $0x38] sm:$0xff] %vm76, %v67
  %85 = vst.msk [vmem:[%s3 + $0x40] sm:$0xff] %vm76, %v68
  %86 = vst.msk [vmem:[%s3 + $0x48] sm:$0xff] %vm76, %v69
  %87 = vst.msk [vmem:[%s3 + $0x50] sm:$0xff] %vm76, %v70
  %88 = vst.msk [vmem:[%s3 + $0x58] sm:$0xff] %vm76, %v71
  %89 = vst.msk [vmem:[%s3 + $0x60] sm:$0xff] %vm76, %v72
  %90 = vst.msk [vmem:[%s3 + $0x68] sm:$0xff] %vm76, %v73
  %91 = vst.msk [vmem:[%s3 + $0x70] sm:$0xff] %vm76, %v74
  %92 = vst.msk [vmem:[%s3 + $0x78] sm:$0xff] %vm76, %v75
  // Predicated region
  $region14: #{forward.17} parent=0 // pred_check
    _
  $region15: #{forward.17} parent=0 // pred_check_branch
    %94 = sbr.rel (0) target = $region17
  $region16: #{forward.17} parent=0 // pred_region
    _
  $region17: #{forward.17} parent=0 // pred_fallthru
    _
  // Predicated region
  $region18: #{forward.17} parent=0 // pred_check
    _
  $region19: #{forward.17} parent=0 // pred_check_branch
    %96 = sbr.rel (0) target = $region21
  $region20: #{forward.17} parent=0 // pred_region
    _
  $region21: #{forward.17} parent=0 // pred_fallthru
    _

// kernel: forward.18
$region0: #{forward.18}
  #allocation0 [shape = 'u32[]', space=smem, size = 0x4, offset = 0x4, fixed_abs, tag = 'smem constant byte address 0x4 - core index']
  #allocation1 [shape = 'u32[144,128]{1,0:T(1,128)}', space=vmem, size = 0x12000, scoped, tag = 'internal scratch']
  #allocation2 [shape = 'f32[32,128]{1,0:T(8,128)}', space=vmem, size = 0x4000, scoped, tag = 'scratch operand']
  %s0 = inlined_call_operand.vmem [shape: f32[32,128], index: 0, kind: input, shape index: {}]
  %s1 = inlined_call_operand.vmem [shape: f32[128,128], index: 1, kind: input, shape index: {}]
  %s2 = inlined_call_operand.vmem [shape: f32[1,128], index: 2, kind: input, shape index: {}]
  %s3 = inlined_call_operand.vmem [shape: f32[32,128], index: 3, kind: output, shape index: {}]
  %s4 = sld [smem:[#allocation0]]
  $region30: #{forward.18} parent=0
    _
  %s6 = ssub.s32 1, %s4
  %s7 = scalar_select 0, %s6, %s4
  // Predicated region
  $region2: #{forward.18} parent=0 // pred_check
    _
  $region3: #{forward.18} parent=0 // pred_check_branch
    %9 = sbr.rel (0) target = $region5
  $region4: #{forward.18} parent=0 // pred_region
    _
  $region5: #{forward.18} parent=0 // pred_fallthru
    _
  // Predicated region
  $region6: #{forward.18} parent=0 // pred_check
    _
  $region7: #{forward.18} parent=0 // pred_check_branch
    %11 = sbr.rel (0) target = $region9
  $region8: #{forward.18} parent=0 // pred_region
    _
  $region9: #{forward.18} parent=0 // pred_fallthru
    _
  // Predicated region
  $region10: #{forward.18} parent=0 // pred_check
    _
  $region11: #{forward.18} parent=0 // pred_check_branch
    %13 = sbr.rel (0) target = $region13
  $region12: #{forward.18} parent=0 // pred_region
    _
  $region13: #{forward.18} parent=0 // pred_fallthru
    _
  %p14 = scmp.eq.s32.totalorder 0, 0
  // Predicated region
  $region14: #{forward.18} parent=0 // pred_check
    %p15 = pneg %p14
  $region15: #{forward.18} parent=0 // pred_check_branch
    %17 = sbr.rel (%p15) target = $region17
  $region16: #{forward.18} parent=0 // pred_region
    %18 = vst [vmem:[#allocation2] sm:$0xff] 0.0
    %19 = vst [vmem:[#allocation2 + $0x8] sm:$0xff] 0.0
    %20 = vst [vmem:[#allocation2 + $0x10] sm:$0xff] 0.0
    %21 = vst [vmem:[#allocation2 + $0x18] sm:$0xff] 0.0
  $region17: #{forward.18} parent=0 // pred_fallthru
    _
  %v22 = vld [vmem:[#allocation2] sm:$0xff]
  %v23 = vld [vmem:[#allocation2 + $0x8] sm:$0xff]
  %v24 = vld [vmem:[#allocation2 + $0x10] sm:$0xff]
  %v25 = vld [vmem:[#allocation2 + $0x18] sm:$0xff]
  %v26 = vld [vmem:[%s0] sm:$0xff]
  %v27 = vld [vmem:[%s0 + $0x8] sm:$0xff]
  %v28 = vld [vmem:[%s0 + $0x10] sm:$0xff]
  %v29 = vld [vmem:[%s0 + $0x18] sm:$0xff]
  %vm30 = vcmp.ge.f32.partialorder %v26, 0.0
  %vm31 = vcmp.ge.f32.partialorder %v27, 0.0
  %vm32 = vcmp.ge.f32.partialorder %v28, 0.0
  %vm33 = vcmp.ge.f32.partialorder %v29, 0.0
  %v34 = vmul.f32 %v26, 0.2
  %v35 = vmul.f32 %v27, 0.2
  %v36 = vmul.f32 %v28, 0.2
  %v37 = vmul.f32 %v29, 0.2
  %v38 = vsel %vm30, %v26, %v34
  %v39 = vsel %vm31, %v27, %v35
  %v40 = vsel %vm32, %v28, %v36
  %v41 = vsel %vm33, %v29, %v37
  %v42 = vld [vmem:[%s1] sm:$0xff]
  %v43 = vld [vmem:[%s1 + $0x8] sm:$0xff]
  %v44 = vld [vmem:[%s1 + $0x10] sm:$0xff]
  %v45 = vld [vmem:[%s1 + $0x18] sm:$0xff]
  %v46 = vld [vmem:[%s1 + $0x20] sm:$0xff]
  %v47 = vld [vmem:[%s1 + $0x28] sm:$0xff]
  %v48 = vld [vmem:[%s1 + $0x30] sm:$0xff]
  %v49 = vld [vmem:[%s1 + $0x38] sm:$0xff]
  %v50 = vld [vmem:[%s1 + $0x40] sm:$0xff]
  %v51 = vld [vmem:[%s1 + $0x48] sm:$0xff]
  %v52 = vld [vmem:[%s1 + $0x50] sm:$0xff]
  %v53 = vld [vmem:[%s1 + $0x58] sm:$0xff]
  %v54 = vld [vmem:[%s1 + $0x60] sm:$0xff]
  %v55 = vld [vmem:[%s1 + $0x68] sm:$0xff]
  %v56 = vld [vmem:[%s1 + $0x70] sm:$0xff]
  %v57 = vld [vmem:[%s1 + $0x78] sm:$0xff]
  %58 = vmatprep.subr.mxu0 0.0
  %59 = vmatpush1.msra.mxu0 %v42
  %60 = vmatprep.subr.mxu0 0.0
  %61 = vmatpush1.msra.mxu0 %v43
  %62 = vmatprep.subr.mxu0 0.0
  %63 = vmatpush1.msra.mxu0 %v44
  %64 = vmatprep.subr.mxu0 0.0
  %65 = vmatpush1.msra.mxu0 %v45
  %66 = vmatprep.subr.mxu0 0.0
  %67 = vmatpush1.msra.mxu0 %v46
  %68 = vmatprep.subr.mxu0 0.0
  %69 = vmatpush1.msra.mxu0 %v47
  %70 = vmatprep.subr.mxu0 0.0
  %71 = vmatpush1.msra.mxu0 %v48
  %72 = vmatprep.subr.mxu0 0.0
  %73 = vmatpush1.msra.mxu0 %v49
  %74 = vmatprep.subr.mxu0 0.0
  %75 = vmatpush1.msra.mxu0 %v50
  %76 = vmatprep.subr.mxu0 0.0
  %77 = vmatpush1.msra.mxu0 %v51
  %78 = vmatprep.subr.mxu0 0.0
  %79 = vmatpush1.msra.mxu0 %v52
  %80 = vmatprep.subr.mxu0 0.0
  %81 = vmatpush1.msra.mxu0 %v53
  %82 = vmatprep.subr.mxu0 0.0
  %83 = vmatpush1.msra.mxu0 %v54
  %84 = vmatprep.subr.mxu0 0.0
  %85 = vmatpush1.msra.mxu0 %v55
  %86 = vmatprep.subr.mxu0 0.0
  %87 = vmatpush1.msra.mxu0 %v56
  %88 = vmatprep.subr.mxu0 0.0
  %89 = vmatpush1.msra.mxu0 %v57
  %90 = vmatprep.subr.mxu0 0.0
  %91 = vmatpush1.msra.mxu0 0.0
  %92 = vmatprep.subr.mxu0 0.0
  %93 = vmatpush1.msra.mxu0 0.0
  %94 = vmatprep.subr.mxu0 0.0
  %95 = vmatpush1.msra.mxu0 0.0
  %96 = vmatprep.subr.mxu0 0.0
  %97 = vmatpush1.msra.mxu0 0.0
  %98 = vmatprep.subr.mxu0 0.0
  %99 = vmatpush1.msra.mxu0 0.0
  %100 = vmatprep.subr.mxu0 0.0
  %101 = vmatpush1.msra.mxu0 0.0
  %102 = vmatprep.subr.mxu0 0.0
  %103 = vmatpush1.msra.mxu0 0.0
  %104 = vmatprep.subr.mxu0 0.0
  %105 = vmatpush1.msra.mxu0 0.0
  %106 = vmatprep.subr.mxu0 0.0
  %107 = vmatpush1.msra.mxu0 0.0
  %108 = vmatprep.subr.mxu0 0.0
  %109 = vmatpush1.msra.mxu0 0.0
  %110 = vmatprep.subr.mxu0 0.0
  %111 = vmatpush1.msra.mxu0 0.0
  %112 = vmatprep.subr.mxu0 0.0
  %113 = vmatpush1.msra.mxu0 0.0
  %114 = vmatprep.subr.mxu0 0.0
  %115 = vmatpush1.msra.mxu0 0.0
  %116 = vmatprep.subr.mxu0 0.0
  %117 = vmatpush1.msra.mxu0 0.0
  %118 = vmatprep.subr.mxu0 0.0
  %119 = vmatpush1.msra.mxu0 0.0
  %120 = vmatprep.subr.mxu0 0.0
  %121 = vmatpush1.msra.mxu0 0.0
  %122 = vmatprep.mubr.f32.mxu0 0.0
  %123 = vmatmul.mubr.f32.gmra.mrb[0].mxu0 %v38
  %v124 = vpop.f32.mrb[0].mxu0
  %v125 = vadd.f32 0.0, %v124
  %v126 = vpop.f32.mrb[0].mxu0
  %127 = vmatprep.mubr.f32.mxu0 0.0
  %128 = vmatmul.mubr.f32.gmra.mrb[0].mxu0 %v39
  %v129 = vpop.f32.mrb[0].mxu0
  %v130 = vadd.f32 0.0, %v129
  %v131 = vpop.f32.mrb[0].mxu0
  %132 = vmatprep.mubr.f32.mxu0 0.0
  %133 = vmatmul.mubr.f32.gmra.mrb[0].mxu0 %v40
  %v134 = vpop.f32.mrb[0].mxu0
  %v135 = vadd.f32 0.0, %v134
  %v136 = vpop.f32.mrb[0].mxu0
  %137 = vmatprep.mubr.f32.mxu0 0.0
  %138 = vmatmul.mubr.f32.gmra.mrb[0].mxu0 %v41
  %v139 = vpop.f32.mrb[0].mxu0
  %v140 = vadd.f32 0.0, %v139
  %v141 = vpop.f32.mrb[0].mxu0
  %142 = vdwg.mxu0
  %v143 = vadd.f32 %v22, %v125
  %v144 = vadd.f32 %v23, %v130
  %v145 = vadd.f32 %v24, %v135
  %v146 = vadd.f32 %v25, %v140
  %147 = vst [vmem:[#allocation2] sm:$0xff] %v143
  %148 = vst [vmem:[#allocation2 + $0x8] sm:$0xff] %v144
  %149 = vst [vmem:[#allocation2 + $0x10] sm:$0xff] %v145
  %150 = vst [vmem:[#allocation2 + $0x18] sm:$0xff] %v146
  // Predicated region
  $region18: #{forward.18} parent=0 // pred_check
    %p151 = pneg %p14
  $region19: #{forward.18} parent=0 // pred_check_branch
    %153 = sbr.rel (%p151) target = $region21
  $region20: #{forward.18} parent=0 // pred_region
    %v154 = vld [vmem:[#allocation2] sm:$0xff]
    %v155 = vld [vmem:[#allocation2 + $0x8] sm:$0xff]
    %v156 = vld [vmem:[#allocation2 + $0x10] sm:$0xff]
    %v157 = vld [vmem:[#allocation2 + $0x18] sm:$0xff]
    %v158 = vld [vmem:[%s2] sm:$0x1]
    %v160 = vlaneseq
    %v161 = vshrl.u32 %v160, 7
    %v162 = vsub.s32 0, %v161
    %v163 = vrot.slane %v158, %v162
    %v165 = vadd.f32 %v154, %v163
    %v166 = vadd.f32 %v155, %v163
    %v167 = vadd.f32 %v156, %v163
    %v168 = vadd.f32 %v157, %v163
    %169 = vst [vmem:[%s3] sm:$0xff] %v165
    %170 = vst [vmem:[%s3 + $0x8] sm:$0xff] %v166
    %171 = vst [vmem:[%s3 + $0x10] sm:$0xff] %v167
    %172 = vst [vmem:[%s3 + $0x18] sm:$0xff] %v168
  $region21: #{forward.18} parent=0 // pred_fallthru
    _
  // Predicated region
  $region22: #{forward.18} parent=0 // pred_check
    _
  $region23: #{forward.18} parent=0 // pred_check_branch
    %174 = sbr.rel (0) target = $region25
  $region24: #{forward.18} parent=0 // pred_region
    _
  $region25: #{forward.18} parent=0 // pred_fallthru
    _
  // Predicated region
  $region26: #{forward.18} parent=0 // pred_check
    _
  $region27: #{forward.18} parent=0 // pred_check_branch
    %176 = sbr.rel (0) target = $region29
  $region28: #{forward.18} parent=0 // pred_region
    _
  $region29: #{forward.18} parent=0 // pred_fallthru
    _

// kernel: tile.13
$region0: #{tile.13}
  #allocation0 [shape = 's32[1]{0}', space=sflag, size = 0x4, scoped, tag = 'scoped memory for tile.13']
  %s0 = inlined_call_operand.vmem [shape: f32[4], index: 0, kind: input, shape index: {}]
  %s1 = inlined_call_operand.vmem [shape: f32[4,4], index: 1, kind: output, shape index: {}]
  // Predicated region
  $region2: #{tile.13} parent=0 // pred_check
    _
  $region3: #{tile.13} parent=0 // pred_check_branch
    %3 = sbr.rel (0) target = $region5
  $region4: #{tile.13} parent=0 // pred_region
    _
  $region5: #{tile.13} parent=0 // pred_fallthru
    _
  %v4 = vld [vmem:[%s0] ss:$0 sm:$0xff]
  %5 = vst [vmem:[%s1] sm:$0xf] %v4

// kernel: tile.14
$region0: #{tile.14}
  %s0 = inlined_call_operand.vmem [shape: f32[4,4], index: 0, kind: input, shape index: {}]
  %s1 = inlined_call_operand.vmem [shape: f32[1,16], index: 1, kind: output, shape index: {}]
  $region1: #{tile.14} parent=0
    #allocation0 [shape = 'u8[4096]{0}', space=vmem, size = 0x1000, scoped, tag = 'scoped mem for output reshape']
    #allocation1 [shape = 'u8[4096]{0}', space=vmem, size = 0x1000, scoped, tag = 'scoped mem for input reshape']
    %s3 = sshllo.u32 0, 4
    %v4 = vld [vmem:[%s0] sm:%s3]
    %5 = vst [vmem:[#allocation1] sm:%s3] %v4
    %v6 = vld [vmem:[#allocation1] sm:$0x1]
    %vm7 = vcmask 31744
    %8 = vst.msk [vmem:[#allocation0] sm:$0x1] %vm7, %v6
    %s9 = scalar_lea.vmem [#allocation1], 3
    %v10 = vld [vmem:[%s9] sm:$0x1]
    %11 = vrot.lane.b32.xlu0 %v10, 12
    %v12 = vpop.permute.xlu0 %11
    %vm13 = vcmask 130144
    %14 = vst.msk [vmem:[#allocation0] sm:$0x1] %vm13, %v12
    %s15 = scalar_lea.vmem [#allocation1], 2
    %v16 = vld [vmem:[%s15] sm:$0x1]
    %17 = vrot.lane.b32.xlu0 %v16, 8
    %v18 = vpop.permute.xlu0 %17
    %vm19 = vcmask 97344
    %20 = vst.msk [vmem:[#allocation0] sm:$0x1] %vm19, %v18
    %s21 = scalar_lea.vmem [#allocation1], 1
    %v22 = vld [vmem:[%s21] sm:$0x1]
    %23 = vrot.lane.b32.xlu0 %v22, 4
    %v24 = vpop.permute.xlu0 %23
    %vm25 = vcmask 64544
    %26 = vst.msk [vmem:[#allocation0] sm:$0x1] %vm25, %v24
    %s28 = sshllo.u32 0, 1
    %v30 = vld [vmem:[#allocation0] sm:%s28]
    %s31 = sshllo.u32 0, 1
    %32 = vst [vmem:[%s1] sm:%s31] %v30

// kernel: forward.19
$region0: #{forward.19}
  #allocation0 [shape = 'u32[]', space=smem, size = 0x4, offset = 0x4, fixed_abs, tag = 'smem constant byte address 0x4 - core index']
  #allocation1 [shape = 'u32[144,128]{1,0:T(1,128)}', space=vmem, size = 0x12000, scoped, tag = 'internal scratch']
  #allocation2 [shape = 'f32[56,128]{1,0:T(8,128)}', space=vmem, size = 0x7000, scoped, tag = 'scratch operand']
  %s0 = inlined_call_operand.vmem [shape: f32[56,128], index: 0, kind: input, shape index: {}]
  %s1 = inlined_call_operand.vmem [shape: f32[128,128], index: 1, kind: input, shape index: {}]
  %s2 = inlined_call_operand.vmem [shape: f32[1,128], index: 2, kind: input, shape index: {}]
  %s3 = inlined_call_operand.vmem [shape: f32[56,128], index: 3, kind: output, shape index: {}]
  %s4 = sld [smem:[#allocation0]]
  $region30: #{forward.19} parent=0
    _
  %s6 = ssub.s32 1, %s4
  %s7 = scalar_select 0, %s6, %s4
  // Predicated region
  $region2: #{forward.19} parent=0 // pred_check
    _
  $region3: #{forward.19} parent=0 // pred_check_branch
    %9 = sbr.rel (0) target = $region5
  $region4: #{forward.19} parent=0 // pred_region
    _
  $region5: #{forward.19} parent=0 // pred_fallthru
    _
  // Predicated region
  $region6: #{forward.19} parent=0 // pred_check
    _
  $region7: #{forward.19} parent=0 // pred_check_branch
    %11 = sbr.rel (0) target = $region9
  $region8: #{forward.19} parent=0 // pred_region
    _
  $region9: #{forward.19} parent=0 // pred_fallthru
    _
  // Predicated region
  $region10: #{forward.19} parent=0 // pred_check
    _
  $region11: #{forward.19} parent=0 // pred_check_branch
    %13 = sbr.rel (0) target = $region13
  $region12: #{forward.19} parent=0 // pred_region
    _
  $region13: #{forward.19} parent=0 // pred_fallthru
    _
  %p14 = scmp.eq.s32.totalorder 0, 0
  // Predicated region
  $region14: #{forward.19} parent=0 // pred_check
    %p15 = pneg %p14
  $region15: #{forward.19} parent=0 // pred_check_branch
    %17 = sbr.rel (%p15) target = $region17
  $region16: #{forward.19} parent=0 // pred_region
    %18 = vst [vmem:[#allocation2] sm:$0xff] 0.0
    %19 = vst [vmem:[#allocation2 + $0x8] sm:$0xff] 0.0
    %20 = vst [vmem:[#allocation2 + $0x10] sm:$0xff] 0.0
    %21 = vst [vmem:[#allocation2 + $0x18] sm:$0xff] 0.0
    %22 = vst [vmem:[#allocation2 + $0x20] sm:$0xff] 0.0
    %23 = vst [vmem:[#allocation2 + $0x28] sm:$0xff] 0.0
    %24 = vst [vmem:[#allocation2 + $0x30] sm:$0xff] 0.0
  $region17: #{forward.19} parent=0 // pred_fallthru
    _
  %v25 = vld [vmem:[#allocation2] sm:$0xff]
  %v26 = vld [vmem:[#allocation2 + $0x8] sm:$0xff]
  %v27 = vld [vmem:[#allocation2 + $0x10] sm:$0xff]
  %v28 = vld [vmem:[#allocation2 + $0x18] sm:$0xff]
  %v29 = vld [vmem:[#allocation2 + $0x20] sm:$0xff]
  %v30 = vld [vmem:[#allocation2 + $0x28] sm:$0xff]
  %v31 = vld [vmem:[#allocation2 + $0x30] sm:$0xff]
  %v32 = vld [vmem:[%s0] sm:$0xff]
  %v33 = vld [vmem:[%s0 + $0x8] sm:$0xff]
  %v34 = vld [vmem:[%s0 + $0x10] sm:$0xff]
  %v35 = vld [vmem:[%s0 + $0x18] sm:$0xff]
  %v36 = vld [vmem:[%s0 + $0x20] sm:$0xff]
  %v37 = vld [vmem:[%s0 + $0x28] sm:$0xff]
  %v38 = vld [vmem:[%s0 + $0x30] sm:$0xff]
  %v39 = vmax.f32 %v32, 0.0
  %v40 = vmax.f32 %v33, 0.0
  %v41 = vmax.f32 %v34, 0.0
  %v42 = vmax.f32 %v35, 0.0
  %v43 = vmax.f32 %v36, 0.0
  %v44 = vmax.f32 %v37, 0.0
  %v45 = vmax.f32 %v38, 0.0
  %v46 = vld [vmem:[%s1] sm:$0xff]
  %v47 = vld [vmem:[%s1 + $0x8] sm:$0xff]
  %v48 = vld [vmem:[%s1 + $0x10] sm:$0xff]
  %v49 = vld [vmem:[%s1 + $0x18] sm:$0xff]
  %v50 = vld [vmem:[%s1 + $0x20] sm:$0xff]
  %v51 = vld [vmem:[%s1 + $0x28] sm:$0xff]
  %v52 = vld [vmem:[%s1 + $0x30] sm:$0xff]
  %v53 = vld [vmem:[%s1 + $0x38] sm:$0xff]
  %v54 = vld [vmem:[%s1 + $0x40] sm:$0xff]
  %v55 = vld [vmem:[%s1 + $0x48] sm:$0xff]
  %v56 = vld [vmem:[%s1 + $0x50] sm:$0xff]
  %v57 = vld [vmem:[%s1 + $0x58] sm:$0xff]
  %v58 = vld [vmem:[%s1 + $0x60] sm:$0xff]
  %v59 = vld [vmem:[%s1 + $0x68] sm:$0xff]
  %v60 = vld [vmem:[%s1 + $0x70] sm:$0xff]
  %v61 = vld [vmem:[%s1 + $0x78] sm:$0xff]
  %62 = vmatprep.subr.mxu0 0.0
  %63 = vmatpush1.msra.mxu0 %v46
  %64 = vmatprep.subr.mxu0 0.0
  %65 = vmatpush1.msra.mxu0 %v47
  %66 = vmatprep.subr.mxu0 0.0
  %67 = vmatpush1.msra.mxu0 %v48
  %68 = vmatprep.subr.mxu0 0.0
  %69 = vmatpush1.msra.mxu0 %v49
  %70 = vmatprep.subr.mxu0 0.0
  %71 = vmatpush1.msra.mxu0 %v50
  %72 = vmatprep.subr.mxu0 0.0
  %73 = vmatpush1.msra.mxu0 %v51
  %74 = vmatprep.subr.mxu0 0.0
  %75 = vmatpush1.msra.mxu0 %v52
  %76 = vmatprep.subr.mxu0 0.0
  %77 = vmatpush1.msra.mxu0 %v53
  %78 = vmatprep.subr.mxu0 0.0
  %79 = vmatpush1.msra.mxu0 %v54
  %80 = vmatprep.subr.mxu0 0.0
  %81 = vmatpush1.msra.mxu0 %v55
  %82 = vmatprep.subr.mxu0 0.0
  %83 = vmatpush1.msra.mxu0 %v56
  %84 = vmatprep.subr.mxu0 0.0
  %85 = vmatpush1.msra.mxu0 %v57
  %86 = vmatprep.subr.mxu0 0.0
  %87 = vmatpush1.msra.mxu0 %v58
  %88 = vmatprep.subr.mxu0 0.0
  %89 = vmatpush1.msra.mxu0 %v59
  %90 = vmatprep.subr.mxu0 0.0
  %91 = vmatpush1.msra.mxu0 %v60
  %92 = vmatprep.subr.mxu0 0.0
  %93 = vmatpush1.msra.mxu0 %v61
  %94 = vmatprep.subr.mxu0 0.0
  %95 = vmatpush1.msra.mxu0 0.0
  %96 = vmatprep.subr.mxu0 0.0
  %97 = vmatpush1.msra.mxu0 0.0
  %98 = vmatprep.subr.mxu0 0.0
  %99 = vmatpush1.msra.mxu0 0.0
  %100 = vmatprep.subr.mxu0 0.0
  %101 = vmatpush1.msra.mxu0 0.0
  %102 = vmatprep.subr.mxu0 0.0
  %103 = vmatpush1.msra.mxu0 0.0
  %104 = vmatprep.subr.mxu0 0.0
  %105 = vmatpush1.msra.mxu0 0.0
  %106 = vmatprep.subr.mxu0 0.0
  %107 = vmatpush1.msra.mxu0 0.0
  %108 = vmatprep.subr.mxu0 0.0
  %109 = vmatpush1.msra.mxu0 0.0
  %110 = vmatprep.subr.mxu0 0.0
  %111 = vmatpush1.msra.mxu0 0.0
  %112 = vmatprep.subr.mxu0 0.0
  %113 = vmatpush1.msra.mxu0 0.0
  %114 = vmatprep.subr.mxu0 0.0
  %115 = vmatpush1.msra.mxu0 0.0
  %116 = vmatprep.subr.mxu0 0.0
  %117 = vmatpush1.msra.mxu0 0.0
  %118 = vmatprep.subr.mxu0 0.0
  %119 = vmatpush1.msra.mxu0 0.0
  %120 = vmatprep.subr.mxu0 0.0
  %121 = vmatpush1.msra.mxu0 0.0
  %122 = vmatprep.subr.mxu0 0.0
  %123 = vmatpush1.msra.mxu0 0.0
  %124 = vmatprep.subr.mxu0 0.0
  %125 = vmatpush1.msra.mxu0 0.0
  %126 = vmatprep.mubr.f32.mxu0 0.0
  %127 = vmatmul.mubr.f32.gmra.mrb[0].mxu0 %v39
  %v128 = vpop.f32.mrb[0].mxu0
  %v129 = vadd.f32 0.0, %v128
  %v130 = vpop.f32.mrb[0].mxu0
  %131 = vmatprep.mubr.f32.mxu0 0.0
  %132 = vmatmul.mubr.f32.gmra.mrb[0].mxu0 %v40
  %v133 = vpop.f32.mrb[0].mxu0
  %v134 = vadd.f32 0.0, %v133
  %v135 = vpop.f32.mrb[0].mxu0
  %136 = vmatprep.mubr.f32.mxu0 0.0
  %137 = vmatmul.mubr.f32.gmra.mrb[0].mxu0 %v41
  %v138 = vpop.f32.mrb[0].mxu0
  %v139 = vadd.f32 0.0, %v138
  %v140 = vpop.f32.mrb[0].mxu0
  %141 = vmatprep.mubr.f32.mxu0 0.0
  %142 = vmatmul.mubr.f32.gmra.mrb[0].mxu0 %v42
  %v143 = vpop.f32.mrb[0].mxu0
  %v144 = vadd.f32 0.0, %v143
  %v145 = vpop.f32.mrb[0].mxu0
  %146 = vmatprep.mubr.f32.mxu0 0.0
  %147 = vmatmul.mubr.f32.gmra.mrb[0].mxu0 %v43
  %v148 = vpop.f32.mrb[0].mxu0
  %v149 = vadd.f32 0.0, %v148
  %v150 = vpop.f32.mrb[0].mxu0
  %151 = vmatprep.mubr.f32.mxu0 0.0
  %152 = vmatmul.mubr.f32.gmra.mrb[0].mxu0 %v44
  %v153 = vpop.f32.mrb[0].mxu0
  %v154 = vadd.f32 0.0, %v153
  %v155 = vpop.f32.mrb[0].mxu0
  %156 = vmatprep.mubr.f32.mxu0 0.0
  %157 = vmatmul.mubr.f32.gmra.mrb[0].mxu0 %v45
  %v158 = vpop.f32.mrb[0].mxu0
  %v159 = vadd.f32 0.0, %v158
  %v160 = vpop.f32.mrb[0].mxu0
  %161 = vdwg.mxu0
  %v162 = vadd.f32 %v25, %v129
  %v163 = vadd.f32 %v26, %v134
  %v164 = vadd.f32 %v27, %v139
  %v165 = vadd.f32 %v28, %v144
  %v166 = vadd.f32 %v29, %v149
  %v167 = vadd.f32 %v30, %v154
  %v168 = vadd.f32 %v31, %v159
  %169 = vst [vmem:[#allocation2] sm:$0xff] %v162
  %170 = vst [vmem:[#allocation2 + $0x8] sm:$0xff] %v163
  %171 = vst [vmem:[#allocation2 + $0x10] sm:$0xff] %v164
  %172 = vst [vmem:[#allocation2 + $0x18] sm:$0xff] %v165
  %173 = vst [vmem:[#allocation2 + $0x20] sm:$0xff] %v166
  %174 = vst [vmem:[#allocation2 + $0x28] sm:$0xff] %v167
  %175 = vst [vmem:[#allocation2 + $0x30] sm:$0xff] %v168
  // Predicated region
  $region18: #{forward.19} parent=0 // pred_check
    %p176 = pneg %p14
  $region19: #{forward.19} parent=0 // pred_check_branch
    %178 = sbr.rel (%p176) target = $region21
  $region20: #{forward.19} parent=0 // pred_region
    %v179 = vld [vmem:[#allocation2] sm:$0xff]
    %v180 = vld [vmem:[#allocation2 + $0x8] sm:$0xff]
    %v181 = vld [vmem:[#allocation2 + $0x10] sm:$0xff]
    %v182 = vld [vmem:[#allocation2 + $0x18] sm:$0xff]
    %v183 = vld [vmem:[#allocation2 + $0x20] sm:$0xff]
    %v184 = vld [vmem:[#allocation2 + $0x28] sm:$0xff]
    %v185 = vld [vmem:[#allocation2 + $0x30] sm:$0xff]
    %v186 = vld [vmem:[%s2] sm:$0x1]
    %v188 = vlaneseq
    %v189 = vshrl.u32 %v188, 7
    %v190 = vsub.s32 0, %v189
    %v191 = vrot.slane %v186, %v190
    %v193 = vadd.f32 %v179, %v191
    %v194 = vadd.f32 %v180, %v191
    %v195 = vadd.f32 %v181, %v191
    %v196 = vadd.f32 %v182, %v191
    %v197 = vadd.f32 %v183, %v191
    %v198 = vadd.f32 %v184, %v191
    %v199 = vadd.f32 %v185, %v191
    %200 = vst [vmem:[%s3] sm:$0xff] %v193
    %201 = vst [vmem:[%s3 + $0x8] sm:$0xff] %v194
    %202 = vst [vmem:[%s3 + $0x10] sm:$0xff] %v195
    %203 = vst [vmem:[%s3 + $0x18] sm:$0xff] %v196
    %204 = vst [vmem:[%s3 + $0x20] sm:$0xff] %v197
    %205 = vst [vmem:[%s3 + $0x28] sm:$0xff] %v198
    %206 = vst [vmem:[%s3 + $0x30] sm:$0xff] %v199
  $region21: #{forward.19} parent=0 // pred_fallthru
    _
  // Predicated region
  $region22: #{forward.19} parent=0 // pred_check
    _
  $region23: #{forward.19} parent=0 // pred_check_branch
    %208 = sbr.rel (0) target = $region25
  $region24: #{forward.19} parent=0 // pred_region
    _
  $region25: #{forward.19} parent=0 // pred_fallthru
    _
  // Predicated region
  $region26: #{forward.19} parent=0 // pred_check
    _
  $region27: #{forward.19} parent=0 // pred_check_branch
    %210 = sbr.rel (0) target = $region29
  $region28: #{forward.19} parent=0 // pred_region
    _
  $region29: #{forward.19} parent=0 // pred_fallthru
    _

// kernel: forward.21
$region0: #{forward.21}
  #allocation0 [shape = 'u32[]', space=smem, size = 0x4, offset = 0x4, fixed_abs, tag = 'smem constant byte address 0x4 - core index']
  #allocation1 [shape = 'u32[144,128]{1,0:T(1,128)}', space=vmem, size = 0x12000, scoped, tag = 'internal scratch']
  %s0 = inlined_call_operand.vmem [shape: f32[128,4], index: 0, kind: input, shape index: {}]
  %s1 = inlined_call_operand.vmem [shape: f32[1,4], index: 1, kind: input, shape index: {}]
  %s2 = inlined_call_operand.vmem [shape: f32[1,4], index: 2, kind: input, shape index: {}]
  %s3 = inlined_call_operand.vmem [shape: f32[128,4], index: 3, kind: output, shape index: {}]
  %s4 = sld [smem:[#allocation0]]
  $region22: #{forward.21} parent=0
    _
  %s6 = ssub.s32 1, %s4
  %s7 = scalar_select 0, %s6, %s4
  // Predicated region
  $region2: #{forward.21} parent=0 // pred_check
    _
  $region3: #{forward.21} parent=0 // pred_check_branch
    %9 = sbr.rel (0) target = $region5
  $region4: #{forward.21} parent=0 // pred_region
    _
  $region5: #{forward.21} parent=0 // pred_fallthru
    _
  // Predicated region
  $region6: #{forward.21} parent=0 // pred_check
    _
  $region7: #{forward.21} parent=0 // pred_check_branch
    %11 = sbr.rel (0) target = $region9
  $region8: #{forward.21} parent=0 // pred_region
    _
  $region9: #{forward.21} parent=0 // pred_fallthru
    _
  // Predicated region
  $region10: #{forward.21} parent=0 // pred_check
    _
  $region11: #{forward.21} parent=0 // pred_check_branch
    %13 = sbr.rel (0) target = $region13
  $region12: #{forward.21} parent=0 // pred_region
    _
  $region13: #{forward.21} parent=0 // pred_fallthru
    _
  %v14 = vld [vmem:[%s0] sm:$0xff]
  %v15 = vld [vmem:[%s0 + $0x8] sm:$0xff]
  %v16 = vld [vmem:[%s0 + $0x10] sm:$0xff]
  %v17 = vld [vmem:[%s0 + $0x18] sm:$0xff]
  %v18 = vld [vmem:[%s0 + $0x20] sm:$0xff]
  %v19 = vld [vmem:[%s0 + $0x28] sm:$0xff]
  %v20 = vld [vmem:[%s0 + $0x30] sm:$0xff]
  %v21 = vld [vmem:[%s0 + $0x38] sm:$0xff]
  %v22 = vld [vmem:[%s0 + $0x40] sm:$0xff]
  %v23 = vld [vmem:[%s0 + $0x48] sm:$0xff]
  %v24 = vld [vmem:[%s0 + $0x50] sm:$0xff]
  %v25 = vld [vmem:[%s0 + $0x58] sm:$0xff]
  %v26 = vld [vmem:[%s0 + $0x60] sm:$0xff]
  %v27 = vld [vmem:[%s0 + $0x68] sm:$0xff]
  %v28 = vld [vmem:[%s0 + $0x70] sm:$0xff]
  %v29 = vld [vmem:[%s0 + $0x78] sm:$0xff]
  %v30 = vld [vmem:[%s1] sm:$0x1]
  %v32 = vlaneseq
  %v33 = vshrl.u32 %v32, 7
  %v34 = vsub.s32 0, %v33
  %v35 = vrot.slane %v30, %v34
  %v37 = vmul.f32 %v14, %v35
  %v38 = vmul.f32 %v15, %v35
  %v39 = vmul.f32 %v16, %v35
  %v40 = vmul.f32 %v17, %v35
  %v41 = vmul.f32 %v18, %v35
  %v42 = vmul.f32 %v19, %v35
  %v43 = vmul.f32 %v20, %v35
  %v44 = vmul.f32 %v21, %v35
  %v45 = vmul.f32 %v22, %v35
  %v46 = vmul.f32 %v23, %v35
  %v47 = vmul.f32 %v24, %v35
  %v48 = vmul.f32 %v25, %v35
  %v49 = vmul.f32 %v26, %v35
  %v50 = vmul.f32 %v27, %v35
  %v51 = vmul.f32 %v28, %v35
  %v52 = vmul.f32 %v29, %v35
  %v53 = vld [vmem:[%s2] sm:$0x1]
  %v55 = vlaneseq
  %v56 = vshrl.u32 %v55, 7
  %v57 = vsub.s32 0, %v56
  %v58 = vrot.slane %v53, %v57
  %v60 = vadd.f32 %v37, %v58
  %v61 = vadd.f32 %v38, %v58
  %v62 = vadd.f32 %v39, %v58
  %v63 = vadd.f32 %v40, %v58
  %v64 = vadd.f32 %v41, %v58
  %v65 = vadd.f32 %v42, %v58
  %v66 = vadd.f32 %v43, %v58
  %v67 = vadd.f32 %v44, %v58
  %v68 = vadd.f32 %v45, %v58
  %v69 = vadd.f32 %v46, %v58
  %v70 = vadd.f32 %v47, %v58
  %v71 = vadd.f32 %v48, %v58
  %v72 = vadd.f32 %v49, %v58
  %v73 = vadd.f32 %v50, %v58
  %v74 = vadd.f32 %v51, %v58
  %v75 = vadd.f32 %v52, %v58
  %v76 = vmax.f32 %v60, 0.0
  %v77 = vmax.f32 %v61, 0.0
  %v78 = vmax.f32 %v62, 0.0
  %v79 = vmax.f32 %v63, 0.0
  %v80 = vmax.f32 %v64, 0.0
  %v81 = vmax.f32 %v65, 0.0
  %v82 = vmax.f32 %v66, 0.0
  %v83 = vmax.f32 %v67, 0.0
  %v84 = vmax.f32 %v68, 0.0
  %v85 = vmax.f32 %v69, 0.0
  %v86 = vmax.f32 %v70, 0.0
  %v87 = vmax.f32 %v71, 0.0
  %v88 = vmax.f32 %v72, 0.0
  %v89 = vmax.f32 %v73, 0.0
  %v90 = vmax.f32 %v74, 0.0
  %v91 = vmax.f32 %v75, 0.0
  %vm92 = vcmask 31744
  %93 = vst.msk [vmem:[%s3] sm:$0xff] %vm92, %v76
  %94 = vst.msk [vmem:[%s3 + $0x8] sm:$0xff] %vm92, %v77
  %95 = vst.msk [vmem:[%s3 + $0x10] sm:$0xff] %vm92, %v78
  %96 = vst.msk [vmem:[%s3 + $0x18] sm:$0xff] %vm92, %v79
  %97 = vst.msk [vmem:[%s3 + $0x20] sm:$0xff] %vm92, %v80
  %98 = vst.msk [vmem:[%s3 + $0x28] sm:$0xff] %vm92, %v81
  %99 = vst.msk [vmem:[%s3 + $0x30] sm:$0xff] %vm92, %v82
  %100 = vst.msk [vmem:[%s3 + $0x38] sm:$0xff] %vm92, %v83
  %101 = vst.msk [vmem:[%s3 + $0x40] sm:$0xff] %vm92, %v84
  %102 = vst.msk [vmem:[%s3 + $0x48] sm:$0xff] %vm92, %v85
  %103 = vst.msk [vmem:[%s3 + $0x50] sm:$0xff] %vm92, %v86
  %104 = vst.msk [vmem:[%s3 + $0x58] sm:$0xff] %vm92, %v87
  %105 = vst.msk [vmem:[%s3 + $0x60] sm:$0xff] %vm92, %v88
  %106 = vst.msk [vmem:[%s3 + $0x68] sm:$0xff] %vm92, %v89
  %107 = vst.msk [vmem:[%s3 + $0x70] sm:$0xff] %vm92, %v90
  %108 = vst.msk [vmem:[%s3 + $0x78] sm:$0xff] %vm92, %v91
  // Predicated region
  $region14: #{forward.21} parent=0 // pred_check
    _
  $region15: #{forward.21} parent=0 // pred_check_branch
    %110 = sbr.rel (0) target = $region17
  $region16: #{forward.21} parent=0 // pred_region
    _
  $region17: #{forward.21} parent=0 // pred_fallthru
    _
  // Predicated region
  $region18: #{forward.21} parent=0 // pred_check
    _
  $region19: #{forward.21} parent=0 // pred_check_branch
    %112 = sbr.rel (0) target = $region21
  $region20: #{forward.21} parent=0 // pred_region
    _
  $region21: #{forward.21} parent=0 // pred_fallthru
    _

// kernel: forward.24
$region0: #{forward.24}
  #allocation0 [shape = 'u32[]', space=smem, size = 0x4, offset = 0x4, fixed_abs, tag = 'smem constant byte address 0x4 - core index']
  #allocation1 [shape = 'u32[144,128]{1,0:T(1,128)}', space=vmem, size = 0x12000, scoped, tag = 'internal scratch']
  %s0 = inlined_call_operand.vmem [shape: f32[128,4], index: 0, kind: input, shape index: {}]
  %s1 = inlined_call_operand.vmem [shape: f32[128,4], index: 1, kind: output, shape index: {}]
  %s2 = sld [smem:[#allocation0]]
  $region37: #{forward.24} parent=0
    _
  %s4 = ssub.s32 1, %s2
  %s5 = scalar_select 0, %s4, %s2
  loop: start=0, step=1, limit=4
  $region2: #{forward.24} parent=0 // loop_pre_header
    _
  $region3: #{forward.24} parent=0 // loop_header
    %s7 = sphi 0, %s11
    %p8 = scmp.ge.s32.totalorder %s7, 4
    %s17 = sphi 0, %s19
    %s20 = sphi 0, %s17
    %s21 = sphi 0, %s20
    %s37 = sphi 0, %s21
    %s43 = sphi 0, %s45
    %s46 = sphi 0, %s43
    %s47 = sphi 0, %s46
    %s63 = sphi 0, %s47
  $region4: #{forward.24} parent=0 // loop_header_branch
    %10 = sbr.rel (%p8) target = $region8
  $region5: #{forward.24} parent=0 // loop_body
    %s12 = ssub.s32 %s7, 1
    %s13 = ssub.s32 %s7, 2
    %s14 = sadd.s32 %s7, 1
    %s15 = ssub.s32 %s7, %s14
    %p16 = scmp.eq.s32.totalorder %s15, 0
    %s18 = sadd.s32 %s17, 1
    %s19 = scalar_select %p16, %s17, %s18
    %p22 = pneg %p16
    %p23 = scmp.eq.s32.totalorder %s7, 1
    %p24 = por %p22, %p23
    %p25 = scmp.ne.s32.totalorder %s17, %s20
    %p26 = scmp.eq.s32.totalorder %s7, 0
    %p27 = por %p25, %p26
    %p28 = scmp.ne.s32.totalorder %s17, %s20
    %p29 = scmp.eq.s32.totalorder %s12, 1
    %p30 = por %p28, %p29
    %p31 = scmp.ne.s32.totalorder %s20, %s21
    %p32 = scmp.eq.s32.totalorder %s12, 0
    %p33 = por %p31, %p32
    %p34 = scmp.ne.s32.totalorder %s20, %s21
    %p35 = scmp.eq.s32.totalorder %s13, 1
    %p36 = por %p34, %p35
    %p38 = scmp.ne.s32.totalorder %s21, %s37
    %p39 = scmp.eq.s32.totalorder %s13, 0
    %p40 = por %p38, %p39
    %s41 = ssub.s32 %s7, %s14
    %p42 = scmp.eq.s32.totalorder %s41, 0
    %s44 = sadd.s32 %s43, 1
    %s45 = scalar_select %p42, %s43, %s44
    %p48 = pneg %p42
    %p49 = scmp.eq.s32.totalorder %s7, 1
    %p50 = por %p48, %p49
    %p51 = scmp.ne.s32.totalorder %s43, %s46
    %p52 = scmp.eq.s32.totalorder %s7, 0
    %p53 = por %p51, %p52
    %p54 = scmp.ne.s32.totalorder %s43, %s46
    %p55 = scmp.eq.s32.totalorder %s12, 1
    %p56 = por %p54, %p55
    %p57 = scmp.ne.s32.totalorder %s46, %s47
    %p58 = scmp.eq.s32.totalorder %s12, 0
    %p59 = por %p57, %p58
    %p60 = scmp.ne.s32.totalorder %s46, %s47
    %p61 = scmp.eq.s32.totalorder %s13, 1
    %p62 = por %p60, %p61
    %p64 = scmp.ne.s32.totalorder %s47, %s63
    %p65 = scmp.eq.s32.totalorder %s13, 0
    %p66 = por %p64, %p65
    %p67 = scmp.le.s32.totalorder 1, %s7
    %p68 = scmp.lt.s32.totalorder %s7, 3
    %p69 = pnand %p67, %p68
    %p70 = pneg %p69
    // Predicated region
    $region9: #{forward.24} parent=5 // pred_check
      _
    $region10: #{forward.24} parent=5 // pred_check_branch
      %72 = sbr.rel (%p69) target = $region12
    $region11: #{forward.24} parent=5 // pred_region
      %s73 = ssub.s32 %s7, 1
    $region12: #{forward.24} parent=5 // pred_fallthru
      _
    %p74 = scmp.lt.s32.totalorder %s7, 2
    // Predicated region
    $region13: #{forward.24} parent=5 // pred_check
      %p75 = pneg %p74
    $region14: #{forward.24} parent=5 // pred_check_branch
      %77 = sbr.rel (%p75) target = $region16
    $region15: #{forward.24} parent=5 // pred_region
      // Predicated region
      $region17: #{forward.24} parent=15 // pred_check
        %p78 = pneg %p27
      $region18: #{forward.24} parent=15 // pred_check_branch
        %80 = sbr.rel (%p78) target = $region20
      $region19: #{forward.24} parent=15 // pred_region
        %s81 = smul.u32 8, %s7
        %p82 = scmp.lt.s32.totalorder %s81, 15
        %s83 = scalar_select %p82, %s81, 15
        %s84 = smul.addr %s83, 8
        %s85 = scalar_lea.vmem %s0, %s84
        %s86 = smul.u32 8, %s7
      $region20: #{forward.24} parent=15 // pred_fallthru
        _
    $region16: #{forward.24} parent=5 // pred_fallthru
      _
    %p87 = scmp.le.s32.totalorder 1, %s7
    %p88 = scmp.lt.s32.totalorder %s7, 3
    %p89 = pnand %p87, %p88
    %p90 = pneg %p89
    // Predicated region
    $region21: #{forward.24} parent=5 // pred_check
      _
    $region22: #{forward.24} parent=5 // pred_check_branch
      %92 = sbr.rel (%p89) target = $region24
    $region23: #{forward.24} parent=5 // pred_region
      %s93 = ssub.s32 %s7, 1
      %s94 = smul.u32 8, %s12
      %p95 = scmp.lt.s32.totalorder %s94, 15
      %s96 = scalar_select %p95, %s94, 15
      %s97 = smul.addr %s96, 8
      %s98 = scalar_lea.vmem %s0, %s97
      %p99 = pneg %p33
      %p100 = pneg %p30
      %p101 = pneg %p59
      %p102 = pneg %p56
      %s103 = smul.u32 8, %s12
      %p104 = scmp.lt.s32.totalorder %s103, 15
      %s105 = scalar_select %p104, %s103, 15
      %s106 = smul.addr %s105, 8
      %s107 = scalar_lea.vmem %s1, %s106
      %s108 = smul.u32 8, %s12
      %p109 = scmp.lt.s32.totalorder %s108, 15
      %s110 = scalar_select %p109, %s108, 15
      %s111 = smul.addr %s110, 8
      %s112 = scalar_lea.vmem %s0, %s111
      %s113 = smul.u32 8, %s12
      %s114 = smul.u32 8, %s12
      %p115 = scmp.lt.s32.totalorder %s114, 15
      %s116 = scalar_select %p115, %s114, 15
      %s117 = smul.addr %s116, 8
      %s118 = scalar_lea.vmem %s1, %s117
      %s119 = smul.u32 8, %s12
      %v120 = vld [vmem:[%s112] sm:$0xff]
      %v121 = vld [vmem:[%s112 + $0x8] sm:$0xff]
      %v122 = vld [vmem:[%s112 + $0x10] sm:$0xff]
      %v123 = vld [vmem:[%s112 + $0x18] sm:$0xff]
      %v124 = vld [vmem:[%s112 + $0x20] sm:$0xff]
      %v125 = vld [vmem:[%s112 + $0x28] sm:$0xff]
      %v126 = vld [vmem:[%s112 + $0x30] sm:$0xff]
      %v127 = vld [vmem:[%s112 + $0x38] sm:$0xff]
      %vm128 = vcmask 31744
      %v129 = vsel %vm128, %v120, 0.0
      %v130 = vsel %vm128, %v121, 0.0
      %v131 = vadd.f32 %v129, %v130
      %v132 = vsel %vm128, %v122, 0.0
      %v133 = vadd.f32 %v131, %v132
      %v134 = vsel %vm128, %v123, 0.0
      %v135 = vadd.f32 %v133, %v134
      %v136 = vsel %vm128, %v124, 0.0
      %v137 = vadd.f32 %v135, %v136
      %v138 = vsel %vm128, %v125, 0.0
      %v139 = vadd.f32 %v137, %v138
      %v140 = vsel %vm128, %v126, 0.0
      %v141 = vadd.f32 %v139, %v140
      %v142 = vsel %vm128, %v127, 0.0
      %v143 = vadd.f32 %v141, %v142
      %v144 = vrot.slane %v143, 4
      %v145 = vadd.f32 %v143, %v144
      %v146 = vrot.slane %v145, 2
      %v147 = vadd.f32 %v145, %v146
      %v148 = vrot.slane %v147, 1
      %v149 = vadd.f32 %v147, %v148
      %v150 = vrcp.pop 64.0
      %v151 = vmul.f32 %v149, %v150
      %v152 = vsub.f32 %v120, %v151
      %v153 = vsub.f32 %v121, %v151
      %v154 = vsub.f32 %v122, %v151
      %v155 = vsub.f32 %v123, %v151
      %v156 = vsub.f32 %v124, %v151
      %v157 = vsub.f32 %v125, %v151
      %v158 = vsub.f32 %v126, %v151
      %v159 = vsub.f32 %v127, %v151
      %v160 = vmul.f32 %v152, %v152
      %v161 = vmul.f32 %v153, %v153
      %v162 = vmul.f32 %v154, %v154
      %v163 = vmul.f32 %v155, %v155
      %v164 = vmul.f32 %v156, %v156
      %v165 = vmul.f32 %v157, %v157
      %v166 = vmul.f32 %v158, %v158
      %v167 = vmul.f32 %v159, %v159
      %v168 = vsel %vm128, %v160, 0.0
      %v169 = vsel %vm128, %v161, 0.0
      %v170 = vadd.f32 %v168, %v169
      %v171 = vsel %vm128, %v162, 0.0
      %v172 = vadd.f32 %v170, %v171
      %v173 = vsel %vm128, %v163, 0.0
      %v174 = vadd.f32 %v172, %v173
      %v175 = vsel %vm128, %v164, 0.0
      %v176 = vadd.f32 %v174, %v175
      %v177 = vsel %vm128, %v165, 0.0
      %v178 = vadd.f32 %v176, %v177
      %v179 = vsel %vm128, %v166, 0.0
      %v180 = vadd.f32 %v178, %v179
      %v181 = vsel %vm128, %v167, 0.0
      %v182 = vadd.f32 %v180, %v181
      %v183 = vrot.slane %v182, 4
      %v184 = vadd.f32 %v182, %v183
      %v185 = vrot.slane %v184, 2
      %v186 = vadd.f32 %v184, %v185
      %v187 = vrot.slane %v186, 1
      %v188 = vadd.f32 %v186, %v187
      %v189 = vmul.f32 %v188, %v150
      %v190 = vadd.f32 %v189, 1e-05
      %v191 = vrsqrt.pop %v190
      %v192 = vmul.f32 %v152, %v191
      %v193 = vmul.f32 %v153, %v191
      %v194 = vmul.f32 %v154, %v191
      %v195 = vmul.f32 %v155, %v191
      %v196 = vmul.f32 %v156, %v191
      %v197 = vmul.f32 %v157, %v191
      %v198 = vmul.f32 %v158, %v191
      %v199 = vmul.f32 %v159, %v191
      %v200 = vmax.f32 %v192, 0.0
      %v201 = vmax.f32 %v193, 0.0
      %v202 = vmax.f32 %v194, 0.0
      %v203 = vmax.f32 %v195, 0.0
      %v204 = vmax.f32 %v196, 0.0
      %v205 = vmax.f32 %v197, 0.0
      %v206 = vmax.f32 %v198, 0.0
      %v207 = vmax.f32 %v199, 0.0
      %208 = vst.msk [vmem:[%s118] sm:$0xff] %vm128, %v200
      %209 = vst.msk [vmem:[%s118 + $0x8] sm:$0xff] %vm128, %v201
      %210 = vst.msk [vmem:[%s118 + $0x10] sm:$0xff] %vm128, %v202
      %211 = vst.msk [vmem:[%s118 + $0x18] sm:$0xff] %vm128, %v203
      %212 = vst.msk [vmem:[%s118 + $0x20] sm:$0xff] %vm128, %v204
      %213 = vst.msk [vmem:[%s118 + $0x28] sm:$0xff] %vm128, %v205
      %214 = vst.msk [vmem:[%s118 + $0x30] sm:$0xff] %vm128, %v206
      %215 = vst.msk [vmem:[%s118 + $0x38] sm:$0xff] %vm128, %v207
      %s216 = smul.u32 8, %s12
      %p217 = scmp.lt.s32.totalorder %s216, 15
      %s218 = scalar_select %p217, %s216, 15
      %s219 = smul.addr %s218, 8
      %s220 = scalar_lea.vmem %s1, %s219
      // Predicated region
      $region25: #{forward.24} parent=23 // pred_check
        %p221 = pneg %p56
      $region26: #{forward.24} parent=23 // pred_check_branch
        %223 = sbr.rel (%p221) target = $region28
      $region27: #{forward.24} parent=23 // pred_region
        %s224 = smul.u32 8, %s12
      $region28: #{forward.24} parent=23 // pred_fallthru
        _
    $region24: #{forward.24} parent=5 // pred_fallthru
      _
    %p225 = scmp.le.s32.totalorder 2, %s7
    // Predicated region
    $region29: #{forward.24} parent=5 // pred_check
      %p226 = pneg %p225
    $region30: #{forward.24} parent=5 // pred_check_branch
      %228 = sbr.rel (%p226) target = $region32
    $region31: #{forward.24} parent=5 // pred_region
      %s229 = ssub.s32 %s7, 2
      // Predicated region
      $region33: #{forward.24} parent=31 // pred_check
        %p230 = pneg %p62
      $region34: #{forward.24} parent=31 // pred_check_branch
        %232 = sbr.rel (%p230) target = $region36
      $region35: #{forward.24} parent=31 // pred_region
        %s233 = smul.u32 8, %s13
        %p234 = scmp.lt.s32.totalorder %s233, 15
        %s235 = scalar_select %p234, %s233, 15
        %s236 = smul.addr %s235, 8
        %s237 = scalar_lea.vmem %s1, %s236
      $region36: #{forward.24} parent=31 // pred_fallthru
        _
    $region32: #{forward.24} parent=5 // pred_fallthru
      _
  $region6: #{forward.24} parent=0 // loop_footer
    %s11 = sadd.s32 1, %s7
  $region7: #{forward.24} parent=0 // loop_footer_branch
    %6 = sbr.rel target = $region3
  $region8: #{forward.24} parent=0 // loop_exit
    _

// kernel: forward.22
$region0: #{forward.22}
  #allocation0 [shape = 'u32[]', space=smem, size = 0x4, offset = 0x4, fixed_abs, tag = 'smem constant byte address 0x4 - core index']
  #allocation1 [shape = 'u32[144,128]{1,0:T(1,128)}', space=vmem, size = 0x12000, scoped, tag = 'internal scratch']
  %s0 = inlined_call_operand.vmem [shape: f32[2,64,128], index: 0, kind: input, shape index: {}]
  %s1 = inlined_call_operand.vmem [shape: f32[2,128,64], index: 1, kind: input, shape index: {}]
  %s2 = inlined_call_operand.vmem [shape: f32[2,1,64], index: 2, kind: input, shape index: {}]
  %s3 = inlined_call_operand.vmem [shape: f32[2,1,64], index: 3, kind: input, shape index: {}]
  %s4 = inlined_call_operand.vmem [shape: f32[2,576,4], index: 4, kind: input, shape index: {}]
  %s5 = inlined_call_operand.vmem [shape: f32[2,64,1], index: 5, kind: input, shape index: {}]
  %s6 = inlined_call_operand.vmem [shape: f32[2,64,4], index: 6, kind: input, shape index: {}]
  %s7 = inlined_call_operand.vmem [shape: f32[2,64,4], index: 7, kind: output, shape index: {}]
  %s8 = sld [smem:[#allocation0]]
  $region61: #{forward.22} parent=0
    _
  %s10 = ssub.s32 1, %s8
  %s11 = scalar_select 0, %s10, %s8
  loop: start=0, step=1, limit=4
  $region2: #{forward.22} parent=0 // loop_pre_header
    _
  $region3: #{forward.22} parent=0 // loop_header
    %s13 = sphi 0, %s17
    %p14 = scmp.ge.s32.totalorder %s13, 4
    %s23 = sphi 0, %s25
    %s26 = sphi 0, %s23
    %s27 = sphi 0, %s26
    %s43 = sphi 0, %s27
    %s49 = sphi 0, %s51
    %s52 = sphi 0, %s49
    %s53 = sphi 0, %s52
    %s69 = sphi 0, %s53
    %s75 = sphi 0, %s77
    %s78 = sphi 0, %s75
    %s79 = sphi 0, %s78
    %s95 = sphi 0, %s79
    %s101 = sphi 0, %s103
    %s104 = sphi 0, %s101
    %s105 = sphi 0, %s104
    %s121 = sphi 0, %s105
    %s127 = sphi 0, %s129
    %s130 = sphi 0, %s127
    %s131 = sphi 0, %s130
    %s147 = sphi 0, %s131
    %s151 = sphi 0, %s151
    %s153 = sphi 0, %s151
    %s154 = sphi 0, %s153
    %s168 = sphi 0, %s154
    %s174 = sphi 0, %s176
    %s177 = sphi 0, %s174
    %s178 = sphi 0, %s177
    %s194 = sphi 0, %s178
    %s200 = sphi 0, %s202
    %s203 = sphi 0, %s200
    %s204 = sphi 0, %s203
    %s220 = sphi 0, %s204
  $region4: #{forward.22} parent=0 // loop_header_branch
    %16 = sbr.rel (%p14) target = $region8
  $region5: #{forward.22} parent=0 // loop_body
    %s18 = ssub.s32 %s13, 1
    %s19 = ssub.s32 %s13, 2
    %s20 = sadd.s32 %s13, 1
    %s21 = ssub.s32 %s13, %s20
    %p22 = scmp.eq.s32.totalorder %s21, 0
    %s24 = sadd.s32 %s23, 1
    %s25 = scalar_select %p22, %s23, %s24
    %p28 = pneg %p22
    %p29 = scmp.eq.s32.totalorder %s13, 1
    %p30 = por %p28, %p29
    %p31 = scmp.ne.s32.totalorder %s23, %s26
    %p32 = scmp.eq.s32.totalorder %s13, 0
    %p33 = por %p31, %p32
    %p34 = scmp.ne.s32.totalorder %s23, %s26
    %p35 = scmp.eq.s32.totalorder %s18, 1
    %p36 = por %p34, %p35
    %p37 = scmp.ne.s32.totalorder %s26, %s27
    %p38 = scmp.eq.s32.totalorder %s18, 0
    %p39 = por %p37, %p38
    %p40 = scmp.ne.s32.totalorder %s26, %s27
    %p41 = scmp.eq.s32.totalorder %s19, 1
    %p42 = por %p40, %p41
    %p44 = scmp.ne.s32.totalorder %s27, %s43
    %p45 = scmp.eq.s32.totalorder %s19, 0
    %p46 = por %p44, %p45
    %s47 = ssub.s32 %s13, %s20
    %p48 = scmp.eq.s32.totalorder %s47, 0
    %s50 = sadd.s32 %s49, 1
    %s51 = scalar_select %p48, %s49, %s50
    %p54 = pneg %p48
    %p55 = scmp.eq.s32.totalorder %s13, 1
    %p56 = por %p54, %p55
    %p57 = scmp.ne.s32.totalorder %s49, %s52
    %p58 = scmp.eq.s32.totalorder %s13, 0
    %p59 = por %p57, %p58
    %p60 = scmp.ne.s32.totalorder %s49, %s52
    %p61 = scmp.eq.s32.totalorder %s18, 1
    %p62 = por %p60, %p61
    %p63 = scmp.ne.s32.totalorder %s52, %s53
    %p64 = scmp.eq.s32.totalorder %s18, 0
    %p65 = por %p63, %p64
    %p66 = scmp.ne.s32.totalorder %s52, %s53
    %p67 = scmp.eq.s32.totalorder %s19, 1
    %p68 = por %p66, %p67
    %p70 = scmp.ne.s32.totalorder %s53, %s69
    %p71 = scmp.eq.s32.totalorder %s19, 0
    %p72 = por %p70, %p71
    %s73 = ssub.s32 %s13, %s20
    %p74 = scmp.eq.s32.totalorder %s73, 0
    %s76 = sadd.s32 %s75, 1
    %s77 = scalar_select %p74, %s75, %s76
    %p80 = pneg %p74
    %p81 = scmp.eq.s32.totalorder %s13, 1
    %p82 = por %p80, %p81
    %p83 = scmp.ne.s32.totalorder %s75, %s78
    %p84 = scmp.eq.s32.totalorder %s13, 0
    %p85 = por %p83, %p84
    %p86 = scmp.ne.s32.totalorder %s75, %s78
    %p87 = scmp.eq.s32.totalorder %s18, 1
    %p88 = por %p86, %p87
    %p89 = scmp.ne.s32.totalorder %s78, %s79
    %p90 = scmp.eq.s32.totalorder %s18, 0
    %p91 = por %p89, %p90
    %p92 = scmp.ne.s32.totalorder %s78, %s79
    %p93 = scmp.eq.s32.totalorder %s19, 1
    %p94 = por %p92, %p93
    %p96 = scmp.ne.s32.totalorder %s79, %s95
    %p97 = scmp.eq.s32.totalorder %s19, 0
    %p98 = por %p96, %p97
    %s99 = ssub.s32 %s13, %s20
    %p100 = scmp.eq.s32.totalorder %s99, 0
    %s102 = sadd.s32 %s101, 1
    %s103 = scalar_select %p100, %s101, %s102
    %p106 = pneg %p100
    %p107 = scmp.eq.s32.totalorder %s13, 1
    %p108 = por %p106, %p107
    %p109 = scmp.ne.s32.totalorder %s101, %s104
    %p110 = scmp.eq.s32.totalorder %s13, 0
    %p111 = por %p109, %p110
    %p112 = scmp.ne.s32.totalorder %s101, %s104
    %p113 = scmp.eq.s32.totalorder %s18, 1
    %p114 = por %p112, %p113
    %p115 = scmp.ne.s32.totalorder %s104, %s105
    %p116 = scmp.eq.s32.totalorder %s18, 0
    %p117 = por %p115, %p116
    %p118 = scmp.ne.s32.totalorder %s104, %s105
    %p119 = scmp.eq.s32.totalorder %s19, 1
    %p120 = por %p118, %p119
    %p122 = scmp.ne.s32.totalorder %s105, %s121
    %p123 = scmp.eq.s32.totalorder %s19, 0
    %p124 = por %p122, %p123
    %s125 = ssub.s32 %s13, %s20
    %p126 = scmp.eq.s32.totalorder %s125, 0
    %s128 = sadd.s32 %s127, 1
    %s129 = scalar_select %p126, %s127, %s128
    %p132 = pneg %p126
    %p133 = scmp.eq.s32.totalorder %s13, 1
    %p134 = por %p132, %p133
    %p135 = scmp.ne.s32.totalorder %s127, %s130
    %p136 = scmp.eq.s32.totalorder %s13, 0
    %p137 = por %p135, %p136
    %p138 = scmp.ne.s32.totalorder %s127, %s130
    %p139 = scmp.eq.s32.totalorder %s18, 1
    %p140 = por %p138, %p139
    %p141 = scmp.ne.s32.totalorder %s130, %s131
    %p142 = scmp.eq.s32.totalorder %s18, 0
    %p143 = por %p141, %p142
    %p144 = scmp.ne.s32.totalorder %s130, %s131
    %p145 = scmp.eq.s32.totalorder %s19, 1
    %p146 = por %p144, %p145
    %p148 = scmp.ne.s32.totalorder %s131, %s147
    %p149 = scmp.eq.s32.totalorder %s19, 0
    %p150 = por %p148, %p149
    %s152 = sadd.s32 %s151, 1
    %p155 = scmp.eq.s32.totalorder %s13, 1
    %p156 = scmp.ne.s32.totalorder %s151, %s153
    %p157 = scmp.eq.s32.totalorder %s13, 0
    %p158 = por %p156, %p157
    %p159 = scmp.ne.s32.totalorder %s151, %s153
    %p160 = scmp.eq.s32.totalorder %s18, 1
    %p161 = por %p159, %p160
    %p162 = scmp.ne.s32.totalorder %s153, %s154
    %p163 = scmp.eq.s32.totalorder %s18, 0
    %p164 = por %p162, %p163
    %p165 = scmp.ne.s32.totalorder %s153, %s154
    %p166 = scmp.eq.s32.totalorder %s19, 1
    %p167 = por %p165, %p166
    %p169 = scmp.ne.s32.totalorder %s154, %s168
    %p170 = scmp.eq.s32.totalorder %s19, 0
    %p171 = por %p169, %p170
    %s172 = ssub.s32 %s13, %s20
    %p173 = scmp.eq.s32.totalorder %s172, 0
    %s175 = sadd.s32 %s174, 1
    %s176 = scalar_select %p173, %s174, %s175
    %p179 = pneg %p173
    %p180 = scmp.eq.s32.totalorder %s13, 1
    %p181 = por %p179, %p180
    %p182 = scmp.ne.s32.totalorder %s174, %s177
    %p183 = scmp.eq.s32.totalorder %s13, 0
    %p184 = por %p182, %p183
    %p185 = scmp.ne.s32.totalorder %s174, %s177
    %p186 = scmp.eq.s32.totalorder %s18, 1
    %p187 = por %p185, %p186
    %p188 = scmp.ne.s32.totalorder %s177, %s178
    %p189 = scmp.eq.s32.totalorder %s18, 0
    %p190 = por %p188, %p189
    %p191 = scmp.ne.s32.totalorder %s177, %s178
    %p192 = scmp.eq.s32.totalorder %s19, 1
    %p193 = por %p191, %p192
    %p195 = scmp.ne.s32.totalorder %s178, %s194
    %p196 = scmp.eq.s32.totalorder %s19, 0
    %p197 = por %p195, %p196
    %s198 = ssub.s32 %s13, %s20
    %p199 = scmp.eq.s32.totalorder %s198, 0
    %s201 = sadd.s32 %s200, 1
    %s202 = scalar_select %p199, %s200, %s201
    %p205 = pneg %p199
    %p206 = scmp.eq.s32.totalorder %s13, 1
    %p207 = por %p205, %p206
    %p208 = scmp.ne.s32.totalorder %s200, %s203
    %p209 = scmp.eq.s32.totalorder %s13, 0
    %p210 = por %p208, %p209
    %p211 = scmp.ne.s32.totalorder %s200, %s203
    %p212 = scmp.eq.s32.totalorder %s18, 1
    %p213 = por %p211, %p212
    %p214 = scmp.ne.s32.totalorder %s203, %s204
    %p215 = scmp.eq.s32.totalorder %s18, 0
    %p216 = por %p214, %p215
    %p217 = scmp.ne.s32.totalorder %s203, %s204
    %p218 = scmp.eq.s32.totalorder %s19, 1
    %p219 = por %p217, %p218
    %p221 = scmp.ne.s32.totalorder %s204, %s220
    %p222 = scmp.eq.s32.totalorder %s19, 0
    %p223 = por %p221, %p222
    %p224 = scmp.le.s32.totalorder 1, %s13
    %p225 = scmp.lt.s32.totalorder %s13, 3
    %p226 = pnand %p224, %p225
    %p227 = pneg %p226
    // Predicated region
    $region9: #{forward.22} parent=5 // pred_check
      _
    $region10: #{forward.22} parent=5 // pred_check_branch
      %229 = sbr.rel (%p226) target = $region12
    $region11: #{forward.22} parent=5 // pred_region
      %s230 = ssub.s32 %s13, 1
      // Predicated region
      $region13: #{forward.22} parent=11 // pred_check
        %p231 = pneg %p164
      $region14: #{forward.22} parent=11 // pred_check_branch
        %233 = sbr.rel (%p231) target = $region16
      $region15: #{forward.22} parent=11 // pred_region
        _
      $region16: #{forward.22} parent=11 // pred_fallthru
        _
    $region12: #{forward.22} parent=5 // pred_fallthru
      _
    %p234 = scmp.lt.s32.totalorder %s13, 2
    // Predicated region
    $region17: #{forward.22} parent=5 // pred_check
      %p235 = pneg %p234
    $region18: #{forward.22} parent=5 // pred_check_branch
      %237 = sbr.rel (%p235) target = $region20
    $region19: #{forward.22} parent=5 // pred_region
      // Predicated region
      $region21: #{forward.22} parent=19 // pred_check
        %p238 = pneg %p33
      $region22: #{forward.22} parent=19 // pred_check_branch
        %240 = sbr.rel (%p238) target = $region24
      $region23: #{forward.22} parent=19 // pred_region
        %p241 = scmp.lt.s32.totalorder %s13, 1
        %s242 = scalar_select %p241, %s13, 1
        %s243 = smul.addr %s242, 8
        %s244 = smul.addr %s243, 8
        %s245 = scalar_lea.vmem %s0, %s244
      $region24: #{forward.22} parent=19 // pred_fallthru
        _
      // Predicated region
      $region25: #{forward.22} parent=19 // pred_check
        %p246 = pneg %p59
      $region26: #{forward.22} parent=19 // pred_check_branch
        %248 = sbr.rel (%p246) target = $region28
      $region27: #{forward.22} parent=19 // pred_region
        %p249 = scmp.lt.s32.totalorder %s13, 1
        %s250 = scalar_select %p249, %s13, 1
        %s251 = smul.addr %s250, 16
        %s252 = smul.addr %s251, 8
        %s253 = scalar_lea.vmem %s1, %s252
      $region28: #{forward.22} parent=19 // pred_fallthru
        _
      // Predicated region
      $region29: #{forward.22} parent=19 // pred_check
        %p254 = pneg %p85
      $region30: #{forward.22} parent=19 // pred_check_branch
        %256 = sbr.rel (%p254) target = $region32
      $region31: #{forward.22} parent=19 // pred_region
        %p257 = scmp.lt.s32.totalorder %s13, 1
        %s258 = scalar_select %p257, %s13, 1
        %s259 = scalar_lea.vmem %s2, %s258
      $region32: #{forward.22} parent=19 // pred_fallthru
        _
      // Predicated region
      $region33: #{forward.22} parent=19 // pred_check
        %p260 = pneg %p111
      $region34: #{forward.22} parent=19 // pred_check_branch
        %262 = sbr.rel (%p260) target = $region36
      $region35: #{forward.22} parent=19 // pred_region
        %p263 = scmp.lt.s32.totalorder %s13, 1
        %s264 = scalar_select %p263, %s13, 1
        %s265 = scalar_lea.vmem %s3, %s264
      $region36: #{forward.22} parent=19 // pred_fallthru
        _
      // Predicated region
      $region37: #{forward.22} parent=19 // pred_check
        %p266 = pneg %p137
      $region38: #{forward.22} parent=19 // pred_check_branch
        %268 = sbr.rel (%p266) target = $region40
      $region39: #{forward.22} parent=19 // pred_region
        %p269 = scmp.lt.s32.totalorder %s13, 1
        %s270 = scalar_select %p269, %s13, 1
        %s271 = smul.addr %s270, 72
        %s272 = smul.addr %s271, 8
        %s273 = scalar_lea.vmem %s4, %s272
      $region40: #{forward.22} parent=19 // pred_fallthru
        _
      // Predicated region
      $region41: #{forward.22} parent=19 // pred_check
        %p274 = pneg %p184
      $region42: #{forward.22} parent=19 // pred_check_branch
        %276 = sbr.rel (%p274) target = $region44
      $region43: #{forward.22} parent=19 // pred_region
        %p277 = scmp.lt.s32.totalorder %s13, 1
        %s278 = scalar_select %p277, %s13, 1
        %s279 = smul.addr %s278, 8
        %s280 = smul.addr %s279, 8
        %s281 = scalar_lea.vmem %s6, %s280
      $region44: #{forward.22} parent=19 // pred_fallthru
        _
    $region20: #{forward.22} parent=5 // pred_fallthru
      _
    %p282 = scmp.le.s32.totalorder 1, %s13
    %p283 = scmp.lt.s32.totalorder %s13, 3
    %p284 = pnand %p282, %p283
    %p285 = pneg %p284
    // Predicated region
    $region45: #{forward.22} parent=5 // pred_check
      _
    $region46: #{forward.22} parent=5 // pred_check_branch
      %287 = sbr.rel (%p284) target = $region48
    $region47: #{forward.22} parent=5 // pred_region
      %s288 = ssub.s32 %s13, 1
      %p289 = scmp.lt.s32.totalorder %s18, 1
      %s290 = scalar_select %p289, %s18, 1
      %s291 = smul.addr %s290, 8
      %s292 = smul.addr %s291, 8
      %s293 = scalar_lea.vmem %s0, %s292
      %p294 = pneg %p39
      %p295 = pneg %p36
      %p296 = scmp.lt.s32.totalorder %s18, 1
      %s297 = scalar_select %p296, %s18, 1
      %s298 = smul.addr %s297, 16
      %s299 = smul.addr %s298, 8
      %s300 = scalar_lea.vmem %s1, %s299
      %p301 = pneg %p65
      %p302 = pneg %p62
      %p303 = scmp.lt.s32.totalorder %s18, 1
      %s304 = scalar_select %p303, %s18, 1
      %s305 = scalar_lea.vmem %s2, %s304
      %p306 = pneg %p91
      %p307 = pneg %p88
      %p308 = scmp.lt.s32.totalorder %s18, 1
      %s309 = scalar_select %p308, %s18, 1
      %s310 = scalar_lea.vmem %s3, %s309
      %p311 = pneg %p117
      %p312 = pneg %p114
      %p313 = scmp.lt.s32.totalorder %s18, 1
      %s314 = scalar_select %p313, %s18, 1
      %s315 = smul.addr %s314, 72
      %s316 = smul.addr %s315, 8
      %s317 = scalar_lea.vmem %s4, %s316
      %p318 = pneg %p143
      %p319 = pneg %p140
      %p320 = pneg %p164
      %p321 = pneg %p161
      %p322 = scmp.lt.s32.totalorder %s18, 1
      %s323 = scalar_select %p322, %s18, 1
      %s324 = smul.addr %s323, 8
      %s325 = smul.addr %s324, 8
      %s326 = scalar_lea.vmem %s6, %s325
      %p327 = pneg %p190
      %p328 = pneg %p187
      %p329 = pneg %p216
      %p330 = pneg %p213
      %p331 = scmp.lt.s32.totalorder %s18, 1
      %s332 = scalar_select %p331, %s18, 1
      %s333 = smul.addr %s332, 8
      %s334 = smul.addr %s333, 8
      %s335 = scalar_lea.vmem %s7, %s334
      %p336 = scmp.lt.s32.totalorder %s18, 1
      %s337 = scalar_select %p336, %s18, 1
      %s338 = smul.addr %s337, 8
      %s339 = smul.addr %s338, 8
      %s340 = scalar_lea.vmem %s0, %s339
      %p341 = scmp.lt.s32.totalorder %s18, 1
      %s342 = scalar_select %p341, %s18, 1
      %s343 = smul.addr %s342, 16
      %s344 = smul.addr %s343, 8
      %s345 = scalar_lea.vmem %s1, %s344
      %p346 = scmp.lt.s32.totalorder %s18, 1
      %s347 = scalar_select %p346, %s18, 1
      %s348 = scalar_lea.vmem %s2, %s347
      %p349 = scmp.lt.s32.totalorder %s18, 1
      %s350 = scalar_select %p349, %s18, 1
      %s351 = scalar_lea.vmem %s3, %s350
      %p352 = scmp.lt.s32.totalorder %s18, 1
      %s353 = scalar_select %p352, %s18, 1
      %s354 = smul.addr %s353, 72
      %s355 = smul.addr %s354, 8
      %s356 = scalar_lea.vmem %s4, %s355
      %p357 = scmp.lt.s32.totalorder %s18, 1
      %s358 = scalar_select %p357, %s18, 1
      %s359 = smul.addr %s358, 8
      %s360 = smul.addr %s359, 8
      %s361 = scalar_lea.vmem %s6, %s360
      %p362 = scmp.lt.s32.totalorder %s18, 1
      %s363 = scalar_select %p362, %s18, 1
      %s364 = smul.addr %s363, 8
      %s365 = smul.addr %s364, 8
      %s366 = scalar_lea.vmem %s7, %s365
      %v367 = vld [vmem:[%s340] sm:$0xff]
      %v368 = vld [vmem:[%s340 + $0x8] sm:$0xff]
      %v369 = vld [vmem:[%s340 + $0x10] sm:$0xff]
      %v370 = vld [vmem:[%s340 + $0x18] sm:$0xff]
      %v371 = vld [vmem:[%s340 + $0x20] sm:$0xff]
      %v372 = vld [vmem:[%s340 + $0x28] sm:$0xff]
      %v373 = vld [vmem:[%s340 + $0x30] sm:$0xff]
      %v374 = vld [vmem:[%s340 + $0x38] sm:$0xff]
      %v375 = vld [vmem:[%s345] sm:$0xff]
      %v376 = vld [vmem:[%s345 + $0x8] sm:$0xff]
      %v377 = vld [vmem:[%s345 + $0x10] sm:$0xff]
      %v378 = vld [vmem:[%s345 + $0x18] sm:$0xff]
      %v379 = vld [vmem:[%s345 + $0x20] sm:$0xff]
      %v380 = vld [vmem:[%s345 + $0x28] sm:$0xff]
      %v381 = vld [vmem:[%s345 + $0x30] sm:$0xff]
      %v382 = vld [vmem:[%s345 + $0x38] sm:$0xff]
      %v383 = vld [vmem:[%s345 + $0x40] sm:$0xff]
      %v384 = vld [vmem:[%s345 + $0x48] sm:$0xff]
      %v385 = vld [vmem:[%s345 + $0x50] sm:$0xff]
      %v386 = vld [vmem:[%s345 + $0x58] sm:$0xff]
      %v387 = vld [vmem:[%s345 + $0x60] sm:$0xff]
      %v388 = vld [vmem:[%s345 + $0x68] sm:$0xff]
      %v389 = vld [vmem:[%s345 + $0x70] sm:$0xff]
      %v390 = vld [vmem:[%s345 + $0x78] sm:$0xff]
      %391 = vmatprep.subr.mxu0 0.0
      %392 = vmatpush1.msra.mxu0 %v375
      %393 = vmatprep.subr.mxu0 0.0
      %394 = vmatpush1.msra.mxu0 %v376
      %395 = vmatprep.subr.mxu0 0.0
      %396 = vmatpush1.msra.mxu0 %v377
      %397 = vmatprep.subr.mxu0 0.0
      %398 = vmatpush1.msra.mxu0 %v378
      %399 = vmatprep.subr.mxu0 0.0
      %400 = vmatpush1.msra.mxu0 %v379
      %401 = vmatprep.subr.mxu0 0.0
      %402 = vmatpush1.msra.mxu0 %v380
      %403 = vmatprep.subr.mxu0 0.0
      %404 = vmatpush1.msra.mxu0 %v381
      %405 = vmatprep.subr.mxu0 0.0
      %406 = vmatpush1.msra.mxu0 %v382
      %407 = vmatprep.subr.mxu0 0.0
      %408 = vmatpush1.msra.mxu0 %v383
      %409 = vmatprep.subr.mxu0 0.0
      %410 = vmatpush1.msra.mxu0 %v384
      %411 = vmatprep.subr.mxu0 0.0
      %412 = vmatpush1.msra.mxu0 %v385
      %413 = vmatprep.subr.mxu0 0.0
      %414 = vmatpush1.msra.mxu0 %v386
      %415 = vmatprep.subr.mxu0 0.0
      %416 = vmatpush1.msra.mxu0 %v387
      %417 = vmatprep.subr.mxu0 0.0
      %418 = vmatpush1.msra.mxu0 %v388
      %419 = vmatprep.subr.mxu0 0.0
      %420 = vmatpush1.msra.mxu0 %v389
      %421 = vmatprep.subr.mxu0 0.0
      %422 = vmatpush1.msra.mxu0 %v390
      %423 = vmatprep.subr.mxu0 0.0
      %424 = vmatpush1.msra.mxu0 0.0
      %425 = vmatprep.subr.mxu0 0.0
      %426 = vmatpush1.msra.mxu0 0.0
      %427 = vmatprep.subr.mxu0 0.0
      %428 = vmatpush1.msra.mxu0 0.0
      %429 = vmatprep.subr.mxu0 0.0
      %430 = vmatpush1.msra.mxu0 0.0
      %431 = vmatprep.subr.mxu0 0.0
      %432 = vmatpush1.msra.mxu0 0.0
      %433 = vmatprep.subr.mxu0 0.0
      %434 = vmatpush1.msra.mxu0 0.0
      %435 = vmatprep.subr.mxu0 0.0
      %436 = vmatpush1.msra.mxu0 0.0
      %437 = vmatprep.subr.mxu0 0.0
      %438 = vmatpush1.msra.mxu0 0.0
      %439 = vmatprep.subr.mxu0 0.0
      %440 = vmatpush1.msra.mxu0 0.0
      %441 = vmatprep.subr.mxu0 0.0
      %442 = vmatpush1.msra.mxu0 0.0
      %443 = vmatprep.subr.mxu0 0.0
      %444 = vmatpush1.msra.mxu0 0.0
      %445 = vmatprep.subr.mxu0 0.0
      %446 = vmatpush1.msra.mxu0 0.0
      %447 = vmatprep.subr.mxu0 0.0
      %448 = vmatpush1.msra.mxu0 0.0
      %449 = vmatprep.subr.mxu0 0.0
      %450 = vmatpush1.msra.mxu0 0.0
      %451 = vmatprep.subr.mxu0 0.0
      %452 = vmatpush1.msra.mxu0 0.0
      %453 = vmatprep.subr.mxu0 0.0
      %454 = vmatpush1.msra.mxu0 0.0
      %455 = vmatprep.mubr.f32.mxu0 0.0
      %456 = vmatmul.mubr.f32.gmra.mrb[0].mxu0 %v367
      %v457 = vpop.f32.mrb[0].mxu0
      %v458 = vadd.f32 0.0, %v457
      %v459 = vpop.f32.mrb[0].mxu0
      %460 = vmatprep.mubr.f32.mxu0 0.0
      %461 = vmatmul.mubr.f32.gmra.mrb[0].mxu0 %v368
      %v462 = vpop.f32.mrb[0].mxu0
      %v463 = vadd.f32 0.0, %v462
      %v464 = vpop.f32.mrb[0].mxu0
      %465 = vmatprep.mubr.f32.mxu0 0.0
      %466 = vmatmul.mubr.f32.gmra.mrb[0].mxu0 %v369
      %v467 = vpop.f32.mrb[0].mxu0
      %v468 = vadd.f32 0.0, %v467
      %v469 = vpop.f32.mrb[0].mxu0
      %470 = vmatprep.mubr.f32.mxu0 0.0
      %471 = vmatmul.mubr.f32.gmra.mrb[0].mxu0 %v370
      %v472 = vpop.f32.mrb[0].mxu0
      %v473 = vadd.f32 0.0, %v472
      %v474 = vpop.f32.mrb[0].mxu0
      %475 = vmatprep.mubr.f32.mxu0 0.0
      %476 = vmatmul.mubr.f32.gmra.mrb[0].mxu0 %v371
      %v477 = vpop.f32.mrb[0].mxu0
      %v478 = vadd.f32 0.0, %v477
      %v479 = vpop.f32.mrb[0].mxu0
      %480 = vmatprep.mubr.f32.mxu0 0.0
      %481 = vmatmul.mubr.f32.gmra.mrb[0].mxu0 %v372
      %v482 = vpop.f32.mrb[0].mxu0
      %v483 = vadd.f32 0.0, %v482
      %v484 = vpop.f32.mrb[0].mxu0
      %485 = vmatprep.mubr.f32.mxu0 0.0
      %486 = vmatmul.mubr.f32.gmra.mrb[0].mxu0 %v373
      %v487 = vpop.f32.mrb[0].mxu0
      %v488 = vadd.f32 0.0, %v487
      %v489 = vpop.f32.mrb[0].mxu0
      %490 = vmatprep.mubr.f32.mxu0 0.0
      %491 = vmatmul.mubr.f32.gmra.mrb[0].mxu0 %v374
      %v492 = vpop.f32.mrb[0].mxu0
      %v493 = vadd.f32 0.0, %v492
      %v494 = vpop.f32.mrb[0].mxu0
      %495 = vdwg.mxu0
      %v496 = vld [vmem:[%s348] sm:$0x1]
      %v498 = vlaneseq
      %v499 = vshrl.u32 %v498, 7
      %v500 = vsub.s32 0, %v499
      %v501 = vrot.slane %v496, %v500
      %v503 = vmul.f32 %v458, %v501
      %v504 = vmul.f32 %v463, %v501
      %v505 = vmul.f32 %v468, %v501
      %v506 = vmul.f32 %v473, %v501
      %v507 = vmul.f32 %v478, %v501
      %v508 = vmul.f32 %v483, %v501
      %v509 = vmul.f32 %v488, %v501
      %v510 = vmul.f32 %v493, %v501
      %v511 = vlaneseq
      %v512 = vshrl.u32 %v511, 7
      %v513 = vadd.s32 %v512, 8
      %v514 = vadd.s32 %v512, 16
      %v515 = vadd.s32 %v512, 24
      %v516 = vadd.s32 %v512, 32
      %v517 = vadd.s32 %v512, 40
      %v518 = vadd.s32 %v512, 48
      %v519 = vadd.s32 %v512, 56
      %v520 = vlaneseq
      %v521 = vand.u32 %v520, 127
      %vm522 = vcmp.gt.s32.totalorder %v512, 0
      %vm523 = vcmp.gt.s32.totalorder %v513, 0
      %vm524 = vcmp.gt.s32.totalorder %v514, 0
      %vm525 = vcmp.gt.s32.totalorder %v515, 0
      %vm526 = vcmp.gt.s32.totalorder %v516, 0
      %vm527 = vcmp.gt.s32.totalorder %v517, 0
      %vm528 = vcmp.gt.s32.totalorder %v518, 0
      %vm529 = vcmp.gt.s32.totalorder %v519, 0
      %v530 = vsel %vm522, 1, 0
      %v531 = vsel %vm523, 1, 0
      %v532 = vsel %vm524, 1, 0
      %v533 = vsel %vm525, 1, 0
      %v534 = vsel %vm526, 1, 0
      %v535 = vsel %vm527, 1, 0
      %v536 = vsel %vm528, 1, 0
      %v537 = vsel %vm529, 1, 0
      %v538 = vcvt.s32.f32 %v530
      %v539 = vcvt.s32.f32 %v531
      %v540 = vcvt.s32.f32 %v532
      %v541 = vcvt.s32.f32 %v533
      %v542 = vcvt.s32.f32 %v534
      %v543 = vcvt.s32.f32 %v535
      %v544 = vcvt.s32.f32 %v536
      %v545 = vcvt.s32.f32 %v537
      %vm546 = vcmp.lt.s32.totalorder %v512, 63
      %vm547 = vcmp.lt.s32.totalorder %v513, 63
      %vm548 = vcmp.lt.s32.totalorder %v514, 63
      %vm549 = vcmp.lt.s32.totalorder %v515, 63
      %vm550 = vcmp.lt.s32.totalorder %v516, 63
      %vm551 = vcmp.lt.s32.totalorder %v517, 63
      %vm552 = vcmp.lt.s32.totalorder %v518, 63
      %vm553 = vcmp.lt.s32.totalorder %v519, 63
      %v554 = vsel %vm546, 1, 0
      %v555 = vsel %vm547, 1, 0
      %v556 = vsel %vm548, 1, 0
      %v557 = vsel %vm549, 1, 0
      %v558 = vsel %vm550, 1, 0
      %v559 = vsel %vm551, 1, 0
      %v560 = vsel %vm552, 1, 0
      %v561 = vsel %vm553, 1, 0
      %v562 = vcvt.s32.f32 %v554
      %v563 = vcvt.s32.f32 %v555
      %v564 = vcvt.s32.f32 %v556
      %v565 = vcvt.s32.f32 %v557
      %v566 = vcvt.s32.f32 %v558
      %v567 = vcvt.s32.f32 %v559
      %v568 = vcvt.s32.f32 %v560
      %v569 = vcvt.s32.f32 %v561
      %vm570 = vcmp.gt.s32.totalorder %v521, 0
      %v571 = vsel %vm570, 1, 0
      %v572 = vcvt.s32.f32 %v571
      %vm573 = vcmp.lt.s32.totalorder %v521, 63
      %v574 = vsel %vm573, 1, 0
      %v575 = vcvt.s32.f32 %v574
      %vm576 = vcmp.lt.s32.totalorder %v512, 8
      %vm577 = vcmp.lt.s32.totalorder %v513, 8
      %vm578 = vcmp.lt.s32.totalorder %v514, 8
      %vm579 = vcmp.lt.s32.totalorder %v515, 8
      %vm580 = vcmp.lt.s32.totalorder %v516, 8
      %vm581 = vcmp.lt.s32.totalorder %v517, 8
      %vm582 = vcmp.lt.s32.totalorder %v518, 8
      %vm583 = vcmp.lt.s32.totalorder %v519, 8
      %vm584 = vcmp.ge.s32.totalorder %v512, 56
      %vm585 = vcmp.ge.s32.totalorder %v513, 56
      %vm586 = vcmp.ge.s32.totalorder %v514, 56
      %vm587 = vcmp.ge.s32.totalorder %v515, 56
      %vm588 = vcmp.ge.s32.totalorder %v516, 56
      %vm589 = vcmp.ge.s32.totalorder %v517, 56
      %vm590 = vcmp.ge.s32.totalorder %v518, 56
      %vm591 = vcmp.ge.s32.totalorder %v519, 56
      %vm592 = vcmp.lt.s32.totalorder %v521, 8
      %vm593 = vcmp.ge.s32.totalorder %v521, 56
      %vm594 = vcmp.ge.s32.totalorder %v512, 8
      %vm595 = vcmp.ge.s32.totalorder %v513, 8
      %vm596 = vcmp.ge.s32.totalorder %v514, 8
      %vm597 = vcmp.ge.s32.totalorder %v515, 8
      %vm598 = vcmp.ge.s32.totalorder %v516, 8
      %vm599 = vcmp.ge.s32.totalorder %v517, 8
      %vm600 = vcmp.ge.s32.totalorder %v518, 8
      %vm601 = vcmp.ge.s32.totalorder %v519, 8
      %v602 = vsel %vm594, 1, 0
      %v603 = vsel %vm595, 1, 0
      %v604 = vsel %vm596, 1, 0
      %v605 = vsel %vm597, 1, 0
      %v606 = vsel %vm598, 1, 0
      %v607 = vsel %vm599, 1, 0
      %v608 = vsel %vm600, 1, 0
      %v609 = vsel %vm601, 1, 0
      %v610 = vcvt.s32.f32 %v602
      %v611 = vcvt.s32.f32 %v603
      %v612 = vcvt.s32.f32 %v604
      %v613 = vcvt.s32.f32 %v605
      %v614 = vcvt.s32.f32 %v606
      %v615 = vcvt.s32.f32 %v607
      %v616 = vcvt.s32.f32 %v608
      %v617 = vcvt.s32.f32 %v609
      %vm618 = vcmp.lt.s32.totalorder %v512, 56
      %vm619 = vcmp.lt.s32.totalorder %v513, 56
      %vm620 = vcmp.lt.s32.totalorder %v514, 56
      %vm621 = vcmp.lt.s32.totalorder %v515, 56
      %vm622 = vcmp.lt.s32.totalorder %v516, 56
      %vm623 = vcmp.lt.s32.totalorder %v517, 56
      %vm624 = vcmp.lt.s32.totalorder %v518, 56
      %vm625 = vcmp.lt.s32.totalorder %v519, 56
      %v626 = vsel %vm618, 1, 0
      %v627 = vsel %vm619, 1, 0
      %v628 = vsel %vm620, 1, 0
      %v629 = vsel %vm621, 1, 0
      %v630 = vsel %vm622, 1, 0
      %v631 = vsel %vm623, 1, 0
      %v632 = vsel %vm624, 1, 0
      %v633 = vsel %vm625, 1, 0
      %v634 = vcvt.s32.f32 %v626
      %v635 = vcvt.s32.f32 %v627
      %v636 = vcvt.s32.f32 %v628
      %v637 = vcvt.s32.f32 %v629
      %v638 = vcvt.s32.f32 %v630
      %v639 = vcvt.s32.f32 %v631
      %v640 = vcvt.s32.f32 %v632
      %v641 = vcvt.s32.f32 %v633
      %v642 = vld [vmem:[%s5] sm:$0xff]
      %v643 = vld [vmem:[%s5 + $0x8] sm:$0xff]
      %v644 = vld [vmem:[%s5 + $0x10] sm:$0xff]
      %v645 = vld [vmem:[%s5 + $0x18] sm:$0xff]
      %v646 = vld [vmem:[%s5 + $0x20] sm:$0xff]
      %v647 = vld [vmem:[%s5 + $0x28] sm:$0xff]
      %v648 = vld [vmem:[%s5 + $0x30] sm:$0xff]
      %v649 = vld [vmem:[%s5 + $0x38] sm:$0xff]
      %s650 = scalar_lea.vmem %s5, 64
      %v651 = vld [vmem:[%s650] sm:$0xff]
      %v652 = vld [vmem:[%s650 + $0x8] sm:$0xff]
      %v653 = vld [vmem:[%s650 + $0x10] sm:$0xff]
      %v654 = vld [vmem:[%s650 + $0x18] sm:$0xff]
      %v655 = vld [vmem:[%s650 + $0x20] sm:$0xff]
      %v656 = vld [vmem:[%s650 + $0x28] sm:$0xff]
      %v657 = vld [vmem:[%s650 + $0x30] sm:$0xff]
      %v658 = vld [vmem:[%s650 + $0x38] sm:$0xff]
      %v659 = vrot.slane %v503, 7
      %v660 = vrot.slane %v504, 7
      %v661 = vrot.slane %v505, 7
      %v662 = vrot.slane %v506, 7
      %v663 = vrot.slane %v507, 7
      %v664 = vrot.slane %v508, 7
      %v665 = vrot.slane %v509, 7
      %v666 = vrot.slane %v510, 7
      %vm667 = vcmp.lt.s32.totalorder %v512, 1
      %v668 = vsel %vm667, %v665, %v666
      %v669 = vsel %vm667, %v664, %v665
      %v670 = vsel %vm667, %v663, %v664
      %v671 = vsel %vm667, %v662, %v663
      %v672 = vsel %vm667, %v661, %v662
      %v673 = vsel %vm667, %v660, %v661
      %v674 = vsel %vm667, %v659, %v660
      %v675 = vsel %vm667, %v666, %v659
      %vm676 = vcmask 1048064
      %677 = vrot.lane.b32.xlu0 %v675, 64
      %v678 = vpop.permute.xlu0 %677
      %v679 = vsel %vm676, %v678, %v675
      %680 = vrot.lane.b32.xlu0 %v674, 64
      %v681 = vpop.permute.xlu0 %680
      %v682 = vsel %vm676, %v681, %v674
      %683 = vrot.lane.b32.xlu0 %v673, 64
      %v684 = vpop.permute.xlu0 %683
      %v685 = vsel %vm676, %v684, %v673
      %686 = vrot.lane.b32.xlu0 %v672, 64
      %v687 = vpop.permute.xlu0 %686
      %v688 = vsel %vm676, %v687, %v672
      %689 = vrot.lane.b32.xlu0 %v671, 64
      %v690 = vpop.permute.xlu0 %689
      %v691 = vsel %vm676, %v690, %v671
      %692 = vrot.lane.b32.xlu0 %v670, 64
      %v693 = vpop.permute.xlu0 %692
      %v694 = vsel %vm676, %v693, %v670
      %695 = vrot.lane.b32.xlu0 %v669, 64
      %v696 = vpop.permute.xlu0 %695
      %v697 = vsel %vm676, %v696, %v669
      %698 = vrot.lane.b32.xlu0 %v668, 64
      %v699 = vpop.permute.xlu0 %698
      %v700 = vsel %vm676, %v699, %v668
      %701 = vrot.lane.b32.xlu0 %v679, 64
      %v702 = vpop.permute.xlu0 %701
      %703 = vrot.lane.b32.xlu0 %v682, 64
      %v704 = vpop.permute.xlu0 %703
      %705 = vrot.lane.b32.xlu0 %v685, 64
      %v706 = vpop.permute.xlu0 %705
      %707 = vrot.lane.b32.xlu0 %v688, 64
      %v708 = vpop.permute.xlu0 %707
      %709 = vrot.lane.b32.xlu0 %v691, 64
      %v710 = vpop.permute.xlu0 %709
      %711 = vrot.lane.b32.xlu0 %v694, 64
      %v712 = vpop.permute.xlu0 %711
      %713 = vrot.lane.b32.xlu0 %v697, 64
      %v714 = vpop.permute.xlu0 %713
      %715 = vrot.lane.b32.xlu0 %v700, 64
      %v716 = vpop.permute.xlu0 %715
      %v717 = vsel %vm676, %v702, %v675
      %v718 = vsel %vm676, %v704, %v674
      %v719 = vsel %vm676, %v706, %v673
      %v720 = vsel %vm676, %v708, %v672
      %v721 = vsel %vm676, %v710, %v671
      %v722 = vsel %vm676, %v712, %v670
      %v723 = vsel %vm676, %v714, %v669
      %v724 = vsel %vm676, %v716, %v668
      %v725 = vmul.f32 %v717, %v538
      %v726 = vmul.f32 %v718, %v539
      %v727 = vmul.f32 %v719, %v540
      %v728 = vmul.f32 %v720, %v541
      %v729 = vmul.f32 %v721, %v542
      %v730 = vmul.f32 %v722, %v543
      %v731 = vmul.f32 %v723, %v544
      %v732 = vmul.f32 %v724, %v545
      %734 = vrot.lane.b32.xlu0 %v572, 63
      %v735 = vpop.permute.xlu0 %734
      %v737 = vmul.f32 %v725, %v735
      %v738 = vmul.f32 %v726, %v735
      %v739 = vmul.f32 %v727, %v735
      %v740 = vmul.f32 %v728, %v735
      %v741 = vmul.f32 %v729, %v735
      %v742 = vmul.f32 %v730, %v735
      %v743 = vmul.f32 %v731, %v735
      %v744 = vmul.f32 %v732, %v735
      %v745 = vrot.slane %v503, 1
      %v746 = vrot.slane %v504, 1
      %v747 = vrot.slane %v505, 1
      %v748 = vrot.slane %v506, 1
      %v749 = vrot.slane %v507, 1
      %v750 = vrot.slane %v508, 1
      %v751 = vrot.slane %v509, 1
      %v752 = vrot.slane %v510, 1
      %vm753 = vcmp.lt.s32.totalorder %v512, 7
      %v754 = vsel %vm753, %v751, %v752
      %v755 = vsel %vm753, %v750, %v751
      %v756 = vsel %vm753, %v749, %v750
      %v757 = vsel %vm753, %v748, %v749
      %v758 = vsel %vm753, %v747, %v748
      %v759 = vsel %vm753, %v746, %v747
      %v760 = vsel %vm753, %v745, %v746
      %v761 = vsel %vm753, %v752, %v745
      %762 = vrot.lane.b32.xlu0 %v760, 64
      %v763 = vpop.permute.xlu0 %762
      %v764 = vsel %vm676, %v763, %v760
      %765 = vrot.lane.b32.xlu0 %v759, 64
      %v766 = vpop.permute.xlu0 %765
      %v767 = vsel %vm676, %v766, %v759
      %768 = vrot.lane.b32.xlu0 %v758, 64
      %v769 = vpop.permute.xlu0 %768
      %v770 = vsel %vm676, %v769, %v758
      %771 = vrot.lane.b32.xlu0 %v757, 64
      %v772 = vpop.permute.xlu0 %771
      %v773 = vsel %vm676, %v772, %v757
      %774 = vrot.lane.b32.xlu0 %v756, 64
      %v775 = vpop.permute.xlu0 %774
      %v776 = vsel %vm676, %v775, %v756
      %777 = vrot.lane.b32.xlu0 %v755, 64
      %v778 = vpop.permute.xlu0 %777
      %v779 = vsel %vm676, %v778, %v755
      %780 = vrot.lane.b32.xlu0 %v754, 64
      %v781 = vpop.permute.xlu0 %780
      %v782 = vsel %vm676, %v781, %v754
      %783 = vrot.lane.b32.xlu0 %v761, 64
      %v784 = vpop.permute.xlu0 %783
      %v785 = vsel %vm676, %v784, %v761
      %786 = vrot.lane.b32.xlu0 %v764, 64
      %v787 = vpop.permute.xlu0 %786
      %788 = vrot.lane.b32.xlu0 %v767, 64
      %v789 = vpop.permute.xlu0 %788
      %790 = vrot.lane.b32.xlu0 %v770, 64
      %v791 = vpop.permute.xlu0 %790
      %792 = vrot.lane.b32.xlu0 %v773, 64
      %v793 = vpop.permute.xlu0 %792
      %794 = vrot.lane.b32.xlu0 %v776, 64
      %v795 = vpop.permute.xlu0 %794
      %796 = vrot.lane.b32.xlu0 %v779, 64
      %v797 = vpop.permute.xlu0 %796
      %798 = vrot.lane.b32.xlu0 %v782, 64
      %v799 = vpop.permute.xlu0 %798
      %800 = vrot.lane.b32.xlu0 %v785, 64
      %v801 = vpop.permute.xlu0 %800
      %v802 = vsel %vm676, %v787, %v760
      %v803 = vsel %vm676, %v789, %v759
      %v804 = vsel %vm676, %v791, %v758
      %v805 = vsel %vm676, %v793, %v757
      %v806 = vsel %vm676, %v795, %v756
      %v807 = vsel %vm676, %v797, %v755
      %v808 = vsel %vm676, %v799, %v754
      %v809 = vsel %vm676, %v801, %v761
      %v810 = vmul.f32 %v802, %v562
      %v811 = vmul.f32 %v803, %v563
      %v812 = vmul.f32 %v804, %v564
      %v813 = vmul.f32 %v805, %v565
      %v814 = vmul.f32 %v806, %v566
      %v815 = vmul.f32 %v807, %v567
      %v816 = vmul.f32 %v808, %v568
      %v817 = vmul.f32 %v809, %v569
      %819 = vrot.lane.b32.xlu0 %v575, 1
      %v820 = vpop.permute.xlu0 %819
      %v822 = vmul.f32 %v810, %v820
      %v823 = vmul.f32 %v811, %v820
      %v824 = vmul.f32 %v812, %v820
      %v825 = vmul.f32 %v813, %v820
      %v826 = vmul.f32 %v814, %v820
      %v827 = vmul.f32 %v815, %v820
      %v828 = vmul.f32 %v816, %v820
      %v829 = vmul.f32 %v817, %v820
      %838 = vrot.lane.b32.xlu0 %v503, 63
      %v839 = vpop.permute.xlu0 %838
      %840 = vrot.lane.b32.xlu0 %v504, 63
      %v841 = vpop.permute.xlu0 %840
      %842 = vrot.lane.b32.xlu0 %v505, 63
      %v843 = vpop.permute.xlu0 %842
      %844 = vrot.lane.b32.xlu0 %v506, 63
      %v845 = vpop.permute.xlu0 %844
      %846 = vrot.lane.b32.xlu0 %v507, 63
      %v847 = vpop.permute.xlu0 %846
      %848 = vrot.lane.b32.xlu0 %v508, 63
      %v849 = vpop.permute.xlu0 %848
      %850 = vrot.lane.b32.xlu0 %v509, 63
      %v851 = vpop.permute.xlu0 %850
      %852 = vrot.lane.b32.xlu0 %v510, 63
      %v853 = vpop.permute.xlu0 %852
      %v862 = vadd.f32 %v737, %v839
      %v863 = vadd.f32 %v738, %v841
      %v864 = vadd.f32 %v739, %v843
      %v865 = vadd.f32 %v740, %v845
      %v866 = vadd.f32 %v741, %v847
      %v867 = vadd.f32 %v742, %v849
      %v868 = vadd.f32 %v743, %v851
      %v869 = vadd.f32 %v744, %v853
      %878 = vrot.lane.b32.xlu0 %v822, 62
      %v879 = vpop.permute.xlu0 %878
      %880 = vrot.lane.b32.xlu0 %v823, 62
      %v881 = vpop.permute.xlu0 %880
      %882 = vrot.lane.b32.xlu0 %v824, 62
      %v883 = vpop.permute.xlu0 %882
      %884 = vrot.lane.b32.xlu0 %v825, 62
      %v885 = vpop.permute.xlu0 %884
      %886 = vrot.lane.b32.xlu0 %v826, 62
      %v887 = vpop.permute.xlu0 %886
      %888 = vrot.lane.b32.xlu0 %v827, 62
      %v889 = vpop.permute.xlu0 %888
      %890 = vrot.lane.b32.xlu0 %v828, 62
      %v891 = vpop.permute.xlu0 %890
      %892 = vrot.lane.b32.xlu0 %v829, 62
      %v893 = vpop.permute.xlu0 %892
      %v902 = vadd.f32 %v862, %v879
      %v903 = vadd.f32 %v863, %v881
      %v904 = vadd.f32 %v864, %v883
      %v905 = vadd.f32 %v865, %v885
      %v906 = vadd.f32 %v866, %v887
      %v907 = vadd.f32 %v867, %v889
      %v908 = vadd.f32 %v868, %v891
      %v909 = vadd.f32 %v869, %v893
      %918 = vrot.lane.b32.xlu0 %v902, 65
      %v919 = vpop.permute.xlu0 %918
      %920 = vrot.lane.b32.xlu0 %v903, 65
      %v921 = vpop.permute.xlu0 %920
      %922 = vrot.lane.b32.xlu0 %v904, 65
      %v923 = vpop.permute.xlu0 %922
      %924 = vrot.lane.b32.xlu0 %v905, 65
      %v925 = vpop.permute.xlu0 %924
      %926 = vrot.lane.b32.xlu0 %v906, 65
      %v927 = vpop.permute.xlu0 %926
      %928 = vrot.lane.b32.xlu0 %v907, 65
      %v929 = vpop.permute.xlu0 %928
      %930 = vrot.lane.b32.xlu0 %v908, 65
      %v931 = vpop.permute.xlu0 %930
      %932 = vrot.lane.b32.xlu0 %v909, 65
      %v933 = vpop.permute.xlu0 %932
      %v942 = vrot.slane %v919, 7
      %v943 = vrot.slane %v921, 7
      %v944 = vrot.slane %v923, 7
      %v945 = vrot.slane %v925, 7
      %v946 = vrot.slane %v927, 7
      %v947 = vrot.slane %v929, 7
      %v948 = vrot.slane %v931, 7
      %v949 = vrot.slane %v933, 7
      %v950 = vsel %vm667, %v948, %v949
      %v951 = vsel %vm667, %v947, %v948
      %v952 = vsel %vm667, %v946, %v947
      %v953 = vsel %vm667, %v945, %v946
      %v954 = vsel %vm667, %v944, %v945
      %v955 = vsel %vm667, %v943, %v944
      %v956 = vsel %vm667, %v942, %v943
      %v957 = vsel %vm667, %v949, %v942
      %v958 = vsel %vm576, 1, 0
      %v959 = vsel %vm577, 1, 0
      %v960 = vsel %vm578, 1, 0
      %v961 = vsel %vm579, 1, 0
      %v962 = vsel %vm580, 1, 0
      %v963 = vsel %vm581, 1, 0
      %v964 = vsel %vm582, 1, 0
      %v965 = vsel %vm583, 1, 0
      %vm966 = vcmp.eq.s32.totalorder %v958, 1
      %vm967 = vcmp.eq.s32.totalorder %v959, 1
      %vm968 = vcmp.eq.s32.totalorder %v960, 1
      %vm969 = vcmp.eq.s32.totalorder %v961, 1
      %vm970 = vcmp.eq.s32.totalorder %v962, 1
      %vm971 = vcmp.eq.s32.totalorder %v963, 1
      %vm972 = vcmp.eq.s32.totalorder %v964, 1
      %vm973 = vcmp.eq.s32.totalorder %v965, 1
      %v974 = vsel %vm966, %v950, %v933
      %v975 = vsel %vm967, %v957, %v919
      %v976 = vsel %vm968, %v956, %v921
      %v977 = vsel %vm969, %v955, %v923
      %v978 = vsel %vm970, %v954, %v925
      %v979 = vsel %vm971, %v953, %v927
      %v980 = vsel %vm972, %v952, %v929
      %v981 = vsel %vm973, %v951, %v931
      %v982 = vmul.f32 %v974, %v538
      %v983 = vmul.f32 %v975, %v539
      %v984 = vmul.f32 %v976, %v540
      %v985 = vmul.f32 %v977, %v541
      %v986 = vmul.f32 %v978, %v542
      %v987 = vmul.f32 %v979, %v543
      %v988 = vmul.f32 %v980, %v544
      %v989 = vmul.f32 %v981, %v545
      %990 = vrot.lane.b32.xlu0 %v982, 64
      %v991 = vpop.permute.xlu0 %990
      %v992 = vsel %vm676, %v991, %v982
      %993 = vrot.lane.b32.xlu0 %v983, 64
      %v994 = vpop.permute.xlu0 %993
      %v995 = vsel %vm676, %v994, %v983
      %996 = vrot.lane.b32.xlu0 %v984, 64
      %v997 = vpop.permute.xlu0 %996
      %v998 = vsel %vm676, %v997, %v984
      %999 = vrot.lane.b32.xlu0 %v985, 64
      %v1000 = vpop.permute.xlu0 %999
      %v1001 = vsel %vm676, %v1000, %v985
      %1002 = vrot.lane.b32.xlu0 %v986, 64
      %v1003 = vpop.permute.xlu0 %1002
      %v1004 = vsel %vm676, %v1003, %v986
      %1005 = vrot.lane.b32.xlu0 %v987, 64
      %v1006 = vpop.permute.xlu0 %1005
      %v1007 = vsel %vm676, %v1006, %v987
      %1008 = vrot.lane.b32.xlu0 %v988, 64
      %v1009 = vpop.permute.xlu0 %1008
      %v1010 = vsel %vm676, %v1009, %v988
      %1011 = vrot.lane.b32.xlu0 %v989, 64
      %v1012 = vpop.permute.xlu0 %1011
      %v1013 = vsel %vm676, %v1012, %v989
      %1014 = vrot.lane.b32.xlu0 %v992, 64
      %v1015 = vpop.permute.xlu0 %1014
      %1016 = vrot.lane.b32.xlu0 %v995, 64
      %v1017 = vpop.permute.xlu0 %1016
      %1018 = vrot.lane.b32.xlu0 %v998, 64
      %v1019 = vpop.permute.xlu0 %1018
      %1020 = vrot.lane.b32.xlu0 %v1001, 64
      %v1021 = vpop.permute.xlu0 %1020
      %1022 = vrot.lane.b32.xlu0 %v1004, 64
      %v1023 = vpop.permute.xlu0 %1022
      %1024 = vrot.lane.b32.xlu0 %v1007, 64
      %v1025 = vpop.permute.xlu0 %1024
      %1026 = vrot.lane.b32.xlu0 %v1010, 64
      %v1027 = vpop.permute.xlu0 %1026
      %1028 = vrot.lane.b32.xlu0 %v1013, 64
      %v1029 = vpop.permute.xlu0 %1028
      %v1030 = vsel %vm676, %v1015, %v982
      %v1031 = vsel %vm676, %v1017, %v983
      %v1032 = vsel %vm676, %v1019, %v984
      %v1033 = vsel %vm676, %v1021, %v985
      %v1034 = vsel %vm676, %v1023, %v986
      %v1035 = vsel %vm676, %v1025, %v987
      %v1036 = vsel %vm676, %v1027, %v988
      %v1037 = vsel %vm676, %v1029, %v989
      %v1038 = vsel %vm592, 1, 0
      %vm1039 = vcmp.eq.s32.totalorder %v1038, 1
      %1048 = vrot.lane.b32.xlu0 %v1030, 73
      %v1049 = vpop.permute.xlu0 %1048
      %1050 = vrot.lane.b32.xlu0 %v1031, 73
      %v1051 = vpop.permute.xlu0 %1050
      %1052 = vrot.lane.b32.xlu0 %v1032, 73
      %v1053 = vpop.permute.xlu0 %1052
      %1054 = vrot.lane.b32.xlu0 %v1033, 73
      %v1055 = vpop.permute.xlu0 %1054
      %1056 = vrot.lane.b32.xlu0 %v1034, 73
      %v1057 = vpop.permute.xlu0 %1056
      %1058 = vrot.lane.b32.xlu0 %v1035, 73
      %v1059 = vpop.permute.xlu0 %1058
      %1060 = vrot.lane.b32.xlu0 %v1036, 73
      %v1061 = vpop.permute.xlu0 %1060
      %1062 = vrot.lane.b32.xlu0 %v1037, 73
      %v1063 = vpop.permute.xlu0 %1062
      %1072 = vrot.lane.b32.xlu0 %v1030, 72
      %v1073 = vpop.permute.xlu0 %1072
      %1074 = vrot.lane.b32.xlu0 %v1031, 72
      %v1075 = vpop.permute.xlu0 %1074
      %1076 = vrot.lane.b32.xlu0 %v1032, 72
      %v1077 = vpop.permute.xlu0 %1076
      %1078 = vrot.lane.b32.xlu0 %v1033, 72
      %v1079 = vpop.permute.xlu0 %1078
      %1080 = vrot.lane.b32.xlu0 %v1034, 72
      %v1081 = vpop.permute.xlu0 %1080
      %1082 = vrot.lane.b32.xlu0 %v1035, 72
      %v1083 = vpop.permute.xlu0 %1082
      %1084 = vrot.lane.b32.xlu0 %v1036, 72
      %v1085 = vpop.permute.xlu0 %1084
      %1086 = vrot.lane.b32.xlu0 %v1037, 72
      %v1087 = vpop.permute.xlu0 %1086
      %v1096 = vsel %vm1039, %v1049, %v1073
      %v1097 = vsel %vm1039, %v1051, %v1075
      %v1098 = vsel %vm1039, %v1053, %v1077
      %v1099 = vsel %vm1039, %v1055, %v1079
      %v1100 = vsel %vm1039, %v1057, %v1081
      %v1101 = vsel %vm1039, %v1059, %v1083
      %v1102 = vsel %vm1039, %v1061, %v1085
      %v1103 = vsel %vm1039, %v1063, %v1087
      %v1104 = vmul.f32 %v1096, %v572
      %v1105 = vmul.f32 %v1097, %v572
      %v1106 = vmul.f32 %v1098, %v572
      %v1107 = vmul.f32 %v1099, %v572
      %v1108 = vmul.f32 %v1100, %v572
      %v1109 = vmul.f32 %v1101, %v572
      %v1110 = vmul.f32 %v1102, %v572
      %v1111 = vmul.f32 %v1103, %v572
      %v1112 = vrot.slane %v919, 1
      %v1113 = vrot.slane %v921, 1
      %v1114 = vrot.slane %v923, 1
      %v1115 = vrot.slane %v925, 1
      %v1116 = vrot.slane %v927, 1
      %v1117 = vrot.slane %v929, 1
      %v1118 = vrot.slane %v931, 1
      %v1119 = vrot.slane %v933, 1
      %v1120 = vsel %vm753, %v1118, %v1119
      %v1121 = vsel %vm753, %v1117, %v1118
      %v1122 = vsel %vm753, %v1116, %v1117
      %v1123 = vsel %vm753, %v1115, %v1116
      %v1124 = vsel %vm753, %v1114, %v1115
      %v1125 = vsel %vm753, %v1113, %v1114
      %v1126 = vsel %vm753, %v1112, %v1113
      %v1127 = vsel %vm753, %v1119, %v1112
      %v1128 = vsel %vm584, 1, 0
      %v1129 = vsel %vm585, 1, 0
      %v1130 = vsel %vm586, 1, 0
      %v1131 = vsel %vm587, 1, 0
      %v1132 = vsel %vm588, 1, 0
      %v1133 = vsel %vm589, 1, 0
      %v1134 = vsel %vm590, 1, 0
      %v1135 = vsel %vm591, 1, 0
      %vm1136 = vcmp.eq.s32.totalorder %v1128, 1
      %vm1137 = vcmp.eq.s32.totalorder %v1129, 1
      %vm1138 = vcmp.eq.s32.totalorder %v1130, 1
      %vm1139 = vcmp.eq.s32.totalorder %v1131, 1
      %vm1140 = vcmp.eq.s32.totalorder %v1132, 1
      %vm1141 = vcmp.eq.s32.totalorder %v1133, 1
      %vm1142 = vcmp.eq.s32.totalorder %v1134, 1
      %vm1143 = vcmp.eq.s32.totalorder %v1135, 1
      %v1144 = vsel %vm1136, %v1125, %v921
      %v1145 = vsel %vm1137, %v1124, %v923
      %v1146 = vsel %vm1138, %v1123, %v925
      %v1147 = vsel %vm1139, %v1122, %v927
      %v1148 = vsel %vm1140, %v1121, %v929
      %v1149 = vsel %vm1141, %v1120, %v931
      %v1150 = vsel %vm1142, %v1127, %v933
      %v1151 = vsel %vm1143, %v1126, %v919
      %v1152 = vmul.f32 %v1144, %v562
      %v1153 = vmul.f32 %v1145, %v563
      %v1154 = vmul.f32 %v1146, %v564
      %v1155 = vmul.f32 %v1147, %v565
      %v1156 = vmul.f32 %v1148, %v566
      %v1157 = vmul.f32 %v1149, %v567
      %v1158 = vmul.f32 %v1150, %v568
      %v1159 = vmul.f32 %v1151, %v569
      %1160 = vrot.lane.b32.xlu0 %v1152, 64
      %v1161 = vpop.permute.xlu0 %1160
      %v1162 = vsel %vm676, %v1161, %v1152
      %1163 = vrot.lane.b32.xlu0 %v1153, 64
      %v1164 = vpop.permute.xlu0 %1163
      %v1165 = vsel %vm676, %v1164, %v1153
      %1166 = vrot.lane.b32.xlu0 %v1154, 64
      %v1167 = vpop.permute.xlu0 %1166
      %v1168 = vsel %vm676, %v1167, %v1154
      %1169 = vrot.lane.b32.xlu0 %v1155, 64
      %v1170 = vpop.permute.xlu0 %1169
      %v1171 = vsel %vm676, %v1170, %v1155
      %1172 = vrot.lane.b32.xlu0 %v1156, 64
      %v1173 = vpop.permute.xlu0 %1172
      %v1174 = vsel %vm676, %v1173, %v1156
      %1175 = vrot.lane.b32.xlu0 %v1157, 64
      %v1176 = vpop.permute.xlu0 %1175
      %v1177 = vsel %vm676, %v1176, %v1157
      %1178 = vrot.lane.b32.xlu0 %v1158, 64
      %v1179 = vpop.permute.xlu0 %1178
      %v1180 = vsel %vm676, %v1179, %v1158
      %1181 = vrot.lane.b32.xlu0 %v1159, 64
      %v1182 = vpop.permute.xlu0 %1181
      %v1183 = vsel %vm676, %v1182, %v1159
      %1184 = vrot.lane.b32.xlu0 %v1162, 64
      %v1185 = vpop.permute.xlu0 %1184
      %1186 = vrot.lane.b32.xlu0 %v1165, 64
      %v1187 = vpop.permute.xlu0 %1186
      %1188 = vrot.lane.b32.xlu0 %v1168, 64
      %v1189 = vpop.permute.xlu0 %1188
      %1190 = vrot.lane.b32.xlu0 %v1171, 64
      %v1191 = vpop.permute.xlu0 %1190
      %1192 = vrot.lane.b32.xlu0 %v1174, 64
      %v1193 = vpop.permute.xlu0 %1192
      %1194 = vrot.lane.b32.xlu0 %v1177, 64
      %v1195 = vpop.permute.xlu0 %1194
      %1196 = vrot.lane.b32.xlu0 %v1180, 64
      %v1197 = vpop.permute.xlu0 %1196
      %1198 = vrot.lane.b32.xlu0 %v1183, 64
      %v1199 = vpop.permute.xlu0 %1198
      %v1200 = vsel %vm676, %v1185, %v1152
      %v1201 = vsel %vm676, %v1187, %v1153
      %v1202 = vsel %vm676, %v1189, %v1154
      %v1203 = vsel %vm676, %v1191, %v1155
      %v1204 = vsel %vm676, %v1193, %v1156
      %v1205 = vsel %vm676, %v1195, %v1157
      %v1206 = vsel %vm676, %v1197, %v1158
      %v1207 = vsel %vm676, %v1199, %v1159
      %v1208 = vsel %vm593, 1, 0
      %vm1209 = vcmp.eq.s32.totalorder %v1208, 1
      %1218 = vrot.lane.b32.xlu0 %v1200, 119
      %v1219 = vpop.permute.xlu0 %1218
      %1220 = vrot.lane.b32.xlu0 %v1201, 119
      %v1221 = vpop.permute.xlu0 %1220
      %1222 = vrot.lane.b32.xlu0 %v1202, 119
      %v1223 = vpop.permute.xlu0 %1222
      %1224 = vrot.lane.b32.xlu0 %v1203, 119
      %v1225 = vpop.permute.xlu0 %1224
      %1226 = vrot.lane.b32.xlu0 %v1204, 119
      %v1227 = vpop.permute.xlu0 %1226
      %1228 = vrot.lane.b32.xlu0 %v1205, 119
      %v1229 = vpop.permute.xlu0 %1228
      %1230 = vrot.lane.b32.xlu0 %v1206, 119
      %v1231 = vpop.permute.xlu0 %1230
      %1232 = vrot.lane.b32.xlu0 %v1207, 119
      %v1233 = vpop.permute.xlu0 %1232
      %1242 = vrot.lane.b32.xlu0 %v1200, 120
      %v1243 = vpop.permute.xlu0 %1242
      %1244 = vrot.lane.b32.xlu0 %v1201, 120
      %v1245 = vpop.permute.xlu0 %1244
      %1246 = vrot.lane.b32.xlu0 %v1202, 120
      %v1247 = vpop.permute.xlu0 %1246
      %1248 = vrot.lane.b32.xlu0 %v1203, 120
      %v1249 = vpop.permute.xlu0 %1248
      %1250 = vrot.lane.b32.xlu0 %v1204, 120
      %v1251 = vpop.permute.xlu0 %1250
      %1252 = vrot.lane.b32.xlu0 %v1205, 120
      %v1253 = vpop.permute.xlu0 %1252
      %1254 = vrot.lane.b32.xlu0 %v1206, 120
      %v1255 = vpop.permute.xlu0 %1254
      %1256 = vrot.lane.b32.xlu0 %v1207, 120
      %v1257 = vpop.permute.xlu0 %1256
      %v1266 = vsel %vm1209, %v1219, %v1243
      %v1267 = vsel %vm1209, %v1221, %v1245
      %v1268 = vsel %vm1209, %v1223, %v1247
      %v1269 = vsel %vm1209, %v1225, %v1249
      %v1270 = vsel %vm1209, %v1227, %v1251
      %v1271 = vsel %vm1209, %v1229, %v1253
      %v1272 = vsel %vm1209, %v1231, %v1255
      %v1273 = vsel %vm1209, %v1233, %v1257
      %v1274 = vmul.f32 %v1266, %v575
      %v1275 = vmul.f32 %v1267, %v575
      %v1276 = vmul.f32 %v1268, %v575
      %v1277 = vmul.f32 %v1269, %v575
      %v1278 = vmul.f32 %v1270, %v575
      %v1279 = vmul.f32 %v1271, %v575
      %v1280 = vmul.f32 %v1272, %v575
      %v1281 = vmul.f32 %v1273, %v575
      %v1282 = vadd.f32 %v1104, %v919
      %v1283 = vadd.f32 %v1105, %v921
      %v1284 = vadd.f32 %v1106, %v923
      %v1285 = vadd.f32 %v1107, %v925
      %v1286 = vadd.f32 %v1108, %v927
      %v1287 = vadd.f32 %v1109, %v929
      %v1288 = vadd.f32 %v1110, %v931
      %v1289 = vadd.f32 %v1111, %v933
      %v1290 = vadd.f32 %v1282, %v1274
      %v1291 = vadd.f32 %v1283, %v1275
      %v1292 = vadd.f32 %v1284, %v1276
      %v1293 = vadd.f32 %v1285, %v1277
      %v1294 = vadd.f32 %v1286, %v1278
      %v1295 = vadd.f32 %v1287, %v1279
      %v1296 = vadd.f32 %v1288, %v1280
      %v1297 = vadd.f32 %v1289, %v1281
      %v1298 = vld [vmem:[%s351] sm:$0x1]
      %v1300 = vlaneseq
      %v1301 = vshrl.u32 %v1300, 7
      %v1302 = vsub.s32 0, %v1301
      %v1303 = vrot.slane %v1298, %v1302
      %v1305 = vmul.f32 %v1290, %v1303
      %v1306 = vmul.f32 %v1291, %v1303
      %v1307 = vmul.f32 %v1292, %v1303
      %v1308 = vmul.f32 %v1293, %v1303
      %v1309 = vmul.f32 %v1294, %v1303
      %v1310 = vmul.f32 %v1295, %v1303
      %v1311 = vmul.f32 %v1296, %v1303
      %v1312 = vmul.f32 %v1297, %v1303
      %v1313 = vmul.f32 %v1305, 10.0
      %v1314 = vmul.f32 %v1306, 10.0
      %v1315 = vmul.f32 %v1307, 10.0
      %v1316 = vmul.f32 %v1308, 10.0
      %v1317 = vmul.f32 %v1309, 10.0
      %v1318 = vmul.f32 %v1310, 10.0
      %v1319 = vmul.f32 %v1311, 10.0
      %v1320 = vmul.f32 %v1312, 10.0
      %vm1321 = vcmask 523264
      %v1322 = vsel %vm1321, %v1313, -inf
      %1323 = vmax.xlane.f32.xlu0 %v1322
      %v1324 = vpop.xlane.xlu0 %1323
      %v1325 = vsel %vm1321, %v1314, -inf
      %1326 = vmax.xlane.f32.xlu0 %v1325
      %v1327 = vpop.xlane.xlu0 %1326
      %v1328 = vsel %vm1321, %v1315, -inf
      %1329 = vmax.xlane.f32.xlu0 %v1328
      %v1330 = vpop.xlane.xlu0 %1329
      %v1331 = vsel %vm1321, %v1316, -inf
      %1332 = vmax.xlane.f32.xlu0 %v1331
      %v1333 = vpop.xlane.xlu0 %1332
      %v1334 = vsel %vm1321, %v1317, -inf
      %1335 = vmax.xlane.f32.xlu0 %v1334
      %v1336 = vpop.xlane.xlu0 %1335
      %v1337 = vsel %vm1321, %v1318, -inf
      %1338 = vmax.xlane.f32.xlu0 %v1337
      %v1339 = vpop.xlane.xlu0 %1338
      %v1340 = vsel %vm1321, %v1319, -inf
      %1341 = vmax.xlane.f32.xlu0 %v1340
      %v1342 = vpop.xlane.xlu0 %1341
      %v1343 = vsel %vm1321, %v1320, -inf
      %1344 = vmax.xlane.f32.xlu0 %v1343
      %v1345 = vpop.xlane.xlu0 %1344
      %v1346 = vsub.f32 %v1313, %v1324
      %v1347 = vsub.f32 %v1314, %v1327
      %v1348 = vsub.f32 %v1315, %v1330
      %v1349 = vsub.f32 %v1316, %v1333
      %v1350 = vsub.f32 %v1317, %v1336
      %v1351 = vsub.f32 %v1318, %v1339
      %v1352 = vsub.f32 %v1319, %v1342
      %v1353 = vsub.f32 %v1320, %v1345
      %v1354 = vmul.f32 %v1346, 1.442695
      %v1355 = vpow.pop %v1354
      %v1356 = vmul.f32 %v1347, 1.442695
      %v1357 = vpow.pop %v1356
      %v1358 = vmul.f32 %v1348, 1.442695
      %v1359 = vpow.pop %v1358
      %v1360 = vmul.f32 %v1349, 1.442695
      %v1361 = vpow.pop %v1360
      %v1362 = vmul.f32 %v1350, 1.442695
      %v1363 = vpow.pop %v1362
      %v1364 = vmul.f32 %v1351, 1.442695
      %v1365 = vpow.pop %v1364
      %v1366 = vmul.f32 %v1352, 1.442695
      %v1367 = vpow.pop %v1366
      %v1368 = vmul.f32 %v1353, 1.442695
      %v1369 = vpow.pop %v1368
      %v1370 = vsel %vm1321, %v1355, 0.0
      %1371 = vadd.xlane.f32.xlu0 %v1370
      %v1372 = vpop.xlane.xlu0 %1371
      %v1373 = vsel %vm1321, %v1357, 0.0
      %1374 = vadd.xlane.f32.xlu0 %v1373
      %v1375 = vpop.xlane.xlu0 %1374
      %v1376 = vsel %vm1321, %v1359, 0.0
      %1377 = vadd.xlane.f32.xlu0 %v1376
      %v1378 = vpop.xlane.xlu0 %1377
      %v1379 = vsel %vm1321, %v1361, 0.0
      %1380 = vadd.xlane.f32.xlu0 %v1379
      %v1381 = vpop.xlane.xlu0 %1380
      %v1382 = vsel %vm1321, %v1363, 0.0
      %1383 = vadd.xlane.f32.xlu0 %v1382
      %v1384 = vpop.xlane.xlu0 %1383
      %v1385 = vsel %vm1321, %v1365, 0.0
      %1386 = vadd.xlane.f32.xlu0 %v1385
      %v1387 = vpop.xlane.xlu0 %1386
      %v1388 = vsel %vm1321, %v1367, 0.0
      %1389 = vadd.xlane.f32.xlu0 %v1388
      %v1390 = vpop.xlane.xlu0 %1389
      %v1391 = vsel %vm1321, %v1369, 0.0
      %1392 = vadd.xlane.f32.xlu0 %v1391
      %v1393 = vpop.xlane.xlu0 %1392
      %v1394 = vrcp.pop %v1372
      %v1395 = vmul.f32 1.0, %v1394
      %v1396 = vrcp.pop %v1375
      %v1397 = vmul.f32 1.0, %v1396
      %v1398 = vrcp.pop %v1378
      %v1399 = vmul.f32 1.0, %v1398
      %v1400 = vrcp.pop %v1381
      %v1401 = vmul.f32 1.0, %v1400
      %v1402 = vrcp.pop %v1384
      %v1403 = vmul.f32 1.0, %v1402
      %v1404 = vrcp.pop %v1387
      %v1405 = vmul.f32 1.0, %v1404
      %v1406 = vrcp.pop %v1390
      %v1407 = vmul.f32 1.0, %v1406
      %v1408 = vrcp.pop %v1393
      %v1409 = vmul.f32 1.0, %v1408
      %v1410 = vmul.f32 %v1355, %v1395
      %v1411 = vmul.f32 %v1357, %v1397
      %v1412 = vmul.f32 %v1359, %v1399
      %v1413 = vmul.f32 %v1361, %v1401
      %v1414 = vmul.f32 %v1363, %v1403
      %v1415 = vmul.f32 %v1365, %v1405
      %v1416 = vmul.f32 %v1367, %v1407
      %v1417 = vmul.f32 %v1369, %v1409
      %v1418 = vmul.f32 %v1410, %v1303
      %v1419 = vmul.f32 %v1411, %v1303
      %v1420 = vmul.f32 %v1412, %v1303
      %v1421 = vmul.f32 %v1413, %v1303
      %v1422 = vmul.f32 %v1414, %v1303
      %v1423 = vmul.f32 %v1415, %v1303
      %v1424 = vmul.f32 %v1416, %v1303
      %v1425 = vmul.f32 %v1417, %v1303
      %v1426 = vld [vmem:[%s356] sm:$0xff]
      %v1427 = vld [vmem:[%s356 + $0x8] sm:$0xff]
      %v1428 = vld [vmem:[%s356 + $0x10] sm:$0xff]
      %v1429 = vld [vmem:[%s356 + $0x18] sm:$0xff]
      %v1430 = vld [vmem:[%s356 + $0x20] sm:$0xff]
      %v1431 = vld [vmem:[%s356 + $0x28] sm:$0xff]
      %v1432 = vld [vmem:[%s356 + $0x30] sm:$0xff]
      %v1433 = vld [vmem:[%s356 + $0x38] sm:$0xff]
      %v1435 = vsel %vm1321, %v1418, 0
      %v1438 = vsel %vm1321, %v1419, 0
      %v1441 = vsel %vm1321, %v1420, 0
      %v1444 = vsel %vm1321, %v1421, 0
      %v1447 = vsel %vm1321, %v1422, 0
      %v1450 = vsel %vm1321, %v1423, 0
      %v1453 = vsel %vm1321, %v1424, 0
      %v1456 = vsel %vm1321, %v1425, 0
      %1458 = vmatprep.subr.mxu0 0.0
      %1459 = vmatpush1.msra.mxu0 %v1426
      %1460 = vmatprep.subr.mxu0 0.0
      %1461 = vmatpush1.msra.mxu0 %v1427
      %1462 = vmatprep.subr.mxu0 0.0
      %1463 = vmatpush1.msra.mxu0 %v1428
      %1464 = vmatprep.subr.mxu0 0.0
      %1465 = vmatpush1.msra.mxu0 %v1429
      %1466 = vmatprep.subr.mxu0 0.0
      %1467 = vmatpush1.msra.mxu0 %v1430
      %1468 = vmatprep.subr.mxu0 0.0
      %1469 = vmatpush1.msra.mxu0 %v1431
      %1470 = vmatprep.subr.mxu0 0.0
      %1471 = vmatpush1.msra.mxu0 %v1432
      %1472 = vmatprep.subr.mxu0 0.0
      %1473 = vmatpush1.msra.mxu0 %v1433
      %1474 = vmatprep.subr.mxu0 0.0
      %1475 = vmatpush1.msra.mxu0 0.0
      %1476 = vmatprep.subr.mxu0 0.0
      %1477 = vmatpush1.msra.mxu0 0.0
      %1478 = vmatprep.subr.mxu0 0.0
      %1479 = vmatpush1.msra.mxu0 0.0
      %1480 = vmatprep.subr.mxu0 0.0
      %1481 = vmatpush1.msra.mxu0 0.0
      %1482 = vmatprep.subr.mxu0 0.0
      %1483 = vmatpush1.msra.mxu0 0.0
      %1484 = vmatprep.subr.mxu0 0.0
      %1485 = vmatpush1.msra.mxu0 0.0
      %1486 = vmatprep.subr.mxu0 0.0
      %1487 = vmatpush1.msra.mxu0 0.0
      %1488 = vmatprep.subr.mxu0 0.0
      %1489 = vmatpush1.msra.mxu0 0.0
      %1490 = vmatprep.subr.mxu0 0.0
      %1491 = vmatpush1.msra.mxu0 0.0
      %1492 = vmatprep.subr.mxu0 0.0
      %1493 = vmatpush1.msra.mxu0 0.0
      %1494 = vmatprep.subr.mxu0 0.0
      %1495 = vmatpush1.msra.mxu0 0.0
      %1496 = vmatprep.subr.mxu0 0.0
      %1497 = vmatpush1.msra.mxu0 0.0
      %1498 = vmatprep.subr.mxu0 0.0
      %1499 = vmatpush1.msra.mxu0 0.0
      %1500 = vmatprep.subr.mxu0 0.0
      %1501 = vmatpush1.msra.mxu0 0.0
      %1502 = vmatprep.subr.mxu0 0.0
      %1503 = vmatpush1.msra.mxu0 0.0
      %1504 = vmatprep.subr.mxu0 0.0
      %1505 = vmatpush1.msra.mxu0 0.0
      %1506 = vmatprep.subr.mxu0 0.0
      %1507 = vmatpush1.msra.mxu0 0.0
      %1508 = vmatprep.subr.mxu0 0.0
      %1509 = vmatpush1.msra.mxu0 0.0
      %1510 = vmatprep.subr.mxu0 0.0
      %1511 = vmatpush1.msra.mxu0 0.0
      %1512 = vmatprep.subr.mxu0 0.0
      %1513 = vmatpush1.msra.mxu0 0.0
      %1514 = vmatprep.subr.mxu0 0.0
      %1515 = vmatpush1.msra.mxu0 0.0
      %1516 = vmatprep.subr.mxu0 0.0
      %1517 = vmatpush1.msra.mxu0 0.0
      %1518 = vmatprep.subr.mxu0 0.0
      %1519 = vmatpush1.msra.mxu0 0.0
      %1520 = vmatprep.subr.mxu0 0.0
      %1521 = vmatpush1.msra.mxu0 0.0
      %1522 = vmatprep.mubr.f32.mxu0 0.0
      %1523 = vmatmul.mubr.f32.gmra.mrb[0].mxu0 %v1435
      %v1524 = vpop.f32.mrb[0].mxu0
      %v1525 = vadd.f32 0.0, %v1524
      %v1526 = vpop.f32.mrb[0].mxu0
      %1527 = vmatprep.mubr.f32.mxu0 0.0
      %1528 = vmatmul.mubr.f32.gmra.mrb[0].mxu0 %v1438
      %v1529 = vpop.f32.mrb[0].mxu0
      %v1530 = vadd.f32 0.0, %v1529
      %v1531 = vpop.f32.mrb[0].mxu0
      %1532 = vmatprep.mubr.f32.mxu0 0.0
      %1533 = vmatmul.mubr.f32.gmra.mrb[0].mxu0 %v1441
      %v1534 = vpop.f32.mrb[0].mxu0
      %v1535 = vadd.f32 0.0, %v1534
      %v1536 = vpop.f32.mrb[0].mxu0
      %1537 = vmatprep.mubr.f32.mxu0 0.0
      %1538 = vmatmul.mubr.f32.gmra.mrb[0].mxu0 %v1444
      %v1539 = vpop.f32.mrb[0].mxu0
      %v1540 = vadd.f32 0.0, %v1539
      %v1541 = vpop.f32.mrb[0].mxu0
      %1542 = vmatprep.mubr.f32.mxu0 0.0
      %1543 = vmatmul.mubr.f32.gmra.mrb[0].mxu0 %v1447
      %v1544 = vpop.f32.mrb[0].mxu0
      %v1545 = vadd.f32 0.0, %v1544
      %v1546 = vpop.f32.mrb[0].mxu0
      %1547 = vmatprep.mubr.f32.mxu0 0.0
      %1548 = vmatmul.mubr.f32.gmra.mrb[0].mxu0 %v1450
      %v1549 = vpop.f32.mrb[0].mxu0
      %v1550 = vadd.f32 0.0, %v1549
      %v1551 = vpop.f32.mrb[0].mxu0
      %1552 = vmatprep.mubr.f32.mxu0 0.0
      %1553 = vmatmul.mubr.f32.gmra.mrb[0].mxu0 %v1453
      %v1554 = vpop.f32.mrb[0].mxu0
      %v1555 = vadd.f32 0.0, %v1554
      %v1556 = vpop.f32.mrb[0].mxu0
      %1557 = vmatprep.mubr.f32.mxu0 0.0
      %1558 = vmatmul.mubr.f32.gmra.mrb[0].mxu0 %v1456
      %v1559 = vpop.f32.mrb[0].mxu0
      %v1560 = vadd.f32 0.0, %v1559
      %v1561 = vpop.f32.mrb[0].mxu0
      %1562 = vdwg.mxu0
      %v1563 = vrot.slane %v1525, 1
      %v1564 = vrot.slane %v1530, 1
      %v1565 = vrot.slane %v1535, 1
      %v1566 = vrot.slane %v1540, 1
      %v1567 = vrot.slane %v1545, 1
      %v1568 = vrot.slane %v1550, 1
      %v1569 = vrot.slane %v1555, 1
      %v1570 = vrot.slane %v1560, 1
      %v1571 = vsel %vm753, %v1569, %v1570
      %v1572 = vsel %vm753, %v1568, %v1569
      %v1573 = vsel %vm753, %v1567, %v1568
      %v1574 = vsel %vm753, %v1566, %v1567
      %v1575 = vsel %vm753, %v1565, %v1566
      %v1576 = vsel %vm753, %v1564, %v1565
      %v1577 = vsel %vm753, %v1563, %v1564
      %v1578 = vsel %vm753, %v1570, %v1563
      %v1579 = vmul.f32 %v1576, %v634
      %v1580 = vmul.f32 %v1575, %v635
      %v1581 = vmul.f32 %v1574, %v636
      %v1582 = vmul.f32 %v1573, %v637
      %v1583 = vmul.f32 %v1572, %v638
      %v1584 = vmul.f32 %v1571, %v639
      %v1585 = vmul.f32 %v1578, %v640
      %v1586 = vmul.f32 %v1577, %v641
      %1588 = vset.pattern.permute.xlu0 0
      %1589 = vperm.xlu0 %1588, %v651
      %v1590 = vpop.permute.xlu0 %1589
      %1593 = vset.pattern.permute.xlu0 0
      %1594 = vperm.xlu0 %1593, %v652
      %v1595 = vpop.permute.xlu0 %1594
      %1598 = vset.pattern.permute.xlu0 0
      %1599 = vperm.xlu0 %1598, %v653
      %v1600 = vpop.permute.xlu0 %1599
      %1603 = vset.pattern.permute.xlu0 0
      %1604 = vperm.xlu0 %1603, %v654
      %v1605 = vpop.permute.xlu0 %1604
      %1608 = vset.pattern.permute.xlu0 0
      %1609 = vperm.xlu0 %1608, %v655
      %v1610 = vpop.permute.xlu0 %1609
      %1613 = vset.pattern.permute.xlu0 0
      %1614 = vperm.xlu0 %1613, %v656
      %v1615 = vpop.permute.xlu0 %1614
      %1618 = vset.pattern.permute.xlu0 0
      %1619 = vperm.xlu0 %1618, %v657
      %v1620 = vpop.permute.xlu0 %1619
      %1623 = vset.pattern.permute.xlu0 0
      %1624 = vperm.xlu0 %1623, %v658
      %v1625 = vpop.permute.xlu0 %1624
      %v1627 = vmul.f32 %v1579, %v1590
      %v1628 = vmul.f32 %v1580, %v1595
      %v1629 = vmul.f32 %v1581, %v1600
      %v1630 = vmul.f32 %v1582, %v1605
      %v1631 = vmul.f32 %v1583, %v1610
      %v1632 = vmul.f32 %v1584, %v1615
      %v1633 = vmul.f32 %v1585, %v1620
      %v1634 = vmul.f32 %v1586, %v1625
      %v1635 = vadd.f32 %v1627, 0.0
      %v1636 = vadd.f32 %v1628, 0.0
      %v1637 = vadd.f32 %v1629, 0.0
      %v1638 = vadd.f32 %v1630, 0.0
      %v1639 = vadd.f32 %v1631, 0.0
      %v1640 = vadd.f32 %v1632, 0.0
      %v1641 = vadd.f32 %v1633, 0.0
      %v1642 = vadd.f32 %v1634, 0.0
      %v1643 = vld [vmem:[%s356 + $0x40] sm:$0xff]
      %v1644 = vld [vmem:[%s356 + $0x48] sm:$0xff]
      %v1645 = vld [vmem:[%s356 + $0x50] sm:$0xff]
      %v1646 = vld [vmem:[%s356 + $0x58] sm:$0xff]
      %v1647 = vld [vmem:[%s356 + $0x60] sm:$0xff]
      %v1648 = vld [vmem:[%s356 + $0x68] sm:$0xff]
      %v1649 = vld [vmem:[%s356 + $0x70] sm:$0xff]
      %v1650 = vld [vmem:[%s356 + $0x78] sm:$0xff]
      %1651 = vmatprep.subr.mxu0 0.0
      %1652 = vmatpush1.msra.mxu0 %v1643
      %1653 = vmatprep.subr.mxu0 0.0
      %1654 = vmatpush1.msra.mxu0 %v1644
      %1655 = vmatprep.subr.mxu0 0.0
      %1656 = vmatpush1.msra.mxu0 %v1645
      %1657 = vmatprep.subr.mxu0 0.0
      %1658 = vmatpush1.msra.mxu0 %v1646
      %1659 = vmatprep.subr.mxu0 0.0
      %1660 = vmatpush1.msra.mxu0 %v1647
      %1661 = vmatprep.subr.mxu0 0.0
      %1662 = vmatpush1.msra.mxu0 %v1648
      %1663 = vmatprep.subr.mxu0 0.0
      %1664 = vmatpush1.msra.mxu0 %v1649
      %1665 = vmatprep.subr.mxu0 0.0
      %1666 = vmatpush1.msra.mxu0 %v1650
      %1667 = vmatprep.subr.mxu0 0.0
      %1668 = vmatpush1.msra.mxu0 0.0
      %1669 = vmatprep.subr.mxu0 0.0
      %1670 = vmatpush1.msra.mxu0 0.0
      %1671 = vmatprep.subr.mxu0 0.0
      %1672 = vmatpush1.msra.mxu0 0.0
      %1673 = vmatprep.subr.mxu0 0.0
      %1674 = vmatpush1.msra.mxu0 0.0
      %1675 = vmatprep.subr.mxu0 0.0
      %1676 = vmatpush1.msra.mxu0 0.0
      %1677 = vmatprep.subr.mxu0 0.0
      %1678 = vmatpush1.msra.mxu0 0.0
      %1679 = vmatprep.subr.mxu0 0.0
      %1680 = vmatpush1.msra.mxu0 0.0
      %1681 = vmatprep.subr.mxu0 0.0
      %1682 = vmatpush1.msra.mxu0 0.0
      %1683 = vmatprep.subr.mxu0 0.0
      %1684 = vmatpush1.msra.mxu0 0.0
      %1685 = vmatprep.subr.mxu0 0.0
      %1686 = vmatpush1.msra.mxu0 0.0
      %1687 = vmatprep.subr.mxu0 0.0
      %1688 = vmatpush1.msra.mxu0 0.0
      %1689 = vmatprep.subr.mxu0 0.0
      %1690 = vmatpush1.msra.mxu0 0.0
      %1691 = vmatprep.subr.mxu0 0.0
      %1692 = vmatpush1.msra.mxu0 0.0
      %1693 = vmatprep.subr.mxu0 0.0
      %1694 = vmatpush1.msra.mxu0 0.0
      %1695 = vmatprep.subr.mxu0 0.0
      %1696 = vmatpush1.msra.mxu0 0.0
      %1697 = vmatprep.subr.mxu0 0.0
      %1698 = vmatpush1.msra.mxu0 0.0
      %1699 = vmatprep.subr.mxu0 0.0
      %1700 = vmatpush1.msra.mxu0 0.0
      %1701 = vmatprep.subr.mxu0 0.0
      %1702 = vmatpush1.msra.mxu0 0.0
      %1703 = vmatprep.subr.mxu0 0.0
      %1704 = vmatpush1.msra.mxu0 0.0
      %1705 = vmatprep.subr.mxu0 0.0
      %1706 = vmatpush1.msra.mxu0 0.0
      %1707 = vmatprep.subr.mxu0 0.0
      %1708 = vmatpush1.msra.mxu0 0.0
      %1709 = vmatprep.subr.mxu0 0.0
      %1710 = vmatpush1.msra.mxu0 0.0
      %1711 = vmatprep.subr.mxu0 0.0
      %1712 = vmatpush1.msra.mxu0 0.0
      %1713 = vmatprep.subr.mxu0 0.0
      %1714 = vmatpush1.msra.mxu0 0.0
      %1715 = vmatprep.mubr.f32.mxu0 0.0
      %1716 = vmatmul.mubr.f32.gmra.mrb[0].mxu0 %v1435
      %v1717 = vpop.f32.mrb[0].mxu0
      %v1718 = vadd.f32 0.0, %v1717
      %v1719 = vpop.f32.mrb[0].mxu0
      %1720 = vmatprep.mubr.f32.mxu0 0.0
      %1721 = vmatmul.mubr.f32.gmra.mrb[0].mxu0 %v1438
      %v1722 = vpop.f32.mrb[0].mxu0
      %v1723 = vadd.f32 0.0, %v1722
      %v1724 = vpop.f32.mrb[0].mxu0
      %1725 = vmatprep.mubr.f32.mxu0 0.0
      %1726 = vmatmul.mubr.f32.gmra.mrb[0].mxu0 %v1441
      %v1727 = vpop.f32.mrb[0].mxu0
      %v1728 = vadd.f32 0.0, %v1727
      %v1729 = vpop.f32.mrb[0].mxu0
      %1730 = vmatprep.mubr.f32.mxu0 0.0
      %1731 = vmatmul.mubr.f32.gmra.mrb[0].mxu0 %v1444
      %v1732 = vpop.f32.mrb[0].mxu0
      %v1733 = vadd.f32 0.0, %v1732
      %v1734 = vpop.f32.mrb[0].mxu0
      %1735 = vmatprep.mubr.f32.mxu0 0.0
      %1736 = vmatmul.mubr.f32.gmra.mrb[0].mxu0 %v1447
      %v1737 = vpop.f32.mrb[0].mxu0
      %v1738 = vadd.f32 0.0, %v1737
      %v1739 = vpop.f32.mrb[0].mxu0
      %1740 = vmatprep.mubr.f32.mxu0 0.0
      %1741 = vmatmul.mubr.f32.gmra.mrb[0].mxu0 %v1450
      %v1742 = vpop.f32.mrb[0].mxu0
      %v1743 = vadd.f32 0.0, %v1742
      %v1744 = vpop.f32.mrb[0].mxu0
      %1745 = vmatprep.mubr.f32.mxu0 0.0
      %1746 = vmatmul.mubr.f32.gmra.mrb[0].mxu0 %v1453
      %v1747 = vpop.f32.mrb[0].mxu0
      %v1748 = vadd.f32 0.0, %v1747
      %v1749 = vpop.f32.mrb[0].mxu0
      %1750 = vmatprep.mubr.f32.mxu0 0.0
      %1751 = vmatmul.mubr.f32.gmra.mrb[0].mxu0 %v1456
      %v1752 = vpop.f32.mrb[0].mxu0
      %v1753 = vadd.f32 0.0, %v1752
      %v1754 = vpop.f32.mrb[0].mxu0
      %1755 = vdwg.mxu0
      %v1756 = vmul.f32 %v1723, %v634
      %v1757 = vmul.f32 %v1728, %v635
      %v1758 = vmul.f32 %v1733, %v636
      %v1759 = vmul.f32 %v1738, %v637
      %v1760 = vmul.f32 %v1743, %v638
      %v1761 = vmul.f32 %v1748, %v639
      %v1762 = vmul.f32 %v1753, %v640
      %v1763 = vmul.f32 %v1718, %v641
      %v1764 = vadd.f32 %v1635, %v1756
      %v1765 = vadd.f32 %v1636, %v1757
      %v1766 = vadd.f32 %v1637, %v1758
      %v1767 = vadd.f32 %v1638, %v1759
      %v1768 = vadd.f32 %v1639, %v1760
      %v1769 = vadd.f32 %v1640, %v1761
      %v1770 = vadd.f32 %v1641, %v1762
      %v1771 = vadd.f32 %v1642, %v1763
      %v1772 = vld [vmem:[%s356 + $0x80] sm:$0xff]
      %v1773 = vld [vmem:[%s356 + $0x88] sm:$0xff]
      %v1774 = vld [vmem:[%s356 + $0x90] sm:$0xff]
      %v1775 = vld [vmem:[%s356 + $0x98] sm:$0xff]
      %v1776 = vld [vmem:[%s356 + $0xa0] sm:$0xff]
      %v1777 = vld [vmem:[%s356 + $0xa8] sm:$0xff]
      %v1778 = vld [vmem:[%s356 + $0xb0] sm:$0xff]
      %v1779 = vld [vmem:[%s356 + $0xb8] sm:$0xff]
      %1780 = vmatprep.subr.mxu0 0.0
      %1781 = vmatpush1.msra.mxu0 %v1772
      %1782 = vmatprep.subr.mxu0 0.0
      %1783 = vmatpush1.msra.mxu0 %v1773
      %1784 = vmatprep.subr.mxu0 0.0
      %1785 = vmatpush1.msra.mxu0 %v1774
      %1786 = vmatprep.subr.mxu0 0.0
      %1787 = vmatpush1.msra.mxu0 %v1775
      %1788 = vmatprep.subr.mxu0 0.0
      %1789 = vmatpush1.msra.mxu0 %v1776
      %1790 = vmatprep.subr.mxu0 0.0
      %1791 = vmatpush1.msra.mxu0 %v1777
      %1792 = vmatprep.subr.mxu0 0.0
      %1793 = vmatpush1.msra.mxu0 %v1778
      %1794 = vmatprep.subr.mxu0 0.0
      %1795 = vmatpush1.msra.mxu0 %v1779
      %1796 = vmatprep.subr.mxu0 0.0
      %1797 = vmatpush1.msra.mxu0 0.0
      %1798 = vmatprep.subr.mxu0 0.0
      %1799 = vmatpush1.msra.mxu0 0.0
      %1800 = vmatprep.subr.mxu0 0.0
      %1801 = vmatpush1.msra.mxu0 0.0
      %1802 = vmatprep.subr.mxu0 0.0
      %1803 = vmatpush1.msra.mxu0 0.0
      %1804 = vmatprep.subr.mxu0 0.0
      %1805 = vmatpush1.msra.mxu0 0.0
      %1806 = vmatprep.subr.mxu0 0.0
      %1807 = vmatpush1.msra.mxu0 0.0
      %1808 = vmatprep.subr.mxu0 0.0
      %1809 = vmatpush1.msra.mxu0 0.0
      %1810 = vmatprep.subr.mxu0 0.0
      %1811 = vmatpush1.msra.mxu0 0.0
      %1812 = vmatprep.subr.mxu0 0.0
      %1813 = vmatpush1.msra.mxu0 0.0
      %1814 = vmatprep.subr.mxu0 0.0
      %1815 = vmatpush1.msra.mxu0 0.0
      %1816 = vmatprep.subr.mxu0 0.0
      %1817 = vmatpush1.msra.mxu0 0.0
      %1818 = vmatprep.subr.mxu0 0.0
      %1819 = vmatpush1.msra.mxu0 0.0
      %1820 = vmatprep.subr.mxu0 0.0
      %1821 = vmatpush1.msra.mxu0 0.0
      %1822 = vmatprep.subr.mxu0 0.0
      %1823 = vmatpush1.msra.mxu0 0.0
      %1824 = vmatprep.subr.mxu0 0.0
      %1825 = vmatpush1.msra.mxu0 0.0
      %1826 = vmatprep.subr.mxu0 0.0
      %1827 = vmatpush1.msra.mxu0 0.0
      %1828 = vmatprep.subr.mxu0 0.0
      %1829 = vmatpush1.msra.mxu0 0.0
      %1830 = vmatprep.subr.mxu0 0.0
      %1831 = vmatpush1.msra.mxu0 0.0
      %1832 = vmatprep.subr.mxu0 0.0
      %1833 = vmatpush1.msra.mxu0 0.0
      %1834 = vmatprep.subr.mxu0 0.0
      %1835 = vmatpush1.msra.mxu0 0.0
      %1836 = vmatprep.subr.mxu0 0.0
      %1837 = vmatpush1.msra.mxu0 0.0
      %1838 = vmatprep.subr.mxu0 0.0
      %1839 = vmatpush1.msra.mxu0 0.0
      %1840 = vmatprep.subr.mxu0 0.0
      %1841 = vmatpush1.msra.mxu0 0.0
      %1842 = vmatprep.subr.mxu0 0.0
      %1843 = vmatpush1.msra.mxu0 0.0
      %1844 = vmatprep.mubr.f32.mxu0 0.0
      %1845 = vmatmul.mubr.f32.gmra.mrb[0].mxu0 %v1435
      %v1846 = vpop.f32.mrb[0].mxu0
      %v1847 = vadd.f32 0.0, %v1846
      %v1848 = vpop.f32.mrb[0].mxu0
      %1849 = vmatprep.mubr.f32.mxu0 0.0
      %1850 = vmatmul.mubr.f32.gmra.mrb[0].mxu0 %v1438
      %v1851 = vpop.f32.mrb[0].mxu0
      %v1852 = vadd.f32 0.0, %v1851
      %v1853 = vpop.f32.mrb[0].mxu0
      %1854 = vmatprep.mubr.f32.mxu0 0.0
      %1855 = vmatmul.mubr.f32.gmra.mrb[0].mxu0 %v1441
      %v1856 = vpop.f32.mrb[0].mxu0
      %v1857 = vadd.f32 0.0, %v1856
      %v1858 = vpop.f32.mrb[0].mxu0
      %1859 = vmatprep.mubr.f32.mxu0 0.0
      %1860 = vmatmul.mubr.f32.gmra.mrb[0].mxu0 %v1444
      %v1861 = vpop.f32.mrb[0].mxu0
      %v1862 = vadd.f32 0.0, %v1861
      %v1863 = vpop.f32.mrb[0].mxu0
      %1864 = vmatprep.mubr.f32.mxu0 0.0
      %1865 = vmatmul.mubr.f32.gmra.mrb[0].mxu0 %v1447
      %v1866 = vpop.f32.mrb[0].mxu0
      %v1867 = vadd.f32 0.0, %v1866
      %v1868 = vpop.f32.mrb[0].mxu0
      %1869 = vmatprep.mubr.f32.mxu0 0.0
      %1870 = vmatmul.mubr.f32.gmra.mrb[0].mxu0 %v1450
      %v1871 = vpop.f32.mrb[0].mxu0
      %v1872 = vadd.f32 0.0, %v1871
      %v1873 = vpop.f32.mrb[0].mxu0
      %1874 = vmatprep.mubr.f32.mxu0 0.0
      %1875 = vmatmul.mubr.f32.gmra.mrb[0].mxu0 %v1453
      %v1876 = vpop.f32.mrb[0].mxu0
      %v1877 = vadd.f32 0.0, %v1876
      %v1878 = vpop.f32.mrb[0].mxu0
      %1879 = vmatprep.mubr.f32.mxu0 0.0
      %1880 = vmatmul.mubr.f32.gmra.mrb[0].mxu0 %v1456
      %v1881 = vpop.f32.mrb[0].mxu0
      %v1882 = vadd.f32 0.0, %v1881
      %v1883 = vpop.f32.mrb[0].mxu0
      %1884 = vdwg.mxu0
      %v1885 = vrot.slane %v1847, 7
      %v1886 = vrot.slane %v1852, 7
      %v1887 = vrot.slane %v1857, 7
      %v1888 = vrot.slane %v1862, 7
      %v1889 = vrot.slane %v1867, 7
      %v1890 = vrot.slane %v1872, 7
      %v1891 = vrot.slane %v1877, 7
      %v1892 = vrot.slane %v1882, 7
      %v1893 = vsel %vm667, %v1891, %v1892
      %v1894 = vsel %vm667, %v1890, %v1891
      %v1895 = vsel %vm667, %v1889, %v1890
      %v1896 = vsel %vm667, %v1888, %v1889
      %v1897 = vsel %vm667, %v1887, %v1888
      %v1898 = vsel %vm667, %v1886, %v1887
      %v1899 = vsel %vm667, %v1885, %v1886
      %v1900 = vsel %vm667, %v1892, %v1885
      %v1901 = vmul.f32 %v1899, %v634
      %v1902 = vmul.f32 %v1898, %v635
      %v1903 = vmul.f32 %v1897, %v636
      %v1904 = vmul.f32 %v1896, %v637
      %v1905 = vmul.f32 %v1895, %v638
      %v1906 = vmul.f32 %v1894, %v639
      %v1907 = vmul.f32 %v1893, %v640
      %v1908 = vmul.f32 %v1900, %v641
      %1910 = vset.pattern.permute.xlu0 0
      %1911 = vperm.xlu0 %1910, %v642
      %v1912 = vpop.permute.xlu0 %1911
      %1915 = vset.pattern.permute.xlu0 0
      %1916 = vperm.xlu0 %1915, %v643
      %v1917 = vpop.permute.xlu0 %1916
      %1920 = vset.pattern.permute.xlu0 0
      %1921 = vperm.xlu0 %1920, %v644
      %v1922 = vpop.permute.xlu0 %1921
      %1925 = vset.pattern.permute.xlu0 0
      %1926 = vperm.xlu0 %1925, %v645
      %v1927 = vpop.permute.xlu0 %1926
      %1930 = vset.pattern.permute.xlu0 0
      %1931 = vperm.xlu0 %1930, %v646
      %v1932 = vpop.permute.xlu0 %1931
      %1935 = vset.pattern.permute.xlu0 0
      %1936 = vperm.xlu0 %1935, %v647
      %v1937 = vpop.permute.xlu0 %1936
      %1940 = vset.pattern.permute.xlu0 0
      %1941 = vperm.xlu0 %1940, %v648
      %v1942 = vpop.permute.xlu0 %1941
      %1945 = vset.pattern.permute.xlu0 0
      %1946 = vperm.xlu0 %1945, %v649
      %v1947 = vpop.permute.xlu0 %1946
      %v1949 = vmul.f32 %v1901, %v1912
      %v1950 = vmul.f32 %v1902, %v1917
      %v1951 = vmul.f32 %v1903, %v1922
      %v1952 = vmul.f32 %v1904, %v1927
      %v1953 = vmul.f32 %v1905, %v1932
      %v1954 = vmul.f32 %v1906, %v1937
      %v1955 = vmul.f32 %v1907, %v1942
      %v1956 = vmul.f32 %v1908, %v1947
      %v1957 = vadd.f32 %v1764, %v1949
      %v1958 = vadd.f32 %v1765, %v1950
      %v1959 = vadd.f32 %v1766, %v1951
      %v1960 = vadd.f32 %v1767, %v1952
      %v1961 = vadd.f32 %v1768, %v1953
      %v1962 = vadd.f32 %v1769, %v1954
      %v1963 = vadd.f32 %v1770, %v1955
      %v1964 = vadd.f32 %v1771, %v1956
      %v1965 = vld [vmem:[%s356 + $0xc0] sm:$0xff]
      %v1966 = vld [vmem:[%s356 + $0xc8] sm:$0xff]
      %v1967 = vld [vmem:[%s356 + $0xd0] sm:$0xff]
      %v1968 = vld [vmem:[%s356 + $0xd8] sm:$0xff]
      %v1969 = vld [vmem:[%s356 + $0xe0] sm:$0xff]
      %v1970 = vld [vmem:[%s356 + $0xe8] sm:$0xff]
      %v1971 = vld [vmem:[%s356 + $0xf0] sm:$0xff]
      %v1972 = vld [vmem:[%s356 + $0xf8] sm:$0xff]
      %1973 = vmatprep.subr.mxu0 0.0
      %1974 = vmatpush1.msra.mxu0 %v1965
      %1975 = vmatprep.subr.mxu0 0.0
      %1976 = vmatpush1.msra.mxu0 %v1966
      %1977 = vmatprep.subr.mxu0 0.0
      %1978 = vmatpush1.msra.mxu0 %v1967
      %1979 = vmatprep.subr.mxu0 0.0
      %1980 = vmatpush1.msra.mxu0 %v1968
      %1981 = vmatprep.subr.mxu0 0.0
      %1982 = vmatpush1.msra.mxu0 %v1969
      %1983 = vmatprep.subr.mxu0 0.0
      %1984 = vmatpush1.msra.mxu0 %v1970
      %1985 = vmatprep.subr.mxu0 0.0
      %1986 = vmatpush1.msra.mxu0 %v1971
      %1987 = vmatprep.subr.mxu0 0.0
      %1988 = vmatpush1.msra.mxu0 %v1972
      %1989 = vmatprep.subr.mxu0 0.0
      %1990 = vmatpush1.msra.mxu0 0.0
      %1991 = vmatprep.subr.mxu0 0.0
      %1992 = vmatpush1.msra.mxu0 0.0
      %1993 = vmatprep.subr.mxu0 0.0
      %1994 = vmatpush1.msra.mxu0 0.0
      %1995 = vmatprep.subr.mxu0 0.0
      %1996 = vmatpush1.msra.mxu0 0.0
      %1997 = vmatprep.subr.mxu0 0.0
      %1998 = vmatpush1.msra.mxu0 0.0
      %1999 = vmatprep.subr.mxu0 0.0
      %2000 = vmatpush1.msra.mxu0 0.0
      %2001 = vmatprep.subr.mxu0 0.0
      %2002 = vmatpush1.msra.mxu0 0.0
      %2003 = vmatprep.subr.mxu0 0.0
      %2004 = vmatpush1.msra.mxu0 0.0
      %2005 = vmatprep.subr.mxu0 0.0
      %2006 = vmatpush1.msra.mxu0 0.0
      %2007 = vmatprep.subr.mxu0 0.0
      %2008 = vmatpush1.msra.mxu0 0.0
      %2009 = vmatprep.subr.mxu0 0.0
      %2010 = vmatpush1.msra.mxu0 0.0
      %2011 = vmatprep.subr.mxu0 0.0
      %2012 = vmatpush1.msra.mxu0 0.0
      %2013 = vmatprep.subr.mxu0 0.0
      %2014 = vmatpush1.msra.mxu0 0.0
      %2015 = vmatprep.subr.mxu0 0.0
      %2016 = vmatpush1.msra.mxu0 0.0
      %2017 = vmatprep.subr.mxu0 0.0
      %2018 = vmatpush1.msra.mxu0 0.0
      %2019 = vmatprep.subr.mxu0 0.0
      %2020 = vmatpush1.msra.mxu0 0.0
      %2021 = vmatprep.subr.mxu0 0.0
      %2022 = vmatpush1.msra.mxu0 0.0
      %2023 = vmatprep.subr.mxu0 0.0
      %2024 = vmatpush1.msra.mxu0 0.0
      %2025 = vmatprep.subr.mxu0 0.0
      %2026 = vmatpush1.msra.mxu0 0.0
      %2027 = vmatprep.subr.mxu0 0.0
      %2028 = vmatpush1.msra.mxu0 0.0
      %2029 = vmatprep.subr.mxu0 0.0
      %2030 = vmatpush1.msra.mxu0 0.0
      %2031 = vmatprep.subr.mxu0 0.0
      %2032 = vmatpush1.msra.mxu0 0.0
      %2033 = vmatprep.subr.mxu0 0.0
      %2034 = vmatpush1.msra.mxu0 0.0
      %2035 = vmatprep.subr.mxu0 0.0
      %2036 = vmatpush1.msra.mxu0 0.0
      %2037 = vmatprep.mubr.f32.mxu0 0.0
      %2038 = vmatmul.mubr.f32.gmra.mrb[0].mxu0 %v1435
      %v2039 = vpop.f32.mrb[0].mxu0
      %v2040 = vadd.f32 0.0, %v2039
      %v2041 = vpop.f32.mrb[0].mxu0
      %2042 = vmatprep.mubr.f32.mxu0 0.0
      %2043 = vmatmul.mubr.f32.gmra.mrb[0].mxu0 %v1438
      %v2044 = vpop.f32.mrb[0].mxu0
      %v2045 = vadd.f32 0.0, %v2044
      %v2046 = vpop.f32.mrb[0].mxu0
      %2047 = vmatprep.mubr.f32.mxu0 0.0
      %2048 = vmatmul.mubr.f32.gmra.mrb[0].mxu0 %v1441
      %v2049 = vpop.f32.mrb[0].mxu0
      %v2050 = vadd.f32 0.0, %v2049
      %v2051 = vpop.f32.mrb[0].mxu0
      %2052 = vmatprep.mubr.f32.mxu0 0.0
      %2053 = vmatmul.mubr.f32.gmra.mrb[0].mxu0 %v1444
      %v2054 = vpop.f32.mrb[0].mxu0
      %v2055 = vadd.f32 0.0, %v2054
      %v2056 = vpop.f32.mrb[0].mxu0
      %2057 = vmatprep.mubr.f32.mxu0 0.0
      %2058 = vmatmul.mubr.f32.gmra.mrb[0].mxu0 %v1447
      %v2059 = vpop.f32.mrb[0].mxu0
      %v2060 = vadd.f32 0.0, %v2059
      %v2061 = vpop.f32.mrb[0].mxu0
      %2062 = vmatprep.mubr.f32.mxu0 0.0
      %2063 = vmatmul.mubr.f32.gmra.mrb[0].mxu0 %v1450
      %v2064 = vpop.f32.mrb[0].mxu0
      %v2065 = vadd.f32 0.0, %v2064
      %v2066 = vpop.f32.mrb[0].mxu0
      %2067 = vmatprep.mubr.f32.mxu0 0.0
      %2068 = vmatmul.mubr.f32.gmra.mrb[0].mxu0 %v1453
      %v2069 = vpop.f32.mrb[0].mxu0
      %v2070 = vadd.f32 0.0, %v2069
      %v2071 = vpop.f32.mrb[0].mxu0
      %2072 = vmatprep.mubr.f32.mxu0 0.0
      %2073 = vmatmul.mubr.f32.gmra.mrb[0].mxu0 %v1456
      %v2074 = vpop.f32.mrb[0].mxu0
      %v2075 = vadd.f32 0.0, %v2074
      %v2076 = vpop.f32.mrb[0].mxu0
      %2077 = vdwg.mxu0
      %v2078 = vrot.slane %v2040, 1
      %v2079 = vrot.slane %v2045, 1
      %v2080 = vrot.slane %v2050, 1
      %v2081 = vrot.slane %v2055, 1
      %v2082 = vrot.slane %v2060, 1
      %v2083 = vrot.slane %v2065, 1
      %v2084 = vrot.slane %v2070, 1
      %v2085 = vrot.slane %v2075, 1
      %v2086 = vsel %vm753, %v2084, %v2085
      %v2087 = vsel %vm753, %v2083, %v2084
      %v2088 = vsel %vm753, %v2082, %v2083
      %v2089 = vsel %vm753, %v2081, %v2082
      %v2090 = vsel %vm753, %v2080, %v2081
      %v2091 = vsel %vm753, %v2079, %v2080
      %v2092 = vsel %vm753, %v2078, %v2079
      %v2093 = vsel %vm753, %v2085, %v2078
      %v2094 = vmul.f32 %v2092, %v1590
      %v2095 = vmul.f32 %v2091, %v1595
      %v2096 = vmul.f32 %v2090, %v1600
      %v2097 = vmul.f32 %v2089, %v1605
      %v2098 = vmul.f32 %v2088, %v1610
      %v2099 = vmul.f32 %v2087, %v1615
      %v2100 = vmul.f32 %v2086, %v1620
      %v2101 = vmul.f32 %v2093, %v1625
      %v2102 = vadd.f32 %v1957, %v2094
      %v2103 = vadd.f32 %v1958, %v2095
      %v2104 = vadd.f32 %v1959, %v2096
      %v2105 = vadd.f32 %v1960, %v2097
      %v2106 = vadd.f32 %v1961, %v2098
      %v2107 = vadd.f32 %v1962, %v2099
      %v2108 = vadd.f32 %v1963, %v2100
      %v2109 = vadd.f32 %v1964, %v2101
      %v2110 = vld [vmem:[%s356 + $0x100] sm:$0xff]
      %v2111 = vld [vmem:[%s356 + $0x108] sm:$0xff]
      %v2112 = vld [vmem:[%s356 + $0x110] sm:$0xff]
      %v2113 = vld [vmem:[%s356 + $0x118] sm:$0xff]
      %v2114 = vld [vmem:[%s356 + $0x120] sm:$0xff]
      %v2115 = vld [vmem:[%s356 + $0x128] sm:$0xff]
      %v2116 = vld [vmem:[%s356 + $0x130] sm:$0xff]
      %v2117 = vld [vmem:[%s356 + $0x138] sm:$0xff]
      %2118 = vmatprep.subr.mxu0 0.0
      %2119 = vmatpush1.msra.mxu0 %v2110
      %2120 = vmatprep.subr.mxu0 0.0
      %2121 = vmatpush1.msra.mxu0 %v2111
      %2122 = vmatprep.subr.mxu0 0.0
      %2123 = vmatpush1.msra.mxu0 %v2112
      %2124 = vmatprep.subr.mxu0 0.0
      %2125 = vmatpush1.msra.mxu0 %v2113
      %2126 = vmatprep.subr.mxu0 0.0
      %2127 = vmatpush1.msra.mxu0 %v2114
      %2128 = vmatprep.subr.mxu0 0.0
      %2129 = vmatpush1.msra.mxu0 %v2115
      %2130 = vmatprep.subr.mxu0 0.0
      %2131 = vmatpush1.msra.mxu0 %v2116
      %2132 = vmatprep.subr.mxu0 0.0
      %2133 = vmatpush1.msra.mxu0 %v2117
      %2134 = vmatprep.subr.mxu0 0.0
      %2135 = vmatpush1.msra.mxu0 0.0
      %2136 = vmatprep.subr.mxu0 0.0
      %2137 = vmatpush1.msra.mxu0 0.0
      %2138 = vmatprep.subr.mxu0 0.0
      %2139 = vmatpush1.msra.mxu0 0.0
      %2140 = vmatprep.subr.mxu0 0.0
      %2141 = vmatpush1.msra.mxu0 0.0
      %2142 = vmatprep.subr.mxu0 0.0
      %2143 = vmatpush1.msra.mxu0 0.0
      %2144 = vmatprep.subr.mxu0 0.0
      %2145 = vmatpush1.msra.mxu0 0.0
      %2146 = vmatprep.subr.mxu0 0.0
      %2147 = vmatpush1.msra.mxu0 0.0
      %2148 = vmatprep.subr.mxu0 0.0
      %2149 = vmatpush1.msra.mxu0 0.0
      %2150 = vmatprep.subr.mxu0 0.0
      %2151 = vmatpush1.msra.mxu0 0.0
      %2152 = vmatprep.subr.mxu0 0.0
      %2153 = vmatpush1.msra.mxu0 0.0
      %2154 = vmatprep.subr.mxu0 0.0
      %2155 = vmatpush1.msra.mxu0 0.0
      %2156 = vmatprep.subr.mxu0 0.0
      %2157 = vmatpush1.msra.mxu0 0.0
      %2158 = vmatprep.subr.mxu0 0.0
      %2159 = vmatpush1.msra.mxu0 0.0
      %2160 = vmatprep.subr.mxu0 0.0
      %2161 = vmatpush1.msra.mxu0 0.0
      %2162 = vmatprep.subr.mxu0 0.0
      %2163 = vmatpush1.msra.mxu0 0.0
      %2164 = vmatprep.subr.mxu0 0.0
      %2165 = vmatpush1.msra.mxu0 0.0
      %2166 = vmatprep.subr.mxu0 0.0
      %2167 = vmatpush1.msra.mxu0 0.0
      %2168 = vmatprep.subr.mxu0 0.0
      %2169 = vmatpush1.msra.mxu0 0.0
      %2170 = vmatprep.subr.mxu0 0.0
      %2171 = vmatpush1.msra.mxu0 0.0
      %2172 = vmatprep.subr.mxu0 0.0
      %2173 = vmatpush1.msra.mxu0 0.0
      %2174 = vmatprep.subr.mxu0 0.0
      %2175 = vmatpush1.msra.mxu0 0.0
      %2176 = vmatprep.subr.mxu0 0.0
      %2177 = vmatpush1.msra.mxu0 0.0
      %2178 = vmatprep.subr.mxu0 0.0
      %2179 = vmatpush1.msra.mxu0 0.0
      %2180 = vmatprep.subr.mxu0 0.0
      %2181 = vmatpush1.msra.mxu0 0.0
      %2182 = vmatprep.mubr.f32.mxu0 0.0
      %2183 = vmatmul.mubr.f32.gmra.mrb[0].mxu0 %v1435
      %v2184 = vpop.f32.mrb[0].mxu0
      %v2185 = vadd.f32 0.0, %v2184
      %v2186 = vpop.f32.mrb[0].mxu0
      %2187 = vmatprep.mubr.f32.mxu0 0.0
      %2188 = vmatmul.mubr.f32.gmra.mrb[0].mxu0 %v1438
      %v2189 = vpop.f32.mrb[0].mxu0
      %v2190 = vadd.f32 0.0, %v2189
      %v2191 = vpop.f32.mrb[0].mxu0
      %2192 = vmatprep.mubr.f32.mxu0 0.0
      %2193 = vmatmul.mubr.f32.gmra.mrb[0].mxu0 %v1441
      %v2194 = vpop.f32.mrb[0].mxu0
      %v2195 = vadd.f32 0.0, %v2194
      %v2196 = vpop.f32.mrb[0].mxu0
      %2197 = vmatprep.mubr.f32.mxu0 0.0
      %2198 = vmatmul.mubr.f32.gmra.mrb[0].mxu0 %v1444
      %v2199 = vpop.f32.mrb[0].mxu0
      %v2200 = vadd.f32 0.0, %v2199
      %v2201 = vpop.f32.mrb[0].mxu0
      %2202 = vmatprep.mubr.f32.mxu0 0.0
      %2203 = vmatmul.mubr.f32.gmra.mrb[0].mxu0 %v1447
      %v2204 = vpop.f32.mrb[0].mxu0
      %v2205 = vadd.f32 0.0, %v2204
      %v2206 = vpop.f32.mrb[0].mxu0
      %2207 = vmatprep.mubr.f32.mxu0 0.0
      %2208 = vmatmul.mubr.f32.gmra.mrb[0].mxu0 %v1450
      %v2209 = vpop.f32.mrb[0].mxu0
      %v2210 = vadd.f32 0.0, %v2209
      %v2211 = vpop.f32.mrb[0].mxu0
      %2212 = vmatprep.mubr.f32.mxu0 0.0
      %2213 = vmatmul.mubr.f32.gmra.mrb[0].mxu0 %v1453
      %v2214 = vpop.f32.mrb[0].mxu0
      %v2215 = vadd.f32 0.0, %v2214
      %v2216 = vpop.f32.mrb[0].mxu0
      %2217 = vmatprep.mubr.f32.mxu0 0.0
      %2218 = vmatmul.mubr.f32.gmra.mrb[0].mxu0 %v1456
      %v2219 = vpop.f32.mrb[0].mxu0
      %v2220 = vadd.f32 0.0, %v2219
      %v2221 = vpop.f32.mrb[0].mxu0
      %2222 = vdwg.mxu0
      %v2223 = vadd.f32 %v2102, %v2185
      %v2224 = vadd.f32 %v2103, %v2190
      %v2225 = vadd.f32 %v2104, %v2195
      %v2226 = vadd.f32 %v2105, %v2200
      %v2227 = vadd.f32 %v2106, %v2205
      %v2228 = vadd.f32 %v2107, %v2210
      %v2229 = vadd.f32 %v2108, %v2215
      %v2230 = vadd.f32 %v2109, %v2220
      %v2231 = vld [vmem:[%s356 + $0x140] sm:$0xff]
      %v2232 = vld [vmem:[%s356 + $0x148] sm:$0xff]
      %v2233 = vld [vmem:[%s356 + $0x150] sm:$0xff]
      %v2234 = vld [vmem:[%s356 + $0x158] sm:$0xff]
      %v2235 = vld [vmem:[%s356 + $0x160] sm:$0xff]
      %v2236 = vld [vmem:[%s356 + $0x168] sm:$0xff]
      %v2237 = vld [vmem:[%s356 + $0x170] sm:$0xff]
      %v2238 = vld [vmem:[%s356 + $0x178] sm:$0xff]
      %2239 = vmatprep.subr.mxu0 0.0
      %2240 = vmatpush1.msra.mxu0 %v2231
      %2241 = vmatprep.subr.mxu0 0.0
      %2242 = vmatpush1.msra.mxu0 %v2232
      %2243 = vmatprep.subr.mxu0 0.0
      %2244 = vmatpush1.msra.mxu0 %v2233
      %2245 = vmatprep.subr.mxu0 0.0
      %2246 = vmatpush1.msra.mxu0 %v2234
      %2247 = vmatprep.subr.mxu0 0.0
      %2248 = vmatpush1.msra.mxu0 %v2235
      %2249 = vmatprep.subr.mxu0 0.0
      %2250 = vmatpush1.msra.mxu0 %v2236
      %2251 = vmatprep.subr.mxu0 0.0
      %2252 = vmatpush1.msra.mxu0 %v2237
      %2253 = vmatprep.subr.mxu0 0.0
      %2254 = vmatpush1.msra.mxu0 %v2238
      %2255 = vmatprep.subr.mxu0 0.0
      %2256 = vmatpush1.msra.mxu0 0.0
      %2257 = vmatprep.subr.mxu0 0.0
      %2258 = vmatpush1.msra.mxu0 0.0
      %2259 = vmatprep.subr.mxu0 0.0
      %2260 = vmatpush1.msra.mxu0 0.0
      %2261 = vmatprep.subr.mxu0 0.0
      %2262 = vmatpush1.msra.mxu0 0.0
      %2263 = vmatprep.subr.mxu0 0.0
      %2264 = vmatpush1.msra.mxu0 0.0
      %2265 = vmatprep.subr.mxu0 0.0
      %2266 = vmatpush1.msra.mxu0 0.0
      %2267 = vmatprep.subr.mxu0 0.0
      %2268 = vmatpush1.msra.mxu0 0.0
      %2269 = vmatprep.subr.mxu0 0.0
      %2270 = vmatpush1.msra.mxu0 0.0
      %2271 = vmatprep.subr.mxu0 0.0
      %2272 = vmatpush1.msra.mxu0 0.0
      %2273 = vmatprep.subr.mxu0 0.0
      %2274 = vmatpush1.msra.mxu0 0.0
      %2275 = vmatprep.subr.mxu0 0.0
      %2276 = vmatpush1.msra.mxu0 0.0
      %2277 = vmatprep.subr.mxu0 0.0
      %2278 = vmatpush1.msra.mxu0 0.0
      %2279 = vmatprep.subr.mxu0 0.0
      %2280 = vmatpush1.msra.mxu0 0.0
      %2281 = vmatprep.subr.mxu0 0.0
      %2282 = vmatpush1.msra.mxu0 0.0
      %2283 = vmatprep.subr.mxu0 0.0
      %2284 = vmatpush1.msra.mxu0 0.0
      %2285 = vmatprep.subr.mxu0 0.0
      %2286 = vmatpush1.msra.mxu0 0.0
      %2287 = vmatprep.subr.mxu0 0.0
      %2288 = vmatpush1.msra.mxu0 0.0
      %2289 = vmatprep.subr.mxu0 0.0
      %2290 = vmatpush1.msra.mxu0 0.0
      %2291 = vmatprep.subr.mxu0 0.0
      %2292 = vmatpush1.msra.mxu0 0.0
      %2293 = vmatprep.subr.mxu0 0.0
      %2294 = vmatpush1.msra.mxu0 0.0
      %2295 = vmatprep.subr.mxu0 0.0
      %2296 = vmatpush1.msra.mxu0 0.0
      %2297 = vmatprep.subr.mxu0 0.0
      %2298 = vmatpush1.msra.mxu0 0.0
      %2299 = vmatprep.subr.mxu0 0.0
      %2300 = vmatpush1.msra.mxu0 0.0
      %2301 = vmatprep.subr.mxu0 0.0
      %2302 = vmatpush1.msra.mxu0 0.0
      %2303 = vmatprep.mubr.f32.mxu0 0.0
      %2304 = vmatmul.mubr.f32.gmra.mrb[0].mxu0 %v1435
      %v2305 = vpop.f32.mrb[0].mxu0
      %v2306 = vadd.f32 0.0, %v2305
      %v2307 = vpop.f32.mrb[0].mxu0
      %2308 = vmatprep.mubr.f32.mxu0 0.0
      %2309 = vmatmul.mubr.f32.gmra.mrb[0].mxu0 %v1438
      %v2310 = vpop.f32.mrb[0].mxu0
      %v2311 = vadd.f32 0.0, %v2310
      %v2312 = vpop.f32.mrb[0].mxu0
      %2313 = vmatprep.mubr.f32.mxu0 0.0
      %2314 = vmatmul.mubr.f32.gmra.mrb[0].mxu0 %v1441
      %v2315 = vpop.f32.mrb[0].mxu0
      %v2316 = vadd.f32 0.0, %v2315
      %v2317 = vpop.f32.mrb[0].mxu0
      %2318 = vmatprep.mubr.f32.mxu0 0.0
      %2319 = vmatmul.mubr.f32.gmra.mrb[0].mxu0 %v1444
      %v2320 = vpop.f32.mrb[0].mxu0
      %v2321 = vadd.f32 0.0, %v2320
      %v2322 = vpop.f32.mrb[0].mxu0
      %2323 = vmatprep.mubr.f32.mxu0 0.0
      %2324 = vmatmul.mubr.f32.gmra.mrb[0].mxu0 %v1447
      %v2325 = vpop.f32.mrb[0].mxu0
      %v2326 = vadd.f32 0.0, %v2325
      %v2327 = vpop.f32.mrb[0].mxu0
      %2328 = vmatprep.mubr.f32.mxu0 0.0
      %2329 = vmatmul.mubr.f32.gmra.mrb[0].mxu0 %v1450
      %v2330 = vpop.f32.mrb[0].mxu0
      %v2331 = vadd.f32 0.0, %v2330
      %v2332 = vpop.f32.mrb[0].mxu0
      %2333 = vmatprep.mubr.f32.mxu0 0.0
      %2334 = vmatmul.mubr.f32.gmra.mrb[0].mxu0 %v1453
      %v2335 = vpop.f32.mrb[0].mxu0
      %v2336 = vadd.f32 0.0, %v2335
      %v2337 = vpop.f32.mrb[0].mxu0
      %2338 = vmatprep.mubr.f32.mxu0 0.0
      %2339 = vmatmul.mubr.f32.gmra.mrb[0].mxu0 %v1456
      %v2340 = vpop.f32.mrb[0].mxu0
      %v2341 = vadd.f32 0.0, %v2340
      %v2342 = vpop.f32.mrb[0].mxu0
      %2343 = vdwg.mxu0
      %v2344 = vrot.slane %v2306, 7
      %v2345 = vrot.slane %v2311, 7
      %v2346 = vrot.slane %v2316, 7
      %v2347 = vrot.slane %v2321, 7
      %v2348 = vrot.slane %v2326, 7
      %v2349 = vrot.slane %v2331, 7
      %v2350 = vrot.slane %v2336, 7
      %v2351 = vrot.slane %v2341, 7
      %v2352 = vsel %vm667, %v2350, %v2351
      %v2353 = vsel %vm667, %v2349, %v2350
      %v2354 = vsel %vm667, %v2348, %v2349
      %v2355 = vsel %vm667, %v2347, %v2348
      %v2356 = vsel %vm667, %v2346, %v2347
      %v2357 = vsel %vm667, %v2345, %v2346
      %v2358 = vsel %vm667, %v2344, %v2345
      %v2359 = vsel %vm667, %v2351, %v2344
      %v2360 = vmul.f32 %v2359, %v1912
      %v2361 = vmul.f32 %v2358, %v1917
      %v2362 = vmul.f32 %v2357, %v1922
      %v2363 = vmul.f32 %v2356, %v1927
      %v2364 = vmul.f32 %v2355, %v1932
      %v2365 = vmul.f32 %v2354, %v1937
      %v2366 = vmul.f32 %v2353, %v1942
      %v2367 = vmul.f32 %v2352, %v1947
      %v2368 = vadd.f32 %v2223, %v2360
      %v2369 = vadd.f32 %v2224, %v2361
      %v2370 = vadd.f32 %v2225, %v2362
      %v2371 = vadd.f32 %v2226, %v2363
      %v2372 = vadd.f32 %v2227, %v2364
      %v2373 = vadd.f32 %v2228, %v2365
      %v2374 = vadd.f32 %v2229, %v2366
      %v2375 = vadd.f32 %v2230, %v2367
      %v2376 = vld [vmem:[%s356 + $0x180] sm:$0xff]
      %v2377 = vld [vmem:[%s356 + $0x188] sm:$0xff]
      %v2378 = vld [vmem:[%s356 + $0x190] sm:$0xff]
      %v2379 = vld [vmem:[%s356 + $0x198] sm:$0xff]
      %v2380 = vld [vmem:[%s356 + $0x1a0] sm:$0xff]
      %v2381 = vld [vmem:[%s356 + $0x1a8] sm:$0xff]
      %v2382 = vld [vmem:[%s356 + $0x1b0] sm:$0xff]
      %v2383 = vld [vmem:[%s356 + $0x1b8] sm:$0xff]
      %2384 = vmatprep.subr.mxu0 0.0
      %2385 = vmatpush1.msra.mxu0 %v2376
      %2386 = vmatprep.subr.mxu0 0.0
      %2387 = vmatpush1.msra.mxu0 %v2377
      %2388 = vmatprep.subr.mxu0 0.0
      %2389 = vmatpush1.msra.mxu0 %v2378
      %2390 = vmatprep.subr.mxu0 0.0
      %2391 = vmatpush1.msra.mxu0 %v2379
      %2392 = vmatprep.subr.mxu0 0.0
      %2393 = vmatpush1.msra.mxu0 %v2380
      %2394 = vmatprep.subr.mxu0 0.0
      %2395 = vmatpush1.msra.mxu0 %v2381
      %2396 = vmatprep.subr.mxu0 0.0
      %2397 = vmatpush1.msra.mxu0 %v2382
      %2398 = vmatprep.subr.mxu0 0.0
      %2399 = vmatpush1.msra.mxu0 %v2383
      %2400 = vmatprep.subr.mxu0 0.0
      %2401 = vmatpush1.msra.mxu0 0.0
      %2402 = vmatprep.subr.mxu0 0.0
      %2403 = vmatpush1.msra.mxu0 0.0
      %2404 = vmatprep.subr.mxu0 0.0
      %2405 = vmatpush1.msra.mxu0 0.0
      %2406 = vmatprep.subr.mxu0 0.0
      %2407 = vmatpush1.msra.mxu0 0.0
      %2408 = vmatprep.subr.mxu0 0.0
      %2409 = vmatpush1.msra.mxu0 0.0
      %2410 = vmatprep.subr.mxu0 0.0
      %2411 = vmatpush1.msra.mxu0 0.0
      %2412 = vmatprep.subr.mxu0 0.0
      %2413 = vmatpush1.msra.mxu0 0.0
      %2414 = vmatprep.subr.mxu0 0.0
      %2415 = vmatpush1.msra.mxu0 0.0
      %2416 = vmatprep.subr.mxu0 0.0
      %2417 = vmatpush1.msra.mxu0 0.0
      %2418 = vmatprep.subr.mxu0 0.0
      %2419 = vmatpush1.msra.mxu0 0.0
      %2420 = vmatprep.subr.mxu0 0.0
      %2421 = vmatpush1.msra.mxu0 0.0
      %2422 = vmatprep.subr.mxu0 0.0
      %2423 = vmatpush1.msra.mxu0 0.0
      %2424 = vmatprep.subr.mxu0 0.0
      %2425 = vmatpush1.msra.mxu0 0.0
      %2426 = vmatprep.subr.mxu0 0.0
      %2427 = vmatpush1.msra.mxu0 0.0
      %2428 = vmatprep.subr.mxu0 0.0
      %2429 = vmatpush1.msra.mxu0 0.0
      %2430 = vmatprep.subr.mxu0 0.0
      %2431 = vmatpush1.msra.mxu0 0.0
      %2432 = vmatprep.subr.mxu0 0.0
      %2433 = vmatpush1.msra.mxu0 0.0
      %2434 = vmatprep.subr.mxu0 0.0
      %2435 = vmatpush1.msra.mxu0 0.0
      %2436 = vmatprep.subr.mxu0 0.0
      %2437 = vmatpush1.msra.mxu0 0.0
      %2438 = vmatprep.subr.mxu0 0.0
      %2439 = vmatpush1.msra.mxu0 0.0
      %2440 = vmatprep.subr.mxu0 0.0
      %2441 = vmatpush1.msra.mxu0 0.0
      %2442 = vmatprep.subr.mxu0 0.0
      %2443 = vmatpush1.msra.mxu0 0.0
      %2444 = vmatprep.subr.mxu0 0.0
      %2445 = vmatpush1.msra.mxu0 0.0
      %2446 = vmatprep.subr.mxu0 0.0
      %2447 = vmatpush1.msra.mxu0 0.0
      %2448 = vmatprep.mubr.f32.mxu0 0.0
      %2449 = vmatmul.mubr.f32.gmra.mrb[0].mxu0 %v1435
      %v2450 = vpop.f32.mrb[0].mxu0
      %v2451 = vadd.f32 0.0, %v2450
      %v2452 = vpop.f32.mrb[0].mxu0
      %2453 = vmatprep.mubr.f32.mxu0 0.0
      %2454 = vmatmul.mubr.f32.gmra.mrb[0].mxu0 %v1438
      %v2455 = vpop.f32.mrb[0].mxu0
      %v2456 = vadd.f32 0.0, %v2455
      %v2457 = vpop.f32.mrb[0].mxu0
      %2458 = vmatprep.mubr.f32.mxu0 0.0
      %2459 = vmatmul.mubr.f32.gmra.mrb[0].mxu0 %v1441
      %v2460 = vpop.f32.mrb[0].mxu0
      %v2461 = vadd.f32 0.0, %v2460
      %v2462 = vpop.f32.mrb[0].mxu0
      %2463 = vmatprep.mubr.f32.mxu0 0.0
      %2464 = vmatmul.mubr.f32.gmra.mrb[0].mxu0 %v1444
      %v2465 = vpop.f32.mrb[0].mxu0
      %v2466 = vadd.f32 0.0, %v2465
      %v2467 = vpop.f32.mrb[0].mxu0
      %2468 = vmatprep.mubr.f32.mxu0 0.0
      %2469 = vmatmul.mubr.f32.gmra.mrb[0].mxu0 %v1447
      %v2470 = vpop.f32.mrb[0].mxu0
      %v2471 = vadd.f32 0.0, %v2470
      %v2472 = vpop.f32.mrb[0].mxu0
      %2473 = vmatprep.mubr.f32.mxu0 0.0
      %2474 = vmatmul.mubr.f32.gmra.mrb[0].mxu0 %v1450
      %v2475 = vpop.f32.mrb[0].mxu0
      %v2476 = vadd.f32 0.0, %v2475
      %v2477 = vpop.f32.mrb[0].mxu0
      %2478 = vmatprep.mubr.f32.mxu0 0.0
      %2479 = vmatmul.mubr.f32.gmra.mrb[0].mxu0 %v1453
      %v2480 = vpop.f32.mrb[0].mxu0
      %v2481 = vadd.f32 0.0, %v2480
      %v2482 = vpop.f32.mrb[0].mxu0
      %2483 = vmatprep.mubr.f32.mxu0 0.0
      %2484 = vmatmul.mubr.f32.gmra.mrb[0].mxu0 %v1456
      %v2485 = vpop.f32.mrb[0].mxu0
      %v2486 = vadd.f32 0.0, %v2485
      %v2487 = vpop.f32.mrb[0].mxu0
      %2488 = vdwg.mxu0
      %v2489 = vrot.slane %v2451, 1
      %v2490 = vrot.slane %v2456, 1
      %v2491 = vrot.slane %v2461, 1
      %v2492 = vrot.slane %v2466, 1
      %v2493 = vrot.slane %v2471, 1
      %v2494 = vrot.slane %v2476, 1
      %v2495 = vrot.slane %v2481, 1
      %v2496 = vrot.slane %v2486, 1
      %v2497 = vsel %vm753, %v2495, %v2496
      %v2498 = vsel %vm753, %v2494, %v2495
      %v2499 = vsel %vm753, %v2493, %v2494
      %v2500 = vsel %vm753, %v2492, %v2493
      %v2501 = vsel %vm753, %v2491, %v2492
      %v2502 = vsel %vm753, %v2490, %v2491
      %v2503 = vsel %vm753, %v2489, %v2490
      %v2504 = vsel %vm753, %v2496, %v2489
      %v2505 = vmul.f32 %v2504, %v610
      %v2506 = vmul.f32 %v2503, %v611
      %v2507 = vmul.f32 %v2502, %v612
      %v2508 = vmul.f32 %v2501, %v613
      %v2509 = vmul.f32 %v2500, %v614
      %v2510 = vmul.f32 %v2499, %v615
      %v2511 = vmul.f32 %v2498, %v616
      %v2512 = vmul.f32 %v2497, %v617
      %v2513 = vmul.f32 %v2505, %v1590
      %v2514 = vmul.f32 %v2506, %v1595
      %v2515 = vmul.f32 %v2507, %v1600
      %v2516 = vmul.f32 %v2508, %v1605
      %v2517 = vmul.f32 %v2509, %v1610
      %v2518 = vmul.f32 %v2510, %v1615
      %v2519 = vmul.f32 %v2511, %v1620
      %v2520 = vmul.f32 %v2512, %v1625
      %v2521 = vadd.f32 %v2368, %v2513
      %v2522 = vadd.f32 %v2369, %v2514
      %v2523 = vadd.f32 %v2370, %v2515
      %v2524 = vadd.f32 %v2371, %v2516
      %v2525 = vadd.f32 %v2372, %v2517
      %v2526 = vadd.f32 %v2373, %v2518
      %v2527 = vadd.f32 %v2374, %v2519
      %v2528 = vadd.f32 %v2375, %v2520
      %v2529 = vld [vmem:[%s356 + $0x1c0] sm:$0xff]
      %v2530 = vld [vmem:[%s356 + $0x1c8] sm:$0xff]
      %v2531 = vld [vmem:[%s356 + $0x1d0] sm:$0xff]
      %v2532 = vld [vmem:[%s356 + $0x1d8] sm:$0xff]
      %v2533 = vld [vmem:[%s356 + $0x1e0] sm:$0xff]
      %v2534 = vld [vmem:[%s356 + $0x1e8] sm:$0xff]
      %v2535 = vld [vmem:[%s356 + $0x1f0] sm:$0xff]
      %v2536 = vld [vmem:[%s356 + $0x1f8] sm:$0xff]
      %2537 = vmatprep.subr.mxu0 0.0
      %2538 = vmatpush1.msra.mxu0 %v2529
      %2539 = vmatprep.subr.mxu0 0.0
      %2540 = vmatpush1.msra.mxu0 %v2530
      %2541 = vmatprep.subr.mxu0 0.0
      %2542 = vmatpush1.msra.mxu0 %v2531
      %2543 = vmatprep.subr.mxu0 0.0
      %2544 = vmatpush1.msra.mxu0 %v2532
      %2545 = vmatprep.subr.mxu0 0.0
      %2546 = vmatpush1.msra.mxu0 %v2533
      %2547 = vmatprep.subr.mxu0 0.0
      %2548 = vmatpush1.msra.mxu0 %v2534
      %2549 = vmatprep.subr.mxu0 0.0
      %2550 = vmatpush1.msra.mxu0 %v2535
      %2551 = vmatprep.subr.mxu0 0.0
      %2552 = vmatpush1.msra.mxu0 %v2536
      %2553 = vmatprep.subr.mxu0 0.0
      %2554 = vmatpush1.msra.mxu0 0.0
      %2555 = vmatprep.subr.mxu0 0.0
      %2556 = vmatpush1.msra.mxu0 0.0
      %2557 = vmatprep.subr.mxu0 0.0
      %2558 = vmatpush1.msra.mxu0 0.0
      %2559 = vmatprep.subr.mxu0 0.0
      %2560 = vmatpush1.msra.mxu0 0.0
      %2561 = vmatprep.subr.mxu0 0.0
      %2562 = vmatpush1.msra.mxu0 0.0
      %2563 = vmatprep.subr.mxu0 0.0
      %2564 = vmatpush1.msra.mxu0 0.0
      %2565 = vmatprep.subr.mxu0 0.0
      %2566 = vmatpush1.msra.mxu0 0.0
      %2567 = vmatprep.subr.mxu0 0.0
      %2568 = vmatpush1.msra.mxu0 0.0
      %2569 = vmatprep.subr.mxu0 0.0
      %2570 = vmatpush1.msra.mxu0 0.0
      %2571 = vmatprep.subr.mxu0 0.0
      %2572 = vmatpush1.msra.mxu0 0.0
      %2573 = vmatprep.subr.mxu0 0.0
      %2574 = vmatpush1.msra.mxu0 0.0
      %2575 = vmatprep.subr.mxu0 0.0
      %2576 = vmatpush1.msra.mxu0 0.0
      %2577 = vmatprep.subr.mxu0 0.0
      %2578 = vmatpush1.msra.mxu0 0.0
      %2579 = vmatprep.subr.mxu0 0.0
      %2580 = vmatpush1.msra.mxu0 0.0
      %2581 = vmatprep.subr.mxu0 0.0
      %2582 = vmatpush1.msra.mxu0 0.0
      %2583 = vmatprep.subr.mxu0 0.0
      %2584 = vmatpush1.msra.mxu0 0.0
      %2585 = vmatprep.subr.mxu0 0.0
      %2586 = vmatpush1.msra.mxu0 0.0
      %2587 = vmatprep.subr.mxu0 0.0
      %2588 = vmatpush1.msra.mxu0 0.0
      %2589 = vmatprep.subr.mxu0 0.0
      %2590 = vmatpush1.msra.mxu0 0.0
      %2591 = vmatprep.subr.mxu0 0.0
      %2592 = vmatpush1.msra.mxu0 0.0
      %2593 = vmatprep.subr.mxu0 0.0
      %2594 = vmatpush1.msra.mxu0 0.0
      %2595 = vmatprep.subr.mxu0 0.0
      %2596 = vmatpush1.msra.mxu0 0.0
      %2597 = vmatprep.subr.mxu0 0.0
      %2598 = vmatpush1.msra.mxu0 0.0
      %2599 = vmatprep.subr.mxu0 0.0
      %2600 = vmatpush1.msra.mxu0 0.0
      %2601 = vmatprep.mubr.f32.mxu0 0.0
      %2602 = vmatmul.mubr.f32.gmra.mrb[0].mxu0 %v1435
      %v2603 = vpop.f32.mrb[0].mxu0
      %v2604 = vadd.f32 0.0, %v2603
      %v2605 = vpop.f32.mrb[0].mxu0
      %2606 = vmatprep.mubr.f32.mxu0 0.0
      %2607 = vmatmul.mubr.f32.gmra.mrb[0].mxu0 %v1438
      %v2608 = vpop.f32.mrb[0].mxu0
      %v2609 = vadd.f32 0.0, %v2608
      %v2610 = vpop.f32.mrb[0].mxu0
      %2611 = vmatprep.mubr.f32.mxu0 0.0
      %2612 = vmatmul.mubr.f32.gmra.mrb[0].mxu0 %v1441
      %v2613 = vpop.f32.mrb[0].mxu0
      %v2614 = vadd.f32 0.0, %v2613
      %v2615 = vpop.f32.mrb[0].mxu0
      %2616 = vmatprep.mubr.f32.mxu0 0.0
      %2617 = vmatmul.mubr.f32.gmra.mrb[0].mxu0 %v1444
      %v2618 = vpop.f32.mrb[0].mxu0
      %v2619 = vadd.f32 0.0, %v2618
      %v2620 = vpop.f32.mrb[0].mxu0
      %2621 = vmatprep.mubr.f32.mxu0 0.0
      %2622 = vmatmul.mubr.f32.gmra.mrb[0].mxu0 %v1447
      %v2623 = vpop.f32.mrb[0].mxu0
      %v2624 = vadd.f32 0.0, %v2623
      %v2625 = vpop.f32.mrb[0].mxu0
      %2626 = vmatprep.mubr.f32.mxu0 0.0
      %2627 = vmatmul.mubr.f32.gmra.mrb[0].mxu0 %v1450
      %v2628 = vpop.f32.mrb[0].mxu0
      %v2629 = vadd.f32 0.0, %v2628
      %v2630 = vpop.f32.mrb[0].mxu0
      %2631 = vmatprep.mubr.f32.mxu0 0.0
      %2632 = vmatmul.mubr.f32.gmra.mrb[0].mxu0 %v1453
      %v2633 = vpop.f32.mrb[0].mxu0
      %v2634 = vadd.f32 0.0, %v2633
      %v2635 = vpop.f32.mrb[0].mxu0
      %2636 = vmatprep.mubr.f32.mxu0 0.0
      %2637 = vmatmul.mubr.f32.gmra.mrb[0].mxu0 %v1456
      %v2638 = vpop.f32.mrb[0].mxu0
      %v2639 = vadd.f32 0.0, %v2638
      %v2640 = vpop.f32.mrb[0].mxu0
      %2641 = vdwg.mxu0
      %v2642 = vmul.f32 %v2639, %v610
      %v2643 = vmul.f32 %v2604, %v611
      %v2644 = vmul.f32 %v2609, %v612
      %v2645 = vmul.f32 %v2614, %v613
      %v2646 = vmul.f32 %v2619, %v614
      %v2647 = vmul.f32 %v2624, %v615
      %v2648 = vmul.f32 %v2629, %v616
      %v2649 = vmul.f32 %v2634, %v617
      %v2650 = vadd.f32 %v2521, %v2642
      %v2651 = vadd.f32 %v2522, %v2643
      %v2652 = vadd.f32 %v2523, %v2644
      %v2653 = vadd.f32 %v2524, %v2645
      %v2654 = vadd.f32 %v2525, %v2646
      %v2655 = vadd.f32 %v2526, %v2647
      %v2656 = vadd.f32 %v2527, %v2648
      %v2657 = vadd.f32 %v2528, %v2649
      %v2658 = vld [vmem:[%s356 + $0x200] sm:$0xff]
      %v2659 = vld [vmem:[%s356 + $0x208] sm:$0xff]
      %v2660 = vld [vmem:[%s356 + $0x210] sm:$0xff]
      %v2661 = vld [vmem:[%s356 + $0x218] sm:$0xff]
      %v2662 = vld [vmem:[%s356 + $0x220] sm:$0xff]
      %v2663 = vld [vmem:[%s356 + $0x228] sm:$0xff]
      %v2664 = vld [vmem:[%s356 + $0x230] sm:$0xff]
      %v2665 = vld [vmem:[%s356 + $0x238] sm:$0xff]
      %2666 = vmatprep.subr.mxu0 0.0
      %2667 = vmatpush1.msra.mxu0 %v2658
      %2668 = vmatprep.subr.mxu0 0.0
      %2669 = vmatpush1.msra.mxu0 %v2659
      %2670 = vmatprep.subr.mxu0 0.0
      %2671 = vmatpush1.msra.mxu0 %v2660
      %2672 = vmatprep.subr.mxu0 0.0
      %2673 = vmatpush1.msra.mxu0 %v2661
      %2674 = vmatprep.subr.mxu0 0.0
      %2675 = vmatpush1.msra.mxu0 %v2662
      %2676 = vmatprep.subr.mxu0 0.0
      %2677 = vmatpush1.msra.mxu0 %v2663
      %2678 = vmatprep.subr.mxu0 0.0
      %2679 = vmatpush1.msra.mxu0 %v2664
      %2680 = vmatprep.subr.mxu0 0.0
      %2681 = vmatpush1.msra.mxu0 %v2665
      %2682 = vmatprep.subr.mxu0 0.0
      %2683 = vmatpush1.msra.mxu0 0.0
      %2684 = vmatprep.subr.mxu0 0.0
      %2685 = vmatpush1.msra.mxu0 0.0
      %2686 = vmatprep.subr.mxu0 0.0
      %2687 = vmatpush1.msra.mxu0 0.0
      %2688 = vmatprep.subr.mxu0 0.0
      %2689 = vmatpush1.msra.mxu0 0.0
      %2690 = vmatprep.subr.mxu0 0.0
      %2691 = vmatpush1.msra.mxu0 0.0
      %2692 = vmatprep.subr.mxu0 0.0
      %2693 = vmatpush1.msra.mxu0 0.0
      %2694 = vmatprep.subr.mxu0 0.0
      %2695 = vmatpush1.msra.mxu0 0.0
      %2696 = vmatprep.subr.mxu0 0.0
      %2697 = vmatpush1.msra.mxu0 0.0
      %2698 = vmatprep.subr.mxu0 0.0
      %2699 = vmatpush1.msra.mxu0 0.0
      %2700 = vmatprep.subr.mxu0 0.0
      %2701 = vmatpush1.msra.mxu0 0.0
      %2702 = vmatprep.subr.mxu0 0.0
      %2703 = vmatpush1.msra.mxu0 0.0
      %2704 = vmatprep.subr.mxu0 0.0
      %2705 = vmatpush1.msra.mxu0 0.0
      %2706 = vmatprep.subr.mxu0 0.0
      %2707 = vmatpush1.msra.mxu0 0.0
      %2708 = vmatprep.subr.mxu0 0.0
      %2709 = vmatpush1.msra.mxu0 0.0
      %2710 = vmatprep.subr.mxu0 0.0
      %2711 = vmatpush1.msra.mxu0 0.0
      %2712 = vmatprep.subr.mxu0 0.0
      %2713 = vmatpush1.msra.mxu0 0.0
      %2714 = vmatprep.subr.mxu0 0.0
      %2715 = vmatpush1.msra.mxu0 0.0
      %2716 = vmatprep.subr.mxu0 0.0
      %2717 = vmatpush1.msra.mxu0 0.0
      %2718 = vmatprep.subr.mxu0 0.0
      %2719 = vmatpush1.msra.mxu0 0.0
      %2720 = vmatprep.subr.mxu0 0.0
      %2721 = vmatpush1.msra.mxu0 0.0
      %2722 = vmatprep.subr.mxu0 0.0
      %2723 = vmatpush1.msra.mxu0 0.0
      %2724 = vmatprep.subr.mxu0 0.0
      %2725 = vmatpush1.msra.mxu0 0.0
      %2726 = vmatprep.subr.mxu0 0.0
      %2727 = vmatpush1.msra.mxu0 0.0
      %2728 = vmatprep.subr.mxu0 0.0
      %2729 = vmatpush1.msra.mxu0 0.0
      %2730 = vmatprep.mubr.f32.mxu0 0.0
      %2731 = vmatmul.mubr.f32.gmra.mrb[0].mxu0 %v1435
      %v2732 = vpop.f32.mrb[0].mxu0
      %v2733 = vadd.f32 0.0, %v2732
      %v2734 = vpop.f32.mrb[0].mxu0
      %2735 = vmatprep.mubr.f32.mxu0 0.0
      %2736 = vmatmul.mubr.f32.gmra.mrb[0].mxu0 %v1438
      %v2737 = vpop.f32.mrb[0].mxu0
      %v2738 = vadd.f32 0.0, %v2737
      %v2739 = vpop.f32.mrb[0].mxu0
      %2740 = vmatprep.mubr.f32.mxu0 0.0
      %2741 = vmatmul.mubr.f32.gmra.mrb[0].mxu0 %v1441
      %v2742 = vpop.f32.mrb[0].mxu0
      %v2743 = vadd.f32 0.0, %v2742
      %v2744 = vpop.f32.mrb[0].mxu0
      %2745 = vmatprep.mubr.f32.mxu0 0.0
      %2746 = vmatmul.mubr.f32.gmra.mrb[0].mxu0 %v1444
      %v2747 = vpop.f32.mrb[0].mxu0
      %v2748 = vadd.f32 0.0, %v2747
      %v2749 = vpop.f32.mrb[0].mxu0
      %2750 = vmatprep.mubr.f32.mxu0 0.0
      %2751 = vmatmul.mubr.f32.gmra.mrb[0].mxu0 %v1447
      %v2752 = vpop.f32.mrb[0].mxu0
      %v2753 = vadd.f32 0.0, %v2752
      %v2754 = vpop.f32.mrb[0].mxu0
      %2755 = vmatprep.mubr.f32.mxu0 0.0
      %2756 = vmatmul.mubr.f32.gmra.mrb[0].mxu0 %v1450
      %v2757 = vpop.f32.mrb[0].mxu0
      %v2758 = vadd.f32 0.0, %v2757
      %v2759 = vpop.f32.mrb[0].mxu0
      %2760 = vmatprep.mubr.f32.mxu0 0.0
      %2761 = vmatmul.mubr.f32.gmra.mrb[0].mxu0 %v1453
      %v2762 = vpop.f32.mrb[0].mxu0
      %v2763 = vadd.f32 0.0, %v2762
      %v2764 = vpop.f32.mrb[0].mxu0
      %2765 = vmatprep.mubr.f32.mxu0 0.0
      %2766 = vmatmul.mubr.f32.gmra.mrb[0].mxu0 %v1456
      %v2767 = vpop.f32.mrb[0].mxu0
      %v2768 = vadd.f32 0.0, %v2767
      %v2769 = vpop.f32.mrb[0].mxu0
      %2770 = vdwg.mxu0
      %v2771 = vrot.slane %v2733, 7
      %v2772 = vrot.slane %v2738, 7
      %v2773 = vrot.slane %v2743, 7
      %v2774 = vrot.slane %v2748, 7
      %v2775 = vrot.slane %v2753, 7
      %v2776 = vrot.slane %v2758, 7
      %v2777 = vrot.slane %v2763, 7
      %v2778 = vrot.slane %v2768, 7
      %v2779 = vsel %vm667, %v2777, %v2778
      %v2780 = vsel %vm667, %v2776, %v2777
      %v2781 = vsel %vm667, %v2775, %v2776
      %v2782 = vsel %vm667, %v2774, %v2775
      %v2783 = vsel %vm667, %v2773, %v2774
      %v2784 = vsel %vm667, %v2772, %v2773
      %v2785 = vsel %vm667, %v2771, %v2772
      %v2786 = vsel %vm667, %v2778, %v2771
      %v2787 = vmul.f32 %v2779, %v610
      %v2788 = vmul.f32 %v2786, %v611
      %v2789 = vmul.f32 %v2785, %v612
      %v2790 = vmul.f32 %v2784, %v613
      %v2791 = vmul.f32 %v2783, %v614
      %v2792 = vmul.f32 %v2782, %v615
      %v2793 = vmul.f32 %v2781, %v616
      %v2794 = vmul.f32 %v2780, %v617
      %v2795 = vmul.f32 %v2787, %v1912
      %v2796 = vmul.f32 %v2788, %v1917
      %v2797 = vmul.f32 %v2789, %v1922
      %v2798 = vmul.f32 %v2790, %v1927
      %v2799 = vmul.f32 %v2791, %v1932
      %v2800 = vmul.f32 %v2792, %v1937
      %v2801 = vmul.f32 %v2793, %v1942
      %v2802 = vmul.f32 %v2794, %v1947
      %v2803 = vadd.f32 %v2650, %v2795
      %v2804 = vadd.f32 %v2651, %v2796
      %v2805 = vadd.f32 %v2652, %v2797
      %v2806 = vadd.f32 %v2653, %v2798
      %v2807 = vadd.f32 %v2654, %v2799
      %v2808 = vadd.f32 %v2655, %v2800
      %v2809 = vadd.f32 %v2656, %v2801
      %v2810 = vadd.f32 %v2657, %v2802
      %v2811 = vld [vmem:[%s361] sm:$0xff]
      %v2812 = vld [vmem:[%s361 + $0x8] sm:$0xff]
      %v2813 = vld [vmem:[%s361 + $0x10] sm:$0xff]
      %v2814 = vld [vmem:[%s361 + $0x18] sm:$0xff]
      %v2815 = vld [vmem:[%s361 + $0x20] sm:$0xff]
      %v2816 = vld [vmem:[%s361 + $0x28] sm:$0xff]
      %v2817 = vld [vmem:[%s361 + $0x30] sm:$0xff]
      %v2818 = vld [vmem:[%s361 + $0x38] sm:$0xff]
      %v2819 = vmul.f32 %v2803, 0.11111111
      %v2820 = vmul.f32 %v2804, 0.11111111
      %v2821 = vmul.f32 %v2805, 0.11111111
      %v2822 = vmul.f32 %v2806, 0.11111111
      %v2823 = vmul.f32 %v2807, 0.11111111
      %v2824 = vmul.f32 %v2808, 0.11111111
      %v2825 = vmul.f32 %v2809, 0.11111111
      %v2826 = vmul.f32 %v2810, 0.11111111
      %v2827 = vmul.f32 %v2811, %v2819
      %v2828 = vmul.f32 %v2812, %v2820
      %v2829 = vmul.f32 %v2813, %v2821
      %v2830 = vmul.f32 %v2814, %v2822
      %v2831 = vmul.f32 %v2815, %v2823
      %v2832 = vmul.f32 %v2816, %v2824
      %v2833 = vmul.f32 %v2817, %v2825
      %v2834 = vmul.f32 %v2818, %v2826
      %vm2835 = vcmask 31744
      %2836 = vst.msk [vmem:[%s366] sm:$0xff] %vm2835, %v2827
      %2837 = vst.msk [vmem:[%s366 + $0x8] sm:$0xff] %vm2835, %v2828
      %2838 = vst.msk [vmem:[%s366 + $0x10] sm:$0xff] %vm2835, %v2829
      %2839 = vst.msk [vmem:[%s366 + $0x18] sm:$0xff] %vm2835, %v2830
      %2840 = vst.msk [vmem:[%s366 + $0x20] sm:$0xff] %vm2835, %v2831
      %2841 = vst.msk [vmem:[%s366 + $0x28] sm:$0xff] %vm2835, %v2832
      %2842 = vst.msk [vmem:[%s366 + $0x30] sm:$0xff] %vm2835, %v2833
      %2843 = vst.msk [vmem:[%s366 + $0x38] sm:$0xff] %vm2835, %v2834
      %p2844 = scmp.lt.s32.totalorder %s18, 1
      %s2845 = scalar_select %p2844, %s18, 1
      %s2846 = smul.addr %s2845, 8
      %s2847 = smul.addr %s2846, 8
      %s2848 = scalar_lea.vmem %s7, %s2847
      // Predicated region
      $region49: #{forward.22} parent=47 // pred_check
        %p2849 = pneg %p213
      $region50: #{forward.22} parent=47 // pred_check_branch
        %2851 = sbr.rel (%p2849) target = $region52
      $region51: #{forward.22} parent=47 // pred_region
        _
      $region52: #{forward.22} parent=47 // pred_fallthru
        _
    $region48: #{forward.22} parent=5 // pred_fallthru
      _
    %p2852 = scmp.le.s32.totalorder 2, %s13
    // Predicated region
    $region53: #{forward.22} parent=5 // pred_check
      %p2853 = pneg %p2852
    $region54: #{forward.22} parent=5 // pred_check_branch
      %2855 = sbr.rel (%p2853) target = $region56
    $region55: #{forward.22} parent=5 // pred_region
      %s2856 = ssub.s32 %s13, 2
      // Predicated region
      $region57: #{forward.22} parent=55 // pred_check
        %p2857 = pneg %p219
      $region58: #{forward.22} parent=55 // pred_check_branch
        %2859 = sbr.rel (%p2857) target = $region60
      $region59: #{forward.22} parent=55 // pred_region
        %p2860 = scmp.lt.s32.totalorder %s19, 1
        %s2861 = scalar_select %p2860, %s19, 1
        %s2862 = smul.addr %s2861, 8
        %s2863 = smul.addr %s2862, 8
        %s2864 = scalar_lea.vmem %s7, %s2863
      $region60: #{forward.22} parent=55 // pred_fallthru
        _
    $region56: #{forward.22} parent=5 // pred_fallthru
      _
  $region6: #{forward.22} parent=0 // loop_footer
    %s17 = sadd.s32 1, %s13
  $region7: #{forward.22} parent=0 // loop_footer_branch
    %12 = sbr.rel target = $region3
  $region8: #{forward.22} parent=0 // loop_exit
    _

// kernel: forward.23
$region0: #{forward.23}
  #allocation0 [shape = 'u32[]', space=smem, size = 0x4, offset = 0x4, fixed_abs, tag = 'smem constant byte address 0x4 - core index']
  #allocation1 [shape = 'u32[144,128]{1,0:T(1,128)}', space=vmem, size = 0x12000, scoped, tag = 'internal scratch']
  #allocation2 [shape = 'f32[128,128]{1,0:T(8,128)}', space=vmem, size = 0x10000, scoped, tag = 'scratch operand']
  %s0 = inlined_call_operand.vmem [shape: f32[128,128], index: 0, kind: input, shape index: {}]
  %s1 = inlined_call_operand.vmem [shape: f32[128,128], index: 1, kind: input, shape index: {}]
  %s2 = inlined_call_operand.vmem [shape: f32[1,128], index: 2, kind: input, shape index: {}]
  %s3 = inlined_call_operand.vmem [shape: f32[128,128], index: 3, kind: output, shape index: {}]
  %s4 = sld [smem:[#allocation0]]
  $region30: #{forward.23} parent=0
    _
  %s6 = ssub.s32 1, %s4
  %s7 = scalar_select 0, %s6, %s4
  // Predicated region
  $region2: #{forward.23} parent=0 // pred_check
    _
  $region3: #{forward.23} parent=0 // pred_check_branch
    %9 = sbr.rel (0) target = $region5
  $region4: #{forward.23} parent=0 // pred_region
    _
  $region5: #{forward.23} parent=0 // pred_fallthru
    _
  // Predicated region
  $region6: #{forward.23} parent=0 // pred_check
    _
  $region7: #{forward.23} parent=0 // pred_check_branch
    %11 = sbr.rel (0) target = $region9
  $region8: #{forward.23} parent=0 // pred_region
    _
  $region9: #{forward.23} parent=0 // pred_fallthru
    _
  // Predicated region
  $region10: #{forward.23} parent=0 // pred_check
    _
  $region11: #{forward.23} parent=0 // pred_check_branch
    %13 = sbr.rel (0) target = $region13
  $region12: #{forward.23} parent=0 // pred_region
    _
  $region13: #{forward.23} parent=0 // pred_fallthru
    _
  %p14 = scmp.eq.s32.totalorder 0, 0
  // Predicated region
  $region14: #{forward.23} parent=0 // pred_check
    %p15 = pneg %p14
  $region15: #{forward.23} parent=0 // pred_check_branch
    %17 = sbr.rel (%p15) target = $region17
  $region16: #{forward.23} parent=0 // pred_region
    %18 = vst [vmem:[#allocation2] sm:$0xff] 0.0
    %19 = vst [vmem:[#allocation2 + $0x8] sm:$0xff] 0.0
    %20 = vst [vmem:[#allocation2 + $0x10] sm:$0xff] 0.0
    %21 = vst [vmem:[#allocation2 + $0x18] sm:$0xff] 0.0
    %22 = vst [vmem:[#allocation2 + $0x20] sm:$0xff] 0.0
    %23 = vst [vmem:[#allocation2 + $0x28] sm:$0xff] 0.0
    %24 = vst [vmem:[#allocation2 + $0x30] sm:$0xff] 0.0
    %25 = vst [vmem:[#allocation2 + $0x38] sm:$0xff] 0.0
    %26 = vst [vmem:[#allocation2 + $0x40] sm:$0xff] 0.0
    %27 = vst [vmem:[#allocation2 + $0x48] sm:$0xff] 0.0
    %28 = vst [vmem:[#allocation2 + $0x50] sm:$0xff] 0.0
    %29 = vst [vmem:[#allocation2 + $0x58] sm:$0xff] 0.0
    %30 = vst [vmem:[#allocation2 + $0x60] sm:$0xff] 0.0
    %31 = vst [vmem:[#allocation2 + $0x68] sm:$0xff] 0.0
    %32 = vst [vmem:[#allocation2 + $0x70] sm:$0xff] 0.0
    %33 = vst [vmem:[#allocation2 + $0x78] sm:$0xff] 0.0
  $region17: #{forward.23} parent=0 // pred_fallthru
    _
  %v34 = vld [vmem:[#allocation2] sm:$0xff]
  %v35 = vld [vmem:[#allocation2 + $0x8] sm:$0xff]
  %v36 = vld [vmem:[#allocation2 + $0x10] sm:$0xff]
  %v37 = vld [vmem:[#allocation2 + $0x18] sm:$0xff]
  %v38 = vld [vmem:[#allocation2 + $0x20] sm:$0xff]
  %v39 = vld [vmem:[#allocation2 + $0x28] sm:$0xff]
  %v40 = vld [vmem:[#allocation2 + $0x30] sm:$0xff]
  %v41 = vld [vmem:[#allocation2 + $0x38] sm:$0xff]
  %v42 = vld [vmem:[#allocation2 + $0x40] sm:$0xff]
  %v43 = vld [vmem:[#allocation2 + $0x48] sm:$0xff]
  %v44 = vld [vmem:[#allocation2 + $0x50] sm:$0xff]
  %v45 = vld [vmem:[#allocation2 + $0x58] sm:$0xff]
  %v46 = vld [vmem:[#allocation2 + $0x60] sm:$0xff]
  %v47 = vld [vmem:[#allocation2 + $0x68] sm:$0xff]
  %v48 = vld [vmem:[#allocation2 + $0x70] sm:$0xff]
  %v49 = vld [vmem:[#allocation2 + $0x78] sm:$0xff]
  %v50 = vld [vmem:[%s0] sm:$0xff]
  %v51 = vld [vmem:[%s0 + $0x8] sm:$0xff]
  %v52 = vld [vmem:[%s0 + $0x10] sm:$0xff]
  %v53 = vld [vmem:[%s0 + $0x18] sm:$0xff]
  %v54 = vld [vmem:[%s0 + $0x20] sm:$0xff]
  %v55 = vld [vmem:[%s0 + $0x28] sm:$0xff]
  %v56 = vld [vmem:[%s0 + $0x30] sm:$0xff]
  %v57 = vld [vmem:[%s0 + $0x38] sm:$0xff]
  %v58 = vld [vmem:[%s0 + $0x40] sm:$0xff]
  %v59 = vld [vmem:[%s0 + $0x48] sm:$0xff]
  %v60 = vld [vmem:[%s0 + $0x50] sm:$0xff]
  %v61 = vld [vmem:[%s0 + $0x58] sm:$0xff]
  %v62 = vld [vmem:[%s0 + $0x60] sm:$0xff]
  %v63 = vld [vmem:[%s0 + $0x68] sm:$0xff]
  %v64 = vld [vmem:[%s0 + $0x70] sm:$0xff]
  %v65 = vld [vmem:[%s0 + $0x78] sm:$0xff]
  %v66 = vld [vmem:[%s1] sm:$0xff]
  %v67 = vld [vmem:[%s1 + $0x8] sm:$0xff]
  %v68 = vld [vmem:[%s1 + $0x10] sm:$0xff]
  %v69 = vld [vmem:[%s1 + $0x18] sm:$0xff]
  %v70 = vld [vmem:[%s1 + $0x20] sm:$0xff]
  %v71 = vld [vmem:[%s1 + $0x28] sm:$0xff]
  %v72 = vld [vmem:[%s1 + $0x30] sm:$0xff]
  %v73 = vld [vmem:[%s1 + $0x38] sm:$0xff]
  %v74 = vld [vmem:[%s1 + $0x40] sm:$0xff]
  %v75 = vld [vmem:[%s1 + $0x48] sm:$0xff]
  %v76 = vld [vmem:[%s1 + $0x50] sm:$0xff]
  %v77 = vld [vmem:[%s1 + $0x58] sm:$0xff]
  %v78 = vld [vmem:[%s1 + $0x60] sm:$0xff]
  %v79 = vld [vmem:[%s1 + $0x68] sm:$0xff]
  %v80 = vld [vmem:[%s1 + $0x70] sm:$0xff]
  %v81 = vld [vmem:[%s1 + $0x78] sm:$0xff]
  %82 = vmatprep.subr.mxu0 0.0
  %83 = vmatpush1.msra.mxu0 %v66
  %84 = vmatprep.subr.mxu0 0.0
  %85 = vmatpush1.msra.mxu0 %v67
  %86 = vmatprep.subr.mxu0 0.0
  %87 = vmatpush1.msra.mxu0 %v68
  %88 = vmatprep.subr.mxu0 0.0
  %89 = vmatpush1.msra.mxu0 %v69
  %90 = vmatprep.subr.mxu0 0.0
  %91 = vmatpush1.msra.mxu0 %v70
  %92 = vmatprep.subr.mxu0 0.0
  %93 = vmatpush1.msra.mxu0 %v71
  %94 = vmatprep.subr.mxu0 0.0
  %95 = vmatpush1.msra.mxu0 %v72
  %96 = vmatprep.subr.mxu0 0.0
  %97 = vmatpush1.msra.mxu0 %v73
  %98 = vmatprep.subr.mxu0 0.0
  %99 = vmatpush1.msra.mxu0 %v74
  %100 = vmatprep.subr.mxu0 0.0
  %101 = vmatpush1.msra.mxu0 %v75
  %102 = vmatprep.subr.mxu0 0.0
  %103 = vmatpush1.msra.mxu0 %v76
  %104 = vmatprep.subr.mxu0 0.0
  %105 = vmatpush1.msra.mxu0 %v77
  %106 = vmatprep.subr.mxu0 0.0
  %107 = vmatpush1.msra.mxu0 %v78
  %108 = vmatprep.subr.mxu0 0.0
  %109 = vmatpush1.msra.mxu0 %v79
  %110 = vmatprep.subr.mxu0 0.0
  %111 = vmatpush1.msra.mxu0 %v80
  %112 = vmatprep.subr.mxu0 0.0
  %113 = vmatpush1.msra.mxu0 %v81
  %114 = vmatprep.subr.mxu0 0.0
  %115 = vmatpush1.msra.mxu0 0.0
  %116 = vmatprep.subr.mxu0 0.0
  %117 = vmatpush1.msra.mxu0 0.0
  %118 = vmatprep.subr.mxu0 0.0
  %119 = vmatpush1.msra.mxu0 0.0
  %120 = vmatprep.subr.mxu0 0.0
  %121 = vmatpush1.msra.mxu0 0.0
  %122 = vmatprep.subr.mxu0 0.0
  %123 = vmatpush1.msra.mxu0 0.0
  %124 = vmatprep.subr.mxu0 0.0
  %125 = vmatpush1.msra.mxu0 0.0
  %126 = vmatprep.subr.mxu0 0.0
  %127 = vmatpush1.msra.mxu0 0.0
  %128 = vmatprep.subr.mxu0 0.0
  %129 = vmatpush1.msra.mxu0 0.0
  %130 = vmatprep.subr.mxu0 0.0
  %131 = vmatpush1.msra.mxu0 0.0
  %132 = vmatprep.subr.mxu0 0.0
  %133 = vmatpush1.msra.mxu0 0.0
  %134 = vmatprep.subr.mxu0 0.0
  %135 = vmatpush1.msra.mxu0 0.0
  %136 = vmatprep.subr.mxu0 0.0
  %137 = vmatpush1.msra.mxu0 0.0
  %138 = vmatprep.subr.mxu0 0.0
  %139 = vmatpush1.msra.mxu0 0.0
  %140 = vmatprep.subr.mxu0 0.0
  %141 = vmatpush1.msra.mxu0 0.0
  %142 = vmatprep.subr.mxu0 0.0
  %143 = vmatpush1.msra.mxu0 0.0
  %144 = vmatprep.subr.mxu0 0.0
  %145 = vmatpush1.msra.mxu0 0.0
  %146 = vmatprep.mubr.f32.mxu0 0.0
  %147 = vmatmul.mubr.f32.gmra.mrb[0].mxu0 %v50
  %v148 = vpop.f32.mrb[0].mxu0
  %v149 = vadd.f32 0.0, %v148
  %v150 = vpop.f32.mrb[0].mxu0
  %151 = vmatprep.mubr.f32.mxu0 0.0
  %152 = vmatmul.mubr.f32.gmra.mrb[0].mxu0 %v51
  %v153 = vpop.f32.mrb[0].mxu0
  %v154 = vadd.f32 0.0, %v153
  %v155 = vpop.f32.mrb[0].mxu0
  %156 = vmatprep.mubr.f32.mxu0 0.0
  %157 = vmatmul.mubr.f32.gmra.mrb[0].mxu0 %v52
  %v158 = vpop.f32.mrb[0].mxu0
  %v159 = vadd.f32 0.0, %v158
  %v160 = vpop.f32.mrb[0].mxu0
  %161 = vmatprep.mubr.f32.mxu0 0.0
  %162 = vmatmul.mubr.f32.gmra.mrb[0].mxu0 %v53
  %v163 = vpop.f32.mrb[0].mxu0
  %v164 = vadd.f32 0.0, %v163
  %v165 = vpop.f32.mrb[0].mxu0
  %166 = vmatprep.mubr.f32.mxu0 0.0
  %167 = vmatmul.mubr.f32.gmra.mrb[0].mxu0 %v54
  %v168 = vpop.f32.mrb[0].mxu0
  %v169 = vadd.f32 0.0, %v168
  %v170 = vpop.f32.mrb[0].mxu0
  %171 = vmatprep.mubr.f32.mxu0 0.0
  %172 = vmatmul.mubr.f32.gmra.mrb[0].mxu0 %v55
  %v173 = vpop.f32.mrb[0].mxu0
  %v174 = vadd.f32 0.0, %v173
  %v175 = vpop.f32.mrb[0].mxu0
  %176 = vmatprep.mubr.f32.mxu0 0.0
  %177 = vmatmul.mubr.f32.gmra.mrb[0].mxu0 %v56
  %v178 = vpop.f32.mrb[0].mxu0
  %v179 = vadd.f32 0.0, %v178
  %v180 = vpop.f32.mrb[0].mxu0
  %181 = vmatprep.mubr.f32.mxu0 0.0
  %182 = vmatmul.mubr.f32.gmra.mrb[0].mxu0 %v57
  %v183 = vpop.f32.mrb[0].mxu0
  %v184 = vadd.f32 0.0, %v183
  %v185 = vpop.f32.mrb[0].mxu0
  %186 = vmatprep.mubr.f32.mxu0 0.0
  %187 = vmatmul.mubr.f32.gmra.mrb[0].mxu0 %v58
  %v188 = vpop.f32.mrb[0].mxu0
  %v189 = vadd.f32 0.0, %v188
  %v190 = vpop.f32.mrb[0].mxu0
  %191 = vmatprep.mubr.f32.mxu0 0.0
  %192 = vmatmul.mubr.f32.gmra.mrb[0].mxu0 %v59
  %v193 = vpop.f32.mrb[0].mxu0
  %v194 = vadd.f32 0.0, %v193
  %v195 = vpop.f32.mrb[0].mxu0
  %196 = vmatprep.mubr.f32.mxu0 0.0
  %197 = vmatmul.mubr.f32.gmra.mrb[0].mxu0 %v60
  %v198 = vpop.f32.mrb[0].mxu0
  %v199 = vadd.f32 0.0, %v198
  %v200 = vpop.f32.mrb[0].mxu0
  %201 = vmatprep.mubr.f32.mxu0 0.0
  %202 = vmatmul.mubr.f32.gmra.mrb[0].mxu0 %v61
  %v203 = vpop.f32.mrb[0].mxu0
  %v204 = vadd.f32 0.0, %v203
  %v205 = vpop.f32.mrb[0].mxu0
  %206 = vmatprep.mubr.f32.mxu0 0.0
  %207 = vmatmul.mubr.f32.gmra.mrb[0].mxu0 %v62
  %v208 = vpop.f32.mrb[0].mxu0
  %v209 = vadd.f32 0.0, %v208
  %v210 = vpop.f32.mrb[0].mxu0
  %211 = vmatprep.mubr.f32.mxu0 0.0
  %212 = vmatmul.mubr.f32.gmra.mrb[0].mxu0 %v63
  %v213 = vpop.f32.mrb[0].mxu0
  %v214 = vadd.f32 0.0, %v213
  %v215 = vpop.f32.mrb[0].mxu0
  %216 = vmatprep.mubr.f32.mxu0 0.0
  %217 = vmatmul.mubr.f32.gmra.mrb[0].mxu0 %v64
  %v218 = vpop.f32.mrb[0].mxu0
  %v219 = vadd.f32 0.0, %v218
  %v220 = vpop.f32.mrb[0].mxu0
  %221 = vmatprep.mubr.f32.mxu0 0.0
  %222 = vmatmul.mubr.f32.gmra.mrb[0].mxu0 %v65
  %v223 = vpop.f32.mrb[0].mxu0
  %v224 = vadd.f32 0.0, %v223
  %v225 = vpop.f32.mrb[0].mxu0
  %226 = vdwg.mxu0
  %v227 = vadd.f32 %v34, %v149
  %v228 = vadd.f32 %v35, %v154
  %v229 = vadd.f32 %v36, %v159
  %v230 = vadd.f32 %v37, %v164
  %v231 = vadd.f32 %v38, %v169
  %v232 = vadd.f32 %v39, %v174
  %v233 = vadd.f32 %v40, %v179
  %v234 = vadd.f32 %v41, %v184
  %v235 = vadd.f32 %v42, %v189
  %v236 = vadd.f32 %v43, %v194
  %v237 = vadd.f32 %v44, %v199
  %v238 = vadd.f32 %v45, %v204
  %v239 = vadd.f32 %v46, %v209
  %v240 = vadd.f32 %v47, %v214
  %v241 = vadd.f32 %v48, %v219
  %v242 = vadd.f32 %v49, %v224
  %243 = vst [vmem:[#allocation2] sm:$0xff] %v227
  %244 = vst [vmem:[#allocation2 + $0x8] sm:$0xff] %v228
  %245 = vst [vmem:[#allocation2 + $0x10] sm:$0xff] %v229
  %246 = vst [vmem:[#allocation2 + $0x18] sm:$0xff] %v230
  %247 = vst [vmem:[#allocation2 + $0x20] sm:$0xff] %v231
  %248 = vst [vmem:[#allocation2 + $0x28] sm:$0xff] %v232
  %249 = vst [vmem:[#allocation2 + $0x30] sm:$0xff] %v233
  %250 = vst [vmem:[#allocation2 + $0x38] sm:$0xff] %v234
  %251 = vst [vmem:[#allocation2 + $0x40] sm:$0xff] %v235
  %252 = vst [vmem:[#allocation2 + $0x48] sm:$0xff] %v236
  %253 = vst [vmem:[#allocation2 + $0x50] sm:$0xff] %v237
  %254 = vst [vmem:[#allocation2 + $0x58] sm:$0xff] %v238
  %255 = vst [vmem:[#allocation2 + $0x60] sm:$0xff] %v239
  %256 = vst [vmem:[#allocation2 + $0x68] sm:$0xff] %v240
  %257 = vst [vmem:[#allocation2 + $0x70] sm:$0xff] %v241
  %258 = vst [vmem:[#allocation2 + $0x78] sm:$0xff] %v242
  // Predicated region
  $region18: #{forward.23} parent=0 // pred_check
    %p259 = pneg %p14
  $region19: #{forward.23} parent=0 // pred_check_branch
    %261 = sbr.rel (%p259) target = $region21
  $region20: #{forward.23} parent=0 // pred_region
    %v262 = vld [vmem:[#allocation2] sm:$0xff]
    %v263 = vld [vmem:[#allocation2 + $0x8] sm:$0xff]
    %v264 = vld [vmem:[#allocation2 + $0x10] sm:$0xff]
    %v265 = vld [vmem:[#allocation2 + $0x18] sm:$0xff]
    %v266 = vld [vmem:[#allocation2 + $0x20] sm:$0xff]
    %v267 = vld [vmem:[#allocation2 + $0x28] sm:$0xff]
    %v268 = vld [vmem:[#allocation2 + $0x30] sm:$0xff]
    %v269 = vld [vmem:[#allocation2 + $0x38] sm:$0xff]
    %v270 = vld [vmem:[#allocation2 + $0x40] sm:$0xff]
    %v271 = vld [vmem:[#allocation2 + $0x48] sm:$0xff]
    %v272 = vld [vmem:[#allocation2 + $0x50] sm:$0xff]
    %v273 = vld [vmem:[#allocation2 + $0x58] sm:$0xff]
    %v274 = vld [vmem:[#allocation2 + $0x60] sm:$0xff]
    %v275 = vld [vmem:[#allocation2 + $0x68] sm:$0xff]
    %v276 = vld [vmem:[#allocation2 + $0x70] sm:$0xff]
    %v277 = vld [vmem:[#allocation2 + $0x78] sm:$0xff]
    %v278 = vld [vmem:[%s2] sm:$0x1]
    %v280 = vlaneseq
    %v281 = vshrl.u32 %v280, 7
    %v282 = vsub.s32 0, %v281
    %v283 = vrot.slane %v278, %v282
    %v285 = vadd.f32 %v262, %v283
    %v286 = vadd.f32 %v263, %v283
    %v287 = vadd.f32 %v264, %v283
    %v288 = vadd.f32 %v265, %v283
    %v289 = vadd.f32 %v266, %v283
    %v290 = vadd.f32 %v267, %v283
    %v291 = vadd.f32 %v268, %v283
    %v292 = vadd.f32 %v269, %v283
    %v293 = vadd.f32 %v270, %v283
    %v294 = vadd.f32 %v271, %v283
    %v295 = vadd.f32 %v272, %v283
    %v296 = vadd.f32 %v273, %v283
    %v297 = vadd.f32 %v274, %v283
    %v298 = vadd.f32 %v275, %v283
    %v299 = vadd.f32 %v276, %v283
    %v300 = vadd.f32 %v277, %v283
    %301 = vst [vmem:[%s3] sm:$0xff] %v285
    %302 = vst [vmem:[%s3 + $0x8] sm:$0xff] %v286
    %303 = vst [vmem:[%s3 + $0x10] sm:$0xff] %v287
    %304 = vst [vmem:[%s3 + $0x18] sm:$0xff] %v288
    %305 = vst [vmem:[%s3 + $0x20] sm:$0xff] %v289
    %306 = vst [vmem:[%s3 + $0x28] sm:$0xff] %v290
    %307 = vst [vmem:[%s3 + $0x30] sm:$0xff] %v291
    %308 = vst [vmem:[%s3 + $0x38] sm:$0xff] %v292
    %309 = vst [vmem:[%s3 + $0x40] sm:$0xff] %v293
    %310 = vst [vmem:[%s3 + $0x48] sm:$0xff] %v294
    %311 = vst [vmem:[%s3 + $0x50] sm:$0xff] %v295
    %312 = vst [vmem:[%s3 + $0x58] sm:$0xff] %v296
    %313 = vst [vmem:[%s3 + $0x60] sm:$0xff] %v297
    %314 = vst [vmem:[%s3 + $0x68] sm:$0xff] %v298
    %315 = vst [vmem:[%s3 + $0x70] sm:$0xff] %v299
    %316 = vst [vmem:[%s3 + $0x78] sm:$0xff] %v300
  $region21: #{forward.23} parent=0 // pred_fallthru
    _
  // Predicated region
  $region22: #{forward.23} parent=0 // pred_check
    _
  $region23: #{forward.23} parent=0 // pred_check_branch
    %318 = sbr.rel (0) target = $region25
  $region24: #{forward.23} parent=0 // pred_region
    _
  $region25: #{forward.23} parent=0 // pred_fallthru
    _
  // Predicated region
  $region26: #{forward.23} parent=0 // pred_check
    _
  $region27: #{forward.23} parent=0 // pred_check_branch
    %320 = sbr.rel (0) target = $region29
  $region28: #{forward.23} parent=0 // pred_region
    _
  $region29: #{forward.23} parent=0 // pred_fallthru
    _

// kernel: forward.26
$region0: #{forward.26}
  #allocation0 [shape = 'u32[]', space=smem, size = 0x4, offset = 0x4, fixed_abs, tag = 'smem constant byte address 0x4 - core index']
  #allocation1 [shape = 'u32[144,128]{1,0:T(1,128)}', space=vmem, size = 0x12000, scoped, tag = 'internal scratch']
  %s0 = inlined_call_operand.vmem [shape: f32[128,4], index: 0, kind: input, shape index: {}]
  %s1 = inlined_call_operand.vmem [shape: f32[128,4], index: 1, kind: input, shape index: {}]
  %s2 = inlined_call_operand.vmem [shape: f32[128,4], index: 2, kind: output, shape index: {}]
  %s3 = sld [smem:[#allocation0]]
  $region41: #{forward.26} parent=0
    _
  %s5 = ssub.s32 1, %s3
  %s6 = scalar_select 0, %s5, %s3
  loop: start=0, step=1, limit=4
  $region2: #{forward.26} parent=0 // loop_pre_header
    _
  $region3: #{forward.26} parent=0 // loop_header
    %s8 = sphi 0, %s12
    %p9 = scmp.ge.s32.totalorder %s8, 4
    %s18 = sphi 0, %s20
    %s21 = sphi 0, %s18
    %s22 = sphi 0, %s21
    %s38 = sphi 0, %s22
    %s44 = sphi 0, %s46
    %s47 = sphi 0, %s44
    %s48 = sphi 0, %s47
    %s64 = sphi 0, %s48
    %s70 = sphi 0, %s72
    %s73 = sphi 0, %s70
    %s74 = sphi 0, %s73
    %s90 = sphi 0, %s74
  $region4: #{forward.26} parent=0 // loop_header_branch
    %11 = sbr.rel (%p9) target = $region8
  $region5: #{forward.26} parent=0 // loop_body
    %s13 = ssub.s32 %s8, 1
    %s14 = ssub.s32 %s8, 2
    %s15 = sadd.s32 %s8, 1
    %s16 = ssub.s32 %s8, %s15
    %p17 = scmp.eq.s32.totalorder %s16, 0
    %s19 = sadd.s32 %s18, 1
    %s20 = scalar_select %p17, %s18, %s19
    %p23 = pneg %p17
    %p24 = scmp.eq.s32.totalorder %s8, 1
    %p25 = por %p23, %p24
    %p26 = scmp.ne.s32.totalorder %s18, %s21
    %p27 = scmp.eq.s32.totalorder %s8, 0
    %p28 = por %p26, %p27
    %p29 = scmp.ne.s32.totalorder %s18, %s21
    %p30 = scmp.eq.s32.totalorder %s13, 1
    %p31 = por %p29, %p30
    %p32 = scmp.ne.s32.totalorder %s21, %s22
    %p33 = scmp.eq.s32.totalorder %s13, 0
    %p34 = por %p32, %p33
    %p35 = scmp.ne.s32.totalorder %s21, %s22
    %p36 = scmp.eq.s32.totalorder %s14, 1
    %p37 = por %p35, %p36
    %p39 = scmp.ne.s32.totalorder %s22, %s38
    %p40 = scmp.eq.s32.totalorder %s14, 0
    %p41 = por %p39, %p40
    %s42 = ssub.s32 %s8, %s15
    %p43 = scmp.eq.s32.totalorder %s42, 0
    %s45 = sadd.s32 %s44, 1
    %s46 = scalar_select %p43, %s44, %s45
    %p49 = pneg %p43
    %p50 = scmp.eq.s32.totalorder %s8, 1
    %p51 = por %p49, %p50
    %p52 = scmp.ne.s32.totalorder %s44, %s47
    %p53 = scmp.eq.s32.totalorder %s8, 0
    %p54 = por %p52, %p53
    %p55 = scmp.ne.s32.totalorder %s44, %s47
    %p56 = scmp.eq.s32.totalorder %s13, 1
    %p57 = por %p55, %p56
    %p58 = scmp.ne.s32.totalorder %s47, %s48
    %p59 = scmp.eq.s32.totalorder %s13, 0
    %p60 = por %p58, %p59
    %p61 = scmp.ne.s32.totalorder %s47, %s48
    %p62 = scmp.eq.s32.totalorder %s14, 1
    %p63 = por %p61, %p62
    %p65 = scmp.ne.s32.totalorder %s48, %s64
    %p66 = scmp.eq.s32.totalorder %s14, 0
    %p67 = por %p65, %p66
    %s68 = ssub.s32 %s8, %s15
    %p69 = scmp.eq.s32.totalorder %s68, 0
    %s71 = sadd.s32 %s70, 1
    %s72 = scalar_select %p69, %s70, %s71
    %p75 = pneg %p69
    %p76 = scmp.eq.s32.totalorder %s8, 1
    %p77 = por %p75, %p76
    %p78 = scmp.ne.s32.totalorder %s70, %s73
    %p79 = scmp.eq.s32.totalorder %s8, 0
    %p80 = por %p78, %p79
    %p81 = scmp.ne.s32.totalorder %s70, %s73
    %p82 = scmp.eq.s32.totalorder %s13, 1
    %p83 = por %p81, %p82
    %p84 = scmp.ne.s32.totalorder %s73, %s74
    %p85 = scmp.eq.s32.totalorder %s13, 0
    %p86 = por %p84, %p85
    %p87 = scmp.ne.s32.totalorder %s73, %s74
    %p88 = scmp.eq.s32.totalorder %s14, 1
    %p89 = por %p87, %p88
    %p91 = scmp.ne.s32.totalorder %s74, %s90
    %p92 = scmp.eq.s32.totalorder %s14, 0
    %p93 = por %p91, %p92
    %p94 = scmp.le.s32.totalorder 1, %s8
    %p95 = scmp.lt.s32.totalorder %s8, 3
    %p96 = pnand %p94, %p95
    %p97 = pneg %p96
    // Predicated region
    $region9: #{forward.26} parent=5 // pred_check
      _
    $region10: #{forward.26} parent=5 // pred_check_branch
      %99 = sbr.rel (%p96) target = $region12
    $region11: #{forward.26} parent=5 // pred_region
      %s100 = ssub.s32 %s8, 1
    $region12: #{forward.26} parent=5 // pred_fallthru
      _
    %p101 = scmp.lt.s32.totalorder %s8, 2
    // Predicated region
    $region13: #{forward.26} parent=5 // pred_check
      %p102 = pneg %p101
    $region14: #{forward.26} parent=5 // pred_check_branch
      %104 = sbr.rel (%p102) target = $region16
    $region15: #{forward.26} parent=5 // pred_region
      // Predicated region
      $region17: #{forward.26} parent=15 // pred_check
        %p105 = pneg %p28
      $region18: #{forward.26} parent=15 // pred_check_branch
        %107 = sbr.rel (%p105) target = $region20
      $region19: #{forward.26} parent=15 // pred_region
        %s108 = smul.u32 8, %s8
        %p109 = scmp.lt.s32.totalorder %s108, 15
        %s110 = scalar_select %p109, %s108, 15
        %s111 = smul.addr %s110, 8
        %s112 = scalar_lea.vmem %s0, %s111
        %s113 = smul.u32 8, %s8
      $region20: #{forward.26} parent=15 // pred_fallthru
        _
      // Predicated region
      $region21: #{forward.26} parent=15 // pred_check
        %p114 = pneg %p54
      $region22: #{forward.26} parent=15 // pred_check_branch
        %116 = sbr.rel (%p114) target = $region24
      $region23: #{forward.26} parent=15 // pred_region
        %s117 = smul.u32 8, %s8
        %p118 = scmp.lt.s32.totalorder %s117, 15
        %s119 = scalar_select %p118, %s117, 15
        %s120 = smul.addr %s119, 8
        %s121 = scalar_lea.vmem %s1, %s120
        %s122 = smul.u32 8, %s8
      $region24: #{forward.26} parent=15 // pred_fallthru
        _
    $region16: #{forward.26} parent=5 // pred_fallthru
      _
    %p123 = scmp.le.s32.totalorder 1, %s8
    %p124 = scmp.lt.s32.totalorder %s8, 3
    %p125 = pnand %p123, %p124
    %p126 = pneg %p125
    // Predicated region
    $region25: #{forward.26} parent=5 // pred_check
      _
    $region26: #{forward.26} parent=5 // pred_check_branch
      %128 = sbr.rel (%p125) target = $region28
    $region27: #{forward.26} parent=5 // pred_region
      %s129 = ssub.s32 %s8, 1
      %s130 = smul.u32 8, %s13
      %p131 = scmp.lt.s32.totalorder %s130, 15
      %s132 = scalar_select %p131, %s130, 15
      %s133 = smul.addr %s132, 8
      %s134 = scalar_lea.vmem %s0, %s133
      %p135 = pneg %p34
      %p136 = pneg %p31
      %s137 = smul.u32 8, %s13
      %p138 = scmp.lt.s32.totalorder %s137, 15
      %s139 = scalar_select %p138, %s137, 15
      %s140 = smul.addr %s139, 8
      %s141 = scalar_lea.vmem %s1, %s140
      %p142 = pneg %p60
      %p143 = pneg %p57
      %p144 = pneg %p86
      %p145 = pneg %p83
      %s146 = smul.u32 8, %s13
      %p147 = scmp.lt.s32.totalorder %s146, 15
      %s148 = scalar_select %p147, %s146, 15
      %s149 = smul.addr %s148, 8
      %s150 = scalar_lea.vmem %s2, %s149
      %s151 = smul.u32 8, %s13
      %p152 = scmp.lt.s32.totalorder %s151, 15
      %s153 = scalar_select %p152, %s151, 15
      %s154 = smul.addr %s153, 8
      %s155 = scalar_lea.vmem %s0, %s154
      %s156 = smul.u32 8, %s13
      %s157 = smul.u32 8, %s13
      %p158 = scmp.lt.s32.totalorder %s157, 15
      %s159 = scalar_select %p158, %s157, 15
      %s160 = smul.addr %s159, 8
      %s161 = scalar_lea.vmem %s1, %s160
      %s162 = smul.u32 8, %s13
      %s163 = smul.u32 8, %s13
      %p164 = scmp.lt.s32.totalorder %s163, 15
      %s165 = scalar_select %p164, %s163, 15
      %s166 = smul.addr %s165, 8
      %s167 = scalar_lea.vmem %s2, %s166
      %s168 = smul.u32 8, %s13
      %v169 = vld [vmem:[%s155] sm:$0xff]
      %v170 = vld [vmem:[%s155 + $0x8] sm:$0xff]
      %v171 = vld [vmem:[%s155 + $0x10] sm:$0xff]
      %v172 = vld [vmem:[%s155 + $0x18] sm:$0xff]
      %v173 = vld [vmem:[%s155 + $0x20] sm:$0xff]
      %v174 = vld [vmem:[%s155 + $0x28] sm:$0xff]
      %v175 = vld [vmem:[%s155 + $0x30] sm:$0xff]
      %v176 = vld [vmem:[%s155 + $0x38] sm:$0xff]
      %vm177 = vcmask 31744
      %v178 = vsel %vm177, %v169, 0.0
      %v179 = vsel %vm177, %v170, 0.0
      %v180 = vadd.f32 %v178, %v179
      %v181 = vsel %vm177, %v171, 0.0
      %v182 = vadd.f32 %v180, %v181
      %v183 = vsel %vm177, %v172, 0.0
      %v184 = vadd.f32 %v182, %v183
      %v185 = vsel %vm177, %v173, 0.0
      %v186 = vadd.f32 %v184, %v185
      %v187 = vsel %vm177, %v174, 0.0
      %v188 = vadd.f32 %v186, %v187
      %v189 = vsel %vm177, %v175, 0.0
      %v190 = vadd.f32 %v188, %v189
      %v191 = vsel %vm177, %v176, 0.0
      %v192 = vadd.f32 %v190, %v191
      %v193 = vrot.slane %v192, 4
      %v194 = vadd.f32 %v192, %v193
      %v195 = vrot.slane %v194, 2
      %v196 = vadd.f32 %v194, %v195
      %v197 = vrot.slane %v196, 1
      %v198 = vadd.f32 %v196, %v197
      %v199 = vrcp.pop 64.0
      %v200 = vmul.f32 %v198, %v199
      %v201 = vsub.f32 %v169, %v200
      %v202 = vsub.f32 %v170, %v200
      %v203 = vsub.f32 %v171, %v200
      %v204 = vsub.f32 %v172, %v200
      %v205 = vsub.f32 %v173, %v200
      %v206 = vsub.f32 %v174, %v200
      %v207 = vsub.f32 %v175, %v200
      %v208 = vsub.f32 %v176, %v200
      %v209 = vmul.f32 %v201, %v201
      %v210 = vmul.f32 %v202, %v202
      %v211 = vmul.f32 %v203, %v203
      %v212 = vmul.f32 %v204, %v204
      %v213 = vmul.f32 %v205, %v205
      %v214 = vmul.f32 %v206, %v206
      %v215 = vmul.f32 %v207, %v207
      %v216 = vmul.f32 %v208, %v208
      %v217 = vsel %vm177, %v209, 0.0
      %v218 = vsel %vm177, %v210, 0.0
      %v219 = vadd.f32 %v217, %v218
      %v220 = vsel %vm177, %v211, 0.0
      %v221 = vadd.f32 %v219, %v220
      %v222 = vsel %vm177, %v212, 0.0
      %v223 = vadd.f32 %v221, %v222
      %v224 = vsel %vm177, %v213, 0.0
      %v225 = vadd.f32 %v223, %v224
      %v226 = vsel %vm177, %v214, 0.0
      %v227 = vadd.f32 %v225, %v226
      %v228 = vsel %vm177, %v215, 0.0
      %v229 = vadd.f32 %v227, %v228
      %v230 = vsel %vm177, %v216, 0.0
      %v231 = vadd.f32 %v229, %v230
      %v232 = vrot.slane %v231, 4
      %v233 = vadd.f32 %v231, %v232
      %v234 = vrot.slane %v233, 2
      %v235 = vadd.f32 %v233, %v234
      %v236 = vrot.slane %v235, 1
      %v237 = vadd.f32 %v235, %v236
      %v238 = vmul.f32 %v237, %v199
      %v239 = vld [vmem:[%s161] sm:$0xff]
      %v240 = vld [vmem:[%s161 + $0x8] sm:$0xff]
      %v241 = vld [vmem:[%s161 + $0x10] sm:$0xff]
      %v242 = vld [vmem:[%s161 + $0x18] sm:$0xff]
      %v243 = vld [vmem:[%s161 + $0x20] sm:$0xff]
      %v244 = vld [vmem:[%s161 + $0x28] sm:$0xff]
      %v245 = vld [vmem:[%s161 + $0x30] sm:$0xff]
      %v246 = vld [vmem:[%s161 + $0x38] sm:$0xff]
      %v247 = vadd.f32 %v238, 1e-05
      %v248 = vrsqrt.pop %v247
      %v249 = vmul.f32 %v201, %v248
      %v250 = vmul.f32 %v202, %v248
      %v251 = vmul.f32 %v203, %v248
      %v252 = vmul.f32 %v204, %v248
      %v253 = vmul.f32 %v205, %v248
      %v254 = vmul.f32 %v206, %v248
      %v255 = vmul.f32 %v207, %v248
      %v256 = vmul.f32 %v208, %v248
      %v257 = vadd.f32 %v239, %v249
      %v258 = vadd.f32 %v240, %v250
      %v259 = vadd.f32 %v241, %v251
      %v260 = vadd.f32 %v242, %v252
      %v261 = vadd.f32 %v243, %v253
      %v262 = vadd.f32 %v244, %v254
      %v263 = vadd.f32 %v245, %v255
      %v264 = vadd.f32 %v246, %v256
      %265 = vst.msk [vmem:[%s167] sm:$0xff] %vm177, %v257
      %266 = vst.msk [vmem:[%s167 + $0x8] sm:$0xff] %vm177, %v258
      %267 = vst.msk [vmem:[%s167 + $0x10] sm:$0xff] %vm177, %v259
      %268 = vst.msk [vmem:[%s167 + $0x18] sm:$0xff] %vm177, %v260
      %269 = vst.msk [vmem:[%s167 + $0x20] sm:$0xff] %vm177, %v261
      %270 = vst.msk [vmem:[%s167 + $0x28] sm:$0xff] %vm177, %v262
      %271 = vst.msk [vmem:[%s167 + $0x30] sm:$0xff] %vm177, %v263
      %272 = vst.msk [vmem:[%s167 + $0x38] sm:$0xff] %vm177, %v264
      %s273 = smul.u32 8, %s13
      %p274 = scmp.lt.s32.totalorder %s273, 15
      %s275 = scalar_select %p274, %s273, 15
      %s276 = smul.addr %s275, 8
      %s277 = scalar_lea.vmem %s2, %s276
      // Predicated region
      $region29: #{forward.26} parent=27 // pred_check
        %p278 = pneg %p83
      $region30: #{forward.26} parent=27 // pred_check_branch
        %280 = sbr.rel (%p278) target = $region32
      $region31: #{forward.26} parent=27 // pred_region
        %s281 = smul.u32 8, %s13
      $region32: #{forward.26} parent=27 // pred_fallthru
        _
    $region28: #{forward.26} parent=5 // pred_fallthru
      _
    %p282 = scmp.le.s32.totalorder 2, %s8
    // Predicated region
    $region33: #{forward.26} parent=5 // pred_check
      %p283 = pneg %p282
    $region34: #{forward.26} parent=5 // pred_check_branch
      %285 = sbr.rel (%p283) target = $region36
    $region35: #{forward.26} parent=5 // pred_region
      %s286 = ssub.s32 %s8, 2
      // Predicated region
      $region37: #{forward.26} parent=35 // pred_check
        %p287 = pneg %p89
      $region38: #{forward.26} parent=35 // pred_check_branch
        %289 = sbr.rel (%p287) target = $region40
      $region39: #{forward.26} parent=35 // pred_region
        %s290 = smul.u32 8, %s14
        %p291 = scmp.lt.s32.totalorder %s290, 15
        %s292 = scalar_select %p291, %s290, 15
        %s293 = smul.addr %s292, 8
        %s294 = scalar_lea.vmem %s2, %s293
      $region40: #{forward.26} parent=35 // pred_fallthru
        _
    $region36: #{forward.26} parent=5 // pred_fallthru
      _
  $region6: #{forward.26} parent=0 // loop_footer
    %s12 = sadd.s32 1, %s8
  $region7: #{forward.26} parent=0 // loop_footer_branch
    %7 = sbr.rel target = $region3
  $region8: #{forward.26} parent=0 // loop_exit
    _

// kernel: forward.27
$region0: #{forward.27}
  #allocation0 [shape = 'u32[]', space=smem, size = 0x4, offset = 0x4, fixed_abs, tag = 'smem constant byte address 0x4 - core index']
  #allocation1 [shape = 'u32[144,128]{1,0:T(1,128)}', space=vmem, size = 0x12000, scoped, tag = 'internal scratch']
  #allocation2 [shape = 'f32[168,128]{1,0:T(8,128)}', space=vmem, size = 0x15000, scoped, tag = 'scratch operand']
  %s0 = inlined_call_operand.vmem [shape: f32[168,128], index: 0, kind: input, shape index: {}]
  %s1 = inlined_call_operand.vmem [shape: f32[128,128], index: 1, kind: input, shape index: {}]
  %s2 = inlined_call_operand.vmem [shape: f32[1,128], index: 2, kind: input, shape index: {}]
  %s3 = inlined_call_operand.vmem [shape: f32[168,128], index: 3, kind: output, shape index: {}]
  %s4 = sld [smem:[#allocation0]]
  $region30: #{forward.27} parent=0
    _
  %s6 = ssub.s32 1, %s4
  %s7 = scalar_select 0, %s6, %s4
  // Predicated region
  $region2: #{forward.27} parent=0 // pred_check
    _
  $region3: #{forward.27} parent=0 // pred_check_branch
    %9 = sbr.rel (0) target = $region5
  $region4: #{forward.27} parent=0 // pred_region
    _
  $region5: #{forward.27} parent=0 // pred_fallthru
    _
  // Predicated region
  $region6: #{forward.27} parent=0 // pred_check
    _
  $region7: #{forward.27} parent=0 // pred_check_branch
    %11 = sbr.rel (0) target = $region9
  $region8: #{forward.27} parent=0 // pred_region
    _
  $region9: #{forward.27} parent=0 // pred_fallthru
    _
  // Predicated region
  $region10: #{forward.27} parent=0 // pred_check
    _
  $region11: #{forward.27} parent=0 // pred_check_branch
    %13 = sbr.rel (0) target = $region13
  $region12: #{forward.27} parent=0 // pred_region
    _
  $region13: #{forward.27} parent=0 // pred_fallthru
    _
  %p14 = scmp.eq.s32.totalorder 0, 0
  // Predicated region
  $region14: #{forward.27} parent=0 // pred_check
    %p15 = pneg %p14
  $region15: #{forward.27} parent=0 // pred_check_branch
    %17 = sbr.rel (%p15) target = $region17
  $region16: #{forward.27} parent=0 // pred_region
    %18 = vst [vmem:[#allocation2] sm:$0xff] 0.0
    %19 = vst [vmem:[#allocation2 + $0x8] sm:$0xff] 0.0
    %20 = vst [vmem:[#allocation2 + $0x10] sm:$0xff] 0.0
    %21 = vst [vmem:[#allocation2 + $0x18] sm:$0xff] 0.0
    %22 = vst [vmem:[#allocation2 + $0x20] sm:$0xff] 0.0
    %23 = vst [vmem:[#allocation2 + $0x28] sm:$0xff] 0.0
    %24 = vst [vmem:[#allocation2 + $0x30] sm:$0xff] 0.0
    %25 = vst [vmem:[#allocation2 + $0x38] sm:$0xff] 0.0
    %26 = vst [vmem:[#allocation2 + $0x40] sm:$0xff] 0.0
    %27 = vst [vmem:[#allocation2 + $0x48] sm:$0xff] 0.0
    %28 = vst [vmem:[#allocation2 + $0x50] sm:$0xff] 0.0
    %29 = vst [vmem:[#allocation2 + $0x58] sm:$0xff] 0.0
    %30 = vst [vmem:[#allocation2 + $0x60] sm:$0xff] 0.0
    %31 = vst [vmem:[#allocation2 + $0x68] sm:$0xff] 0.0
    %32 = vst [vmem:[#allocation2 + $0x70] sm:$0xff] 0.0
    %33 = vst [vmem:[#allocation2 + $0x78] sm:$0xff] 0.0
    %34 = vst [vmem:[#allocation2 + $0x80] sm:$0xff] 0.0
    %35 = vst [vmem:[#allocation2 + $0x88] sm:$0xff] 0.0
    %36 = vst [vmem:[#allocation2 + $0x90] sm:$0xff] 0.0
    %37 = vst [vmem:[#allocation2 + $0x98] sm:$0xff] 0.0
    %38 = vst [vmem:[#allocation2 + $0xa0] sm:$0xff] 0.0
  $region17: #{forward.27} parent=0 // pred_fallthru
    _
  %v39 = vld [vmem:[#allocation2] sm:$0xff]
  %v40 = vld [vmem:[#allocation2 + $0x8] sm:$0xff]
  %v41 = vld [vmem:[#allocation2 + $0x10] sm:$0xff]
  %v42 = vld [vmem:[#allocation2 + $0x18] sm:$0xff]
  %v43 = vld [vmem:[#allocation2 + $0x20] sm:$0xff]
  %v44 = vld [vmem:[#allocation2 + $0x28] sm:$0xff]
  %v45 = vld [vmem:[#allocation2 + $0x30] sm:$0xff]
  %v46 = vld [vmem:[#allocation2 + $0x38] sm:$0xff]
  %v47 = vld [vmem:[#allocation2 + $0x40] sm:$0xff]
  %v48 = vld [vmem:[#allocation2 + $0x48] sm:$0xff]
  %v49 = vld [vmem:[#allocation2 + $0x50] sm:$0xff]
  %v50 = vld [vmem:[#allocation2 + $0x58] sm:$0xff]
  %v51 = vld [vmem:[#allocation2 + $0x60] sm:$0xff]
  %v52 = vld [vmem:[#allocation2 + $0x68] sm:$0xff]
  %v53 = vld [vmem:[#allocation2 + $0x70] sm:$0xff]
  %v54 = vld [vmem:[#allocation2 + $0x78] sm:$0xff]
  %v55 = vld [vmem:[#allocation2 + $0x80] sm:$0xff]
  %v56 = vld [vmem:[#allocation2 + $0x88] sm:$0xff]
  %v57 = vld [vmem:[#allocation2 + $0x90] sm:$0xff]
  %v58 = vld [vmem:[#allocation2 + $0x98] sm:$0xff]
  %v59 = vld [vmem:[#allocation2 + $0xa0] sm:$0xff]
  %v60 = vld [vmem:[%s0] sm:$0xff]
  %v61 = vld [vmem:[%s0 + $0x8] sm:$0xff]
  %v62 = vld [vmem:[%s0 + $0x10] sm:$0xff]
  %v63 = vld [vmem:[%s0 + $0x18] sm:$0xff]
  %v64 = vld [vmem:[%s0 + $0x20] sm:$0xff]
  %v65 = vld [vmem:[%s0 + $0x28] sm:$0xff]
  %v66 = vld [vmem:[%s0 + $0x30] sm:$0xff]
  %v67 = vld [vmem:[%s0 + $0x38] sm:$0xff]
  %v68 = vld [vmem:[%s0 + $0x40] sm:$0xff]
  %v69 = vld [vmem:[%s0 + $0x48] sm:$0xff]
  %v70 = vld [vmem:[%s0 + $0x50] sm:$0xff]
  %v71 = vld [vmem:[%s0 + $0x58] sm:$0xff]
  %v72 = vld [vmem:[%s0 + $0x60] sm:$0xff]
  %v73 = vld [vmem:[%s0 + $0x68] sm:$0xff]
  %v74 = vld [vmem:[%s0 + $0x70] sm:$0xff]
  %v75 = vld [vmem:[%s0 + $0x78] sm:$0xff]
  %v76 = vld [vmem:[%s0 + $0x80] sm:$0xff]
  %v77 = vld [vmem:[%s0 + $0x88] sm:$0xff]
  %v78 = vld [vmem:[%s0 + $0x90] sm:$0xff]
  %v79 = vld [vmem:[%s0 + $0x98] sm:$0xff]
  %v80 = vld [vmem:[%s0 + $0xa0] sm:$0xff]
  %v81 = vld [vmem:[%s1] sm:$0xff]
  %v82 = vld [vmem:[%s1 + $0x8] sm:$0xff]
  %v83 = vld [vmem:[%s1 + $0x10] sm:$0xff]
  %v84 = vld [vmem:[%s1 + $0x18] sm:$0xff]
  %v85 = vld [vmem:[%s1 + $0x20] sm:$0xff]
  %v86 = vld [vmem:[%s1 + $0x28] sm:$0xff]
  %v87 = vld [vmem:[%s1 + $0x30] sm:$0xff]
  %v88 = vld [vmem:[%s1 + $0x38] sm:$0xff]
  %v89 = vld [vmem:[%s1 + $0x40] sm:$0xff]
  %v90 = vld [vmem:[%s1 + $0x48] sm:$0xff]
  %v91 = vld [vmem:[%s1 + $0x50] sm:$0xff]
  %v92 = vld [vmem:[%s1 + $0x58] sm:$0xff]
  %v93 = vld [vmem:[%s1 + $0x60] sm:$0xff]
  %v94 = vld [vmem:[%s1 + $0x68] sm:$0xff]
  %v95 = vld [vmem:[%s1 + $0x70] sm:$0xff]
  %v96 = vld [vmem:[%s1 + $0x78] sm:$0xff]
  %97 = vmatprep.subr.mxu0 0.0
  %98 = vmatpush1.msra.mxu0 %v81
  %99 = vmatprep.subr.mxu0 0.0
  %100 = vmatpush1.msra.mxu0 %v82
  %101 = vmatprep.subr.mxu0 0.0
  %102 = vmatpush1.msra.mxu0 %v83
  %103 = vmatprep.subr.mxu0 0.0
  %104 = vmatpush1.msra.mxu0 %v84
  %105 = vmatprep.subr.mxu0 0.0
  %106 = vmatpush1.msra.mxu0 %v85
  %107 = vmatprep.subr.mxu0 0.0
  %108 = vmatpush1.msra.mxu0 %v86
  %109 = vmatprep.subr.mxu0 0.0
  %110 = vmatpush1.msra.mxu0 %v87
  %111 = vmatprep.subr.mxu0 0.0
  %112 = vmatpush1.msra.mxu0 %v88
  %113 = vmatprep.subr.mxu0 0.0
  %114 = vmatpush1.msra.mxu0 %v89
  %115 = vmatprep.subr.mxu0 0.0
  %116 = vmatpush1.msra.mxu0 %v90
  %117 = vmatprep.subr.mxu0 0.0
  %118 = vmatpush1.msra.mxu0 %v91
  %119 = vmatprep.subr.mxu0 0.0
  %120 = vmatpush1.msra.mxu0 %v92
  %121 = vmatprep.subr.mxu0 0.0
  %122 = vmatpush1.msra.mxu0 %v93
  %123 = vmatprep.subr.mxu0 0.0
  %124 = vmatpush1.msra.mxu0 %v94
  %125 = vmatprep.subr.mxu0 0.0
  %126 = vmatpush1.msra.mxu0 %v95
  %127 = vmatprep.subr.mxu0 0.0
  %128 = vmatpush1.msra.mxu0 %v96
  %129 = vmatprep.subr.mxu0 0.0
  %130 = vmatpush1.msra.mxu0 0.0
  %131 = vmatprep.subr.mxu0 0.0
  %132 = vmatpush1.msra.mxu0 0.0
  %133 = vmatprep.subr.mxu0 0.0
  %134 = vmatpush1.msra.mxu0 0.0
  %135 = vmatprep.subr.mxu0 0.0
  %136 = vmatpush1.msra.mxu0 0.0
  %137 = vmatprep.subr.mxu0 0.0
  %138 = vmatpush1.msra.mxu0 0.0
  %139 = vmatprep.subr.mxu0 0.0
  %140 = vmatpush1.msra.mxu0 0.0
  %141 = vmatprep.subr.mxu0 0.0
  %142 = vmatpush1.msra.mxu0 0.0
  %143 = vmatprep.subr.mxu0 0.0
  %144 = vmatpush1.msra.mxu0 0.0
  %145 = vmatprep.subr.mxu0 0.0
  %146 = vmatpush1.msra.mxu0 0.0
  %147 = vmatprep.subr.mxu0 0.0
  %148 = vmatpush1.msra.mxu0 0.0
  %149 = vmatprep.subr.mxu0 0.0
  %150 = vmatpush1.msra.mxu0 0.0
  %151 = vmatprep.subr.mxu0 0.0
  %152 = vmatpush1.msra.mxu0 0.0
  %153 = vmatprep.subr.mxu0 0.0
  %154 = vmatpush1.msra.mxu0 0.0
  %155 = vmatprep.subr.mxu0 0.0
  %156 = vmatpush1.msra.mxu0 0.0
  %157 = vmatprep.subr.mxu0 0.0
  %158 = vmatpush1.msra.mxu0 0.0
  %159 = vmatprep.subr.mxu0 0.0
  %160 = vmatpush1.msra.mxu0 0.0
  %161 = vmatprep.mubr.f32.mxu0 0.0
  %162 = vmatmul.mubr.f32.gmra.mrb[0].mxu0 %v60
  %v163 = vpop.f32.mrb[0].mxu0
  %v164 = vadd.f32 0.0, %v163
  %v165 = vpop.f32.mrb[0].mxu0
  %166 = vmatprep.mubr.f32.mxu0 0.0
  %167 = vmatmul.mubr.f32.gmra.mrb[0].mxu0 %v61
  %v168 = vpop.f32.mrb[0].mxu0
  %v169 = vadd.f32 0.0, %v168
  %v170 = vpop.f32.mrb[0].mxu0
  %171 = vmatprep.mubr.f32.mxu0 0.0
  %172 = vmatmul.mubr.f32.gmra.mrb[0].mxu0 %v62
  %v173 = vpop.f32.mrb[0].mxu0
  %v174 = vadd.f32 0.0, %v173
  %v175 = vpop.f32.mrb[0].mxu0
  %176 = vmatprep.mubr.f32.mxu0 0.0
  %177 = vmatmul.mubr.f32.gmra.mrb[0].mxu0 %v63
  %v178 = vpop.f32.mrb[0].mxu0
  %v179 = vadd.f32 0.0, %v178
  %v180 = vpop.f32.mrb[0].mxu0
  %181 = vmatprep.mubr.f32.mxu0 0.0
  %182 = vmatmul.mubr.f32.gmra.mrb[0].mxu0 %v64
  %v183 = vpop.f32.mrb[0].mxu0
  %v184 = vadd.f32 0.0, %v183
  %v185 = vpop.f32.mrb[0].mxu0
  %186 = vmatprep.mubr.f32.mxu0 0.0
  %187 = vmatmul.mubr.f32.gmra.mrb[0].mxu0 %v65
  %v188 = vpop.f32.mrb[0].mxu0
  %v189 = vadd.f32 0.0, %v188
  %v190 = vpop.f32.mrb[0].mxu0
  %191 = vmatprep.mubr.f32.mxu0 0.0
  %192 = vmatmul.mubr.f32.gmra.mrb[0].mxu0 %v66
  %v193 = vpop.f32.mrb[0].mxu0
  %v194 = vadd.f32 0.0, %v193
  %v195 = vpop.f32.mrb[0].mxu0
  %196 = vmatprep.mubr.f32.mxu0 0.0
  %197 = vmatmul.mubr.f32.gmra.mrb[0].mxu0 %v67
  %v198 = vpop.f32.mrb[0].mxu0
  %v199 = vadd.f32 0.0, %v198
  %v200 = vpop.f32.mrb[0].mxu0
  %201 = vmatprep.mubr.f32.mxu0 0.0
  %202 = vmatmul.mubr.f32.gmra.mrb[0].mxu0 %v68
  %v203 = vpop.f32.mrb[0].mxu0
  %v204 = vadd.f32 0.0, %v203
  %v205 = vpop.f32.mrb[0].mxu0
  %206 = vmatprep.mubr.f32.mxu0 0.0
  %207 = vmatmul.mubr.f32.gmra.mrb[0].mxu0 %v69
  %v208 = vpop.f32.mrb[0].mxu0
  %v209 = vadd.f32 0.0, %v208
  %v210 = vpop.f32.mrb[0].mxu0
  %211 = vmatprep.mubr.f32.mxu0 0.0
  %212 = vmatmul.mubr.f32.gmra.mrb[0].mxu0 %v70
  %v213 = vpop.f32.mrb[0].mxu0
  %v214 = vadd.f32 0.0, %v213
  %v215 = vpop.f32.mrb[0].mxu0
  %216 = vmatprep.mubr.f32.mxu0 0.0
  %217 = vmatmul.mubr.f32.gmra.mrb[0].mxu0 %v71
  %v218 = vpop.f32.mrb[0].mxu0
  %v219 = vadd.f32 0.0, %v218
  %v220 = vpop.f32.mrb[0].mxu0
  %221 = vmatprep.mubr.f32.mxu0 0.0
  %222 = vmatmul.mubr.f32.gmra.mrb[0].mxu0 %v72
  %v223 = vpop.f32.mrb[0].mxu0
  %v224 = vadd.f32 0.0, %v223
  %v225 = vpop.f32.mrb[0].mxu0
  %226 = vmatprep.mubr.f32.mxu0 0.0
  %227 = vmatmul.mubr.f32.gmra.mrb[0].mxu0 %v73
  %v228 = vpop.f32.mrb[0].mxu0
  %v229 = vadd.f32 0.0, %v228
  %v230 = vpop.f32.mrb[0].mxu0
  %231 = vmatprep.mubr.f32.mxu0 0.0
  %232 = vmatmul.mubr.f32.gmra.mrb[0].mxu0 %v74
  %v233 = vpop.f32.mrb[0].mxu0
  %v234 = vadd.f32 0.0, %v233
  %v235 = vpop.f32.mrb[0].mxu0
  %236 = vmatprep.mubr.f32.mxu0 0.0
  %237 = vmatmul.mubr.f32.gmra.mrb[0].mxu0 %v75
  %v238 = vpop.f32.mrb[0].mxu0
  %v239 = vadd.f32 0.0, %v238
  %v240 = vpop.f32.mrb[0].mxu0
  %241 = vmatprep.mubr.f32.mxu0 0.0
  %242 = vmatmul.mubr.f32.gmra.mrb[0].mxu0 %v76
  %v243 = vpop.f32.mrb[0].mxu0
  %v244 = vadd.f32 0.0, %v243
  %v245 = vpop.f32.mrb[0].mxu0
  %246 = vmatprep.mubr.f32.mxu0 0.0
  %247 = vmatmul.mubr.f32.gmra.mrb[0].mxu0 %v77
  %v248 = vpop.f32.mrb[0].mxu0
  %v249 = vadd.f32 0.0, %v248
  %v250 = vpop.f32.mrb[0].mxu0
  %251 = vmatprep.mubr.f32.mxu0 0.0
  %252 = vmatmul.mubr.f32.gmra.mrb[0].mxu0 %v78
  %v253 = vpop.f32.mrb[0].mxu0
  %v254 = vadd.f32 0.0, %v253
  %v255 = vpop.f32.mrb[0].mxu0
  %256 = vmatprep.mubr.f32.mxu0 0.0
  %257 = vmatmul.mubr.f32.gmra.mrb[0].mxu0 %v79
  %v258 = vpop.f32.mrb[0].mxu0
  %v259 = vadd.f32 0.0, %v258
  %v260 = vpop.f32.mrb[0].mxu0
  %261 = vmatprep.mubr.f32.mxu0 0.0
  %262 = vmatmul.mubr.f32.gmra.mrb[0].mxu0 %v80
  %v263 = vpop.f32.mrb[0].mxu0
  %v264 = vadd.f32 0.0, %v263
  %v265 = vpop.f32.mrb[0].mxu0
  %266 = vdwg.mxu0
  %v267 = vadd.f32 %v39, %v164
  %v268 = vadd.f32 %v40, %v169
  %v269 = vadd.f32 %v41, %v174
  %v270 = vadd.f32 %v42, %v179
  %v271 = vadd.f32 %v43, %v184
  %v272 = vadd.f32 %v44, %v189
  %v273 = vadd.f32 %v45, %v194
  %v274 = vadd.f32 %v46, %v199
  %v275 = vadd.f32 %v47, %v204
  %v276 = vadd.f32 %v48, %v209
  %v277 = vadd.f32 %v49, %v214
  %v278 = vadd.f32 %v50, %v219
  %v279 = vadd.f32 %v51, %v224
  %v280 = vadd.f32 %v52, %v229
  %v281 = vadd.f32 %v53, %v234
  %v282 = vadd.f32 %v54, %v239
  %v283 = vadd.f32 %v55, %v244
  %v284 = vadd.f32 %v56, %v249
  %v285 = vadd.f32 %v57, %v254
  %v286 = vadd.f32 %v58, %v259
  %v287 = vadd.f32 %v59, %v264
  %288 = vst [vmem:[#allocation2] sm:$0xff] %v267
  %289 = vst [vmem:[#allocation2 + $0x8] sm:$0xff] %v268
  %290 = vst [vmem:[#allocation2 + $0x10] sm:$0xff] %v269
  %291 = vst [vmem:[#allocation2 + $0x18] sm:$0xff] %v270
  %292 = vst [vmem:[#allocation2 + $0x20] sm:$0xff] %v271
  %293 = vst [vmem:[#allocation2 + $0x28] sm:$0xff] %v272
  %294 = vst [vmem:[#allocation2 + $0x30] sm:$0xff] %v273
  %295 = vst [vmem:[#allocation2 + $0x38] sm:$0xff] %v274
  %296 = vst [vmem:[#allocation2 + $0x40] sm:$0xff] %v275
  %297 = vst [vmem:[#allocation2 + $0x48] sm:$0xff] %v276
  %298 = vst [vmem:[#allocation2 + $0x50] sm:$0xff] %v277
  %299 = vst [vmem:[#allocation2 + $0x58] sm:$0xff] %v278
  %300 = vst [vmem:[#allocation2 + $0x60] sm:$0xff] %v279
  %301 = vst [vmem:[#allocation2 + $0x68] sm:$0xff] %v280
  %302 = vst [vmem:[#allocation2 + $0x70] sm:$0xff] %v281
  %303 = vst [vmem:[#allocation2 + $0x78] sm:$0xff] %v282
  %304 = vst [vmem:[#allocation2 + $0x80] sm:$0xff] %v283
  %305 = vst [vmem:[#allocation2 + $0x88] sm:$0xff] %v284
  %306 = vst [vmem:[#allocation2 + $0x90] sm:$0xff] %v285
  %307 = vst [vmem:[#allocation2 + $0x98] sm:$0xff] %v286
  %308 = vst [vmem:[#allocation2 + $0xa0] sm:$0xff] %v287
  // Predicated region
  $region18: #{forward.27} parent=0 // pred_check
    %p309 = pneg %p14
  $region19: #{forward.27} parent=0 // pred_check_branch
    %311 = sbr.rel (%p309) target = $region21
  $region20: #{forward.27} parent=0 // pred_region
    %v312 = vld [vmem:[#allocation2] sm:$0xff]
    %v313 = vld [vmem:[#allocation2 + $0x8] sm:$0xff]
    %v314 = vld [vmem:[#allocation2 + $0x10] sm:$0xff]
    %v315 = vld [vmem:[#allocation2 + $0x18] sm:$0xff]
    %v316 = vld [vmem:[#allocation2 + $0x20] sm:$0xff]
    %v317 = vld [vmem:[#allocation2 + $0x28] sm:$0xff]
    %v318 = vld [vmem:[#allocation2 + $0x30] sm:$0xff]
    %v319 = vld [vmem:[#allocation2 + $0x38] sm:$0xff]
    %v320 = vld [vmem:[#allocation2 + $0x40] sm:$0xff]
    %v321 = vld [vmem:[#allocation2 + $0x48] sm:$0xff]
    %v322 = vld [vmem:[#allocation2 + $0x50] sm:$0xff]
    %v323 = vld [vmem:[#allocation2 + $0x58] sm:$0xff]
    %v324 = vld [vmem:[#allocation2 + $0x60] sm:$0xff]
    %v325 = vld [vmem:[#allocation2 + $0x68] sm:$0xff]
    %v326 = vld [vmem:[#allocation2 + $0x70] sm:$0xff]
    %v327 = vld [vmem:[#allocation2 + $0x78] sm:$0xff]
    %v328 = vld [vmem:[#allocation2 + $0x80] sm:$0xff]
    %v329 = vld [vmem:[#allocation2 + $0x88] sm:$0xff]
    %v330 = vld [vmem:[#allocation2 + $0x90] sm:$0xff]
    %v331 = vld [vmem:[#allocation2 + $0x98] sm:$0xff]
    %v332 = vld [vmem:[#allocation2 + $0xa0] sm:$0xff]
    %v333 = vld [vmem:[%s2] sm:$0x1]
    %v335 = vlaneseq
    %v336 = vshrl.u32 %v335, 7
    %v337 = vsub.s32 0, %v336
    %v338 = vrot.slane %v333, %v337
    %v340 = vadd.f32 %v312, %v338
    %v341 = vadd.f32 %v313, %v338
    %v342 = vadd.f32 %v314, %v338
    %v343 = vadd.f32 %v315, %v338
    %v344 = vadd.f32 %v316, %v338
    %v345 = vadd.f32 %v317, %v338
    %v346 = vadd.f32 %v318, %v338
    %v347 = vadd.f32 %v319, %v338
    %v348 = vadd.f32 %v320, %v338
    %v349 = vadd.f32 %v321, %v338
    %v350 = vadd.f32 %v322, %v338
    %v351 = vadd.f32 %v323, %v338
    %v352 = vadd.f32 %v324, %v338
    %v353 = vadd.f32 %v325, %v338
    %v354 = vadd.f32 %v326, %v338
    %v355 = vadd.f32 %v327, %v338
    %v356 = vadd.f32 %v328, %v338
    %v357 = vadd.f32 %v329, %v338
    %v358 = vadd.f32 %v330, %v338
    %v359 = vadd.f32 %v331, %v338
    %v360 = vadd.f32 %v332, %v338
    %361 = vst [vmem:[%s3] sm:$0xff] %v340
    %362 = vst [vmem:[%s3 + $0x8] sm:$0xff] %v341
    %363 = vst [vmem:[%s3 + $0x10] sm:$0xff] %v342
    %364 = vst [vmem:[%s3 + $0x18] sm:$0xff] %v343
    %365 = vst [vmem:[%s3 + $0x20] sm:$0xff] %v344
    %366 = vst [vmem:[%s3 + $0x28] sm:$0xff] %v345
    %367 = vst [vmem:[%s3 + $0x30] sm:$0xff] %v346
    %368 = vst [vmem:[%s3 + $0x38] sm:$0xff] %v347
    %369 = vst [vmem:[%s3 + $0x40] sm:$0xff] %v348
    %370 = vst [vmem:[%s3 + $0x48] sm:$0xff] %v349
    %371 = vst [vmem:[%s3 + $0x50] sm:$0xff] %v350
    %372 = vst [vmem:[%s3 + $0x58] sm:$0xff] %v351
    %373 = vst [vmem:[%s3 + $0x60] sm:$0xff] %v352
    %374 = vst [vmem:[%s3 + $0x68] sm:$0xff] %v353
    %375 = vst [vmem:[%s3 + $0x70] sm:$0xff] %v354
    %376 = vst [vmem:[%s3 + $0x78] sm:$0xff] %v355
    %377 = vst [vmem:[%s3 + $0x80] sm:$0xff] %v356
    %378 = vst [vmem:[%s3 + $0x88] sm:$0xff] %v357
    %379 = vst [vmem:[%s3 + $0x90] sm:$0xff] %v358
    %380 = vst [vmem:[%s3 + $0x98] sm:$0xff] %v359
    %381 = vst [vmem:[%s3 + $0xa0] sm:$0xff] %v360
  $region21: #{forward.27} parent=0 // pred_fallthru
    _
  // Predicated region
  $region22: #{forward.27} parent=0 // pred_check
    _
  $region23: #{forward.27} parent=0 // pred_check_branch
    %383 = sbr.rel (0) target = $region25
  $region24: #{forward.27} parent=0 // pred_region
    _
  $region25: #{forward.27} parent=0 // pred_fallthru
    _
  // Predicated region
  $region26: #{forward.27} parent=0 // pred_check
    _
  $region27: #{forward.27} parent=0 // pred_check_branch
    %385 = sbr.rel (0) target = $region29
  $region28: #{forward.27} parent=0 // pred_region
    _
  $region29: #{forward.27} parent=0 // pred_fallthru
    _

// kernel: forward.29
$region0: #{forward.29}
  #allocation0 [shape = 'u32[]', space=smem, size = 0x4, offset = 0x4, fixed_abs, tag = 'smem constant byte address 0x4 - core index']
  #allocation1 [shape = 'u32[144,128]{1,0:T(1,128)}', space=vmem, size = 0x12000, scoped, tag = 'internal scratch']
  %s0 = inlined_call_operand.vmem [shape: f32[512,4], index: 0, kind: input, shape index: {}]
  %s1 = inlined_call_operand.vmem [shape: f32[1,4], index: 1, kind: input, shape index: {}]
  %s2 = inlined_call_operand.vmem [shape: f32[1,4], index: 2, kind: input, shape index: {}]
  %s3 = inlined_call_operand.vmem [shape: f32[512,4], index: 3, kind: output, shape index: {}]
  %s4 = sld [smem:[#allocation0]]
  $region22: #{forward.29} parent=0
    _
  %s6 = ssub.s32 1, %s4
  %s7 = scalar_select 0, %s6, %s4
  // Predicated region
  $region2: #{forward.29} parent=0 // pred_check
    _
  $region3: #{forward.29} parent=0 // pred_check_branch
    %9 = sbr.rel (0) target = $region5
  $region4: #{forward.29} parent=0 // pred_region
    _
  $region5: #{forward.29} parent=0 // pred_fallthru
    _
  // Predicated region
  $region6: #{forward.29} parent=0 // pred_check
    _
  $region7: #{forward.29} parent=0 // pred_check_branch
    %11 = sbr.rel (0) target = $region9
  $region8: #{forward.29} parent=0 // pred_region
    _
  $region9: #{forward.29} parent=0 // pred_fallthru
    _
  // Predicated region
  $region10: #{forward.29} parent=0 // pred_check
    _
  $region11: #{forward.29} parent=0 // pred_check_branch
    %13 = sbr.rel (0) target = $region13
  $region12: #{forward.29} parent=0 // pred_region
    _
  $region13: #{forward.29} parent=0 // pred_fallthru
    _
  %v14 = vld [vmem:[%s0] sm:$0xff]
  %v15 = vld [vmem:[%s0 + $0x8] sm:$0xff]
  %v16 = vld [vmem:[%s0 + $0x10] sm:$0xff]
  %v17 = vld [vmem:[%s0 + $0x18] sm:$0xff]
  %v18 = vld [vmem:[%s0 + $0x20] sm:$0xff]
  %v19 = vld [vmem:[%s0 + $0x28] sm:$0xff]
  %v20 = vld [vmem:[%s0 + $0x30] sm:$0xff]
  %v21 = vld [vmem:[%s0 + $0x38] sm:$0xff]
  %v22 = vld [vmem:[%s0 + $0x40] sm:$0xff]
  %v23 = vld [vmem:[%s0 + $0x48] sm:$0xff]
  %v24 = vld [vmem:[%s0 + $0x50] sm:$0xff]
  %v25 = vld [vmem:[%s0 + $0x58] sm:$0xff]
  %v26 = vld [vmem:[%s0 + $0x60] sm:$0xff]
  %v27 = vld [vmem:[%s0 + $0x68] sm:$0xff]
  %v28 = vld [vmem:[%s0 + $0x70] sm:$0xff]
  %v29 = vld [vmem:[%s0 + $0x78] sm:$0xff]
  %v30 = vld [vmem:[%s0 + $0x80] sm:$0xff]
  %v31 = vld [vmem:[%s0 + $0x88] sm:$0xff]
  %v32 = vld [vmem:[%s0 + $0x90] sm:$0xff]
  %v33 = vld [vmem:[%s0 + $0x98] sm:$0xff]
  %v34 = vld [vmem:[%s0 + $0xa0] sm:$0xff]
  %v35 = vld [vmem:[%s0 + $0xa8] sm:$0xff]
  %v36 = vld [vmem:[%s0 + $0xb0] sm:$0xff]
  %v37 = vld [vmem:[%s0 + $0xb8] sm:$0xff]
  %v38 = vld [vmem:[%s0 + $0xc0] sm:$0xff]
  %v39 = vld [vmem:[%s0 + $0xc8] sm:$0xff]
  %v40 = vld [vmem:[%s0 + $0xd0] sm:$0xff]
  %v41 = vld [vmem:[%s0 + $0xd8] sm:$0xff]
  %v42 = vld [vmem:[%s0 + $0xe0] sm:$0xff]
  %v43 = vld [vmem:[%s0 + $0xe8] sm:$0xff]
  %v44 = vld [vmem:[%s0 + $0xf0] sm:$0xff]
  %v45 = vld [vmem:[%s0 + $0xf8] sm:$0xff]
  %v46 = vld [vmem:[%s0 + $0x100] sm:$0xff]
  %v47 = vld [vmem:[%s0 + $0x108] sm:$0xff]
  %v48 = vld [vmem:[%s0 + $0x110] sm:$0xff]
  %v49 = vld [vmem:[%s0 + $0x118] sm:$0xff]
  %v50 = vld [vmem:[%s0 + $0x120] sm:$0xff]
  %v51 = vld [vmem:[%s0 + $0x128] sm:$0xff]
  %v52 = vld [vmem:[%s0 + $0x130] sm:$0xff]
  %v53 = vld [vmem:[%s0 + $0x138] sm:$0xff]
  %v54 = vld [vmem:[%s0 + $0x140] sm:$0xff]
  %v55 = vld [vmem:[%s0 + $0x148] sm:$0xff]
  %v56 = vld [vmem:[%s0 + $0x150] sm:$0xff]
  %v57 = vld [vmem:[%s0 + $0x158] sm:$0xff]
  %v58 = vld [vmem:[%s0 + $0x160] sm:$0xff]
  %v59 = vld [vmem:[%s0 + $0x168] sm:$0xff]
  %v60 = vld [vmem:[%s0 + $0x170] sm:$0xff]
  %v61 = vld [vmem:[%s0 + $0x178] sm:$0xff]
  %v62 = vld [vmem:[%s0 + $0x180] sm:$0xff]
  %v63 = vld [vmem:[%s0 + $0x188] sm:$0xff]
  %v64 = vld [vmem:[%s0 + $0x190] sm:$0xff]
  %v65 = vld [vmem:[%s0 + $0x198] sm:$0xff]
  %v66 = vld [vmem:[%s0 + $0x1a0] sm:$0xff]
  %v67 = vld [vmem:[%s0 + $0x1a8] sm:$0xff]
  %v68 = vld [vmem:[%s0 + $0x1b0] sm:$0xff]
  %v69 = vld [vmem:[%s0 + $0x1b8] sm:$0xff]
  %v70 = vld [vmem:[%s0 + $0x1c0] sm:$0xff]
  %v71 = vld [vmem:[%s0 + $0x1c8] sm:$0xff]
  %v72 = vld [vmem:[%s0 + $0x1d0] sm:$0xff]
  %v73 = vld [vmem:[%s0 + $0x1d8] sm:$0xff]
  %v74 = vld [vmem:[%s0 + $0x1e0] sm:$0xff]
  %v75 = vld [vmem:[%s0 + $0x1e8] sm:$0xff]
  %v76 = vld [vmem:[%s0 + $0x1f0] sm:$0xff]
  %v77 = vld [vmem:[%s0 + $0x1f8] sm:$0xff]
  %v78 = vld [vmem:[%s1] sm:$0x1]
  %v80 = vlaneseq
  %v81 = vshrl.u32 %v80, 7
  %v82 = vsub.s32 0, %v81
  %v83 = vrot.slane %v78, %v82
  %v85 = vmul.f32 %v14, %v83
  %v86 = vmul.f32 %v15, %v83
  %v87 = vmul.f32 %v16, %v83
  %v88 = vmul.f32 %v17, %v83
  %v89 = vmul.f32 %v18, %v83
  %v90 = vmul.f32 %v19, %v83
  %v91 = vmul.f32 %v20, %v83
  %v92 = vmul.f32 %v21, %v83
  %v93 = vmul.f32 %v22, %v83
  %v94 = vmul.f32 %v23, %v83
  %v95 = vmul.f32 %v24, %v83
  %v96 = vmul.f32 %v25, %v83
  %v97 = vmul.f32 %v26, %v83
  %v98 = vmul.f32 %v27, %v83
  %v99 = vmul.f32 %v28, %v83
  %v100 = vmul.f32 %v29, %v83
  %v101 = vmul.f32 %v30, %v83
  %v102 = vmul.f32 %v31, %v83
  %v103 = vmul.f32 %v32, %v83
  %v104 = vmul.f32 %v33, %v83
  %v105 = vmul.f32 %v34, %v83
  %v106 = vmul.f32 %v35, %v83
  %v107 = vmul.f32 %v36, %v83
  %v108 = vmul.f32 %v37, %v83
  %v109 = vmul.f32 %v38, %v83
  %v110 = vmul.f32 %v39, %v83
  %v111 = vmul.f32 %v40, %v83
  %v112 = vmul.f32 %v41, %v83
  %v113 = vmul.f32 %v42, %v83
  %v114 = vmul.f32 %v43, %v83
  %v115 = vmul.f32 %v44, %v83
  %v116 = vmul.f32 %v45, %v83
  %v117 = vmul.f32 %v46, %v83
  %v118 = vmul.f32 %v47, %v83
  %v119 = vmul.f32 %v48, %v83
  %v120 = vmul.f32 %v49, %v83
  %v121 = vmul.f32 %v50, %v83
  %v122 = vmul.f32 %v51, %v83
  %v123 = vmul.f32 %v52, %v83
  %v124 = vmul.f32 %v53, %v83
  %v125 = vmul.f32 %v54, %v83
  %v126 = vmul.f32 %v55, %v83
  %v127 = vmul.f32 %v56, %v83
  %v128 = vmul.f32 %v57, %v83
  %v129 = vmul.f32 %v58, %v83
  %v130 = vmul.f32 %v59, %v83
  %v131 = vmul.f32 %v60, %v83
  %v132 = vmul.f32 %v61, %v83
  %v133 = vmul.f32 %v62, %v83
  %v134 = vmul.f32 %v63, %v83
  %v135 = vmul.f32 %v64, %v83
  %v136 = vmul.f32 %v65, %v83
  %v137 = vmul.f32 %v66, %v83
  %v138 = vmul.f32 %v67, %v83
  %v139 = vmul.f32 %v68, %v83
  %v140 = vmul.f32 %v69, %v83
  %v141 = vmul.f32 %v70, %v83
  %v142 = vmul.f32 %v71, %v83
  %v143 = vmul.f32 %v72, %v83
  %v144 = vmul.f32 %v73, %v83
  %v145 = vmul.f32 %v74, %v83
  %v146 = vmul.f32 %v75, %v83
  %v147 = vmul.f32 %v76, %v83
  %v148 = vmul.f32 %v77, %v83
  %v149 = vld [vmem:[%s2] sm:$0x1]
  %v151 = vlaneseq
  %v152 = vshrl.u32 %v151, 7
  %v153 = vsub.s32 0, %v152
  %v154 = vrot.slane %v149, %v153
  %v156 = vadd.f32 %v85, %v154
  %v157 = vadd.f32 %v86, %v154
  %v158 = vadd.f32 %v87, %v154
  %v159 = vadd.f32 %v88, %v154
  %v160 = vadd.f32 %v89, %v154
  %v161 = vadd.f32 %v90, %v154
  %v162 = vadd.f32 %v91, %v154
  %v163 = vadd.f32 %v92, %v154
  %v164 = vadd.f32 %v93, %v154
  %v165 = vadd.f32 %v94, %v154
  %v166 = vadd.f32 %v95, %v154
  %v167 = vadd.f32 %v96, %v154
  %v168 = vadd.f32 %v97, %v154
  %v169 = vadd.f32 %v98, %v154
  %v170 = vadd.f32 %v99, %v154
  %v171 = vadd.f32 %v100, %v154
  %v172 = vadd.f32 %v101, %v154
  %v173 = vadd.f32 %v102, %v154
  %v174 = vadd.f32 %v103, %v154
  %v175 = vadd.f32 %v104, %v154
  %v176 = vadd.f32 %v105, %v154
  %v177 = vadd.f32 %v106, %v154
  %v178 = vadd.f32 %v107, %v154
  %v179 = vadd.f32 %v108, %v154
  %v180 = vadd.f32 %v109, %v154
  %v181 = vadd.f32 %v110, %v154
  %v182 = vadd.f32 %v111, %v154
  %v183 = vadd.f32 %v112, %v154
  %v184 = vadd.f32 %v113, %v154
  %v185 = vadd.f32 %v114, %v154
  %v186 = vadd.f32 %v115, %v154
  %v187 = vadd.f32 %v116, %v154
  %v188 = vadd.f32 %v117, %v154
  %v189 = vadd.f32 %v118, %v154
  %v190 = vadd.f32 %v119, %v154
  %v191 = vadd.f32 %v120, %v154
  %v192 = vadd.f32 %v121, %v154
  %v193 = vadd.f32 %v122, %v154
  %v194 = vadd.f32 %v123, %v154
  %v195 = vadd.f32 %v124, %v154
  %v196 = vadd.f32 %v125, %v154
  %v197 = vadd.f32 %v126, %v154
  %v198 = vadd.f32 %v127, %v154
  %v199 = vadd.f32 %v128, %v154
  %v200 = vadd.f32 %v129, %v154
  %v201 = vadd.f32 %v130, %v154
  %v202 = vadd.f32 %v131, %v154
  %v203 = vadd.f32 %v132, %v154
  %v204 = vadd.f32 %v133, %v154
  %v205 = vadd.f32 %v134, %v154
  %v206 = vadd.f32 %v135, %v154
  %v207 = vadd.f32 %v136, %v154
  %v208 = vadd.f32 %v137, %v154
  %v209 = vadd.f32 %v138, %v154
  %v210 = vadd.f32 %v139, %v154
  %v211 = vadd.f32 %v140, %v154
  %v212 = vadd.f32 %v141, %v154
  %v213 = vadd.f32 %v142, %v154
  %v214 = vadd.f32 %v143, %v154
  %v215 = vadd.f32 %v144, %v154
  %v216 = vadd.f32 %v145, %v154
  %v217 = vadd.f32 %v146, %v154
  %v218 = vadd.f32 %v147, %v154
  %v219 = vadd.f32 %v148, %v154
  %vm220 = vcmask 31744
  %221 = vst.msk [vmem:[%s3] sm:$0xff] %vm220, %v156
  %222 = vst.msk [vmem:[%s3 + $0x8] sm:$0xff] %vm220, %v157
  %223 = vst.msk [vmem:[%s3 + $0x10] sm:$0xff] %vm220, %v158
  %224 = vst.msk [vmem:[%s3 + $0x18] sm:$0xff] %vm220, %v159
  %225 = vst.msk [vmem:[%s3 + $0x20] sm:$0xff] %vm220, %v160
  %226 = vst.msk [vmem:[%s3 + $0x28] sm:$0xff] %vm220, %v161
  %227 = vst.msk [vmem:[%s3 + $0x30] sm:$0xff] %vm220, %v162
  %228 = vst.msk [vmem:[%s3 + $0x38] sm:$0xff] %vm220, %v163
  %229 = vst.msk [vmem:[%s3 + $0x40] sm:$0xff] %vm220, %v164
  %230 = vst.msk [vmem:[%s3 + $0x48] sm:$0xff] %vm220, %v165
  %231 = vst.msk [vmem:[%s3 + $0x50] sm:$0xff] %vm220, %v166
  %232 = vst.msk [vmem:[%s3 + $0x58] sm:$0xff] %vm220, %v167
  %233 = vst.msk [vmem:[%s3 + $0x60] sm:$0xff] %vm220, %v168
  %234 = vst.msk [vmem:[%s3 + $0x68] sm:$0xff] %vm220, %v169
  %235 = vst.msk [vmem:[%s3 + $0x70] sm:$0xff] %vm220, %v170
  %236 = vst.msk [vmem:[%s3 + $0x78] sm:$0xff] %vm220, %v171
  %237 = vst.msk [vmem:[%s3 + $0x80] sm:$0xff] %vm220, %v172
  %238 = vst.msk [vmem:[%s3 + $0x88] sm:$0xff] %vm220, %v173
  %239 = vst.msk [vmem:[%s3 + $0x90] sm:$0xff] %vm220, %v174
  %240 = vst.msk [vmem:[%s3 + $0x98] sm:$0xff] %vm220, %v175
  %241 = vst.msk [vmem:[%s3 + $0xa0] sm:$0xff] %vm220, %v176
  %242 = vst.msk [vmem:[%s3 + $0xa8] sm:$0xff] %vm220, %v177
  %243 = vst.msk [vmem:[%s3 + $0xb0] sm:$0xff] %vm220, %v178
  %244 = vst.msk [vmem:[%s3 + $0xb8] sm:$0xff] %vm220, %v179
  %245 = vst.msk [vmem:[%s3 + $0xc0] sm:$0xff] %vm220, %v180
  %246 = vst.msk [vmem:[%s3 + $0xc8] sm:$0xff] %vm220, %v181
  %247 = vst.msk [vmem:[%s3 + $0xd0] sm:$0xff] %vm220, %v182
  %248 = vst.msk [vmem:[%s3 + $0xd8] sm:$0xff] %vm220, %v183
  %249 = vst.msk [vmem:[%s3 + $0xe0] sm:$0xff] %vm220, %v184
  %250 = vst.msk [vmem:[%s3 + $0xe8] sm:$0xff] %vm220, %v185
  %251 = vst.msk [vmem:[%s3 + $0xf0] sm:$0xff] %vm220, %v186
  %252 = vst.msk [vmem:[%s3 + $0xf8] sm:$0xff] %vm220, %v187
  %253 = vst.msk [vmem:[%s3 + $0x100] sm:$0xff] %vm220, %v188
  %254 = vst.msk [vmem:[%s3 + $0x108] sm:$0xff] %vm220, %v189
  %255 = vst.msk [vmem:[%s3 + $0x110] sm:$0xff] %vm220, %v190
  %256 = vst.msk [vmem:[%s3 + $0x118] sm:$0xff] %vm220, %v191
  %257 = vst.msk [vmem:[%s3 + $0x120] sm:$0xff] %vm220, %v192
  %258 = vst.msk [vmem:[%s3 + $0x128] sm:$0xff] %vm220, %v193
  %259 = vst.msk [vmem:[%s3 + $0x130] sm:$0xff] %vm220, %v194
  %260 = vst.msk [vmem:[%s3 + $0x138] sm:$0xff] %vm220, %v195
  %261 = vst.msk [vmem:[%s3 + $0x140] sm:$0xff] %vm220, %v196
  %262 = vst.msk [vmem:[%s3 + $0x148] sm:$0xff] %vm220, %v197
  %263 = vst.msk [vmem:[%s3 + $0x150] sm:$0xff] %vm220, %v198
  %264 = vst.msk [vmem:[%s3 + $0x158] sm:$0xff] %vm220, %v199
  %265 = vst.msk [vmem:[%s3 + $0x160] sm:$0xff] %vm220, %v200
  %266 = vst.msk [vmem:[%s3 + $0x168] sm:$0xff] %vm220, %v201
  %267 = vst.msk [vmem:[%s3 + $0x170] sm:$0xff] %vm220, %v202
  %268 = vst.msk [vmem:[%s3 + $0x178] sm:$0xff] %vm220, %v203
  %269 = vst.msk [vmem:[%s3 + $0x180] sm:$0xff] %vm220, %v204
  %270 = vst.msk [vmem:[%s3 + $0x188] sm:$0xff] %vm220, %v205
  %271 = vst.msk [vmem:[%s3 + $0x190] sm:$0xff] %vm220, %v206
  %272 = vst.msk [vmem:[%s3 + $0x198] sm:$0xff] %vm220, %v207
  %273 = vst.msk [vmem:[%s3 + $0x1a0] sm:$0xff] %vm220, %v208
  %274 = vst.msk [vmem:[%s3 + $0x1a8] sm:$0xff] %vm220, %v209
  %275 = vst.msk [vmem:[%s3 + $0x1b0] sm:$0xff] %vm220, %v210
  %276 = vst.msk [vmem:[%s3 + $0x1b8] sm:$0xff] %vm220, %v211
  %277 = vst.msk [vmem:[%s3 + $0x1c0] sm:$0xff] %vm220, %v212
  %278 = vst.msk [vmem:[%s3 + $0x1c8] sm:$0xff] %vm220, %v213
  %279 = vst.msk [vmem:[%s3 + $0x1d0] sm:$0xff] %vm220, %v214
  %280 = vst.msk [vmem:[%s3 + $0x1d8] sm:$0xff] %vm220, %v215
  %281 = vst.msk [vmem:[%s3 + $0x1e0] sm:$0xff] %vm220, %v216
  %282 = vst.msk [vmem:[%s3 + $0x1e8] sm:$0xff] %vm220, %v217
  %283 = vst.msk [vmem:[%s3 + $0x1f0] sm:$0xff] %vm220, %v218
  %284 = vst.msk [vmem:[%s3 + $0x1f8] sm:$0xff] %vm220, %v219
  // Predicated region
  $region14: #{forward.29} parent=0 // pred_check
    _
  $region15: #{forward.29} parent=0 // pred_check_branch
    %286 = sbr.rel (0) target = $region17
  $region16: #{forward.29} parent=0 // pred_region
    _
  $region17: #{forward.29} parent=0 // pred_fallthru
    _
  // Predicated region
  $region18: #{forward.29} parent=0 // pred_check
    _
  $region19: #{forward.29} parent=0 // pred_check_branch
    %288 = sbr.rel (0) target = $region21
  $region20: #{forward.29} parent=0 // pred_region
    _
  $region21: #{forward.29} parent=0 // pred_fallthru
    _

// kernel: forward.28
$region0: #{forward.28}
  #allocation0 [shape = 'u32[]', space=smem, size = 0x4, offset = 0x4, fixed_abs, tag = 'smem constant byte address 0x4 - core index']
  #allocation1 [shape = 'u32[144,128]{1,0:T(1,128)}', space=vmem, size = 0x12000, scoped, tag = 'internal scratch']
  %s0 = inlined_call_operand.vmem [shape: f32[512,4], index: 0, kind: input, shape index: {}]
  %s1 = inlined_call_operand.vmem [shape: f32[2,4], index: 1, kind: output, shape index: {}]
  %s2 = sld [smem:[#allocation0]]
  $region18: #{forward.28} parent=0
    _
  %s4 = ssub.s32 1, %s2
  %s5 = scalar_select 0, %s4, %s2
  // Predicated region
  $region2: #{forward.28} parent=0 // pred_check
    _
  $region3: #{forward.28} parent=0 // pred_check_branch
    %7 = sbr.rel (0) target = $region5
  $region4: #{forward.28} parent=0 // pred_region
    _
  $region5: #{forward.28} parent=0 // pred_fallthru
    _
  %p8 = scmp.eq.s32.totalorder 0, 0
  // Predicated region
  $region6: #{forward.28} parent=0 // pred_check
    %p9 = pneg %p8
  $region7: #{forward.28} parent=0 // pred_check_branch
    %11 = sbr.rel (%p9) target = $region9
  $region8: #{forward.28} parent=0 // pred_region
    %vm12 = vcmask 25600
    %13 = vst.msk [vmem:[%s1] sm:$0x3] %vm12, 0.0
  $region9: #{forward.28} parent=0 // pred_fallthru
    _
  %v14 = vld [vmem:[%s0] sm:$0xff]
  %v15 = vld [vmem:[%s0 + $0x8] sm:$0xff]
  %v16 = vld [vmem:[%s0 + $0x10] sm:$0xff]
  %v17 = vld [vmem:[%s0 + $0x18] sm:$0xff]
  %v18 = vld [vmem:[%s0 + $0x20] sm:$0xff]
  %v19 = vld [vmem:[%s0 + $0x28] sm:$0xff]
  %v20 = vld [vmem:[%s0 + $0x30] sm:$0xff]
  %v21 = vld [vmem:[%s0 + $0x38] sm:$0xff]
  %v22 = vld [vmem:[%s0 + $0x40] sm:$0xff]
  %v23 = vld [vmem:[%s0 + $0x48] sm:$0xff]
  %v24 = vld [vmem:[%s0 + $0x50] sm:$0xff]
  %v25 = vld [vmem:[%s0 + $0x58] sm:$0xff]
  %v26 = vld [vmem:[%s0 + $0x60] sm:$0xff]
  %v27 = vld [vmem:[%s0 + $0x68] sm:$0xff]
  %v28 = vld [vmem:[%s0 + $0x70] sm:$0xff]
  %v29 = vld [vmem:[%s0 + $0x78] sm:$0xff]
  %v30 = vld [vmem:[%s0 + $0x80] sm:$0xff]
  %v31 = vld [vmem:[%s0 + $0x88] sm:$0xff]
  %v32 = vld [vmem:[%s0 + $0x90] sm:$0xff]
  %v33 = vld [vmem:[%s0 + $0x98] sm:$0xff]
  %v34 = vld [vmem:[%s0 + $0xa0] sm:$0xff]
  %v35 = vld [vmem:[%s0 + $0xa8] sm:$0xff]
  %v36 = vld [vmem:[%s0 + $0xb0] sm:$0xff]
  %v37 = vld [vmem:[%s0 + $0xb8] sm:$0xff]
  %v38 = vld [vmem:[%s0 + $0xc0] sm:$0xff]
  %v39 = vld [vmem:[%s0 + $0xc8] sm:$0xff]
  %v40 = vld [vmem:[%s0 + $0xd0] sm:$0xff]
  %v41 = vld [vmem:[%s0 + $0xd8] sm:$0xff]
  %v42 = vld [vmem:[%s0 + $0xe0] sm:$0xff]
  %v43 = vld [vmem:[%s0 + $0xe8] sm:$0xff]
  %v44 = vld [vmem:[%s0 + $0xf0] sm:$0xff]
  %v45 = vld [vmem:[%s0 + $0xf8] sm:$0xff]
  %v46 = vld [vmem:[%s0 + $0x100] sm:$0xff]
  %v47 = vld [vmem:[%s0 + $0x108] sm:$0xff]
  %v48 = vld [vmem:[%s0 + $0x110] sm:$0xff]
  %v49 = vld [vmem:[%s0 + $0x118] sm:$0xff]
  %v50 = vld [vmem:[%s0 + $0x120] sm:$0xff]
  %v51 = vld [vmem:[%s0 + $0x128] sm:$0xff]
  %v52 = vld [vmem:[%s0 + $0x130] sm:$0xff]
  %v53 = vld [vmem:[%s0 + $0x138] sm:$0xff]
  %v54 = vld [vmem:[%s0 + $0x140] sm:$0xff]
  %v55 = vld [vmem:[%s0 + $0x148] sm:$0xff]
  %v56 = vld [vmem:[%s0 + $0x150] sm:$0xff]
  %v57 = vld [vmem:[%s0 + $0x158] sm:$0xff]
  %v58 = vld [vmem:[%s0 + $0x160] sm:$0xff]
  %v59 = vld [vmem:[%s0 + $0x168] sm:$0xff]
  %v60 = vld [vmem:[%s0 + $0x170] sm:$0xff]
  %v61 = vld [vmem:[%s0 + $0x178] sm:$0xff]
  %v62 = vld [vmem:[%s0 + $0x180] sm:$0xff]
  %v63 = vld [vmem:[%s0 + $0x188] sm:$0xff]
  %v64 = vld [vmem:[%s0 + $0x190] sm:$0xff]
  %v65 = vld [vmem:[%s0 + $0x198] sm:$0xff]
  %v66 = vld [vmem:[%s0 + $0x1a0] sm:$0xff]
  %v67 = vld [vmem:[%s0 + $0x1a8] sm:$0xff]
  %v68 = vld [vmem:[%s0 + $0x1b0] sm:$0xff]
  %v69 = vld [vmem:[%s0 + $0x1b8] sm:$0xff]
  %v70 = vld [vmem:[%s0 + $0x1c0] sm:$0xff]
  %v71 = vld [vmem:[%s0 + $0x1c8] sm:$0xff]
  %v72 = vld [vmem:[%s0 + $0x1d0] sm:$0xff]
  %v73 = vld [vmem:[%s0 + $0x1d8] sm:$0xff]
  %v74 = vld [vmem:[%s0 + $0x1e0] sm:$0xff]
  %v75 = vld [vmem:[%s0 + $0x1e8] sm:$0xff]
  %v76 = vld [vmem:[%s0 + $0x1f0] sm:$0xff]
  %v77 = vld [vmem:[%s0 + $0x1f8] sm:$0xff]
  %v78 = vld [vmem:[%s1] sm:$0x1]
  %vm79 = vcmask 31744
  %v80 = vsel %vm79, %v14, 0.0
  %v81 = vsel %vm79, %v15, 0.0
  %v82 = vadd.f32 %v80, %v81
  %v83 = vsel %vm79, %v16, 0.0
  %v84 = vadd.f32 %v82, %v83
  %v85 = vsel %vm79, %v17, 0.0
  %v86 = vadd.f32 %v84, %v85
  %v87 = vsel %vm79, %v18, 0.0
  %v88 = vadd.f32 %v86, %v87
  %v89 = vsel %vm79, %v19, 0.0
  %v90 = vadd.f32 %v88, %v89
  %v91 = vsel %vm79, %v20, 0.0
  %v92 = vadd.f32 %v90, %v91
  %v93 = vsel %vm79, %v21, 0.0
  %v94 = vadd.f32 %v92, %v93
  %v95 = vsel %vm79, %v22, 0.0
  %v96 = vadd.f32 %v94, %v95
  %v97 = vsel %vm79, %v23, 0.0
  %v98 = vadd.f32 %v96, %v97
  %v99 = vsel %vm79, %v24, 0.0
  %v100 = vadd.f32 %v98, %v99
  %v101 = vsel %vm79, %v25, 0.0
  %v102 = vadd.f32 %v100, %v101
  %v103 = vsel %vm79, %v26, 0.0
  %v104 = vadd.f32 %v102, %v103
  %v105 = vsel %vm79, %v27, 0.0
  %v106 = vadd.f32 %v104, %v105
  %v107 = vsel %vm79, %v28, 0.0
  %v108 = vadd.f32 %v106, %v107
  %v109 = vsel %vm79, %v29, 0.0
  %v110 = vadd.f32 %v108, %v109
  %v111 = vsel %vm79, %v30, 0.0
  %v112 = vadd.f32 %v110, %v111
  %v113 = vsel %vm79, %v31, 0.0
  %v114 = vadd.f32 %v112, %v113
  %v115 = vsel %vm79, %v32, 0.0
  %v116 = vadd.f32 %v114, %v115
  %v117 = vsel %vm79, %v33, 0.0
  %v118 = vadd.f32 %v116, %v117
  %v119 = vsel %vm79, %v34, 0.0
  %v120 = vadd.f32 %v118, %v119
  %v121 = vsel %vm79, %v35, 0.0
  %v122 = vadd.f32 %v120, %v121
  %v123 = vsel %vm79, %v36, 0.0
  %v124 = vadd.f32 %v122, %v123
  %v125 = vsel %vm79, %v37, 0.0
  %v126 = vadd.f32 %v124, %v125
  %v127 = vsel %vm79, %v38, 0.0
  %v128 = vadd.f32 %v126, %v127
  %v129 = vsel %vm79, %v39, 0.0
  %v130 = vadd.f32 %v128, %v129
  %v131 = vsel %vm79, %v40, 0.0
  %v132 = vadd.f32 %v130, %v131
  %v133 = vsel %vm79, %v41, 0.0
  %v134 = vadd.f32 %v132, %v133
  %v135 = vsel %vm79, %v42, 0.0
  %v136 = vadd.f32 %v134, %v135
  %v137 = vsel %vm79, %v43, 0.0
  %v138 = vadd.f32 %v136, %v137
  %v139 = vsel %vm79, %v44, 0.0
  %v140 = vadd.f32 %v138, %v139
  %v141 = vsel %vm79, %v45, 0.0
  %v142 = vadd.f32 %v140, %v141
  %v143 = vsel %vm79, %v46, 0.0
  %v144 = vadd.f32 %v142, %v143
  %v145 = vsel %vm79, %v47, 0.0
  %v146 = vadd.f32 %v144, %v145
  %v147 = vsel %vm79, %v48, 0.0
  %v148 = vadd.f32 %v146, %v147
  %v149 = vsel %vm79, %v49, 0.0
  %v150 = vadd.f32 %v148, %v149
  %v151 = vsel %vm79, %v50, 0.0
  %v152 = vadd.f32 %v150, %v151
  %v153 = vsel %vm79, %v51, 0.0
  %v154 = vadd.f32 %v152, %v153
  %v155 = vsel %vm79, %v52, 0.0
  %v156 = vadd.f32 %v154, %v155
  %v157 = vsel %vm79, %v53, 0.0
  %v158 = vadd.f32 %v156, %v157
  %v159 = vsel %vm79, %v54, 0.0
  %v160 = vadd.f32 %v158, %v159
  %v161 = vsel %vm79, %v55, 0.0
  %v162 = vadd.f32 %v160, %v161
  %v163 = vsel %vm79, %v56, 0.0
  %v164 = vadd.f32 %v162, %v163
  %v165 = vsel %vm79, %v57, 0.0
  %v166 = vadd.f32 %v164, %v165
  %v167 = vsel %vm79, %v58, 0.0
  %v168 = vadd.f32 %v166, %v167
  %v169 = vsel %vm79, %v59, 0.0
  %v170 = vadd.f32 %v168, %v169
  %v171 = vsel %vm79, %v60, 0.0
  %v172 = vadd.f32 %v170, %v171
  %v173 = vsel %vm79, %v61, 0.0
  %v174 = vadd.f32 %v172, %v173
  %v175 = vsel %vm79, %v62, 0.0
  %v176 = vadd.f32 %v174, %v175
  %v177 = vsel %vm79, %v63, 0.0
  %v178 = vadd.f32 %v176, %v177
  %v179 = vsel %vm79, %v64, 0.0
  %v180 = vadd.f32 %v178, %v179
  %v181 = vsel %vm79, %v65, 0.0
  %v182 = vadd.f32 %v180, %v181
  %v183 = vsel %vm79, %v66, 0.0
  %v184 = vadd.f32 %v182, %v183
  %v185 = vsel %vm79, %v67, 0.0
  %v186 = vadd.f32 %v184, %v185
  %v187 = vsel %vm79, %v68, 0.0
  %v188 = vadd.f32 %v186, %v187
  %v189 = vsel %vm79, %v69, 0.0
  %v190 = vadd.f32 %v188, %v189
  %v191 = vsel %vm79, %v70, 0.0
  %v192 = vadd.f32 %v190, %v191
  %v193 = vsel %vm79, %v71, 0.0
  %v194 = vadd.f32 %v192, %v193
  %v195 = vsel %vm79, %v72, 0.0
  %v196 = vadd.f32 %v194, %v195
  %v197 = vsel %vm79, %v73, 0.0
  %v198 = vadd.f32 %v196, %v197
  %v199 = vsel %vm79, %v74, 0.0
  %v200 = vadd.f32 %v198, %v199
  %v201 = vsel %vm79, %v75, 0.0
  %v202 = vadd.f32 %v200, %v201
  %v203 = vsel %vm79, %v76, 0.0
  %v204 = vadd.f32 %v202, %v203
  %v205 = vsel %vm79, %v77, 0.0
  %v206 = vadd.f32 %v204, %v205
  %v207 = vrot.slane %v206, 4
  %v208 = vadd.f32 %v206, %v207
  %v209 = vrot.slane %v208, 2
  %v210 = vadd.f32 %v208, %v209
  %v211 = vrot.slane %v210, 1
  %v212 = vadd.f32 %v210, %v211
  %v213 = vadd.f32 %v78, %v212
  %vm214 = vcmask 24576
  %215 = vst.msk [vmem:[%s1] sm:$0x1] %vm214, %v213
  %v216 = vld [vmem:[%s1 + $0x1] sm:$0x1]
  %v217 = vmul.f32 %v14, %v14
  %v218 = vmul.f32 %v15, %v15
  %v219 = vmul.f32 %v16, %v16
  %v220 = vmul.f32 %v17, %v17
  %v221 = vmul.f32 %v18, %v18
  %v222 = vmul.f32 %v19, %v19
  %v223 = vmul.f32 %v20, %v20
  %v224 = vmul.f32 %v21, %v21
  %v225 = vmul.f32 %v22, %v22
  %v226 = vmul.f32 %v23, %v23
  %v227 = vmul.f32 %v24, %v24
  %v228 = vmul.f32 %v25, %v25
  %v229 = vmul.f32 %v26, %v26
  %v230 = vmul.f32 %v27, %v27
  %v231 = vmul.f32 %v28, %v28
  %v232 = vmul.f32 %v29, %v29
  %v233 = vmul.f32 %v30, %v30
  %v234 = vmul.f32 %v31, %v31
  %v235 = vmul.f32 %v32, %v32
  %v236 = vmul.f32 %v33, %v33
  %v237 = vmul.f32 %v34, %v34
  %v238 = vmul.f32 %v35, %v35
  %v239 = vmul.f32 %v36, %v36
  %v240 = vmul.f32 %v37, %v37
  %v241 = vmul.f32 %v38, %v38
  %v242 = vmul.f32 %v39, %v39
  %v243 = vmul.f32 %v40, %v40
  %v244 = vmul.f32 %v41, %v41
  %v245 = vmul.f32 %v42, %v42
  %v246 = vmul.f32 %v43, %v43
  %v247 = vmul.f32 %v44, %v44
  %v248 = vmul.f32 %v45, %v45
  %v249 = vmul.f32 %v46, %v46
  %v250 = vmul.f32 %v47, %v47
  %v251 = vmul.f32 %v48, %v48
  %v252 = vmul.f32 %v49, %v49
  %v253 = vmul.f32 %v50, %v50
  %v254 = vmul.f32 %v51, %v51
  %v255 = vmul.f32 %v52, %v52
  %v256 = vmul.f32 %v53, %v53
  %v257 = vmul.f32 %v54, %v54
  %v258 = vmul.f32 %v55, %v55
  %v259 = vmul.f32 %v56, %v56
  %v260 = vmul.f32 %v57, %v57
  %v261 = vmul.f32 %v58, %v58
  %v262 = vmul.f32 %v59, %v59
  %v263 = vmul.f32 %v60, %v60
  %v264 = vmul.f32 %v61, %v61
  %v265 = vmul.f32 %v62, %v62
  %v266 = vmul.f32 %v63, %v63
  %v267 = vmul.f32 %v64, %v64
  %v268 = vmul.f32 %v65, %v65
  %v269 = vmul.f32 %v66, %v66
  %v270 = vmul.f32 %v67, %v67
  %v271 = vmul.f32 %v68, %v68
  %v272 = vmul.f32 %v69, %v69
  %v273 = vmul.f32 %v70, %v70
  %v274 = vmul.f32 %v71, %v71
  %v275 = vmul.f32 %v72, %v72
  %v276 = vmul.f32 %v73, %v73
  %v277 = vmul.f32 %v74, %v74
  %v278 = vmul.f32 %v75, %v75
  %v279 = vmul.f32 %v76, %v76
  %v280 = vmul.f32 %v77, %v77
  %v281 = vsel %vm79, %v217, 0.0
  %v282 = vsel %vm79, %v218, 0.0
  %v283 = vadd.f32 %v281, %v282
  %v284 = vsel %vm79, %v219, 0.0
  %v285 = vadd.f32 %v283, %v284
  %v286 = vsel %vm79, %v220, 0.0
  %v287 = vadd.f32 %v285, %v286
  %v288 = vsel %vm79, %v221, 0.0
  %v289 = vadd.f32 %v287, %v288
  %v290 = vsel %vm79, %v222, 0.0
  %v291 = vadd.f32 %v289, %v290
  %v292 = vsel %vm79, %v223, 0.0
  %v293 = vadd.f32 %v291, %v292
  %v294 = vsel %vm79, %v224, 0.0
  %v295 = vadd.f32 %v293, %v294
  %v296 = vsel %vm79, %v225, 0.0
  %v297 = vadd.f32 %v295, %v296
  %v298 = vsel %vm79, %v226, 0.0
  %v299 = vadd.f32 %v297, %v298
  %v300 = vsel %vm79, %v227, 0.0
  %v301 = vadd.f32 %v299, %v300
  %v302 = vsel %vm79, %v228, 0.0
  %v303 = vadd.f32 %v301, %v302
  %v304 = vsel %vm79, %v229, 0.0
  %v305 = vadd.f32 %v303, %v304
  %v306 = vsel %vm79, %v230, 0.0
  %v307 = vadd.f32 %v305, %v306
  %v308 = vsel %vm79, %v231, 0.0
  %v309 = vadd.f32 %v307, %v308
  %v310 = vsel %vm79, %v232, 0.0
  %v311 = vadd.f32 %v309, %v310
  %v312 = vsel %vm79, %v233, 0.0
  %v313 = vadd.f32 %v311, %v312
  %v314 = vsel %vm79, %v234, 0.0
  %v315 = vadd.f32 %v313, %v314
  %v316 = vsel %vm79, %v235, 0.0
  %v317 = vadd.f32 %v315, %v316
  %v318 = vsel %vm79, %v236, 0.0
  %v319 = vadd.f32 %v317, %v318
  %v320 = vsel %vm79, %v237, 0.0
  %v321 = vadd.f32 %v319, %v320
  %v322 = vsel %vm79, %v238, 0.0
  %v323 = vadd.f32 %v321, %v322
  %v324 = vsel %vm79, %v239, 0.0
  %v325 = vadd.f32 %v323, %v324
  %v326 = vsel %vm79, %v240, 0.0
  %v327 = vadd.f32 %v325, %v326
  %v328 = vsel %vm79, %v241, 0.0
  %v329 = vadd.f32 %v327, %v328
  %v330 = vsel %vm79, %v242, 0.0
  %v331 = vadd.f32 %v329, %v330
  %v332 = vsel %vm79, %v243, 0.0
  %v333 = vadd.f32 %v331, %v332
  %v334 = vsel %vm79, %v244, 0.0
  %v335 = vadd.f32 %v333, %v334
  %v336 = vsel %vm79, %v245, 0.0
  %v337 = vadd.f32 %v335, %v336
  %v338 = vsel %vm79, %v246, 0.0
  %v339 = vadd.f32 %v337, %v338
  %v340 = vsel %vm79, %v247, 0.0
  %v341 = vadd.f32 %v339, %v340
  %v342 = vsel %vm79, %v248, 0.0
  %v343 = vadd.f32 %v341, %v342
  %v344 = vsel %vm79, %v249, 0.0
  %v345 = vadd.f32 %v343, %v344
  %v346 = vsel %vm79, %v250, 0.0
  %v347 = vadd.f32 %v345, %v346
  %v348 = vsel %vm79, %v251, 0.0
  %v349 = vadd.f32 %v347, %v348
  %v350 = vsel %vm79, %v252, 0.0
  %v351 = vadd.f32 %v349, %v350
  %v352 = vsel %vm79, %v253, 0.0
  %v353 = vadd.f32 %v351, %v352
  %v354 = vsel %vm79, %v254, 0.0
  %v355 = vadd.f32 %v353, %v354
  %v356 = vsel %vm79, %v255, 0.0
  %v357 = vadd.f32 %v355, %v356
  %v358 = vsel %vm79, %v256, 0.0
  %v359 = vadd.f32 %v357, %v358
  %v360 = vsel %vm79, %v257, 0.0
  %v361 = vadd.f32 %v359, %v360
  %v362 = vsel %vm79, %v258, 0.0
  %v363 = vadd.f32 %v361, %v362
  %v364 = vsel %vm79, %v259, 0.0
  %v365 = vadd.f32 %v363, %v364
  %v366 = vsel %vm79, %v260, 0.0
  %v367 = vadd.f32 %v365, %v366
  %v368 = vsel %vm79, %v261, 0.0
  %v369 = vadd.f32 %v367, %v368
  %v370 = vsel %vm79, %v262, 0.0
  %v371 = vadd.f32 %v369, %v370
  %v372 = vsel %vm79, %v263, 0.0
  %v373 = vadd.f32 %v371, %v372
  %v374 = vsel %vm79, %v264, 0.0
  %v375 = vadd.f32 %v373, %v374
  %v376 = vsel %vm79, %v265, 0.0
  %v377 = vadd.f32 %v375, %v376
  %v378 = vsel %vm79, %v266, 0.0
  %v379 = vadd.f32 %v377, %v378
  %v380 = vsel %vm79, %v267, 0.0
  %v381 = vadd.f32 %v379, %v380
  %v382 = vsel %vm79, %v268, 0.0
  %v383 = vadd.f32 %v381, %v382
  %v384 = vsel %vm79, %v269, 0.0
  %v385 = vadd.f32 %v383, %v384
  %v386 = vsel %vm79, %v270, 0.0
  %v387 = vadd.f32 %v385, %v386
  %v388 = vsel %vm79, %v271, 0.0
  %v389 = vadd.f32 %v387, %v388
  %v390 = vsel %vm79, %v272, 0.0
  %v391 = vadd.f32 %v389, %v390
  %v392 = vsel %vm79, %v273, 0.0
  %v393 = vadd.f32 %v391, %v392
  %v394 = vsel %vm79, %v274, 0.0
  %v395 = vadd.f32 %v393, %v394
  %v396 = vsel %vm79, %v275, 0.0
  %v397 = vadd.f32 %v395, %v396
  %v398 = vsel %vm79, %v276, 0.0
  %v399 = vadd.f32 %v397, %v398
  %v400 = vsel %vm79, %v277, 0.0
  %v401 = vadd.f32 %v399, %v400
  %v402 = vsel %vm79, %v278, 0.0
  %v403 = vadd.f32 %v401, %v402
  %v404 = vsel %vm79, %v279, 0.0
  %v405 = vadd.f32 %v403, %v404
  %v406 = vsel %vm79, %v280, 0.0
  %v407 = vadd.f32 %v405, %v406
  %v408 = vrot.slane %v407, 4
  %v409 = vadd.f32 %v407, %v408
  %v410 = vrot.slane %v409, 2
  %v411 = vadd.f32 %v409, %v410
  %v412 = vrot.slane %v411, 1
  %v413 = vadd.f32 %v411, %v412
  %v414 = vadd.f32 %v216, %v413
  %415 = vst.msk [vmem:[%s1 + $0x1] sm:$0x1] %vm214, %v414
  // Predicated region
  $region10: #{forward.28} parent=0 // pred_check
    _
  $region11: #{forward.28} parent=0 // pred_check_branch
    %417 = sbr.rel (0) target = $region13
  $region12: #{forward.28} parent=0 // pred_region
    _
  $region13: #{forward.28} parent=0 // pred_fallthru
    _
  // Predicated region
  $region14: #{forward.28} parent=0 // pred_check
    _
  $region15: #{forward.28} parent=0 // pred_check_branch
    %419 = sbr.rel (0) target = $region17
  $region16: #{forward.28} parent=0 // pred_region
    _
  $region17: #{forward.28} parent=0 // pred_fallthru
    _

</llo_original>
